<compile_context>
chip_gen: v5e
topology: v5e:2x2
jax: 0.10.0
libtpu: 0.0.40
codegen_flags: <defaults>
</compile_context>

<pallas_src>
import math
import numpy as np
import jax
import jax.numpy as jnp
from jax.experimental import pallas as pl
from jax.experimental.pallas import tpu as pltpu

NEG = 1e30        # finite stand-in for the -inf max-pool padding (no inf/NaN in matmuls)
GUARD = 4         # zero guard lanes on each side of a packed sample
MAX_REACH = 6     # largest lane offset any op reads (7-tap conv at dilation 2)


def _round_up(v, m):
    return (v + m - 1) // m * m


# --------------------------------- the kernel --------------------------------

def inception_kernel(x_ref, msk_ref, wb1_ref, bb1_ref, wb2_ref, bb2_ref,
                     wl_ref, bl_ref, amat_ref, out_ref):
    """One grid step processes nb lane-packed samples.

    x_ref    : (1, C8, P)       f32   packed input, zero guard bands, C padded to 8
    msk_ref  : (8, P)           f32   row0: +/-NEG cap (stage-1 data lanes)
                                      row1: stage-2 lane mask
                                      rows2-5: additive -NEG masks for maxpool neighbors
    wb1_ref  : (co1p, 7*C8)     bf16  block-1 convs, 7 taps folded into K
    wb2_ref  : (ch3p, 8*ch2p)   bf16  block-2 convs + conv1_frommax, folded into K
    wl_ref   : (L4, out_dim, ch3p) bf16  linear weight, per avgpool position
    amat_ref : (P, L4*nb)       bf16  avg(1/3) window + stride-2 downsample + gather
    out_ref  : (1, out_dim, nb) f32
    """
    x = x_ref[0]                        # (C8, P)
    P = x.shape[-1]
    msk = msk_ref[...]
    cap1 = msk[0:1]                     # +NEG at stage-1 data lanes, -NEG elsewhere
    m2 = msk[1:2]                       # 1.0 at stage-2 data lanes
    nl1 = msk[2:3]; nr1 = msk[3:4]      # -NEG where the +-1 neighbor is not stage-1 data
    nl2 = msk[4:5]; nr2 = msk[5:6]      # -NEG where the +-2 neighbor is not stage-2 data

    # ---- inception block 1: 7 taps folded into one K = 7*C8 matmul ----
    xs = [x if t == 3 else pltpu.roll(x, shift=(3 - t) % P, axis=1) for t in range(7)]
    xstack = jnp.concatenate(xs, axis=0)                               # (7*C8, P), tile-aligned
    c1 = jnp.maximum(jnp.dot(wb1_ref[...], xstack.astype(jnp.bfloat16),
                             preferred_element_type=jnp.float32) + bb1_ref[...], 0.0)
    # maxpool_1 branch (k3 s1 p1, -inf pad) reusing the +-1 rolls of x
    p1 = jnp.maximum(jnp.maximum(xs[2] + nl1, x), xs[4] + nr1)         # (C8, P)
    h1 = jnp.concatenate([c1, p1], axis=0)                             # (ch2p, P)

    # ---- maxpool_1_to_2 (k3 s2 p1): stride-1 max with -inf pad, keep even lanes ----
    h1m = jnp.minimum(h1, cap1)
    pooled = jnp.maximum(jnp.maximum(pltpu.roll(h1m, shift=1, axis=1), h1m),
                         pltpu.roll(h1m, shift=P - 1, axis=1))
    h1d = jnp.where(m2 > 0.5, pooled, 0.0)                             # zero off-lattice lanes

    # ---- inception block 2: 7 dilation-2 taps + conv1_frommax(maxpool_2), one matmul ----
    hs = [h1d if t == 3 else pltpu.roll(h1d, shift=(2 * (3 - t)) % P, axis=1)
          for t in range(7)]
    mp = jnp.maximum(jnp.maximum(hs[2] + nl2, h1d), hs[4] + nr2)       # maxpool_2 (reused rolls)
    hstack = jnp.concatenate(hs + [mp], axis=0)                        # (8*ch2p, P)
    h2 = jnp.maximum(jnp.dot(wb2_ref[...], hstack.astype(jnp.bfloat16),
                             preferred_element_type=jnp.float32) + bb2_ref[...], 0.0)

    # ---- avgpool(k3 s2 p1) + flatten + linear ----
    # A only has rows for stage-2 data lanes, so garbage on guard/odd lanes of h2
    # never reaches the output (no final mask needed).
    cols = jnp.dot(h2.astype(jnp.bfloat16), amat_ref[...],
                   preferred_element_type=jnp.float32)                 # (ch3p, L4*nb)
    colsb = cols.astype(jnp.bfloat16)
    out_dim, nb = out_ref.shape[1], out_ref.shape[2]
    L4 = wl_ref.shape[0]
    acc = jnp.zeros((out_dim, nb), jnp.float32)
    for m in range(L4):
        acc = acc + jnp.dot(wl_ref[m], colsb[:, m * nb:(m + 1) * nb],
                            preferred_element_type=jnp.float32)
    out_ref[0] = acc + bl_ref[...]                                     # (out_dim, nb)


# --------------------------- host-side packing helpers ------------------------

def _pack_block1(params, names, c_in, c8):
    """Block-1 branch convs fused into a single (co1p, 7*c8) tap-stacked weight."""
    co = [int(np.asarray(params[n + '_w']).shape[0]) for n in names]
    co1 = sum(co)
    co1p = _round_up(co1, 8)
    w = np.zeros((co1p, 7 * c8), np.float32)
    b = np.zeros((co1p, 1), np.float32)
    off = 0
    for n, c in zip(names, co):
        wn = np.asarray(params[n + '_w'], np.float32)           # (c, c_in, k)
        k = wn.shape[2]
        t0 = (7 - k) // 2                                        # center shorter kernels
        for kk in range(k):
            w[off:off + c, (t0 + kk) * c8:(t0 + kk) * c8 + c_in] = wn[:, :, kk]
        b[off:off + c, 0] = np.asarray(params[n + '_b'], np.float32)
        off += c
    return w, b, co1, co1p


def _pack_block2(params, names, fm_name, c_in, co1, co1p, c8):
    """Block-2 branch convs + conv1_frommax fused into one (ch3p, 8*ch2p) weight."""
    ch2p = co1p + c8
    row_to_orig = [-1] * ch2p                # padded h1 row -> original ch2 channel
    for r in range(co1):
        row_to_orig[r] = r
    for c in range(c_in):
        row_to_orig[co1p + c] = co1 + c
    co = [int(np.asarray(params[n + '_w']).shape[0]) for n in names]
    cfm = int(np.asarray(params[fm_name + '_w']).shape[0])
    ch3 = sum(co) + cfm
    ch3p = _round_up(ch3, 8)
    w = np.zeros((ch3p, 8 * ch2p), np.float32)
    b = np.zeros((ch3p, 1), np.float32)
    off = 0
    for n, c in zip(names, co):
        wn = np.asarray(params[n + '_w'], np.float32)            # (c, ch2, k)
        k = wn.shape[2]
        t0 = (7 - k) // 2
        for kk in range(k):
            for r, o in enumerate(row_to_orig):
                if o >= 0:
                    w[off:off + c, (t0 + kk) * ch2p + r] = wn[:, o, kk]
        b[off:off + c, 0] = np.asarray(params[n + '_b'], np.float32)
        off += c
    wfm = np.asarray(params[fm_name + '_w'], np.float32)[:, :, 0]    # (cfm, ch2)
    for r, o in enumerate(row_to_orig):
        if o >= 0:
            w[off:off + cfm, 7 * ch2p + r] = wfm[:, o]
    b[off:off + cfm, 0] = np.asarray(params[fm_name + '_b'], np.float32)
    return w, b, ch2p, ch3, ch3p


def _build_constants(nb, S1, L, L4):
    """Packed mask rows and the avgpool+flatten gather matrix A (compile-time)."""
    P = nb * S1
    m1 = np.zeros(P, np.float32)
    m2 = np.zeros(P, np.float32)
    for n in range(nb):
        base = n * S1 + GUARD
        m1[base:base + L] = 1.0
        m2[base:base + L:2] = 1.0
    msk = np.zeros((8, P), np.float32)
    msk[0] = np.where(m1 > 0.5, NEG, -NEG)            # min-cap mask (stage-1 data lanes)
    msk[1] = m2
    msk[2] = -NEG * (1.0 - np.roll(m1, 1))            # left  +-1 neighbor not stage-1 data
    msk[3] = -NEG * (1.0 - np.roll(m1, -1))           # right +-1 neighbor
    msk[4] = -NEG * (1.0 - np.roll(m2, 2))            # left  +-2 neighbor not stage-2 data
    msk[5] = -NEG * (1.0 - np.roll(m2, -2))           # right +-2 neighbor
    # A folds the /3 avg window, stride-2 downsample and per-sample column gather.
    A = np.zeros((P, L4 * nb), np.float32)
    for n in range(nb):
        base = n * S1 + GUARD
        for m in range(L4):
            for t in (-1, 0, 1):
                j = 2 * m + t
                if 0 <= j < L // 2:                   # outside -> avgpool zero pad (contributes 0)
                    A[base + 2 * j, m * nb + n] += 1.0 / 3.0
    return msk, A


# --------------------------------- wrapper ------------------------------------

def inception_forward_pallas(x, params, cfg, num_notes, out_dim, nb_max=128):
    B, T = x.shape[0], x.shape[1]
    C_in = int(x.shape[-1])
    N = B * T
    # torch: h = reshape(x, (B*T, x.shape[-1], -1))  (same row-major semantics)
    h = jnp.reshape(x, (N, C_in, -1)).astype(jnp.float32)
    L = int(h.shape[-1])
    assert L % 4 == 0
    L4 = L // 4
    assert MAX_REACH <= 2 * GUARD, "guard band too small for 7-tap dilation-2 reach"
    S1 = L + 2 * GUARD
    C8 = _round_up(C_in, 8)

    # nb samples per grid step: keep P = nb*S1 a multiple of 128 (lane-dense blocks
    # and an unmasked lane-dense output tile).  Cap at 128 so the gather constant A
    # stays small (v7x: 64 MiB VMEM) and big batches still span >= 2 grid steps
    # (dimension_semantics="parallel" then uses both v7x TensorCores).
    lane_q = 128 // math.gcd(S1, 128)
    nb_cap = max(lane_q, (nb_max // lane_q) * lane_q)
    nb = min(nb_cap, _round_up(max(N, 1), lane_q))
    P = nb * S1
    nblk = -(-N // nb)
    npad = nblk * nb

    # ---- host-side weight fusion / repacking (once per parameter set) ----
    wb1, bb1, co1, co1p = _pack_block1(
        params, ['conv1_1', 'conv3_1', 'conv5_1', 'conv7_1'], C_in, C8)
    wb2, bb2, ch2p, ch3, ch3p = _pack_block2(
        params, ['conv1_2', 'conv3_2', 'conv5_2', 'conv7_2'], 'conv1_frommax',
        C_in, co1, co1p, C8)
    wl_full = np.asarray(params['linear_w'], np.float32).reshape(out_dim, ch3, L4)
    wl = np.zeros((L4, out_dim, ch3p), np.float32)
    wl[:, :, :ch3] = wl_full.transpose(2, 0, 1)
    bl = np.asarray(params['linear_b'], np.float32)[:, None]
    msk, A = _build_constants(nb, S1, L, L4)

    wb1 = jnp.asarray(wb1, jnp.bfloat16); bb1 = jnp.asarray(bb1)
    wb2 = jnp.asarray(wb2, jnp.bfloat16); bb2 = jnp.asarray(bb2)
    wl = jnp.asarray(wl, jnp.bfloat16);   bl = jnp.asarray(bl)
    msk = jnp.asarray(msk);               A = jnp.asarray(A, jnp.bfloat16)

    # ---- lane-pack nb samples per grid step (zero guards, C padded to 8) ----
    # TODO(synk): for very large B*T this relayout is 1-2 extra HBM passes; produce
    # or cache the packed layout upstream when the same x is reused.
    hp = jnp.pad(h, ((0, npad - N), (0, C8 - C_in), (GUARD, GUARD)))
    xp = hp.reshape(nblk, nb, C8, S1).transpose(0, 2, 1, 3).reshape(nblk, C8, P)

    consts = [msk, wb1, bb1, wb2, bb2, wl, bl, A]
    in_specs = [pl.BlockSpec((1, C8, P), lambda g: (g, 0, 0))]
    for a in consts:   # constant index maps -> weights stay VMEM-resident across the grid
        in_specs.append(pl.BlockSpec(a.shape, lambda g, nd=a.ndim: (0,) * nd))

    out = pl.pallas_call(
        inception_kernel,
        out_shape=jax.ShapeDtypeStruct((nblk, out_dim, nb), jnp.float32),
        grid=(nblk,),
        in_specs=in_specs,
        out_specs=pl.BlockSpec((1, out_dim, nb), lambda g: (g, 0, 0)),
        compiler_params=pltpu.CompilerParams(
            dimension_semantics=("parallel",),
            vmem_limit_bytes=40 * 1024 * 1024),
    )(xp, *consts)

    # (nblk, out_dim, nb) -> (B, T, out_dim); drop zero-padded samples.
    y = jnp.transpose(out, (0, 2, 1)).reshape(npad, out_dim)[:N]
    return y.reshape(B, T, out_dim)


# ------------------------------ pure-JAX reference -----------------------------

def inception_forward_ref(x, params, cfg, num_notes, out_dim):
    B, T = x.shape[0], x.shape[1]
    C_in = x.shape[-1]
    N = B * T
    h = jnp.reshape(x, (N, C_in, -1)).astype(jnp.float32)

    def conv(xx, name, pad):
        w = params[name + '_w']
        b = params[name + '_b']
        y = jax.lax.conv_general_dilated(xx, w, (1,), [(pad, pad)],
                                         dimension_numbers=('NCH', 'OIH', 'NCH'))
        return y + b[None, :, None]

    def maxpool(xx, stride):
        return jax.lax.reduce_window(xx, -jnp.inf, jax.lax.max,
                                     (1, 1, 3), (1, 1, stride),
                                     [(0, 0), (0, 0), (1, 1)])

    def avgpool(xx):
        s = jax.lax.reduce_window(xx, 0.0, jax.lax.add,
                                  (1, 1, 3), (1, 1, 2),
                                  [(0, 0), (0, 0), (1, 1)])
        return s / 3.0

    relu = jax.nn.relu
    h1 = relu(conv(h, 'conv1_1', 0)); h3 = relu(conv(h, 'conv3_1', 1))
    h5 = relu(conv(h, 'conv5_1', 2)); h7 = relu(conv(h, 'conv7_1', 3))
    m1 = maxpool(h, 1)
    h_1 = jnp.concatenate([h1, h3, h5, h7, m1], axis=1)
    h_1 = maxpool(h_1, 2)
    h1b = relu(conv(h_1, 'conv1_2', 0)); h3b = relu(conv(h_1, 'conv3_2', 1))
    h5b = relu(conv(h_1, 'conv5_2', 2)); h7b = relu(conv(h_1, 'conv7_2', 3))
    m2 = relu(conv(maxpool(h_1, 1), 'conv1_frommax', 0))
    h_2 = jnp.concatenate([h1b, h3b, h5b, h7b, m2], axis=1)
    h_2 = avgpool(h_2)
    flat = h_2.reshape(N, -1)
    y = flat @ params['linear_w'].T + params['linear_b']
    return y.reshape(B, T, -1)


# ------------------------------ params / config --------------------------------

class Config:
    in_channels = 4
    conv1_1 = 4; conv3_1 = 4; conv5_1 = 4; conv7_1 = 4
    conv1_2 = 4; conv3_2 = 4; conv5_2 = 4; conv7_2 = 4
    conv1_frommax = 4


def init_params(key, cfg, num_notes, out_dim):
    ch2 = cfg.conv1_1 + cfg.conv3_1 + cfg.conv5_1 + cfg.conv7_1 + cfg.in_channels
    ch3 = cfg.conv1_2 + cfg.conv3_2 + cfg.conv5_2 + cfg.conv7_2 + cfg.conv1_frommax
    hidden = ch3 * (num_notes // 4)
    specs = {
        'conv1_1': (cfg.conv1_1, cfg.in_channels, 1),
        'conv3_1': (cfg.conv3_1, cfg.in_channels, 3),
        'conv5_1': (cfg.conv5_1, cfg.in_channels, 5),
        'conv7_1': (cfg.conv7_1, cfg.in_channels, 7),
        'conv1_2': (cfg.conv1_2, ch2, 1),
        'conv3_2': (cfg.conv3_2, ch2, 3),
        'conv5_2': (cfg.conv5_2, ch2, 5),
        'conv7_2': (cfg.conv7_2, ch2, 7),
        'conv1_frommax': (cfg.conv1_frommax, ch2, 1),
    }
    keys = jax.random.split(key, 2 * len(specs) + 2)
    params, i = {}, 0
    for name, shp in specs.items():
        params[name + '_w'] = 0.1 * jax.random.normal(keys[i], shp, jnp.float32); i += 1
        params[name + '_b'] = 0.1 * jax.random.normal(keys[i], (shp[0],), jnp.float32); i += 1
    params['linear_w'] = 0.1 * jax.random.normal(keys[i], (out_dim, hidden), jnp.float32); i += 1
    params['linear_b'] = 0.1 * jax.random.normal(keys[i], (out_dim,), jnp.float32)
    return params


# ----------------------------------- main ---------------------------------------

if __name__ == "__main__":
    cfg = Config()
    B, T = 2, 70              # N = 140 samples -> nb = 128, nblk = 2 (tests packing + padding)
    num_notes = 16            # divisible by 4
    out_dim = 8

    key = jax.random.PRNGKey(0)
    kx, kp = jax.random.split(key)
    # x mirrors the PyTorch input: (B, T, num_notes, in_channels); the forward's
    # reshape turns it into (B*T, in_channels, num_notes) exactly as torch.reshape does.
    x = jax.random.normal(kx, (B, T, num_notes, cfg.in_channels), jnp.float32)
    params = init_params(kp, cfg, num_notes, out_dim)

    y_kernel = jax.block_until_ready(
        inception_forward_pallas(x, params, cfg, num_notes, out_dim))

    y_ref = inception_forward_ref(x, params, cfg, num_notes, out_dim)
    # bf16 MXU operands (f32 accumulate) vs the all-f32 reference -> looser tolerance.
    np.testing.assert_allclose(np.asarray(y_kernel), np.asarray(y_ref),
                               rtol=5e-2, atol=8e-2)
    print("KERNEL_OK")
</pallas_src>

<mosaic_0001>
module attributes {stable_mosaic.version = 11 : i64} {
  func.func @inception_kernel(%arg0: i32, %arg1: memref<1x8x3072xf32, #tpu.memory_space<vmem>>, %arg2: memref<8x3072xf32, #tpu.memory_space<vmem>>, %arg3: memref<16x56xbf16, #tpu.memory_space<vmem>>, %arg4: memref<16x1xf32, #tpu.memory_space<vmem>>, %arg5: memref<24x192xbf16, #tpu.memory_space<vmem>>, %arg6: memref<24x1xf32, #tpu.memory_space<vmem>>, %arg7: memref<4x8x24xbf16, #tpu.memory_space<vmem>>, %arg8: memref<8x1xf32, #tpu.memory_space<vmem>>, %arg9: memref<3072x512xbf16, #tpu.memory_space<vmem>>, %arg10: memref<1x8x128xf32, #tpu.memory_space<vmem>>) attributes {dimension_semantics = [#tpu.dimension_semantics<parallel>], iteration_bounds = array<i64: 2>, scalar_prefetch = 0 : i64, scratch_operands = 0 : i64, tpu.core_type = #tpu.core_type<tc>, window_params = [{transform_indices = @transform_0, window_bounds = array<i64: 1, 8, 3072>}, {pipeline_mode = #tpu.pipeline_mode<synchronous>, transform_indices = @transform_1, window_bounds = array<i64: 8, 3072>}, {pipeline_mode = #tpu.pipeline_mode<synchronous>, transform_indices = @transform_2, window_bounds = array<i64: 16, 56>}, {pipeline_mode = #tpu.pipeline_mode<synchronous>, transform_indices = @transform_3, window_bounds = array<i64: 16, 1>}, {pipeline_mode = #tpu.pipeline_mode<synchronous>, transform_indices = @transform_4, window_bounds = array<i64: 24, 192>}, {pipeline_mode = #tpu.pipeline_mode<synchronous>, transform_indices = @transform_5, window_bounds = array<i64: 24, 1>}, {pipeline_mode = #tpu.pipeline_mode<synchronous>, transform_indices = @transform_6, window_bounds = array<i64: 4, 8, 24>}, {pipeline_mode = #tpu.pipeline_mode<synchronous>, transform_indices = @transform_7, window_bounds = array<i64: 8, 1>}, {pipeline_mode = #tpu.pipeline_mode<synchronous>, transform_indices = @transform_8, window_bounds = array<i64: 3072, 512>}, {transform_indices = @transform_9, window_bounds = array<i64: 1, 8, 128>}]} {
    %c0 = arith.constant 0 : index
    %c0_0 = arith.constant 0 : index
    %c0_1 = arith.constant 0 : index
    %0 = vector.load %arg1[%c0, %c0_0, %c0_1] : memref<1x8x3072xf32, #tpu.memory_space<vmem>>, vector<1x8x3072xf32>
    %1 = vector.shape_cast %0 : vector<1x8x3072xf32> to vector<8x3072xf32>
    %c0_2 = arith.constant 0 : index
    %c0_3 = arith.constant 0 : index
    %2 = vector.load %arg2[%c0_2, %c0_3] : memref<8x3072xf32, #tpu.memory_space<vmem>>, vector<8x3072xf32>
    %3 = vector.extract_strided_slice %2 {offsets = [0, 0], sizes = [1, 3072], strides = [1, 1]} : vector<8x3072xf32> to vector<1x3072xf32>
    %4 = vector.extract_strided_slice %2 {offsets = [1, 0], sizes = [1, 3072], strides = [1, 1]} : vector<8x3072xf32> to vector<1x3072xf32>
    %5 = vector.extract_strided_slice %2 {offsets = [2, 0], sizes = [1, 3072], strides = [1, 1]} : vector<8x3072xf32> to vector<1x3072xf32>
    %6 = vector.extract_strided_slice %2 {offsets = [3, 0], sizes = [1, 3072], strides = [1, 1]} : vector<8x3072xf32> to vector<1x3072xf32>
    %7 = vector.extract_strided_slice %2 {offsets = [4, 0], sizes = [1, 3072], strides = [1, 1]} : vector<8x3072xf32> to vector<1x3072xf32>
    %8 = vector.extract_strided_slice %2 {offsets = [5, 0], sizes = [1, 3072], strides = [1, 1]} : vector<8x3072xf32> to vector<1x3072xf32>
    %c3_i32 = arith.constant 3 : i32
    %9 = tpu.dynamic_rotate %1 by %c3_i32 dim 1 : vector<8x3072xf32>, i32 -> vector<8x3072xf32>
    %c2_i32 = arith.constant 2 : i32
    %10 = tpu.dynamic_rotate %1 by %c2_i32 dim 1 : vector<8x3072xf32>, i32 -> vector<8x3072xf32>
    %c1_i32 = arith.constant 1 : i32
    %11 = tpu.dynamic_rotate %1 by %c1_i32 dim 1 : vector<8x3072xf32>, i32 -> vector<8x3072xf32>
    %c3071_i32 = arith.constant 3071 : i32
    %12 = tpu.dynamic_rotate %1 by %c3071_i32 dim 1 : vector<8x3072xf32>, i32 -> vector<8x3072xf32>
    %c3070_i32 = arith.constant 3070 : i32
    %13 = tpu.dynamic_rotate %1 by %c3070_i32 dim 1 : vector<8x3072xf32>, i32 -> vector<8x3072xf32>
    %c3069_i32 = arith.constant 3069 : i32
    %14 = tpu.dynamic_rotate %1 by %c3069_i32 dim 1 : vector<8x3072xf32>, i32 -> vector<8x3072xf32>
    %15 = tpu.concatenate %9, %10, %11, %1, %12, %13, %14 in 0 : vector<8x3072xf32>, vector<8x3072xf32>, vector<8x3072xf32>, vector<8x3072xf32>, vector<8x3072xf32>, vector<8x3072xf32>, vector<8x3072xf32> -> vector<56x3072xf32>
    %c0_4 = arith.constant 0 : index
    %c0_5 = arith.constant 0 : index
    %16 = vector.load %arg3[%c0_4, %c0_5] : memref<16x56xbf16, #tpu.memory_space<vmem>>, vector<16x56xbf16>
    %17 = arith.truncf %15 : vector<56x3072xf32> to vector<56x3072xbf16>
    %cst = arith.constant dense<0.000000e+00> : vector<16x3072xf32>
    %18 = tpu.matmul %16, %17, %cst {dimension_numbers = #tpu.dot_dimension_numbers<[1], [0], [0], [1], [0, 0, 1, 1], [], []>} : vector<16x56xbf16>, vector<56x3072xbf16>, vector<16x3072xf32> -> vector<16x3072xf32>
    %c0_6 = arith.constant 0 : index
    %c0_7 = arith.constant 0 : index
    %19 = vector.load %arg4[%c0_6, %c0_7] : memref<16x1xf32, #tpu.memory_space<vmem>>, vector<16x1xf32>
    %20 = vector.broadcast %19 : vector<16x1xf32> to vector<16x3072xf32>
    %21 = arith.addf %18, %20 : vector<16x3072xf32>
    %cst_8 = arith.constant 0.000000e+00 : f32
    %22 = vector.broadcast %cst_8 : f32 to vector<16x3072xf32>
    %23 = arith.maximumf %21, %22 : vector<16x3072xf32>
    %24 = vector.broadcast %5 : vector<1x3072xf32> to vector<8x3072xf32>
    %25 = arith.addf %11, %24 : vector<8x3072xf32>
    %26 = arith.maximumf %25, %1 : vector<8x3072xf32>
    %27 = vector.broadcast %6 : vector<1x3072xf32> to vector<8x3072xf32>
    %28 = arith.addf %12, %27 : vector<8x3072xf32>
    %29 = arith.maximumf %26, %28 : vector<8x3072xf32>
    %30 = tpu.concatenate %23, %29 in 0 : vector<16x3072xf32>, vector<8x3072xf32> -> vector<24x3072xf32>
    %31 = vector.broadcast %3 : vector<1x3072xf32> to vector<24x3072xf32>
    %32 = arith.minimumf %30, %31 : vector<24x3072xf32>
    %c1_i32_9 = arith.constant 1 : i32
    %33 = tpu.dynamic_rotate %32 by %c1_i32_9 dim 1 : vector<24x3072xf32>, i32 -> vector<24x3072xf32>
    %34 = arith.maximumf %33, %32 : vector<24x3072xf32>
    %c3071_i32_10 = arith.constant 3071 : i32
    %35 = tpu.dynamic_rotate %32 by %c3071_i32_10 dim 1 : vector<24x3072xf32>, i32 -> vector<24x3072xf32>
    %36 = arith.maximumf %34, %35 : vector<24x3072xf32>
    %cst_11 = arith.constant 5.000000e-01 : f32
    %37 = vector.broadcast %cst_11 : f32 to vector<1x3072xf32>
    %38 = arith.cmpf ogt, %4, %37 : vector<1x3072xf32>
    %cst_12 = arith.constant 0.000000e+00 : f32
    %39 = vector.shape_cast %38 : vector<1x3072xi1> to vector<1x3072xi1>
    %40 = vector.broadcast %39 : vector<1x3072xi1> to vector<24x3072xi1>
    %41 = vector.broadcast %cst_12 : f32 to vector<24x3072xf32>
    %42 = arith.select %40, %36, %41 : vector<24x3072xi1>, vector<24x3072xf32>
    %c6_i32 = arith.constant 6 : i32
    %43 = tpu.dynamic_rotate %42 by %c6_i32 dim 1 : vector<24x3072xf32>, i32 -> vector<24x3072xf32>
    %c4_i32 = arith.constant 4 : i32
    %44 = tpu.dynamic_rotate %42 by %c4_i32 dim 1 : vector<24x3072xf32>, i32 -> vector<24x3072xf32>
    %c2_i32_13 = arith.constant 2 : i32
    %45 = tpu.dynamic_rotate %42 by %c2_i32_13 dim 1 : vector<24x3072xf32>, i32 -> vector<24x3072xf32>
    %c3070_i32_14 = arith.constant 3070 : i32
    %46 = tpu.dynamic_rotate %42 by %c3070_i32_14 dim 1 : vector<24x3072xf32>, i32 -> vector<24x3072xf32>
    %c3068_i32 = arith.constant 3068 : i32
    %47 = tpu.dynamic_rotate %42 by %c3068_i32 dim 1 : vector<24x3072xf32>, i32 -> vector<24x3072xf32>
    %c3066_i32 = arith.constant 3066 : i32
    %48 = tpu.dynamic_rotate %42 by %c3066_i32 dim 1 : vector<24x3072xf32>, i32 -> vector<24x3072xf32>
    %49 = vector.broadcast %7 : vector<1x3072xf32> to vector<24x3072xf32>
    %50 = arith.addf %45, %49 : vector<24x3072xf32>
    %51 = arith.maximumf %50, %42 : vector<24x3072xf32>
    %52 = vector.broadcast %8 : vector<1x3072xf32> to vector<24x3072xf32>
    %53 = arith.addf %46, %52 : vector<24x3072xf32>
    %54 = arith.maximumf %51, %53 : vector<24x3072xf32>
    %55 = tpu.concatenate %43, %44, %45, %42, %46, %47, %48, %54 in 0 : vector<24x3072xf32>, vector<24x3072xf32>, vector<24x3072xf32>, vector<24x3072xf32>, vector<24x3072xf32>, vector<24x3072xf32>, vector<24x3072xf32>, vector<24x3072xf32> -> vector<192x3072xf32>
    %c0_15 = arith.constant 0 : index
    %c0_16 = arith.constant 0 : index
    %56 = vector.load %arg5[%c0_15, %c0_16] : memref<24x192xbf16, #tpu.memory_space<vmem>>, vector<24x192xbf16>
    %57 = arith.truncf %55 : vector<192x3072xf32> to vector<192x3072xbf16>
    %cst_17 = arith.constant dense<0.000000e+00> : vector<24x3072xf32>
    %58 = tpu.matmul %56, %57, %cst_17 {dimension_numbers = #tpu.dot_dimension_numbers<[1], [0], [0], [1], [0, 0, 1, 1], [], []>} : vector<24x192xbf16>, vector<192x3072xbf16>, vector<24x3072xf32> -> vector<24x3072xf32>
    %c0_18 = arith.constant 0 : index
    %c0_19 = arith.constant 0 : index
    %59 = vector.load %arg6[%c0_18, %c0_19] : memref<24x1xf32, #tpu.memory_space<vmem>>, vector<24x1xf32>
    %60 = vector.broadcast %59 : vector<24x1xf32> to vector<24x3072xf32>
    %61 = arith.addf %58, %60 : vector<24x3072xf32>
    %cst_20 = arith.constant 0.000000e+00 : f32
    %62 = vector.broadcast %cst_20 : f32 to vector<24x3072xf32>
    %63 = arith.maximumf %61, %62 : vector<24x3072xf32>
    %64 = arith.truncf %63 : vector<24x3072xf32> to vector<24x3072xbf16>
    %c0_21 = arith.constant 0 : index
    %c0_22 = arith.constant 0 : index
    %65 = vector.load %arg9[%c0_21, %c0_22] : memref<3072x512xbf16, #tpu.memory_space<vmem>>, vector<3072x512xbf16>
    %cst_23 = arith.constant dense<0.000000e+00> : vector<24x512xf32>
    %66 = tpu.matmul %64, %65, %cst_23 {dimension_numbers = #tpu.dot_dimension_numbers<[1], [0], [0], [1], [0, 0, 1, 1], [], []>} : vector<24x3072xbf16>, vector<3072x512xbf16>, vector<24x512xf32> -> vector<24x512xf32>
    %67 = arith.truncf %66 : vector<24x512xf32> to vector<24x512xbf16>
    %cst_24 = arith.constant 0.000000e+00 : f32
    %68 = vector.broadcast %cst_24 : f32 to vector<8x128xf32>
    %c0_25 = arith.constant 0 : index
    %c0_26 = arith.constant 0 : index
    %c0_27 = arith.constant 0 : index
    %69 = vector.load %arg7[%c0_25, %c0_26, %c0_27] : memref<4x8x24xbf16, #tpu.memory_space<vmem>>, vector<1x8x24xbf16>
    %70 = vector.shape_cast %69 : vector<1x8x24xbf16> to vector<8x24xbf16>
    %71 = vector.extract_strided_slice %67 {offsets = [0, 0], sizes = [24, 128], strides = [1, 1]} : vector<24x512xbf16> to vector<24x128xbf16>
    %cst_28 = arith.constant dense<0.000000e+00> : vector<8x128xf32>
    %72 = tpu.matmul %70, %71, %cst_28 {dimension_numbers = #tpu.dot_dimension_numbers<[1], [0], [0], [1], [0, 0, 1, 1], [], []>} : vector<8x24xbf16>, vector<24x128xbf16>, vector<8x128xf32> -> vector<8x128xf32>
    %73 = arith.addf %68, %72 : vector<8x128xf32>
    %c1 = arith.constant 1 : index
    %c0_29 = arith.constant 0 : index
    %c0_30 = arith.constant 0 : index
    %74 = vector.load %arg7[%c1, %c0_29, %c0_30] : memref<4x8x24xbf16, #tpu.memory_space<vmem>>, vector<1x8x24xbf16>
    %75 = vector.shape_cast %74 : vector<1x8x24xbf16> to vector<8x24xbf16>
    %76 = vector.extract_strided_slice %67 {offsets = [0, 128], sizes = [24, 128], strides = [1, 1]} : vector<24x512xbf16> to vector<24x128xbf16>
    %cst_31 = arith.constant dense<0.000000e+00> : vector<8x128xf32>
    %77 = tpu.matmul %75, %76, %cst_31 {dimension_numbers = #tpu.dot_dimension_numbers<[1], [0], [0], [1], [0, 0, 1, 1], [], []>} : vector<8x24xbf16>, vector<24x128xbf16>, vector<8x128xf32> -> vector<8x128xf32>
    %78 = arith.addf %73, %77 : vector<8x128xf32>
    %c2 = arith.constant 2 : index
    %c0_32 = arith.constant 0 : index
    %c0_33 = arith.constant 0 : index
    %79 = vector.load %arg7[%c2, %c0_32, %c0_33] : memref<4x8x24xbf16, #tpu.memory_space<vmem>>, vector<1x8x24xbf16>
    %80 = vector.shape_cast %79 : vector<1x8x24xbf16> to vector<8x24xbf16>
    %81 = vector.extract_strided_slice %67 {offsets = [0, 256], sizes = [24, 128], strides = [1, 1]} : vector<24x512xbf16> to vector<24x128xbf16>
    %cst_34 = arith.constant dense<0.000000e+00> : vector<8x128xf32>
    %82 = tpu.matmul %80, %81, %cst_34 {dimension_numbers = #tpu.dot_dimension_numbers<[1], [0], [0], [1], [0, 0, 1, 1], [], []>} : vector<8x24xbf16>, vector<24x128xbf16>, vector<8x128xf32> -> vector<8x128xf32>
    %83 = arith.addf %78, %82 : vector<8x128xf32>
    %c3 = arith.constant 3 : index
    %c0_35 = arith.constant 0 : index
    %c0_36 = arith.constant 0 : index
    %84 = vector.load %arg7[%c3, %c0_35, %c0_36] : memref<4x8x24xbf16, #tpu.memory_space<vmem>>, vector<1x8x24xbf16>
    %85 = vector.shape_cast %84 : vector<1x8x24xbf16> to vector<8x24xbf16>
    %86 = vector.extract_strided_slice %67 {offsets = [0, 384], sizes = [24, 128], strides = [1, 1]} : vector<24x512xbf16> to vector<24x128xbf16>
    %cst_37 = arith.constant dense<0.000000e+00> : vector<8x128xf32>
    %87 = tpu.matmul %85, %86, %cst_37 {dimension_numbers = #tpu.dot_dimension_numbers<[1], [0], [0], [1], [0, 0, 1, 1], [], []>} : vector<8x24xbf16>, vector<24x128xbf16>, vector<8x128xf32> -> vector<8x128xf32>
    %88 = arith.addf %83, %87 : vector<8x128xf32>
    %c0_38 = arith.constant 0 : index
    %c0_39 = arith.constant 0 : index
    %89 = vector.load %arg8[%c0_38, %c0_39] : memref<8x1xf32, #tpu.memory_space<vmem>>, vector<8x1xf32>
    %90 = vector.broadcast %89 : vector<8x1xf32> to vector<8x128xf32>
    %91 = arith.addf %88, %90 : vector<8x128xf32>
    %c0_40 = arith.constant 0 : index
    %c0_41 = arith.constant 0 : index
    %c0_42 = arith.constant 0 : index
    %92 = vector.load %arg10[%c0_40, %c0_41, %c0_42] : memref<1x8x128xf32, #tpu.memory_space<vmem>>, vector<1x8x128xf32>
    %93 = vector.shape_cast %92 : vector<1x8x128xf32> to vector<8x128xf32>
    %94 = vector.shape_cast %91 : vector<8x128xf32> to vector<1x8x128xf32>
    tpu.vector_store %arg10[%c0_40, %c0_41, %c0_42], %94 {strides = array<i32>} : memref<1x8x128xf32, #tpu.memory_space<vmem>>, vector<1x8x128xf32>,
    return
  }
  func.func @transform_0(%arg0: i32) -> (i32, i32, i32) {
    %c0_i32 = arith.constant 0 : i32
    %c0_i32_0 = arith.constant 0 : i32
    %c0_i32_1 = arith.constant 0 : i32
    return %arg0, %c0_i32, %c0_i32_0 : i32, i32, i32
  }
  func.func @transform_1(%arg0: i32) -> (i32, i32) {
    %c0_i32 = arith.constant 0 : i32
    %c0_i32_0 = arith.constant 0 : i32
    %c0_i32_1 = arith.constant 0 : i32
    return %c0_i32, %c0_i32_0 : i32, i32
  }
  func.func @transform_2(%arg0: i32) -> (i32, i32) {
    %c0_i32 = arith.constant 0 : i32
    %c0_i32_0 = arith.constant 0 : i32
    %c0_i32_1 = arith.constant 0 : i32
    return %c0_i32, %c0_i32_0 : i32, i32
  }
  func.func @transform_3(%arg0: i32) -> (i32, i32) {
    %c0_i32 = arith.constant 0 : i32
    %c0_i32_0 = arith.constant 0 : i32
    %c0_i32_1 = arith.constant 0 : i32
    return %c0_i32, %c0_i32_0 : i32, i32
  }
  func.func @transform_4(%arg0: i32) -> (i32, i32) {
    %c0_i32 = arith.constant 0 : i32
    %c0_i32_0 = arith.constant 0 : i32
    %c0_i32_1 = arith.constant 0 : i32
    return %c0_i32, %c0_i32_0 : i32, i32
  }
  func.func @transform_5(%arg0: i32) -> (i32, i32) {
    %c0_i32 = arith.constant 0 : i32
    %c0_i32_0 = arith.constant 0 : i32
    %c0_i32_1 = arith.constant 0 : i32
    return %c0_i32, %c0_i32_0 : i32, i32
  }
  func.func @transform_6(%arg0: i32) -> (i32, i32, i32) {
    %c0_i32 = arith.constant 0 : i32
    %c0_i32_0 = arith.constant 0 : i32
    %c0_i32_1 = arith.constant 0 : i32
    %c0_i32_2 = arith.constant 0 : i32
    return %c0_i32, %c0_i32_0, %c0_i32_1 : i32, i32, i32
  }
  func.func @transform_7(%arg0: i32) -> (i32, i32) {
    %c0_i32 = arith.constant 0 : i32
    %c0_i32_0 = arith.constant 0 : i32
    %c0_i32_1 = arith.constant 0 : i32
    return %c0_i32, %c0_i32_0 : i32, i32
  }
  func.func @transform_8(%arg0: i32) -> (i32, i32) {
    %c0_i32 = arith.constant 0 : i32
    %c0_i32_0 = arith.constant 0 : i32
    %c0_i32_1 = arith.constant 0 : i32
    return %c0_i32, %c0_i32_0 : i32, i32
  }
  func.func @transform_9(%arg0: i32) -> (i32, i32, i32) {
    %c0_i32 = arith.constant 0 : i32
    %c0_i32_0 = arith.constant 0 : i32
    %c0_i32_1 = arith.constant 0 : i32
    return %arg0, %c0_i32, %c0_i32_0 : i32, i32, i32
  }
}

</mosaic_0001>

<llo_original>
// kernel: tpu_custom_call.1
$region0: #{tpu_custom_call.1}
  #allocation0 [shape = 'u32[]', space=smem, size = 0x4, offset = 0x4, fixed_abs, tag = 'smem constant byte address 0x4 - core index']
  #allocation1 [shape = 'u32[72,128]{1,0:T(1,128)}', space=vmem, size = 0x9000, scoped, tag = 'internal scratch']
  %s0 = inlined_call_operand.hbm [shape: f32[2,8,3072], index: 0, kind: input, shape index: {}]
  %s1 = inlined_call_operand.hbm [shape: f32[8,3072], index: 1, kind: input, shape index: {}]
  %s2 = inlined_call_operand.hbm [shape: bf16[16,56], index: 2, kind: input, shape index: {}]
  %s3 = inlined_call_operand.vmem [shape: f32[16,1], index: 3, kind: input, shape index: {}]
  %s4 = inlined_call_operand.hbm [shape: bf16[24,192], index: 4, kind: input, shape index: {}]
  %s5 = inlined_call_operand.vmem [shape: f32[24,1], index: 5, kind: input, shape index: {}]
  %s6 = inlined_call_operand.hbm [shape: bf16[4,8,24], index: 6, kind: input, shape index: {}]
  %s7 = inlined_call_operand.vmem [shape: f32[8,1], index: 7, kind: input, shape index: {}]
  %s8 = inlined_call_operand.hbm [shape: bf16[3072,512], index: 8, kind: input, shape index: {}]
  %s9 = inlined_call_operand.hbm [shape: f32[2,8,128], index: 9, kind: output, shape index: {}]
  %s10 = sld [smem:[#allocation0]]
  $region93: #{tpu_custom_call.1} parent=0
    _
  %s12 = ssub.s32 1, %s10
  %s13 = scalar_select 0, %s12, %s10
  $region1: #{tpu_custom_call.1} parent=0
    #allocation2 [shape = 'u8[196608]{0}', space=vmem, size = 0x30000, scoped, tag = 'input window, operand 0']
    #allocation3 [shape = 's32[2]{0}', space=sflag, size = 0x8, scoped, tag = 'scoped memory for tpu_custom_call.1']
    #allocation4 [shape = 's32[2]{0}', space=sflag, size = 0x8, scoped, tag = 'scoped memory for tpu_custom_call.1']
    #allocation5 [shape = 'u8[98304]{0}', space=vmem, size = 0x18000, scoped, tag = 'input window, operand 1, single buffered']
    #allocation6 [shape = 's32[1]{0}', space=sflag, size = 0x4, scoped, tag = 'scoped memory for tpu_custom_call.1']
    #allocation7 [shape = 'u8[4096]{0}', space=vmem, size = 0x1000, scoped, tag = 'input window, operand 2, single buffered']
    #allocation8 [shape = 'u8[12288]{0}', space=vmem, size = 0x3000, scoped, tag = 'input window, operand 4, single buffered']
    #allocation9 [shape = 's32[1]{0}', space=sflag, size = 0x4, scoped, tag = 'scoped memory for tpu_custom_call.1']
    #allocation10 [shape = 'u8[8192]{0}', space=vmem, size = 0x2000, scoped, tag = 'input window, operand 6, single buffered']
    #allocation11 [shape = 'u8[3145728]{0}', space=vmem, size = 0x300000, scoped, tag = 'input window, operand 8, single buffered']
    #allocation12 [shape = 's32[1]{0}', space=sflag, size = 0x4, scoped, tag = 'scoped memory for tpu_custom_call.1']
    #allocation13 [shape = 'u8[8192]{0}', space=vmem, size = 0x2000, scoped, tag = 'output window, operand 0']
    %14 = vsyncpa [#allocation3], 0
    %s15 = scalar_lea.sflag [#allocation3], 1
    %16 = vsyncpa %s15, 0
    %17 = vsyncpa [#allocation6], 0
    %18 = vsyncpa [#allocation9], 0
    %19 = vsyncpa [#allocation12], 0
    %20 = vsyncpa [#allocation4], 0
    %s21 = scalar_lea.sflag [#allocation4], 1
    %22 = vsyncpa %s21, 0
    loop: start=0, step=1, limit=4
    $region2: #{tpu_custom_call.1} parent=1 // loop_pre_header
      _
    $region3: #{tpu_custom_call.1} parent=1 // loop_header
      %s24 = sphi 0, %s28
      %p25 = scmp.ge.s32.totalorder %s24, 4
      %s34 = sphi 0, %s36
      %s37 = sphi 0, %s34
      %s38 = sphi 0, %s37
      %s54 = sphi 0, %s38
      %s58 = sphi 0, %s58
      %s60 = sphi 0, %s58
      %s61 = sphi 0, %s60
      %s75 = sphi 0, %s61
      %s79 = sphi 0, %s79
      %s81 = sphi 0, %s79
      %s82 = sphi 0, %s81
      %s96 = sphi 0, %s82
      %s100 = sphi 0, %s100
      %s102 = sphi 0, %s100
      %s103 = sphi 0, %s102
      %s117 = sphi 0, %s103
      %s121 = sphi 0, %s121
      %s123 = sphi 0, %s121
      %s124 = sphi 0, %s123
      %s138 = sphi 0, %s124
      %s142 = sphi 0, %s142
      %s144 = sphi 0, %s142
      %s145 = sphi 0, %s144
      %s159 = sphi 0, %s145
      %s163 = sphi 0, %s163
      %s165 = sphi 0, %s163
      %s166 = sphi 0, %s165
      %s180 = sphi 0, %s166
      %s184 = sphi 0, %s184
      %s186 = sphi 0, %s184
      %s187 = sphi 0, %s186
      %s201 = sphi 0, %s187
      %s205 = sphi 0, %s205
      %s207 = sphi 0, %s205
      %s208 = sphi 0, %s207
      %s222 = sphi 0, %s208
      %s228 = sphi 0, %s230
      %s231 = sphi 0, %s228
      %s232 = sphi 0, %s231
      %s248 = sphi 0, %s232
    $region4: #{tpu_custom_call.1} parent=1 // loop_header_branch
      %27 = sbr.rel (%p25) target = $region8
    $region5: #{tpu_custom_call.1} parent=1 // loop_body
      %s29 = ssub.s32 %s24, 1
      %s30 = ssub.s32 %s24, 2
      %s31 = sadd.s32 %s24, 1
      %s32 = ssub.s32 %s24, %s31
      %p33 = scmp.eq.s32.totalorder %s32, 0
      %s35 = sadd.s32 %s34, 1
      %s36 = scalar_select %p33, %s34, %s35
      %p39 = pneg %p33
      %p40 = scmp.eq.s32.totalorder %s24, 1
      %p41 = por %p39, %p40
      %p42 = scmp.ne.s32.totalorder %s34, %s37
      %p43 = scmp.eq.s32.totalorder %s24, 0
      %p44 = por %p42, %p43
      %p45 = scmp.ne.s32.totalorder %s34, %s37
      %p46 = scmp.eq.s32.totalorder %s29, 1
      %p47 = por %p45, %p46
      %p48 = scmp.ne.s32.totalorder %s37, %s38
      %p49 = scmp.eq.s32.totalorder %s29, 0
      %p50 = por %p48, %p49
      %p51 = scmp.ne.s32.totalorder %s37, %s38
      %p52 = scmp.eq.s32.totalorder %s30, 1
      %p53 = por %p51, %p52
      %p55 = scmp.ne.s32.totalorder %s38, %s54
      %p56 = scmp.eq.s32.totalorder %s30, 0
      %p57 = por %p55, %p56
      %s59 = sadd.s32 %s58, 1
      %p62 = scmp.eq.s32.totalorder %s24, 1
      %p63 = scmp.ne.s32.totalorder %s58, %s60
      %p64 = scmp.eq.s32.totalorder %s24, 0
      %p65 = por %p63, %p64
      %p66 = scmp.ne.s32.totalorder %s58, %s60
      %p67 = scmp.eq.s32.totalorder %s29, 1
      %p68 = por %p66, %p67
      %p69 = scmp.ne.s32.totalorder %s60, %s61
      %p70 = scmp.eq.s32.totalorder %s29, 0
      %p71 = por %p69, %p70
      %p72 = scmp.ne.s32.totalorder %s60, %s61
      %p73 = scmp.eq.s32.totalorder %s30, 1
      %p74 = por %p72, %p73
      %p76 = scmp.ne.s32.totalorder %s61, %s75
      %p77 = scmp.eq.s32.totalorder %s30, 0
      %p78 = por %p76, %p77
      %s80 = sadd.s32 %s79, 1
      %p83 = scmp.eq.s32.totalorder %s24, 1
      %p84 = scmp.ne.s32.totalorder %s79, %s81
      %p85 = scmp.eq.s32.totalorder %s24, 0
      %p86 = por %p84, %p85
      %p87 = scmp.ne.s32.totalorder %s79, %s81
      %p88 = scmp.eq.s32.totalorder %s29, 1
      %p89 = por %p87, %p88
      %p90 = scmp.ne.s32.totalorder %s81, %s82
      %p91 = scmp.eq.s32.totalorder %s29, 0
      %p92 = por %p90, %p91
      %p93 = scmp.ne.s32.totalorder %s81, %s82
      %p94 = scmp.eq.s32.totalorder %s30, 1
      %p95 = por %p93, %p94
      %p97 = scmp.ne.s32.totalorder %s82, %s96
      %p98 = scmp.eq.s32.totalorder %s30, 0
      %p99 = por %p97, %p98
      %s101 = sadd.s32 %s100, 1
      %p104 = scmp.eq.s32.totalorder %s24, 1
      %p105 = scmp.ne.s32.totalorder %s100, %s102
      %p106 = scmp.eq.s32.totalorder %s24, 0
      %p107 = por %p105, %p106
      %p108 = scmp.ne.s32.totalorder %s100, %s102
      %p109 = scmp.eq.s32.totalorder %s29, 1
      %p110 = por %p108, %p109
      %p111 = scmp.ne.s32.totalorder %s102, %s103
      %p112 = scmp.eq.s32.totalorder %s29, 0
      %p113 = por %p111, %p112
      %p114 = scmp.ne.s32.totalorder %s102, %s103
      %p115 = scmp.eq.s32.totalorder %s30, 1
      %p116 = por %p114, %p115
      %p118 = scmp.ne.s32.totalorder %s103, %s117
      %p119 = scmp.eq.s32.totalorder %s30, 0
      %p120 = por %p118, %p119
      %s122 = sadd.s32 %s121, 1
      %p125 = scmp.eq.s32.totalorder %s24, 1
      %p126 = scmp.ne.s32.totalorder %s121, %s123
      %p127 = scmp.eq.s32.totalorder %s24, 0
      %p128 = por %p126, %p127
      %p129 = scmp.ne.s32.totalorder %s121, %s123
      %p130 = scmp.eq.s32.totalorder %s29, 1
      %p131 = por %p129, %p130
      %p132 = scmp.ne.s32.totalorder %s123, %s124
      %p133 = scmp.eq.s32.totalorder %s29, 0
      %p134 = por %p132, %p133
      %p135 = scmp.ne.s32.totalorder %s123, %s124
      %p136 = scmp.eq.s32.totalorder %s30, 1
      %p137 = por %p135, %p136
      %p139 = scmp.ne.s32.totalorder %s124, %s138
      %p140 = scmp.eq.s32.totalorder %s30, 0
      %p141 = por %p139, %p140
      %s143 = sadd.s32 %s142, 1
      %p146 = scmp.eq.s32.totalorder %s24, 1
      %p147 = scmp.ne.s32.totalorder %s142, %s144
      %p148 = scmp.eq.s32.totalorder %s24, 0
      %p149 = por %p147, %p148
      %p150 = scmp.ne.s32.totalorder %s142, %s144
      %p151 = scmp.eq.s32.totalorder %s29, 1
      %p152 = por %p150, %p151
      %p153 = scmp.ne.s32.totalorder %s144, %s145
      %p154 = scmp.eq.s32.totalorder %s29, 0
      %p155 = por %p153, %p154
      %p156 = scmp.ne.s32.totalorder %s144, %s145
      %p157 = scmp.eq.s32.totalorder %s30, 1
      %p158 = por %p156, %p157
      %p160 = scmp.ne.s32.totalorder %s145, %s159
      %p161 = scmp.eq.s32.totalorder %s30, 0
      %p162 = por %p160, %p161
      %s164 = sadd.s32 %s163, 1
      %p167 = scmp.eq.s32.totalorder %s24, 1
      %p168 = scmp.ne.s32.totalorder %s163, %s165
      %p169 = scmp.eq.s32.totalorder %s24, 0
      %p170 = por %p168, %p169
      %p171 = scmp.ne.s32.totalorder %s163, %s165
      %p172 = scmp.eq.s32.totalorder %s29, 1
      %p173 = por %p171, %p172
      %p174 = scmp.ne.s32.totalorder %s165, %s166
      %p175 = scmp.eq.s32.totalorder %s29, 0
      %p176 = por %p174, %p175
      %p177 = scmp.ne.s32.totalorder %s165, %s166
      %p178 = scmp.eq.s32.totalorder %s30, 1
      %p179 = por %p177, %p178
      %p181 = scmp.ne.s32.totalorder %s166, %s180
      %p182 = scmp.eq.s32.totalorder %s30, 0
      %p183 = por %p181, %p182
      %s185 = sadd.s32 %s184, 1
      %p188 = scmp.eq.s32.totalorder %s24, 1
      %p189 = scmp.ne.s32.totalorder %s184, %s186
      %p190 = scmp.eq.s32.totalorder %s24, 0
      %p191 = por %p189, %p190
      %p192 = scmp.ne.s32.totalorder %s184, %s186
      %p193 = scmp.eq.s32.totalorder %s29, 1
      %p194 = por %p192, %p193
      %p195 = scmp.ne.s32.totalorder %s186, %s187
      %p196 = scmp.eq.s32.totalorder %s29, 0
      %p197 = por %p195, %p196
      %p198 = scmp.ne.s32.totalorder %s186, %s187
      %p199 = scmp.eq.s32.totalorder %s30, 1
      %p200 = por %p198, %p199
      %p202 = scmp.ne.s32.totalorder %s187, %s201
      %p203 = scmp.eq.s32.totalorder %s30, 0
      %p204 = por %p202, %p203
      %s206 = sadd.s32 %s205, 1
      %p209 = scmp.eq.s32.totalorder %s24, 1
      %p210 = scmp.ne.s32.totalorder %s205, %s207
      %p211 = scmp.eq.s32.totalorder %s24, 0
      %p212 = por %p210, %p211
      %p213 = scmp.ne.s32.totalorder %s205, %s207
      %p214 = scmp.eq.s32.totalorder %s29, 1
      %p215 = por %p213, %p214
      %p216 = scmp.ne.s32.totalorder %s207, %s208
      %p217 = scmp.eq.s32.totalorder %s29, 0
      %p218 = por %p216, %p217
      %p219 = scmp.ne.s32.totalorder %s207, %s208
      %p220 = scmp.eq.s32.totalorder %s30, 1
      %p221 = por %p219, %p220
      %p223 = scmp.ne.s32.totalorder %s208, %s222
      %p224 = scmp.eq.s32.totalorder %s30, 0
      %p225 = por %p223, %p224
      %s226 = ssub.s32 %s24, %s31
      %p227 = scmp.eq.s32.totalorder %s226, 0
      %s229 = sadd.s32 %s228, 1
      %s230 = scalar_select %p227, %s228, %s229
      %p233 = pneg %p227
      %p234 = scmp.eq.s32.totalorder %s24, 1
      %p235 = por %p233, %p234
      %p236 = scmp.ne.s32.totalorder %s228, %s231
      %p237 = scmp.eq.s32.totalorder %s24, 0
      %p238 = por %p236, %p237
      %p239 = scmp.ne.s32.totalorder %s228, %s231
      %p240 = scmp.eq.s32.totalorder %s29, 1
      %p241 = por %p239, %p240
      %p242 = scmp.ne.s32.totalorder %s231, %s232
      %p243 = scmp.eq.s32.totalorder %s29, 0
      %p244 = por %p242, %p243
      %p245 = scmp.ne.s32.totalorder %s231, %s232
      %p246 = scmp.eq.s32.totalorder %s30, 1
      %p247 = por %p245, %p246
      %p249 = scmp.ne.s32.totalorder %s232, %s248
      %p250 = scmp.eq.s32.totalorder %s30, 0
      %p251 = por %p249, %p250
      %p252 = scmp.le.s32.totalorder 1, %s24
      %p253 = scmp.lt.s32.totalorder %s24, 3
      %p254 = pnand %p252, %p253
      %p255 = pneg %p254
      // Predicated region
      $region9: #{tpu_custom_call.1} parent=5 // pred_check
        _
      $region10: #{tpu_custom_call.1} parent=5 // pred_check_branch
        %257 = sbr.rel (%p254) target = $region12
      $region11: #{tpu_custom_call.1} parent=5 // pred_region
        %s258 = ssub.s32 %s24, 1
        // Predicated region
        $region13: #{tpu_custom_call.1} parent=11 // pred_check
          %p259 = pneg %p71
        $region14: #{tpu_custom_call.1} parent=11 // pred_check_branch
          %261 = sbr.rel (%p259) target = $region16
        $region15: #{tpu_custom_call.1} parent=11 // pred_region
          %263 = vsyncadd [#allocation6], 0
          %s265 = sshll.u32 %s1, 4
          %s266 = int_to_ptr.hbm [resolvable:$true] %s265
          %s267 = sshll.u32 [#allocation5], 4
          %s268 = int_to_ptr.vmem [resolvable:$true] %s267
          %270 = dma.hbm_to_vmem [thread:$0]  %s266, 3072, %s268, [#allocation6]
        $region16: #{tpu_custom_call.1} parent=11 // pred_fallthru
          _
        // Predicated region
        $region17: #{tpu_custom_call.1} parent=11 // pred_check
          %p271 = pneg %p92
        $region18: #{tpu_custom_call.1} parent=11 // pred_check_branch
          %273 = sbr.rel (%p271) target = $region20
        $region19: #{tpu_custom_call.1} parent=11 // pred_region
          %275 = vsyncadd [#allocation6], 0
          %s276 = sshll.u32 %s2, 4
          %s277 = int_to_ptr.hbm [resolvable:$true] %s276
          %s278 = sshll.u32 [#allocation7], 4
          %s279 = int_to_ptr.vmem [resolvable:$true] %s278
          %284 = dma.hbm_to_vmem [thread:$0]  %s277, 128, %s279, [#allocation6], 64, 64, 4
        $region20: #{tpu_custom_call.1} parent=11 // pred_fallthru
          _
        // Predicated region
        $region21: #{tpu_custom_call.1} parent=11 // pred_check
          %p285 = pneg %p113
        $region22: #{tpu_custom_call.1} parent=11 // pred_check_branch
          %287 = sbr.rel (%p285) target = $region24
        $region23: #{tpu_custom_call.1} parent=11 // pred_region
          _
        $region24: #{tpu_custom_call.1} parent=11 // pred_fallthru
          _
        // Predicated region
        $region25: #{tpu_custom_call.1} parent=11 // pred_check
          %p288 = pneg %p134
        $region26: #{tpu_custom_call.1} parent=11 // pred_check_branch
          %290 = sbr.rel (%p288) target = $region28
        $region27: #{tpu_custom_call.1} parent=11 // pred_region
          %292 = vsyncadd [#allocation9], 0
          %s293 = sshll.u32 %s4, 4
          %s294 = int_to_ptr.hbm [resolvable:$true] %s293
          %s295 = sshll.u32 [#allocation8], 4
          %s296 = int_to_ptr.vmem [resolvable:$true] %s295
          %301 = dma.hbm_to_vmem [thread:$0]  %s294, 384, %s296, [#allocation9], 128, 128, 8
        $region28: #{tpu_custom_call.1} parent=11 // pred_fallthru
          _
        // Predicated region
        $region29: #{tpu_custom_call.1} parent=11 // pred_check
          %p302 = pneg %p155
        $region30: #{tpu_custom_call.1} parent=11 // pred_check_branch
          %304 = sbr.rel (%p302) target = $region32
        $region31: #{tpu_custom_call.1} parent=11 // pred_region
          _
        $region32: #{tpu_custom_call.1} parent=11 // pred_fallthru
          _
        // Predicated region
        $region33: #{tpu_custom_call.1} parent=11 // pred_check
          %p305 = pneg %p176
        $region34: #{tpu_custom_call.1} parent=11 // pred_check_branch
          %307 = sbr.rel (%p305) target = $region36
        $region35: #{tpu_custom_call.1} parent=11 // pred_region
          %309 = vsyncadd [#allocation9], 0
          %s310 = sshll.u32 %s6, 4
          %s311 = int_to_ptr.hbm [resolvable:$true] %s310
          %s312 = sshll.u32 [#allocation10], 4
          %s313 = int_to_ptr.vmem [resolvable:$true] %s312
          %318 = dma.hbm_to_vmem [thread:$0]  %s311, 256, %s313, [#allocation9], 64, 64, 4
        $region36: #{tpu_custom_call.1} parent=11 // pred_fallthru
          _
        // Predicated region
        $region37: #{tpu_custom_call.1} parent=11 // pred_check
          %p319 = pneg %p197
        $region38: #{tpu_custom_call.1} parent=11 // pred_check_branch
          %321 = sbr.rel (%p319) target = $region40
        $region39: #{tpu_custom_call.1} parent=11 // pred_region
          _
        $region40: #{tpu_custom_call.1} parent=11 // pred_fallthru
          _
        // Predicated region
        $region41: #{tpu_custom_call.1} parent=11 // pred_check
          %p322 = pneg %p218
        $region42: #{tpu_custom_call.1} parent=11 // pred_check_branch
          %324 = sbr.rel (%p322) target = $region44
        $region43: #{tpu_custom_call.1} parent=11 // pred_region
          %326 = vsyncadd [#allocation12], 0
          %s327 = sshll.u32 %s8, 4
          %s328 = int_to_ptr.hbm [resolvable:$true] %s327
          %s329 = sshll.u32 [#allocation11], 4
          %s330 = int_to_ptr.vmem [resolvable:$true] %s329
          %335 = dma.hbm_to_vmem [thread:$0]  %s328, 98304, %s330, [#allocation12], 256, 256, 16
        $region44: #{tpu_custom_call.1} parent=11 // pred_fallthru
          _
      $region12: #{tpu_custom_call.1} parent=5 // pred_fallthru
        _
      %p336 = scmp.lt.s32.totalorder %s24, 2
      // Predicated region
      $region45: #{tpu_custom_call.1} parent=5 // pred_check
        %p337 = pneg %p336
      $region46: #{tpu_custom_call.1} parent=5 // pred_check_branch
        %339 = sbr.rel (%p337) target = $region48
      $region47: #{tpu_custom_call.1} parent=5 // pred_region
        // Predicated region
        $region49: #{tpu_custom_call.1} parent=47 // pred_check
          %p340 = pneg %p44
        $region50: #{tpu_custom_call.1} parent=47 // pred_check_branch
          %342 = sbr.rel (%p340) target = $region52
        $region51: #{tpu_custom_call.1} parent=47 // pred_region
          %s343 = sand.u32 %s34, 1
          %s344 = scalar_lea.sflag [#allocation3], %s343
          %s345 = sand.u32 %s34, 1
          %s346 = smul.addr %s345, 192
          %s347 = scalar_lea.vmem [#allocation2], %s346
          %349 = vsyncadd %s344, 0
          %s350 = smul.addr %s24, 24
          %s351 = smul.addr %s350, 8
          %s352 = scalar_lea.hbm %s0, %s351
          %s354 = sshll.u32 %s352, 4
          %s355 = int_to_ptr.hbm [resolvable:$true] %s354
          %s356 = sshll.u32 %s347, 4
          %s357 = int_to_ptr.vmem [resolvable:$true] %s356
          %359 = dma.hbm_to_vmem [thread:$0]  %s355, 3072, %s357, %s344
        $region52: #{tpu_custom_call.1} parent=47 // pred_fallthru
          _
      $region48: #{tpu_custom_call.1} parent=5 // pred_fallthru
        _
      %p360 = scmp.le.s32.totalorder 1, %s24
      %p361 = scmp.lt.s32.totalorder %s24, 3
      %p362 = pnand %p360, %p361
      %p363 = pneg %p362
      // Predicated region
      $region53: #{tpu_custom_call.1} parent=5 // pred_check
        _
      $region54: #{tpu_custom_call.1} parent=5 // pred_check_branch
        %365 = sbr.rel (%p362) target = $region56
      $region55: #{tpu_custom_call.1} parent=5 // pred_region
        %s366 = ssub.s32 %s24, 1
        %s367 = sand.u32 %s37, 1
        %s368 = scalar_lea.sflag [#allocation3], %s367
        %s369 = sand.u32 %s37, 1
        %s370 = smul.addr %s369, 192
        %s371 = scalar_lea.vmem [#allocation2], %s370
        // Predicated region
        $region57: #{tpu_custom_call.1} parent=55 // pred_check
          %p372 = pneg %p50
        $region58: #{tpu_custom_call.1} parent=55 // pred_check_branch
          %374 = sbr.rel (%p372) target = $region60
        $region59: #{tpu_custom_call.1} parent=55 // pred_region
          %376 = dma.done %s368, 3072
        $region60: #{tpu_custom_call.1} parent=55 // pred_fallthru
          _
        // Predicated region
        $region61: #{tpu_custom_call.1} parent=55 // pred_check
          %p377 = pneg %p71
        $region62: #{tpu_custom_call.1} parent=55 // pred_check_branch
          %379 = sbr.rel (%p377) target = $region64
        $region63: #{tpu_custom_call.1} parent=55 // pred_region
          %381 = dma.done [#allocation6], 3072
        $region64: #{tpu_custom_call.1} parent=55 // pred_fallthru
          _
        // Predicated region
        $region65: #{tpu_custom_call.1} parent=55 // pred_check
          %p382 = pneg %p92
        $region66: #{tpu_custom_call.1} parent=55 // pred_check_branch
          %384 = sbr.rel (%p382) target = $region68
        $region67: #{tpu_custom_call.1} parent=55 // pred_region
          %386 = dma.done [#allocation6], 128
        $region68: #{tpu_custom_call.1} parent=55 // pred_fallthru
          _
        // Predicated region
        $region69: #{tpu_custom_call.1} parent=55 // pred_check
          %p387 = pneg %p134
        $region70: #{tpu_custom_call.1} parent=55 // pred_check_branch
          %389 = sbr.rel (%p387) target = $region72
        $region71: #{tpu_custom_call.1} parent=55 // pred_region
          %391 = dma.done [#allocation9], 384
        $region72: #{tpu_custom_call.1} parent=55 // pred_fallthru
          _
        // Predicated region
        $region73: #{tpu_custom_call.1} parent=55 // pred_check
          %p392 = pneg %p176
        $region74: #{tpu_custom_call.1} parent=55 // pred_check_branch
          %394 = sbr.rel (%p392) target = $region76
        $region75: #{tpu_custom_call.1} parent=55 // pred_region
          %396 = dma.done [#allocation9], 256
        $region76: #{tpu_custom_call.1} parent=55 // pred_fallthru
          _
        // Predicated region
        $region77: #{tpu_custom_call.1} parent=55 // pred_check
          %p397 = pneg %p218
        $region78: #{tpu_custom_call.1} parent=55 // pred_check_branch
          %399 = sbr.rel (%p397) target = $region80
        $region79: #{tpu_custom_call.1} parent=55 // pred_region
          %401 = dma.done [#allocation12], 98304
        $region80: #{tpu_custom_call.1} parent=55 // pred_fallthru
          _
        %s402 = sand.u32 %s37, 1
        %s403 = scalar_lea.sflag [#allocation3], %s402
        %s404 = sand.u32 %s37, 1
        %s405 = smul.addr %s404, 192
        %s406 = scalar_lea.vmem [#allocation2], %s405
        %p407 = pneg %p50
        %p408 = pneg %p47
        %p409 = pneg %p71
        %p410 = pneg %p68
        %p411 = pneg %p92
        %p412 = pneg %p89
        %p413 = pneg %p113
        %p414 = pneg %p110
        %p415 = pneg %p134
        %p416 = pneg %p131
        %p417 = pneg %p155
        %p418 = pneg %p152
        %p419 = pneg %p176
        %p420 = pneg %p173
        %p421 = pneg %p197
        %p422 = pneg %p194
        %p423 = pneg %p218
        %p424 = pneg %p215
        %p425 = pneg %p244
        %p426 = pneg %p241
        %s427 = sand.u32 %s231, 1
        %s428 = scalar_lea.sflag [#allocation4], %s427
        %s429 = sand.u32 %s231, 1
        %s430 = smul.addr %s429, 8
        %s431 = scalar_lea.vmem [#allocation13], %s430
        %v433 = vld [vmem:[%s371] sm:$0xff]
        %v434 = vld [vmem:[%s371 + $0x8] sm:$0xff]
        %v435 = vld [vmem:[%s371 + $0x10] sm:$0xff]
        %v436 = vld [vmem:[%s371 + $0x18] sm:$0xff]
        %v437 = vld [vmem:[%s371 + $0x20] sm:$0xff]
        %v438 = vld [vmem:[%s371 + $0x28] sm:$0xff]
        %v439 = vld [vmem:[%s371 + $0x30] sm:$0xff]
        %v440 = vld [vmem:[%s371 + $0x38] sm:$0xff]
        %v441 = vld [vmem:[%s371 + $0x40] sm:$0xff]
        %v442 = vld [vmem:[%s371 + $0x48] sm:$0xff]
        %v443 = vld [vmem:[%s371 + $0x50] sm:$0xff]
        %v444 = vld [vmem:[%s371 + $0x58] sm:$0xff]
        %v445 = vld [vmem:[%s371 + $0x60] sm:$0xff]
        %v446 = vld [vmem:[%s371 + $0x68] sm:$0xff]
        %v447 = vld [vmem:[%s371 + $0x70] sm:$0xff]
        %v448 = vld [vmem:[%s371 + $0x78] sm:$0xff]
        %v449 = vld [vmem:[%s371 + $0x80] sm:$0xff]
        %v450 = vld [vmem:[%s371 + $0x88] sm:$0xff]
        %v451 = vld [vmem:[%s371 + $0x90] sm:$0xff]
        %v452 = vld [vmem:[%s371 + $0x98] sm:$0xff]
        %v453 = vld [vmem:[%s371 + $0xa0] sm:$0xff]
        %v454 = vld [vmem:[%s371 + $0xa8] sm:$0xff]
        %v455 = vld [vmem:[%s371 + $0xb0] sm:$0xff]
        %v456 = vld [vmem:[%s371 + $0xb8] sm:$0xff]
        %v457 = vld [vmem:[#allocation5] sm:$0xff]
        %v458 = vld [vmem:[#allocation5 + $0x8] sm:$0xff]
        %v459 = vld [vmem:[#allocation5 + $0x10] sm:$0xff]
        %v460 = vld [vmem:[#allocation5 + $0x18] sm:$0xff]
        %v461 = vld [vmem:[#allocation5 + $0x20] sm:$0xff]
        %v462 = vld [vmem:[#allocation5 + $0x28] sm:$0xff]
        %v463 = vld [vmem:[#allocation5 + $0x30] sm:$0xff]
        %v464 = vld [vmem:[#allocation5 + $0x38] sm:$0xff]
        %v465 = vld [vmem:[#allocation5 + $0x40] sm:$0xff]
        %v466 = vld [vmem:[#allocation5 + $0x48] sm:$0xff]
        %v467 = vld [vmem:[#allocation5 + $0x50] sm:$0xff]
        %v468 = vld [vmem:[#allocation5 + $0x58] sm:$0xff]
        %v469 = vld [vmem:[#allocation5 + $0x60] sm:$0xff]
        %v470 = vld [vmem:[#allocation5 + $0x68] sm:$0xff]
        %v471 = vld [vmem:[#allocation5 + $0x70] sm:$0xff]
        %v472 = vld [vmem:[#allocation5 + $0x78] sm:$0xff]
        %v473 = vld [vmem:[#allocation5 + $0x80] sm:$0xff]
        %v474 = vld [vmem:[#allocation5 + $0x88] sm:$0xff]
        %v475 = vld [vmem:[#allocation5 + $0x90] sm:$0xff]
        %v476 = vld [vmem:[#allocation5 + $0x98] sm:$0xff]
        %v477 = vld [vmem:[#allocation5 + $0xa0] sm:$0xff]
        %v478 = vld [vmem:[#allocation5 + $0xa8] sm:$0xff]
        %v479 = vld [vmem:[#allocation5 + $0xb0] sm:$0xff]
        %v480 = vld [vmem:[#allocation5 + $0xb8] sm:$0xff]
        %481 = vrot.lane.b32.xlu0 %v433, 3
        %v482 = vpop.permute.xlu0 %481
        %483 = vrot.lane.b32.xlu0 %v434, 3
        %v484 = vpop.permute.xlu0 %483
        %485 = vrot.lane.b32.xlu0 %v435, 3
        %v486 = vpop.permute.xlu0 %485
        %487 = vrot.lane.b32.xlu0 %v436, 3
        %v488 = vpop.permute.xlu0 %487
        %489 = vrot.lane.b32.xlu0 %v437, 3
        %v490 = vpop.permute.xlu0 %489
        %491 = vrot.lane.b32.xlu0 %v438, 3
        %v492 = vpop.permute.xlu0 %491
        %493 = vrot.lane.b32.xlu0 %v439, 3
        %v494 = vpop.permute.xlu0 %493
        %495 = vrot.lane.b32.xlu0 %v440, 3
        %v496 = vpop.permute.xlu0 %495
        %497 = vrot.lane.b32.xlu0 %v441, 3
        %v498 = vpop.permute.xlu0 %497
        %499 = vrot.lane.b32.xlu0 %v442, 3
        %v500 = vpop.permute.xlu0 %499
        %501 = vrot.lane.b32.xlu0 %v443, 3
        %v502 = vpop.permute.xlu0 %501
        %503 = vrot.lane.b32.xlu0 %v444, 3
        %v504 = vpop.permute.xlu0 %503
        %505 = vrot.lane.b32.xlu0 %v445, 3
        %v506 = vpop.permute.xlu0 %505
        %507 = vrot.lane.b32.xlu0 %v446, 3
        %v508 = vpop.permute.xlu0 %507
        %509 = vrot.lane.b32.xlu0 %v447, 3
        %v510 = vpop.permute.xlu0 %509
        %511 = vrot.lane.b32.xlu0 %v448, 3
        %v512 = vpop.permute.xlu0 %511
        %513 = vrot.lane.b32.xlu0 %v449, 3
        %v514 = vpop.permute.xlu0 %513
        %515 = vrot.lane.b32.xlu0 %v450, 3
        %v516 = vpop.permute.xlu0 %515
        %517 = vrot.lane.b32.xlu0 %v451, 3
        %v518 = vpop.permute.xlu0 %517
        %519 = vrot.lane.b32.xlu0 %v452, 3
        %v520 = vpop.permute.xlu0 %519
        %521 = vrot.lane.b32.xlu0 %v453, 3
        %v522 = vpop.permute.xlu0 %521
        %523 = vrot.lane.b32.xlu0 %v454, 3
        %v524 = vpop.permute.xlu0 %523
        %525 = vrot.lane.b32.xlu0 %v455, 3
        %v526 = vpop.permute.xlu0 %525
        %527 = vrot.lane.b32.xlu0 %v456, 3
        %v528 = vpop.permute.xlu0 %527
        %v529 = vlaneseq
        %v530 = vand.u32 %v529, 127
        %vm531 = vcmp.lt.s32.totalorder %v530, 3
        %v532 = vsel %vm531, %v526, %v528
        %v533 = vsel %vm531, %v524, %v526
        %v534 = vsel %vm531, %v522, %v524
        %v535 = vsel %vm531, %v520, %v522
        %v536 = vsel %vm531, %v518, %v520
        %v537 = vsel %vm531, %v516, %v518
        %v538 = vsel %vm531, %v514, %v516
        %v539 = vsel %vm531, %v512, %v514
        %v540 = vsel %vm531, %v510, %v512
        %v541 = vsel %vm531, %v508, %v510
        %v542 = vsel %vm531, %v506, %v508
        %v543 = vsel %vm531, %v504, %v506
        %v544 = vsel %vm531, %v502, %v504
        %v545 = vsel %vm531, %v500, %v502
        %v546 = vsel %vm531, %v498, %v500
        %v547 = vsel %vm531, %v496, %v498
        %v548 = vsel %vm531, %v494, %v496
        %v549 = vsel %vm531, %v492, %v494
        %v550 = vsel %vm531, %v490, %v492
        %v551 = vsel %vm531, %v488, %v490
        %v552 = vsel %vm531, %v486, %v488
        %v553 = vsel %vm531, %v484, %v486
        %v554 = vsel %vm531, %v482, %v484
        %v555 = vsel %vm531, %v528, %v482
        %556 = vrot.lane.b32.xlu0 %v433, 2
        %v557 = vpop.permute.xlu0 %556
        %558 = vrot.lane.b32.xlu0 %v434, 2
        %v559 = vpop.permute.xlu0 %558
        %560 = vrot.lane.b32.xlu0 %v435, 2
        %v561 = vpop.permute.xlu0 %560
        %562 = vrot.lane.b32.xlu0 %v436, 2
        %v563 = vpop.permute.xlu0 %562
        %564 = vrot.lane.b32.xlu0 %v437, 2
        %v565 = vpop.permute.xlu0 %564
        %566 = vrot.lane.b32.xlu0 %v438, 2
        %v567 = vpop.permute.xlu0 %566
        %568 = vrot.lane.b32.xlu0 %v439, 2
        %v569 = vpop.permute.xlu0 %568
        %570 = vrot.lane.b32.xlu0 %v440, 2
        %v571 = vpop.permute.xlu0 %570
        %572 = vrot.lane.b32.xlu0 %v441, 2
        %v573 = vpop.permute.xlu0 %572
        %574 = vrot.lane.b32.xlu0 %v442, 2
        %v575 = vpop.permute.xlu0 %574
        %576 = vrot.lane.b32.xlu0 %v443, 2
        %v577 = vpop.permute.xlu0 %576
        %578 = vrot.lane.b32.xlu0 %v444, 2
        %v579 = vpop.permute.xlu0 %578
        %580 = vrot.lane.b32.xlu0 %v445, 2
        %v581 = vpop.permute.xlu0 %580
        %582 = vrot.lane.b32.xlu0 %v446, 2
        %v583 = vpop.permute.xlu0 %582
        %584 = vrot.lane.b32.xlu0 %v447, 2
        %v585 = vpop.permute.xlu0 %584
        %586 = vrot.lane.b32.xlu0 %v448, 2
        %v587 = vpop.permute.xlu0 %586
        %588 = vrot.lane.b32.xlu0 %v449, 2
        %v589 = vpop.permute.xlu0 %588
        %590 = vrot.lane.b32.xlu0 %v450, 2
        %v591 = vpop.permute.xlu0 %590
        %592 = vrot.lane.b32.xlu0 %v451, 2
        %v593 = vpop.permute.xlu0 %592
        %594 = vrot.lane.b32.xlu0 %v452, 2
        %v595 = vpop.permute.xlu0 %594
        %596 = vrot.lane.b32.xlu0 %v453, 2
        %v597 = vpop.permute.xlu0 %596
        %598 = vrot.lane.b32.xlu0 %v454, 2
        %v599 = vpop.permute.xlu0 %598
        %600 = vrot.lane.b32.xlu0 %v455, 2
        %v601 = vpop.permute.xlu0 %600
        %602 = vrot.lane.b32.xlu0 %v456, 2
        %v603 = vpop.permute.xlu0 %602
        %vm604 = vcmp.lt.s32.totalorder %v530, 2
        %v605 = vsel %vm604, %v601, %v603
        %v606 = vsel %vm604, %v599, %v601
        %v607 = vsel %vm604, %v597, %v599
        %v608 = vsel %vm604, %v595, %v597
        %v609 = vsel %vm604, %v593, %v595
        %v610 = vsel %vm604, %v591, %v593
        %v611 = vsel %vm604, %v589, %v591
        %v612 = vsel %vm604, %v587, %v589
        %v613 = vsel %vm604, %v585, %v587
        %v614 = vsel %vm604, %v583, %v585
        %v615 = vsel %vm604, %v581, %v583
        %v616 = vsel %vm604, %v579, %v581
        %v617 = vsel %vm604, %v577, %v579
        %v618 = vsel %vm604, %v575, %v577
        %v619 = vsel %vm604, %v573, %v575
        %v620 = vsel %vm604, %v571, %v573
        %v621 = vsel %vm604, %v569, %v571
        %v622 = vsel %vm604, %v567, %v569
        %v623 = vsel %vm604, %v565, %v567
        %v624 = vsel %vm604, %v563, %v565
        %v625 = vsel %vm604, %v561, %v563
        %v626 = vsel %vm604, %v559, %v561
        %v627 = vsel %vm604, %v557, %v559
        %v628 = vsel %vm604, %v603, %v557
        %629 = vrot.lane.b32.xlu0 %v433, 1
        %v630 = vpop.permute.xlu0 %629
        %631 = vrot.lane.b32.xlu0 %v434, 1
        %v632 = vpop.permute.xlu0 %631
        %633 = vrot.lane.b32.xlu0 %v435, 1
        %v634 = vpop.permute.xlu0 %633
        %635 = vrot.lane.b32.xlu0 %v436, 1
        %v636 = vpop.permute.xlu0 %635
        %637 = vrot.lane.b32.xlu0 %v437, 1
        %v638 = vpop.permute.xlu0 %637
        %639 = vrot.lane.b32.xlu0 %v438, 1
        %v640 = vpop.permute.xlu0 %639
        %641 = vrot.lane.b32.xlu0 %v439, 1
        %v642 = vpop.permute.xlu0 %641
        %643 = vrot.lane.b32.xlu0 %v440, 1
        %v644 = vpop.permute.xlu0 %643
        %645 = vrot.lane.b32.xlu0 %v441, 1
        %v646 = vpop.permute.xlu0 %645
        %647 = vrot.lane.b32.xlu0 %v442, 1
        %v648 = vpop.permute.xlu0 %647
        %649 = vrot.lane.b32.xlu0 %v443, 1
        %v650 = vpop.permute.xlu0 %649
        %651 = vrot.lane.b32.xlu0 %v444, 1
        %v652 = vpop.permute.xlu0 %651
        %653 = vrot.lane.b32.xlu0 %v445, 1
        %v654 = vpop.permute.xlu0 %653
        %655 = vrot.lane.b32.xlu0 %v446, 1
        %v656 = vpop.permute.xlu0 %655
        %657 = vrot.lane.b32.xlu0 %v447, 1
        %v658 = vpop.permute.xlu0 %657
        %659 = vrot.lane.b32.xlu0 %v448, 1
        %v660 = vpop.permute.xlu0 %659
        %661 = vrot.lane.b32.xlu0 %v449, 1
        %v662 = vpop.permute.xlu0 %661
        %663 = vrot.lane.b32.xlu0 %v450, 1
        %v664 = vpop.permute.xlu0 %663
        %665 = vrot.lane.b32.xlu0 %v451, 1
        %v666 = vpop.permute.xlu0 %665
        %667 = vrot.lane.b32.xlu0 %v452, 1
        %v668 = vpop.permute.xlu0 %667
        %669 = vrot.lane.b32.xlu0 %v453, 1
        %v670 = vpop.permute.xlu0 %669
        %671 = vrot.lane.b32.xlu0 %v454, 1
        %v672 = vpop.permute.xlu0 %671
        %673 = vrot.lane.b32.xlu0 %v455, 1
        %v674 = vpop.permute.xlu0 %673
        %675 = vrot.lane.b32.xlu0 %v456, 1
        %v676 = vpop.permute.xlu0 %675
        %vm677 = vcmp.lt.s32.totalorder %v530, 1
        %v678 = vsel %vm677, %v674, %v676
        %v679 = vsel %vm677, %v672, %v674
        %v680 = vsel %vm677, %v670, %v672
        %v681 = vsel %vm677, %v668, %v670
        %v682 = vsel %vm677, %v666, %v668
        %v683 = vsel %vm677, %v664, %v666
        %v684 = vsel %vm677, %v662, %v664
        %v685 = vsel %vm677, %v660, %v662
        %v686 = vsel %vm677, %v658, %v660
        %v687 = vsel %vm677, %v656, %v658
        %v688 = vsel %vm677, %v654, %v656
        %v689 = vsel %vm677, %v652, %v654
        %v690 = vsel %vm677, %v650, %v652
        %v691 = vsel %vm677, %v648, %v650
        %v692 = vsel %vm677, %v646, %v648
        %v693 = vsel %vm677, %v644, %v646
        %v694 = vsel %vm677, %v642, %v644
        %v695 = vsel %vm677, %v640, %v642
        %v696 = vsel %vm677, %v638, %v640
        %v697 = vsel %vm677, %v636, %v638
        %v698 = vsel %vm677, %v634, %v636
        %v699 = vsel %vm677, %v632, %v634
        %v700 = vsel %vm677, %v630, %v632
        %v701 = vsel %vm677, %v676, %v630
        %702 = vrot.lane.b32.xlu0 %v433, 127
        %v703 = vpop.permute.xlu0 %702
        %704 = vrot.lane.b32.xlu0 %v434, 127
        %v705 = vpop.permute.xlu0 %704
        %706 = vrot.lane.b32.xlu0 %v435, 127
        %v707 = vpop.permute.xlu0 %706
        %708 = vrot.lane.b32.xlu0 %v436, 127
        %v709 = vpop.permute.xlu0 %708
        %710 = vrot.lane.b32.xlu0 %v437, 127
        %v711 = vpop.permute.xlu0 %710
        %712 = vrot.lane.b32.xlu0 %v438, 127
        %v713 = vpop.permute.xlu0 %712
        %714 = vrot.lane.b32.xlu0 %v439, 127
        %v715 = vpop.permute.xlu0 %714
        %716 = vrot.lane.b32.xlu0 %v440, 127
        %v717 = vpop.permute.xlu0 %716
        %718 = vrot.lane.b32.xlu0 %v441, 127
        %v719 = vpop.permute.xlu0 %718
        %720 = vrot.lane.b32.xlu0 %v442, 127
        %v721 = vpop.permute.xlu0 %720
        %722 = vrot.lane.b32.xlu0 %v443, 127
        %v723 = vpop.permute.xlu0 %722
        %724 = vrot.lane.b32.xlu0 %v444, 127
        %v725 = vpop.permute.xlu0 %724
        %726 = vrot.lane.b32.xlu0 %v445, 127
        %v727 = vpop.permute.xlu0 %726
        %728 = vrot.lane.b32.xlu0 %v446, 127
        %v729 = vpop.permute.xlu0 %728
        %730 = vrot.lane.b32.xlu0 %v447, 127
        %v731 = vpop.permute.xlu0 %730
        %732 = vrot.lane.b32.xlu0 %v448, 127
        %v733 = vpop.permute.xlu0 %732
        %734 = vrot.lane.b32.xlu0 %v449, 127
        %v735 = vpop.permute.xlu0 %734
        %736 = vrot.lane.b32.xlu0 %v450, 127
        %v737 = vpop.permute.xlu0 %736
        %738 = vrot.lane.b32.xlu0 %v451, 127
        %v739 = vpop.permute.xlu0 %738
        %740 = vrot.lane.b32.xlu0 %v452, 127
        %v741 = vpop.permute.xlu0 %740
        %742 = vrot.lane.b32.xlu0 %v453, 127
        %v743 = vpop.permute.xlu0 %742
        %744 = vrot.lane.b32.xlu0 %v454, 127
        %v745 = vpop.permute.xlu0 %744
        %746 = vrot.lane.b32.xlu0 %v455, 127
        %v747 = vpop.permute.xlu0 %746
        %748 = vrot.lane.b32.xlu0 %v456, 127
        %v749 = vpop.permute.xlu0 %748
        %vm750 = vcmp.lt.s32.totalorder %v530, 127
        %v751 = vsel %vm750, %v747, %v749
        %v752 = vsel %vm750, %v745, %v747
        %v753 = vsel %vm750, %v743, %v745
        %v754 = vsel %vm750, %v741, %v743
        %v755 = vsel %vm750, %v739, %v741
        %v756 = vsel %vm750, %v737, %v739
        %v757 = vsel %vm750, %v735, %v737
        %v758 = vsel %vm750, %v733, %v735
        %v759 = vsel %vm750, %v731, %v733
        %v760 = vsel %vm750, %v729, %v731
        %v761 = vsel %vm750, %v727, %v729
        %v762 = vsel %vm750, %v725, %v727
        %v763 = vsel %vm750, %v723, %v725
        %v764 = vsel %vm750, %v721, %v723
        %v765 = vsel %vm750, %v719, %v721
        %v766 = vsel %vm750, %v717, %v719
        %v767 = vsel %vm750, %v715, %v717
        %v768 = vsel %vm750, %v713, %v715
        %v769 = vsel %vm750, %v711, %v713
        %v770 = vsel %vm750, %v709, %v711
        %v771 = vsel %vm750, %v707, %v709
        %v772 = vsel %vm750, %v705, %v707
        %v773 = vsel %vm750, %v703, %v705
        %v774 = vsel %vm750, %v749, %v703
        %775 = vrot.lane.b32.xlu0 %v433, 126
        %v776 = vpop.permute.xlu0 %775
        %777 = vrot.lane.b32.xlu0 %v434, 126
        %v778 = vpop.permute.xlu0 %777
        %779 = vrot.lane.b32.xlu0 %v435, 126
        %v780 = vpop.permute.xlu0 %779
        %781 = vrot.lane.b32.xlu0 %v436, 126
        %v782 = vpop.permute.xlu0 %781
        %783 = vrot.lane.b32.xlu0 %v437, 126
        %v784 = vpop.permute.xlu0 %783
        %785 = vrot.lane.b32.xlu0 %v438, 126
        %v786 = vpop.permute.xlu0 %785
        %787 = vrot.lane.b32.xlu0 %v439, 126
        %v788 = vpop.permute.xlu0 %787
        %789 = vrot.lane.b32.xlu0 %v440, 126
        %v790 = vpop.permute.xlu0 %789
        %791 = vrot.lane.b32.xlu0 %v441, 126
        %v792 = vpop.permute.xlu0 %791
        %793 = vrot.lane.b32.xlu0 %v442, 126
        %v794 = vpop.permute.xlu0 %793
        %795 = vrot.lane.b32.xlu0 %v443, 126
        %v796 = vpop.permute.xlu0 %795
        %797 = vrot.lane.b32.xlu0 %v444, 126
        %v798 = vpop.permute.xlu0 %797
        %799 = vrot.lane.b32.xlu0 %v445, 126
        %v800 = vpop.permute.xlu0 %799
        %801 = vrot.lane.b32.xlu0 %v446, 126
        %v802 = vpop.permute.xlu0 %801
        %803 = vrot.lane.b32.xlu0 %v447, 126
        %v804 = vpop.permute.xlu0 %803
        %805 = vrot.lane.b32.xlu0 %v448, 126
        %v806 = vpop.permute.xlu0 %805
        %807 = vrot.lane.b32.xlu0 %v449, 126
        %v808 = vpop.permute.xlu0 %807
        %809 = vrot.lane.b32.xlu0 %v450, 126
        %v810 = vpop.permute.xlu0 %809
        %811 = vrot.lane.b32.xlu0 %v451, 126
        %v812 = vpop.permute.xlu0 %811
        %813 = vrot.lane.b32.xlu0 %v452, 126
        %v814 = vpop.permute.xlu0 %813
        %815 = vrot.lane.b32.xlu0 %v453, 126
        %v816 = vpop.permute.xlu0 %815
        %817 = vrot.lane.b32.xlu0 %v454, 126
        %v818 = vpop.permute.xlu0 %817
        %819 = vrot.lane.b32.xlu0 %v455, 126
        %v820 = vpop.permute.xlu0 %819
        %821 = vrot.lane.b32.xlu0 %v456, 126
        %v822 = vpop.permute.xlu0 %821
        %vm823 = vcmp.lt.s32.totalorder %v530, 126
        %v824 = vsel %vm823, %v820, %v822
        %v825 = vsel %vm823, %v818, %v820
        %v826 = vsel %vm823, %v816, %v818
        %v827 = vsel %vm823, %v814, %v816
        %v828 = vsel %vm823, %v812, %v814
        %v829 = vsel %vm823, %v810, %v812
        %v830 = vsel %vm823, %v808, %v810
        %v831 = vsel %vm823, %v806, %v808
        %v832 = vsel %vm823, %v804, %v806
        %v833 = vsel %vm823, %v802, %v804
        %v834 = vsel %vm823, %v800, %v802
        %v835 = vsel %vm823, %v798, %v800
        %v836 = vsel %vm823, %v796, %v798
        %v837 = vsel %vm823, %v794, %v796
        %v838 = vsel %vm823, %v792, %v794
        %v839 = vsel %vm823, %v790, %v792
        %v840 = vsel %vm823, %v788, %v790
        %v841 = vsel %vm823, %v786, %v788
        %v842 = vsel %vm823, %v784, %v786
        %v843 = vsel %vm823, %v782, %v784
        %v844 = vsel %vm823, %v780, %v782
        %v845 = vsel %vm823, %v778, %v780
        %v846 = vsel %vm823, %v776, %v778
        %v847 = vsel %vm823, %v822, %v776
        %848 = vrot.lane.b32.xlu0 %v433, 125
        %v849 = vpop.permute.xlu0 %848
        %850 = vrot.lane.b32.xlu0 %v434, 125
        %v851 = vpop.permute.xlu0 %850
        %852 = vrot.lane.b32.xlu0 %v435, 125
        %v853 = vpop.permute.xlu0 %852
        %854 = vrot.lane.b32.xlu0 %v436, 125
        %v855 = vpop.permute.xlu0 %854
        %856 = vrot.lane.b32.xlu0 %v437, 125
        %v857 = vpop.permute.xlu0 %856
        %858 = vrot.lane.b32.xlu0 %v438, 125
        %v859 = vpop.permute.xlu0 %858
        %860 = vrot.lane.b32.xlu0 %v439, 125
        %v861 = vpop.permute.xlu0 %860
        %862 = vrot.lane.b32.xlu0 %v440, 125
        %v863 = vpop.permute.xlu0 %862
        %864 = vrot.lane.b32.xlu0 %v441, 125
        %v865 = vpop.permute.xlu0 %864
        %866 = vrot.lane.b32.xlu0 %v442, 125
        %v867 = vpop.permute.xlu0 %866
        %868 = vrot.lane.b32.xlu0 %v443, 125
        %v869 = vpop.permute.xlu0 %868
        %870 = vrot.lane.b32.xlu0 %v444, 125
        %v871 = vpop.permute.xlu0 %870
        %872 = vrot.lane.b32.xlu0 %v445, 125
        %v873 = vpop.permute.xlu0 %872
        %874 = vrot.lane.b32.xlu0 %v446, 125
        %v875 = vpop.permute.xlu0 %874
        %876 = vrot.lane.b32.xlu0 %v447, 125
        %v877 = vpop.permute.xlu0 %876
        %878 = vrot.lane.b32.xlu0 %v448, 125
        %v879 = vpop.permute.xlu0 %878
        %880 = vrot.lane.b32.xlu0 %v449, 125
        %v881 = vpop.permute.xlu0 %880
        %882 = vrot.lane.b32.xlu0 %v450, 125
        %v883 = vpop.permute.xlu0 %882
        %884 = vrot.lane.b32.xlu0 %v451, 125
        %v885 = vpop.permute.xlu0 %884
        %886 = vrot.lane.b32.xlu0 %v452, 125
        %v887 = vpop.permute.xlu0 %886
        %888 = vrot.lane.b32.xlu0 %v453, 125
        %v889 = vpop.permute.xlu0 %888
        %890 = vrot.lane.b32.xlu0 %v454, 125
        %v891 = vpop.permute.xlu0 %890
        %892 = vrot.lane.b32.xlu0 %v455, 125
        %v893 = vpop.permute.xlu0 %892
        %894 = vrot.lane.b32.xlu0 %v456, 125
        %v895 = vpop.permute.xlu0 %894
        %vm896 = vcmp.lt.s32.totalorder %v530, 125
        %v897 = vsel %vm896, %v893, %v895
        %v898 = vsel %vm896, %v891, %v893
        %v899 = vsel %vm896, %v889, %v891
        %v900 = vsel %vm896, %v887, %v889
        %v901 = vsel %vm896, %v885, %v887
        %v902 = vsel %vm896, %v883, %v885
        %v903 = vsel %vm896, %v881, %v883
        %v904 = vsel %vm896, %v879, %v881
        %v905 = vsel %vm896, %v877, %v879
        %v906 = vsel %vm896, %v875, %v877
        %v907 = vsel %vm896, %v873, %v875
        %v908 = vsel %vm896, %v871, %v873
        %v909 = vsel %vm896, %v869, %v871
        %v910 = vsel %vm896, %v867, %v869
        %v911 = vsel %vm896, %v865, %v867
        %v912 = vsel %vm896, %v863, %v865
        %v913 = vsel %vm896, %v861, %v863
        %v914 = vsel %vm896, %v859, %v861
        %v915 = vsel %vm896, %v857, %v859
        %v916 = vsel %vm896, %v855, %v857
        %v917 = vsel %vm896, %v853, %v855
        %v918 = vsel %vm896, %v851, %v853
        %v919 = vsel %vm896, %v849, %v851
        %v920 = vsel %vm896, %v895, %v849
        %v921 = vld [vmem:[#allocation7] sm:$0xf]
        %v922 = vld [vmem:[#allocation7 + $0x4] sm:$0xf]
        %v923 = vpack.c.bf16 %v628, %v555
        %v924 = vpack.c.bf16 %v627, %v554
        %v925 = vpack.c.bf16 %v626, %v553
        %v926 = vpack.c.bf16 %v625, %v552
        %v927 = vpack.c.bf16 %v624, %v551
        %v928 = vpack.c.bf16 %v623, %v550
        %v929 = vpack.c.bf16 %v622, %v549
        %v930 = vpack.c.bf16 %v621, %v548
        %v931 = vpack.c.bf16 %v620, %v547
        %v932 = vpack.c.bf16 %v619, %v546
        %v933 = vpack.c.bf16 %v618, %v545
        %v934 = vpack.c.bf16 %v617, %v544
        %v935 = vpack.c.bf16 %v616, %v543
        %v936 = vpack.c.bf16 %v615, %v542
        %v937 = vpack.c.bf16 %v614, %v541
        %v938 = vpack.c.bf16 %v613, %v540
        %v939 = vpack.c.bf16 %v612, %v539
        %v940 = vpack.c.bf16 %v611, %v538
        %v941 = vpack.c.bf16 %v610, %v537
        %v942 = vpack.c.bf16 %v609, %v536
        %v943 = vpack.c.bf16 %v608, %v535
        %v944 = vpack.c.bf16 %v607, %v534
        %v945 = vpack.c.bf16 %v606, %v533
        %v946 = vpack.c.bf16 %v605, %v532
        %v947 = vpack.c.bf16 %v433, %v701
        %v948 = vpack.c.bf16 %v434, %v700
        %v949 = vpack.c.bf16 %v435, %v699
        %v950 = vpack.c.bf16 %v436, %v698
        %v951 = vpack.c.bf16 %v437, %v697
        %v952 = vpack.c.bf16 %v438, %v696
        %v953 = vpack.c.bf16 %v439, %v695
        %v954 = vpack.c.bf16 %v440, %v694
        %v955 = vpack.c.bf16 %v441, %v693
        %v956 = vpack.c.bf16 %v442, %v692
        %v957 = vpack.c.bf16 %v443, %v691
        %v958 = vpack.c.bf16 %v444, %v690
        %v959 = vpack.c.bf16 %v445, %v689
        %v960 = vpack.c.bf16 %v446, %v688
        %v961 = vpack.c.bf16 %v447, %v687
        %v962 = vpack.c.bf16 %v448, %v686
        %v963 = vpack.c.bf16 %v449, %v685
        %v964 = vpack.c.bf16 %v450, %v684
        %v965 = vpack.c.bf16 %v451, %v683
        %v966 = vpack.c.bf16 %v452, %v682
        %v967 = vpack.c.bf16 %v453, %v681
        %v968 = vpack.c.bf16 %v454, %v680
        %v969 = vpack.c.bf16 %v455, %v679
        %v970 = vpack.c.bf16 %v456, %v678
        %v971 = vpack.c.bf16 %v846, %v773
        %v972 = vpack.c.bf16 %v845, %v772
        %v973 = vpack.c.bf16 %v844, %v771
        %v974 = vpack.c.bf16 %v843, %v770
        %v975 = vpack.c.bf16 %v842, %v769
        %v976 = vpack.c.bf16 %v841, %v768
        %v977 = vpack.c.bf16 %v840, %v767
        %v978 = vpack.c.bf16 %v839, %v766
        %v979 = vpack.c.bf16 %v838, %v765
        %v980 = vpack.c.bf16 %v837, %v764
        %v981 = vpack.c.bf16 %v836, %v763
        %v982 = vpack.c.bf16 %v835, %v762
        %v983 = vpack.c.bf16 %v834, %v761
        %v984 = vpack.c.bf16 %v833, %v760
        %v985 = vpack.c.bf16 %v832, %v759
        %v986 = vpack.c.bf16 %v831, %v758
        %v987 = vpack.c.bf16 %v830, %v757
        %v988 = vpack.c.bf16 %v829, %v756
        %v989 = vpack.c.bf16 %v828, %v755
        %v990 = vpack.c.bf16 %v827, %v754
        %v991 = vpack.c.bf16 %v826, %v753
        %v992 = vpack.c.bf16 %v825, %v752
        %v993 = vpack.c.bf16 %v824, %v751
        %v994 = vpack.c.bf16 %v847, %v774
        %v995 = vpack.c.bf16 %v919, %v919
        %v996 = vpack.c.bf16 %v918, %v918
        %v997 = vpack.c.bf16 %v917, %v917
        %v998 = vpack.c.bf16 %v916, %v916
        %v999 = vpack.c.bf16 %v915, %v915
        %v1000 = vpack.c.bf16 %v914, %v914
        %v1001 = vpack.c.bf16 %v913, %v913
        %v1002 = vpack.c.bf16 %v912, %v912
        %v1003 = vpack.c.bf16 %v911, %v911
        %v1004 = vpack.c.bf16 %v910, %v910
        %v1005 = vpack.c.bf16 %v909, %v909
        %v1006 = vpack.c.bf16 %v908, %v908
        %v1007 = vpack.c.bf16 %v907, %v907
        %v1008 = vpack.c.bf16 %v906, %v906
        %v1009 = vpack.c.bf16 %v905, %v905
        %v1010 = vpack.c.bf16 %v904, %v904
        %v1011 = vpack.c.bf16 %v903, %v903
        %v1012 = vpack.c.bf16 %v902, %v902
        %v1013 = vpack.c.bf16 %v901, %v901
        %v1014 = vpack.c.bf16 %v900, %v900
        %v1015 = vpack.c.bf16 %v899, %v899
        %v1016 = vpack.c.bf16 %v898, %v898
        %v1017 = vpack.c.bf16 %v897, %v897
        %v1018 = vpack.c.bf16 %v920, %v920
        %v1019 = vld [vmem:[%s3] sm:$0xff]
        %v1020 = vld [vmem:[%s3 + $0x8] sm:$0xff]
        %1022 = vset.pattern.permute.xlu0 0
        %1023 = vperm.xlu0 %1022, %v1019
        %v1024 = vpop.permute.xlu0 %1023
        %1027 = vset.pattern.permute.xlu0 0
        %1028 = vperm.xlu0 %1027, %v1020
        %v1029 = vpop.permute.xlu0 %1028
        %v1033 = vunpack.c.l.b16 %v921
        %v1034 = vunpack.c.l.b16 %v922
        %v1035 = vpack.c.b16 %v1034, %v1033
        %vm1036 = vcmask 457728
        %v1038 = vsel %vm1036, %v1035, 0
        %vm1040 = vcmask 1043456
        %v1042 = vsel %vm1040, %v995, 0
        %v1045 = vsel %vm1040, %v996, 0
        %v1048 = vsel %vm1040, %v997, 0
        %v1051 = vsel %vm1040, %v998, 0
        %v1054 = vsel %vm1040, %v999, 0
        %v1057 = vsel %vm1040, %v1000, 0
        %v1060 = vsel %vm1040, %v1001, 0
        %v1063 = vsel %vm1040, %v1002, 0
        %v1066 = vsel %vm1040, %v1003, 0
        %v1069 = vsel %vm1040, %v1004, 0
        %v1072 = vsel %vm1040, %v1005, 0
        %v1075 = vsel %vm1040, %v1006, 0
        %v1078 = vsel %vm1040, %v1007, 0
        %v1081 = vsel %vm1040, %v1008, 0
        %v1084 = vsel %vm1040, %v1009, 0
        %v1087 = vsel %vm1040, %v1010, 0
        %v1090 = vsel %vm1040, %v1011, 0
        %v1093 = vsel %vm1040, %v1012, 0
        %v1096 = vsel %vm1040, %v1013, 0
        %v1099 = vsel %vm1040, %v1014, 0
        %v1102 = vsel %vm1040, %v1015, 0
        %v1105 = vsel %vm1040, %v1016, 0
        %v1108 = vsel %vm1040, %v1017, 0
        %v1111 = vsel %vm1040, %v1018, 0
        %1113 = vmatpush.bf16.msra.mxu0 0
        %1114 = vmatpush.bf16.msra.mxu0 0
        %1115 = vmatpush.bf16.msra.mxu0 0
        %1116 = vmatpush.bf16.msra.mxu0 0
        %1117 = vmatpush.bf16.msra.mxu0 %v1042
        %1118 = vmatpush.bf16.msra.mxu0 %v971
        %1119 = vmatpush.bf16.msra.mxu0 %v947
        %1120 = vmatpush.bf16.msra.mxu0 %v923
        %1121 = vmatmul.bf16.gmra.mxu0 %v1038
        %v1122 = vpop.f32.mrf.mxu0
        %v1123 = vadd.f32 %v1024, %v1122
        %v1124 = vpop.f32.mrf.mxu0
        %v1125 = vadd.f32 %v1029, %v1124
        %1126 = vdwg.mxu0
        %1127 = vmatpush.bf16.msra.mxu0 0
        %1128 = vmatpush.bf16.msra.mxu0 0
        %1129 = vmatpush.bf16.msra.mxu0 0
        %1130 = vmatpush.bf16.msra.mxu0 0
        %1131 = vmatpush.bf16.msra.mxu0 %v1045
        %1132 = vmatpush.bf16.msra.mxu0 %v972
        %1133 = vmatpush.bf16.msra.mxu0 %v948
        %1134 = vmatpush.bf16.msra.mxu0 %v924
        %1135 = vmatmul.bf16.gmra.mxu0 %v1038
        %v1136 = vpop.f32.mrf.mxu0
        %v1137 = vadd.f32 %v1024, %v1136
        %v1138 = vpop.f32.mrf.mxu0
        %v1139 = vadd.f32 %v1029, %v1138
        %1140 = vdwg.mxu0
        %1141 = vmatpush.bf16.msra.mxu0 0
        %1142 = vmatpush.bf16.msra.mxu0 0
        %1143 = vmatpush.bf16.msra.mxu0 0
        %1144 = vmatpush.bf16.msra.mxu0 0
        %1145 = vmatpush.bf16.msra.mxu0 %v1048
        %1146 = vmatpush.bf16.msra.mxu0 %v973
        %1147 = vmatpush.bf16.msra.mxu0 %v949
        %1148 = vmatpush.bf16.msra.mxu0 %v925
        %1149 = vmatmul.bf16.gmra.mxu0 %v1038
        %v1150 = vpop.f32.mrf.mxu0
        %v1151 = vadd.f32 %v1024, %v1150
        %v1152 = vpop.f32.mrf.mxu0
        %v1153 = vadd.f32 %v1029, %v1152
        %1154 = vdwg.mxu0
        %1155 = vmatpush.bf16.msra.mxu0 0
        %1156 = vmatpush.bf16.msra.mxu0 0
        %1157 = vmatpush.bf16.msra.mxu0 0
        %1158 = vmatpush.bf16.msra.mxu0 0
        %1159 = vmatpush.bf16.msra.mxu0 %v1051
        %1160 = vmatpush.bf16.msra.mxu0 %v974
        %1161 = vmatpush.bf16.msra.mxu0 %v950
        %1162 = vmatpush.bf16.msra.mxu0 %v926
        %1163 = vmatmul.bf16.gmra.mxu0 %v1038
        %v1164 = vpop.f32.mrf.mxu0
        %v1165 = vadd.f32 %v1024, %v1164
        %v1166 = vpop.f32.mrf.mxu0
        %v1167 = vadd.f32 %v1029, %v1166
        %1168 = vdwg.mxu0
        %1169 = vmatpush.bf16.msra.mxu0 0
        %1170 = vmatpush.bf16.msra.mxu0 0
        %1171 = vmatpush.bf16.msra.mxu0 0
        %1172 = vmatpush.bf16.msra.mxu0 0
        %1173 = vmatpush.bf16.msra.mxu0 %v1054
        %1174 = vmatpush.bf16.msra.mxu0 %v975
        %1175 = vmatpush.bf16.msra.mxu0 %v951
        %1176 = vmatpush.bf16.msra.mxu0 %v927
        %1177 = vmatmul.bf16.gmra.mxu0 %v1038
        %v1178 = vpop.f32.mrf.mxu0
        %v1179 = vadd.f32 %v1024, %v1178
        %v1180 = vpop.f32.mrf.mxu0
        %v1181 = vadd.f32 %v1029, %v1180
        %1182 = vdwg.mxu0
        %1183 = vmatpush.bf16.msra.mxu0 0
        %1184 = vmatpush.bf16.msra.mxu0 0
        %1185 = vmatpush.bf16.msra.mxu0 0
        %1186 = vmatpush.bf16.msra.mxu0 0
        %1187 = vmatpush.bf16.msra.mxu0 %v1057
        %1188 = vmatpush.bf16.msra.mxu0 %v976
        %1189 = vmatpush.bf16.msra.mxu0 %v952
        %1190 = vmatpush.bf16.msra.mxu0 %v928
        %1191 = vmatmul.bf16.gmra.mxu0 %v1038
        %v1192 = vpop.f32.mrf.mxu0
        %v1193 = vadd.f32 %v1024, %v1192
        %v1194 = vpop.f32.mrf.mxu0
        %v1195 = vadd.f32 %v1029, %v1194
        %1196 = vdwg.mxu0
        %1197 = vmatpush.bf16.msra.mxu0 0
        %1198 = vmatpush.bf16.msra.mxu0 0
        %1199 = vmatpush.bf16.msra.mxu0 0
        %1200 = vmatpush.bf16.msra.mxu0 0
        %1201 = vmatpush.bf16.msra.mxu0 %v1060
        %1202 = vmatpush.bf16.msra.mxu0 %v977
        %1203 = vmatpush.bf16.msra.mxu0 %v953
        %1204 = vmatpush.bf16.msra.mxu0 %v929
        %1205 = vmatmul.bf16.gmra.mxu0 %v1038
        %v1206 = vpop.f32.mrf.mxu0
        %v1207 = vadd.f32 %v1024, %v1206
        %v1208 = vpop.f32.mrf.mxu0
        %v1209 = vadd.f32 %v1029, %v1208
        %1210 = vdwg.mxu0
        %1211 = vmatpush.bf16.msra.mxu0 0
        %1212 = vmatpush.bf16.msra.mxu0 0
        %1213 = vmatpush.bf16.msra.mxu0 0
        %1214 = vmatpush.bf16.msra.mxu0 0
        %1215 = vmatpush.bf16.msra.mxu0 %v1063
        %1216 = vmatpush.bf16.msra.mxu0 %v978
        %1217 = vmatpush.bf16.msra.mxu0 %v954
        %1218 = vmatpush.bf16.msra.mxu0 %v930
        %1219 = vmatmul.bf16.gmra.mxu0 %v1038
        %v1220 = vpop.f32.mrf.mxu0
        %v1221 = vadd.f32 %v1024, %v1220
        %v1222 = vpop.f32.mrf.mxu0
        %v1223 = vadd.f32 %v1029, %v1222
        %1224 = vdwg.mxu0
        %1225 = vmatpush.bf16.msra.mxu0 0
        %1226 = vmatpush.bf16.msra.mxu0 0
        %1227 = vmatpush.bf16.msra.mxu0 0
        %1228 = vmatpush.bf16.msra.mxu0 0
        %1229 = vmatpush.bf16.msra.mxu0 %v1066
        %1230 = vmatpush.bf16.msra.mxu0 %v979
        %1231 = vmatpush.bf16.msra.mxu0 %v955
        %1232 = vmatpush.bf16.msra.mxu0 %v931
        %1233 = vmatmul.bf16.gmra.mxu0 %v1038
        %v1234 = vpop.f32.mrf.mxu0
        %v1235 = vadd.f32 %v1024, %v1234
        %v1236 = vpop.f32.mrf.mxu0
        %v1237 = vadd.f32 %v1029, %v1236
        %1238 = vdwg.mxu0
        %1239 = vmatpush.bf16.msra.mxu0 0
        %1240 = vmatpush.bf16.msra.mxu0 0
        %1241 = vmatpush.bf16.msra.mxu0 0
        %1242 = vmatpush.bf16.msra.mxu0 0
        %1243 = vmatpush.bf16.msra.mxu0 %v1069
        %1244 = vmatpush.bf16.msra.mxu0 %v980
        %1245 = vmatpush.bf16.msra.mxu0 %v956
        %1246 = vmatpush.bf16.msra.mxu0 %v932
        %1247 = vmatmul.bf16.gmra.mxu0 %v1038
        %v1248 = vpop.f32.mrf.mxu0
        %v1249 = vadd.f32 %v1024, %v1248
        %v1250 = vpop.f32.mrf.mxu0
        %v1251 = vadd.f32 %v1029, %v1250
        %1252 = vdwg.mxu0
        %1253 = vmatpush.bf16.msra.mxu0 0
        %1254 = vmatpush.bf16.msra.mxu0 0
        %1255 = vmatpush.bf16.msra.mxu0 0
        %1256 = vmatpush.bf16.msra.mxu0 0
        %1257 = vmatpush.bf16.msra.mxu0 %v1072
        %1258 = vmatpush.bf16.msra.mxu0 %v981
        %1259 = vmatpush.bf16.msra.mxu0 %v957
        %1260 = vmatpush.bf16.msra.mxu0 %v933
        %1261 = vmatmul.bf16.gmra.mxu0 %v1038
        %v1262 = vpop.f32.mrf.mxu0
        %v1263 = vadd.f32 %v1024, %v1262
        %v1264 = vpop.f32.mrf.mxu0
        %v1265 = vadd.f32 %v1029, %v1264
        %1266 = vdwg.mxu0
        %1267 = vmatpush.bf16.msra.mxu0 0
        %1268 = vmatpush.bf16.msra.mxu0 0
        %1269 = vmatpush.bf16.msra.mxu0 0
        %1270 = vmatpush.bf16.msra.mxu0 0
        %1271 = vmatpush.bf16.msra.mxu0 %v1075
        %1272 = vmatpush.bf16.msra.mxu0 %v982
        %1273 = vmatpush.bf16.msra.mxu0 %v958
        %1274 = vmatpush.bf16.msra.mxu0 %v934
        %1275 = vmatmul.bf16.gmra.mxu0 %v1038
        %v1276 = vpop.f32.mrf.mxu0
        %v1277 = vadd.f32 %v1024, %v1276
        %v1278 = vpop.f32.mrf.mxu0
        %v1279 = vadd.f32 %v1029, %v1278
        %1280 = vdwg.mxu0
        %1281 = vmatpush.bf16.msra.mxu0 0
        %1282 = vmatpush.bf16.msra.mxu0 0
        %1283 = vmatpush.bf16.msra.mxu0 0
        %1284 = vmatpush.bf16.msra.mxu0 0
        %1285 = vmatpush.bf16.msra.mxu0 %v1078
        %1286 = vmatpush.bf16.msra.mxu0 %v983
        %1287 = vmatpush.bf16.msra.mxu0 %v959
        %1288 = vmatpush.bf16.msra.mxu0 %v935
        %1289 = vmatmul.bf16.gmra.mxu0 %v1038
        %v1290 = vpop.f32.mrf.mxu0
        %v1291 = vadd.f32 %v1024, %v1290
        %v1292 = vpop.f32.mrf.mxu0
        %v1293 = vadd.f32 %v1029, %v1292
        %1294 = vdwg.mxu0
        %1295 = vmatpush.bf16.msra.mxu0 0
        %1296 = vmatpush.bf16.msra.mxu0 0
        %1297 = vmatpush.bf16.msra.mxu0 0
        %1298 = vmatpush.bf16.msra.mxu0 0
        %1299 = vmatpush.bf16.msra.mxu0 %v1081
        %1300 = vmatpush.bf16.msra.mxu0 %v984
        %1301 = vmatpush.bf16.msra.mxu0 %v960
        %1302 = vmatpush.bf16.msra.mxu0 %v936
        %1303 = vmatmul.bf16.gmra.mxu0 %v1038
        %v1304 = vpop.f32.mrf.mxu0
        %v1305 = vadd.f32 %v1024, %v1304
        %v1306 = vpop.f32.mrf.mxu0
        %v1307 = vadd.f32 %v1029, %v1306
        %1308 = vdwg.mxu0
        %1309 = vmatpush.bf16.msra.mxu0 0
        %1310 = vmatpush.bf16.msra.mxu0 0
        %1311 = vmatpush.bf16.msra.mxu0 0
        %1312 = vmatpush.bf16.msra.mxu0 0
        %1313 = vmatpush.bf16.msra.mxu0 %v1084
        %1314 = vmatpush.bf16.msra.mxu0 %v985
        %1315 = vmatpush.bf16.msra.mxu0 %v961
        %1316 = vmatpush.bf16.msra.mxu0 %v937
        %1317 = vmatmul.bf16.gmra.mxu0 %v1038
        %v1318 = vpop.f32.mrf.mxu0
        %v1319 = vadd.f32 %v1024, %v1318
        %v1320 = vpop.f32.mrf.mxu0
        %v1321 = vadd.f32 %v1029, %v1320
        %1322 = vdwg.mxu0
        %1323 = vmatpush.bf16.msra.mxu0 0
        %1324 = vmatpush.bf16.msra.mxu0 0
        %1325 = vmatpush.bf16.msra.mxu0 0
        %1326 = vmatpush.bf16.msra.mxu0 0
        %1327 = vmatpush.bf16.msra.mxu0 %v1087
        %1328 = vmatpush.bf16.msra.mxu0 %v986
        %1329 = vmatpush.bf16.msra.mxu0 %v962
        %1330 = vmatpush.bf16.msra.mxu0 %v938
        %1331 = vmatmul.bf16.gmra.mxu0 %v1038
        %v1332 = vpop.f32.mrf.mxu0
        %v1333 = vadd.f32 %v1024, %v1332
        %v1334 = vpop.f32.mrf.mxu0
        %v1335 = vadd.f32 %v1029, %v1334
        %1336 = vdwg.mxu0
        %1337 = vmatpush.bf16.msra.mxu0 0
        %1338 = vmatpush.bf16.msra.mxu0 0
        %1339 = vmatpush.bf16.msra.mxu0 0
        %1340 = vmatpush.bf16.msra.mxu0 0
        %1341 = vmatpush.bf16.msra.mxu0 %v1090
        %1342 = vmatpush.bf16.msra.mxu0 %v987
        %1343 = vmatpush.bf16.msra.mxu0 %v963
        %1344 = vmatpush.bf16.msra.mxu0 %v939
        %1345 = vmatmul.bf16.gmra.mxu0 %v1038
        %v1346 = vpop.f32.mrf.mxu0
        %v1347 = vadd.f32 %v1024, %v1346
        %v1348 = vpop.f32.mrf.mxu0
        %v1349 = vadd.f32 %v1029, %v1348
        %1350 = vdwg.mxu0
        %1351 = vmatpush.bf16.msra.mxu0 0
        %1352 = vmatpush.bf16.msra.mxu0 0
        %1353 = vmatpush.bf16.msra.mxu0 0
        %1354 = vmatpush.bf16.msra.mxu0 0
        %1355 = vmatpush.bf16.msra.mxu0 %v1093
        %1356 = vmatpush.bf16.msra.mxu0 %v988
        %1357 = vmatpush.bf16.msra.mxu0 %v964
        %1358 = vmatpush.bf16.msra.mxu0 %v940
        %1359 = vmatmul.bf16.gmra.mxu0 %v1038
        %v1360 = vpop.f32.mrf.mxu0
        %v1361 = vadd.f32 %v1024, %v1360
        %v1362 = vpop.f32.mrf.mxu0
        %v1363 = vadd.f32 %v1029, %v1362
        %1364 = vdwg.mxu0
        %1365 = vmatpush.bf16.msra.mxu0 0
        %1366 = vmatpush.bf16.msra.mxu0 0
        %1367 = vmatpush.bf16.msra.mxu0 0
        %1368 = vmatpush.bf16.msra.mxu0 0
        %1369 = vmatpush.bf16.msra.mxu0 %v1096
        %1370 = vmatpush.bf16.msra.mxu0 %v989
        %1371 = vmatpush.bf16.msra.mxu0 %v965
        %1372 = vmatpush.bf16.msra.mxu0 %v941
        %1373 = vmatmul.bf16.gmra.mxu0 %v1038
        %v1374 = vpop.f32.mrf.mxu0
        %v1375 = vadd.f32 %v1024, %v1374
        %v1376 = vpop.f32.mrf.mxu0
        %v1377 = vadd.f32 %v1029, %v1376
        %1378 = vdwg.mxu0
        %1379 = vmatpush.bf16.msra.mxu0 0
        %1380 = vmatpush.bf16.msra.mxu0 0
        %1381 = vmatpush.bf16.msra.mxu0 0
        %1382 = vmatpush.bf16.msra.mxu0 0
        %1383 = vmatpush.bf16.msra.mxu0 %v1099
        %1384 = vmatpush.bf16.msra.mxu0 %v990
        %1385 = vmatpush.bf16.msra.mxu0 %v966
        %1386 = vmatpush.bf16.msra.mxu0 %v942
        %1387 = vmatmul.bf16.gmra.mxu0 %v1038
        %v1388 = vpop.f32.mrf.mxu0
        %v1389 = vadd.f32 %v1024, %v1388
        %v1390 = vpop.f32.mrf.mxu0
        %v1391 = vadd.f32 %v1029, %v1390
        %1392 = vdwg.mxu0
        %1393 = vmatpush.bf16.msra.mxu0 0
        %1394 = vmatpush.bf16.msra.mxu0 0
        %1395 = vmatpush.bf16.msra.mxu0 0
        %1396 = vmatpush.bf16.msra.mxu0 0
        %1397 = vmatpush.bf16.msra.mxu0 %v1102
        %1398 = vmatpush.bf16.msra.mxu0 %v991
        %1399 = vmatpush.bf16.msra.mxu0 %v967
        %1400 = vmatpush.bf16.msra.mxu0 %v943
        %1401 = vmatmul.bf16.gmra.mxu0 %v1038
        %v1402 = vpop.f32.mrf.mxu0
        %v1403 = vadd.f32 %v1024, %v1402
        %v1404 = vpop.f32.mrf.mxu0
        %v1405 = vadd.f32 %v1029, %v1404
        %1406 = vdwg.mxu0
        %1407 = vmatpush.bf16.msra.mxu0 0
        %1408 = vmatpush.bf16.msra.mxu0 0
        %1409 = vmatpush.bf16.msra.mxu0 0
        %1410 = vmatpush.bf16.msra.mxu0 0
        %1411 = vmatpush.bf16.msra.mxu0 %v1105
        %1412 = vmatpush.bf16.msra.mxu0 %v992
        %1413 = vmatpush.bf16.msra.mxu0 %v968
        %1414 = vmatpush.bf16.msra.mxu0 %v944
        %1415 = vmatmul.bf16.gmra.mxu0 %v1038
        %v1416 = vpop.f32.mrf.mxu0
        %v1417 = vadd.f32 %v1024, %v1416
        %v1418 = vpop.f32.mrf.mxu0
        %v1419 = vadd.f32 %v1029, %v1418
        %1420 = vdwg.mxu0
        %1421 = vmatpush.bf16.msra.mxu0 0
        %1422 = vmatpush.bf16.msra.mxu0 0
        %1423 = vmatpush.bf16.msra.mxu0 0
        %1424 = vmatpush.bf16.msra.mxu0 0
        %1425 = vmatpush.bf16.msra.mxu0 %v1108
        %1426 = vmatpush.bf16.msra.mxu0 %v993
        %1427 = vmatpush.bf16.msra.mxu0 %v969
        %1428 = vmatpush.bf16.msra.mxu0 %v945
        %1429 = vmatmul.bf16.gmra.mxu0 %v1038
        %v1430 = vpop.f32.mrf.mxu0
        %v1431 = vadd.f32 %v1024, %v1430
        %v1432 = vpop.f32.mrf.mxu0
        %v1433 = vadd.f32 %v1029, %v1432
        %1434 = vdwg.mxu0
        %1435 = vmatpush.bf16.msra.mxu0 0
        %1436 = vmatpush.bf16.msra.mxu0 0
        %1437 = vmatpush.bf16.msra.mxu0 0
        %1438 = vmatpush.bf16.msra.mxu0 0
        %1439 = vmatpush.bf16.msra.mxu0 %v1111
        %1440 = vmatpush.bf16.msra.mxu0 %v994
        %1441 = vmatpush.bf16.msra.mxu0 %v970
        %1442 = vmatpush.bf16.msra.mxu0 %v946
        %1443 = vmatmul.bf16.gmra.mxu0 %v1038
        %v1444 = vpop.f32.mrf.mxu0
        %v1445 = vadd.f32 %v1024, %v1444
        %v1446 = vpop.f32.mrf.mxu0
        %v1447 = vadd.f32 %v1029, %v1446
        %1448 = vdwg.mxu0
        %v1449 = vmax.f32 %v1123, 0.0
        %v1450 = vmax.f32 %v1137, 0.0
        %v1451 = vmax.f32 %v1151, 0.0
        %v1452 = vmax.f32 %v1165, 0.0
        %v1453 = vmax.f32 %v1179, 0.0
        %v1454 = vmax.f32 %v1193, 0.0
        %v1455 = vmax.f32 %v1207, 0.0
        %v1456 = vmax.f32 %v1221, 0.0
        %v1457 = vmax.f32 %v1235, 0.0
        %v1458 = vmax.f32 %v1249, 0.0
        %v1459 = vmax.f32 %v1263, 0.0
        %v1460 = vmax.f32 %v1277, 0.0
        %v1461 = vmax.f32 %v1291, 0.0
        %v1462 = vmax.f32 %v1305, 0.0
        %v1463 = vmax.f32 %v1319, 0.0
        %v1464 = vmax.f32 %v1333, 0.0
        %v1465 = vmax.f32 %v1347, 0.0
        %v1466 = vmax.f32 %v1361, 0.0
        %v1467 = vmax.f32 %v1375, 0.0
        %v1468 = vmax.f32 %v1389, 0.0
        %v1469 = vmax.f32 %v1403, 0.0
        %v1470 = vmax.f32 %v1417, 0.0
        %v1471 = vmax.f32 %v1431, 0.0
        %v1472 = vmax.f32 %v1445, 0.0
        %v1473 = vmax.f32 %v1125, 0.0
        %v1474 = vmax.f32 %v1139, 0.0
        %v1475 = vmax.f32 %v1153, 0.0
        %v1476 = vmax.f32 %v1167, 0.0
        %v1477 = vmax.f32 %v1181, 0.0
        %v1478 = vmax.f32 %v1195, 0.0
        %v1479 = vmax.f32 %v1209, 0.0
        %v1480 = vmax.f32 %v1223, 0.0
        %v1481 = vmax.f32 %v1237, 0.0
        %v1482 = vmax.f32 %v1251, 0.0
        %v1483 = vmax.f32 %v1265, 0.0
        %v1484 = vmax.f32 %v1279, 0.0
        %v1485 = vmax.f32 %v1293, 0.0
        %v1486 = vmax.f32 %v1307, 0.0
        %v1487 = vmax.f32 %v1321, 0.0
        %v1488 = vmax.f32 %v1335, 0.0
        %v1489 = vmax.f32 %v1349, 0.0
        %v1490 = vmax.f32 %v1363, 0.0
        %v1491 = vmax.f32 %v1377, 0.0
        %v1492 = vmax.f32 %v1391, 0.0
        %v1493 = vmax.f32 %v1405, 0.0
        %v1494 = vmax.f32 %v1419, 0.0
        %v1495 = vmax.f32 %v1433, 0.0
        %v1496 = vmax.f32 %v1447, 0.0
        %v1497 = vperm.slane %v457, 2
        %v1498 = vperm.slane %v458, 2
        %v1499 = vperm.slane %v459, 2
        %v1500 = vperm.slane %v460, 2
        %v1501 = vperm.slane %v461, 2
        %v1502 = vperm.slane %v462, 2
        %v1503 = vperm.slane %v463, 2
        %v1504 = vperm.slane %v464, 2
        %v1505 = vperm.slane %v465, 2
        %v1506 = vperm.slane %v466, 2
        %v1507 = vperm.slane %v467, 2
        %v1508 = vperm.slane %v468, 2
        %v1509 = vperm.slane %v469, 2
        %v1510 = vperm.slane %v470, 2
        %v1511 = vperm.slane %v471, 2
        %v1512 = vperm.slane %v472, 2
        %v1513 = vperm.slane %v473, 2
        %v1514 = vperm.slane %v474, 2
        %v1515 = vperm.slane %v475, 2
        %v1516 = vperm.slane %v476, 2
        %v1517 = vperm.slane %v477, 2
        %v1518 = vperm.slane %v478, 2
        %v1519 = vperm.slane %v479, 2
        %v1520 = vperm.slane %v480, 2
        %v1521 = vadd.f32 %v701, %v1497
        %v1522 = vadd.f32 %v700, %v1498
        %v1523 = vadd.f32 %v699, %v1499
        %v1524 = vadd.f32 %v698, %v1500
        %v1525 = vadd.f32 %v697, %v1501
        %v1526 = vadd.f32 %v696, %v1502
        %v1527 = vadd.f32 %v695, %v1503
        %v1528 = vadd.f32 %v694, %v1504
        %v1529 = vadd.f32 %v693, %v1505
        %v1530 = vadd.f32 %v692, %v1506
        %v1531 = vadd.f32 %v691, %v1507
        %v1532 = vadd.f32 %v690, %v1508
        %v1533 = vadd.f32 %v689, %v1509
        %v1534 = vadd.f32 %v688, %v1510
        %v1535 = vadd.f32 %v687, %v1511
        %v1536 = vadd.f32 %v686, %v1512
        %v1537 = vadd.f32 %v685, %v1513
        %v1538 = vadd.f32 %v684, %v1514
        %v1539 = vadd.f32 %v683, %v1515
        %v1540 = vadd.f32 %v682, %v1516
        %v1541 = vadd.f32 %v681, %v1517
        %v1542 = vadd.f32 %v680, %v1518
        %v1543 = vadd.f32 %v679, %v1519
        %v1544 = vadd.f32 %v678, %v1520
        %v1545 = vmax.f32 %v1521, %v433
        %v1546 = vmax.f32 %v1522, %v434
        %v1547 = vmax.f32 %v1523, %v435
        %v1548 = vmax.f32 %v1524, %v436
        %v1549 = vmax.f32 %v1525, %v437
        %v1550 = vmax.f32 %v1526, %v438
        %v1551 = vmax.f32 %v1527, %v439
        %v1552 = vmax.f32 %v1528, %v440
        %v1553 = vmax.f32 %v1529, %v441
        %v1554 = vmax.f32 %v1530, %v442
        %v1555 = vmax.f32 %v1531, %v443
        %v1556 = vmax.f32 %v1532, %v444
        %v1557 = vmax.f32 %v1533, %v445
        %v1558 = vmax.f32 %v1534, %v446
        %v1559 = vmax.f32 %v1535, %v447
        %v1560 = vmax.f32 %v1536, %v448
        %v1561 = vmax.f32 %v1537, %v449
        %v1562 = vmax.f32 %v1538, %v450
        %v1563 = vmax.f32 %v1539, %v451
        %v1564 = vmax.f32 %v1540, %v452
        %v1565 = vmax.f32 %v1541, %v453
        %v1566 = vmax.f32 %v1542, %v454
        %v1567 = vmax.f32 %v1543, %v455
        %v1568 = vmax.f32 %v1544, %v456
        %v1569 = vperm.slane %v457, 3
        %v1570 = vperm.slane %v458, 3
        %v1571 = vperm.slane %v459, 3
        %v1572 = vperm.slane %v460, 3
        %v1573 = vperm.slane %v461, 3
        %v1574 = vperm.slane %v462, 3
        %v1575 = vperm.slane %v463, 3
        %v1576 = vperm.slane %v464, 3
        %v1577 = vperm.slane %v465, 3
        %v1578 = vperm.slane %v466, 3
        %v1579 = vperm.slane %v467, 3
        %v1580 = vperm.slane %v468, 3
        %v1581 = vperm.slane %v469, 3
        %v1582 = vperm.slane %v470, 3
        %v1583 = vperm.slane %v471, 3
        %v1584 = vperm.slane %v472, 3
        %v1585 = vperm.slane %v473, 3
        %v1586 = vperm.slane %v474, 3
        %v1587 = vperm.slane %v475, 3
        %v1588 = vperm.slane %v476, 3
        %v1589 = vperm.slane %v477, 3
        %v1590 = vperm.slane %v478, 3
        %v1591 = vperm.slane %v479, 3
        %v1592 = vperm.slane %v480, 3
        %v1593 = vadd.f32 %v773, %v1569
        %v1594 = vadd.f32 %v772, %v1570
        %v1595 = vadd.f32 %v771, %v1571
        %v1596 = vadd.f32 %v770, %v1572
        %v1597 = vadd.f32 %v769, %v1573
        %v1598 = vadd.f32 %v768, %v1574
        %v1599 = vadd.f32 %v767, %v1575
        %v1600 = vadd.f32 %v766, %v1576
        %v1601 = vadd.f32 %v765, %v1577
        %v1602 = vadd.f32 %v764, %v1578
        %v1603 = vadd.f32 %v763, %v1579
        %v1604 = vadd.f32 %v762, %v1580
        %v1605 = vadd.f32 %v761, %v1581
        %v1606 = vadd.f32 %v760, %v1582
        %v1607 = vadd.f32 %v759, %v1583
        %v1608 = vadd.f32 %v758, %v1584
        %v1609 = vadd.f32 %v757, %v1585
        %v1610 = vadd.f32 %v756, %v1586
        %v1611 = vadd.f32 %v755, %v1587
        %v1612 = vadd.f32 %v754, %v1588
        %v1613 = vadd.f32 %v753, %v1589
        %v1614 = vadd.f32 %v752, %v1590
        %v1615 = vadd.f32 %v751, %v1591
        %v1616 = vadd.f32 %v774, %v1592
        %v1617 = vmax.f32 %v1545, %v1593
        %v1618 = vmax.f32 %v1546, %v1594
        %v1619 = vmax.f32 %v1547, %v1595
        %v1620 = vmax.f32 %v1548, %v1596
        %v1621 = vmax.f32 %v1549, %v1597
        %v1622 = vmax.f32 %v1550, %v1598
        %v1623 = vmax.f32 %v1551, %v1599
        %v1624 = vmax.f32 %v1552, %v1600
        %v1625 = vmax.f32 %v1553, %v1601
        %v1626 = vmax.f32 %v1554, %v1602
        %v1627 = vmax.f32 %v1555, %v1603
        %v1628 = vmax.f32 %v1556, %v1604
        %v1629 = vmax.f32 %v1557, %v1605
        %v1630 = vmax.f32 %v1558, %v1606
        %v1631 = vmax.f32 %v1559, %v1607
        %v1632 = vmax.f32 %v1560, %v1608
        %v1633 = vmax.f32 %v1561, %v1609
        %v1634 = vmax.f32 %v1562, %v1610
        %v1635 = vmax.f32 %v1563, %v1611
        %v1636 = vmax.f32 %v1564, %v1612
        %v1637 = vmax.f32 %v1565, %v1613
        %v1638 = vmax.f32 %v1566, %v1614
        %v1639 = vmax.f32 %v1567, %v1615
        %v1640 = vmax.f32 %v1568, %v1616
        %v1641 = vperm.slane %v457, 0
        %v1642 = vperm.slane %v458, 0
        %v1643 = vperm.slane %v459, 0
        %v1644 = vperm.slane %v460, 0
        %v1645 = vperm.slane %v461, 0
        %v1646 = vperm.slane %v462, 0
        %v1647 = vperm.slane %v463, 0
        %v1648 = vperm.slane %v464, 0
        %v1649 = vperm.slane %v465, 0
        %v1650 = vperm.slane %v466, 0
        %v1651 = vperm.slane %v467, 0
        %v1652 = vperm.slane %v468, 0
        %v1653 = vperm.slane %v469, 0
        %v1654 = vperm.slane %v470, 0
        %v1655 = vperm.slane %v471, 0
        %v1656 = vperm.slane %v472, 0
        %v1657 = vperm.slane %v473, 0
        %v1658 = vperm.slane %v474, 0
        %v1659 = vperm.slane %v475, 0
        %v1660 = vperm.slane %v476, 0
        %v1661 = vperm.slane %v477, 0
        %v1662 = vperm.slane %v478, 0
        %v1663 = vperm.slane %v479, 0
        %v1664 = vperm.slane %v480, 0
        %v1665 = vmin.f32 %v1449, %v1641
        %v1666 = vmin.f32 %v1450, %v1642
        %v1667 = vmin.f32 %v1451, %v1643
        %v1668 = vmin.f32 %v1452, %v1644
        %v1669 = vmin.f32 %v1453, %v1645
        %v1670 = vmin.f32 %v1454, %v1646
        %v1671 = vmin.f32 %v1455, %v1647
        %v1672 = vmin.f32 %v1456, %v1648
        %v1673 = vmin.f32 %v1457, %v1649
        %v1674 = vmin.f32 %v1458, %v1650
        %v1675 = vmin.f32 %v1459, %v1651
        %v1676 = vmin.f32 %v1460, %v1652
        %v1677 = vmin.f32 %v1461, %v1653
        %v1678 = vmin.f32 %v1462, %v1654
        %v1679 = vmin.f32 %v1463, %v1655
        %v1680 = vmin.f32 %v1464, %v1656
        %v1681 = vmin.f32 %v1465, %v1657
        %v1682 = vmin.f32 %v1466, %v1658
        %v1683 = vmin.f32 %v1467, %v1659
        %v1684 = vmin.f32 %v1468, %v1660
        %v1685 = vmin.f32 %v1469, %v1661
        %v1686 = vmin.f32 %v1470, %v1662
        %v1687 = vmin.f32 %v1471, %v1663
        %v1688 = vmin.f32 %v1472, %v1664
        %v1689 = vmin.f32 %v1473, %v1641
        %v1690 = vmin.f32 %v1474, %v1642
        %v1691 = vmin.f32 %v1475, %v1643
        %v1692 = vmin.f32 %v1476, %v1644
        %v1693 = vmin.f32 %v1477, %v1645
        %v1694 = vmin.f32 %v1478, %v1646
        %v1695 = vmin.f32 %v1479, %v1647
        %v1696 = vmin.f32 %v1480, %v1648
        %v1697 = vmin.f32 %v1481, %v1649
        %v1698 = vmin.f32 %v1482, %v1650
        %v1699 = vmin.f32 %v1483, %v1651
        %v1700 = vmin.f32 %v1484, %v1652
        %v1701 = vmin.f32 %v1485, %v1653
        %v1702 = vmin.f32 %v1486, %v1654
        %v1703 = vmin.f32 %v1487, %v1655
        %v1704 = vmin.f32 %v1488, %v1656
        %v1705 = vmin.f32 %v1489, %v1657
        %v1706 = vmin.f32 %v1490, %v1658
        %v1707 = vmin.f32 %v1491, %v1659
        %v1708 = vmin.f32 %v1492, %v1660
        %v1709 = vmin.f32 %v1493, %v1661
        %v1710 = vmin.f32 %v1494, %v1662
        %v1711 = vmin.f32 %v1495, %v1663
        %v1712 = vmin.f32 %v1496, %v1664
        %v1713 = vmin.f32 %v1617, %v1641
        %v1714 = vmin.f32 %v1618, %v1642
        %v1715 = vmin.f32 %v1619, %v1643
        %v1716 = vmin.f32 %v1620, %v1644
        %v1717 = vmin.f32 %v1621, %v1645
        %v1718 = vmin.f32 %v1622, %v1646
        %v1719 = vmin.f32 %v1623, %v1647
        %v1720 = vmin.f32 %v1624, %v1648
        %v1721 = vmin.f32 %v1625, %v1649
        %v1722 = vmin.f32 %v1626, %v1650
        %v1723 = vmin.f32 %v1627, %v1651
        %v1724 = vmin.f32 %v1628, %v1652
        %v1725 = vmin.f32 %v1629, %v1653
        %v1726 = vmin.f32 %v1630, %v1654
        %v1727 = vmin.f32 %v1631, %v1655
        %v1728 = vmin.f32 %v1632, %v1656
        %v1729 = vmin.f32 %v1633, %v1657
        %v1730 = vmin.f32 %v1634, %v1658
        %v1731 = vmin.f32 %v1635, %v1659
        %v1732 = vmin.f32 %v1636, %v1660
        %v1733 = vmin.f32 %v1637, %v1661
        %v1734 = vmin.f32 %v1638, %v1662
        %v1735 = vmin.f32 %v1639, %v1663
        %v1736 = vmin.f32 %v1640, %v1664
        %1737 = vrot.lane.b32.xlu0 %v1665, 1
        %v1738 = vpop.permute.xlu0 %1737
        %1739 = vrot.lane.b32.xlu0 %v1689, 1
        %v1740 = vpop.permute.xlu0 %1739
        %1741 = vrot.lane.b32.xlu0 %v1713, 1
        %v1742 = vpop.permute.xlu0 %1741
        %1743 = vrot.lane.b32.xlu0 %v1666, 1
        %v1744 = vpop.permute.xlu0 %1743
        %1745 = vrot.lane.b32.xlu0 %v1690, 1
        %v1746 = vpop.permute.xlu0 %1745
        %1747 = vrot.lane.b32.xlu0 %v1714, 1
        %v1748 = vpop.permute.xlu0 %1747
        %1749 = vrot.lane.b32.xlu0 %v1667, 1
        %v1750 = vpop.permute.xlu0 %1749
        %1751 = vrot.lane.b32.xlu0 %v1691, 1
        %v1752 = vpop.permute.xlu0 %1751
        %1753 = vrot.lane.b32.xlu0 %v1715, 1
        %v1754 = vpop.permute.xlu0 %1753
        %1755 = vrot.lane.b32.xlu0 %v1668, 1
        %v1756 = vpop.permute.xlu0 %1755
        %1757 = vrot.lane.b32.xlu0 %v1692, 1
        %v1758 = vpop.permute.xlu0 %1757
        %1759 = vrot.lane.b32.xlu0 %v1716, 1
        %v1760 = vpop.permute.xlu0 %1759
        %1761 = vrot.lane.b32.xlu0 %v1669, 1
        %v1762 = vpop.permute.xlu0 %1761
        %1763 = vrot.lane.b32.xlu0 %v1693, 1
        %v1764 = vpop.permute.xlu0 %1763
        %1765 = vrot.lane.b32.xlu0 %v1717, 1
        %v1766 = vpop.permute.xlu0 %1765
        %1767 = vrot.lane.b32.xlu0 %v1670, 1
        %v1768 = vpop.permute.xlu0 %1767
        %1769 = vrot.lane.b32.xlu0 %v1694, 1
        %v1770 = vpop.permute.xlu0 %1769
        %1771 = vrot.lane.b32.xlu0 %v1718, 1
        %v1772 = vpop.permute.xlu0 %1771
        %1773 = vrot.lane.b32.xlu0 %v1671, 1
        %v1774 = vpop.permute.xlu0 %1773
        %1775 = vrot.lane.b32.xlu0 %v1695, 1
        %v1776 = vpop.permute.xlu0 %1775
        %1777 = vrot.lane.b32.xlu0 %v1719, 1
        %v1778 = vpop.permute.xlu0 %1777
        %1779 = vrot.lane.b32.xlu0 %v1672, 1
        %v1780 = vpop.permute.xlu0 %1779
        %1781 = vrot.lane.b32.xlu0 %v1696, 1
        %v1782 = vpop.permute.xlu0 %1781
        %1783 = vrot.lane.b32.xlu0 %v1720, 1
        %v1784 = vpop.permute.xlu0 %1783
        %1785 = vrot.lane.b32.xlu0 %v1673, 1
        %v1786 = vpop.permute.xlu0 %1785
        %1787 = vrot.lane.b32.xlu0 %v1697, 1
        %v1788 = vpop.permute.xlu0 %1787
        %1789 = vrot.lane.b32.xlu0 %v1721, 1
        %v1790 = vpop.permute.xlu0 %1789
        %1791 = vrot.lane.b32.xlu0 %v1674, 1
        %v1792 = vpop.permute.xlu0 %1791
        %1793 = vrot.lane.b32.xlu0 %v1698, 1
        %v1794 = vpop.permute.xlu0 %1793
        %1795 = vrot.lane.b32.xlu0 %v1722, 1
        %v1796 = vpop.permute.xlu0 %1795
        %1797 = vrot.lane.b32.xlu0 %v1675, 1
        %v1798 = vpop.permute.xlu0 %1797
        %1799 = vrot.lane.b32.xlu0 %v1699, 1
        %v1800 = vpop.permute.xlu0 %1799
        %1801 = vrot.lane.b32.xlu0 %v1723, 1
        %v1802 = vpop.permute.xlu0 %1801
        %1803 = vrot.lane.b32.xlu0 %v1676, 1
        %v1804 = vpop.permute.xlu0 %1803
        %1805 = vrot.lane.b32.xlu0 %v1700, 1
        %v1806 = vpop.permute.xlu0 %1805
        %1807 = vrot.lane.b32.xlu0 %v1724, 1
        %v1808 = vpop.permute.xlu0 %1807
        %1809 = vrot.lane.b32.xlu0 %v1677, 1
        %v1810 = vpop.permute.xlu0 %1809
        %1811 = vrot.lane.b32.xlu0 %v1701, 1
        %v1812 = vpop.permute.xlu0 %1811
        %1813 = vrot.lane.b32.xlu0 %v1725, 1
        %v1814 = vpop.permute.xlu0 %1813
        %1815 = vrot.lane.b32.xlu0 %v1678, 1
        %v1816 = vpop.permute.xlu0 %1815
        %1817 = vrot.lane.b32.xlu0 %v1702, 1
        %v1818 = vpop.permute.xlu0 %1817
        %1819 = vrot.lane.b32.xlu0 %v1726, 1
        %v1820 = vpop.permute.xlu0 %1819
        %1821 = vrot.lane.b32.xlu0 %v1679, 1
        %v1822 = vpop.permute.xlu0 %1821
        %1823 = vrot.lane.b32.xlu0 %v1703, 1
        %v1824 = vpop.permute.xlu0 %1823
        %1825 = vrot.lane.b32.xlu0 %v1727, 1
        %v1826 = vpop.permute.xlu0 %1825
        %1827 = vrot.lane.b32.xlu0 %v1680, 1
        %v1828 = vpop.permute.xlu0 %1827
        %1829 = vrot.lane.b32.xlu0 %v1704, 1
        %v1830 = vpop.permute.xlu0 %1829
        %1831 = vrot.lane.b32.xlu0 %v1728, 1
        %v1832 = vpop.permute.xlu0 %1831
        %1833 = vrot.lane.b32.xlu0 %v1681, 1
        %v1834 = vpop.permute.xlu0 %1833
        %1835 = vrot.lane.b32.xlu0 %v1705, 1
        %v1836 = vpop.permute.xlu0 %1835
        %1837 = vrot.lane.b32.xlu0 %v1729, 1
        %v1838 = vpop.permute.xlu0 %1837
        %1839 = vrot.lane.b32.xlu0 %v1682, 1
        %v1840 = vpop.permute.xlu0 %1839
        %1841 = vrot.lane.b32.xlu0 %v1706, 1
        %v1842 = vpop.permute.xlu0 %1841
        %1843 = vrot.lane.b32.xlu0 %v1730, 1
        %v1844 = vpop.permute.xlu0 %1843
        %1845 = vrot.lane.b32.xlu0 %v1683, 1
        %v1846 = vpop.permute.xlu0 %1845
        %1847 = vrot.lane.b32.xlu0 %v1707, 1
        %v1848 = vpop.permute.xlu0 %1847
        %1849 = vrot.lane.b32.xlu0 %v1731, 1
        %v1850 = vpop.permute.xlu0 %1849
        %1851 = vrot.lane.b32.xlu0 %v1684, 1
        %v1852 = vpop.permute.xlu0 %1851
        %1853 = vrot.lane.b32.xlu0 %v1708, 1
        %v1854 = vpop.permute.xlu0 %1853
        %1855 = vrot.lane.b32.xlu0 %v1732, 1
        %v1856 = vpop.permute.xlu0 %1855
        %1857 = vrot.lane.b32.xlu0 %v1685, 1
        %v1858 = vpop.permute.xlu0 %1857
        %1859 = vrot.lane.b32.xlu0 %v1709, 1
        %v1860 = vpop.permute.xlu0 %1859
        %1861 = vrot.lane.b32.xlu0 %v1733, 1
        %v1862 = vpop.permute.xlu0 %1861
        %1863 = vrot.lane.b32.xlu0 %v1686, 1
        %v1864 = vpop.permute.xlu0 %1863
        %1865 = vrot.lane.b32.xlu0 %v1710, 1
        %v1866 = vpop.permute.xlu0 %1865
        %1867 = vrot.lane.b32.xlu0 %v1734, 1
        %v1868 = vpop.permute.xlu0 %1867
        %1869 = vrot.lane.b32.xlu0 %v1687, 1
        %v1870 = vpop.permute.xlu0 %1869
        %1871 = vrot.lane.b32.xlu0 %v1711, 1
        %v1872 = vpop.permute.xlu0 %1871
        %1873 = vrot.lane.b32.xlu0 %v1735, 1
        %v1874 = vpop.permute.xlu0 %1873
        %1875 = vrot.lane.b32.xlu0 %v1688, 1
        %v1876 = vpop.permute.xlu0 %1875
        %1877 = vrot.lane.b32.xlu0 %v1712, 1
        %v1878 = vpop.permute.xlu0 %1877
        %1879 = vrot.lane.b32.xlu0 %v1736, 1
        %v1880 = vpop.permute.xlu0 %1879
        %v1881 = vsel %vm677, %v1870, %v1876
        %v1882 = vsel %vm677, %v1872, %v1878
        %v1883 = vsel %vm677, %v1874, %v1880
        %v1884 = vsel %vm677, %v1864, %v1870
        %v1885 = vsel %vm677, %v1866, %v1872
        %v1886 = vsel %vm677, %v1868, %v1874
        %v1887 = vsel %vm677, %v1858, %v1864
        %v1888 = vsel %vm677, %v1860, %v1866
        %v1889 = vsel %vm677, %v1862, %v1868
        %v1890 = vsel %vm677, %v1852, %v1858
        %v1891 = vsel %vm677, %v1854, %v1860
        %v1892 = vsel %vm677, %v1856, %v1862
        %v1893 = vsel %vm677, %v1846, %v1852
        %v1894 = vsel %vm677, %v1848, %v1854
        %v1895 = vsel %vm677, %v1850, %v1856
        %v1896 = vsel %vm677, %v1840, %v1846
        %v1897 = vsel %vm677, %v1842, %v1848
        %v1898 = vsel %vm677, %v1844, %v1850
        %v1899 = vsel %vm677, %v1834, %v1840
        %v1900 = vsel %vm677, %v1836, %v1842
        %v1901 = vsel %vm677, %v1838, %v1844
        %v1902 = vsel %vm677, %v1828, %v1834
        %v1903 = vsel %vm677, %v1830, %v1836
        %v1904 = vsel %vm677, %v1832, %v1838
        %v1905 = vsel %vm677, %v1822, %v1828
        %v1906 = vsel %vm677, %v1824, %v1830
        %v1907 = vsel %vm677, %v1826, %v1832
        %v1908 = vsel %vm677, %v1816, %v1822
        %v1909 = vsel %vm677, %v1818, %v1824
        %v1910 = vsel %vm677, %v1820, %v1826
        %v1911 = vsel %vm677, %v1810, %v1816
        %v1912 = vsel %vm677, %v1812, %v1818
        %v1913 = vsel %vm677, %v1814, %v1820
        %v1914 = vsel %vm677, %v1804, %v1810
        %v1915 = vsel %vm677, %v1806, %v1812
        %v1916 = vsel %vm677, %v1808, %v1814
        %v1917 = vsel %vm677, %v1798, %v1804
        %v1918 = vsel %vm677, %v1800, %v1806
        %v1919 = vsel %vm677, %v1802, %v1808
        %v1920 = vsel %vm677, %v1792, %v1798
        %v1921 = vsel %vm677, %v1794, %v1800
        %v1922 = vsel %vm677, %v1796, %v1802
        %v1923 = vsel %vm677, %v1786, %v1792
        %v1924 = vsel %vm677, %v1788, %v1794
        %v1925 = vsel %vm677, %v1790, %v1796
        %v1926 = vsel %vm677, %v1780, %v1786
        %v1927 = vsel %vm677, %v1782, %v1788
        %v1928 = vsel %vm677, %v1784, %v1790
        %v1929 = vsel %vm677, %v1774, %v1780
        %v1930 = vsel %vm677, %v1776, %v1782
        %v1931 = vsel %vm677, %v1778, %v1784
        %v1932 = vsel %vm677, %v1768, %v1774
        %v1933 = vsel %vm677, %v1770, %v1776
        %v1934 = vsel %vm677, %v1772, %v1778
        %v1935 = vsel %vm677, %v1762, %v1768
        %v1936 = vsel %vm677, %v1764, %v1770
        %v1937 = vsel %vm677, %v1766, %v1772
        %v1938 = vsel %vm677, %v1756, %v1762
        %v1939 = vsel %vm677, %v1758, %v1764
        %v1940 = vsel %vm677, %v1760, %v1766
        %v1941 = vsel %vm677, %v1750, %v1756
        %v1942 = vsel %vm677, %v1752, %v1758
        %v1943 = vsel %vm677, %v1754, %v1760
        %v1944 = vsel %vm677, %v1744, %v1750
        %v1945 = vsel %vm677, %v1746, %v1752
        %v1946 = vsel %vm677, %v1748, %v1754
        %v1947 = vsel %vm677, %v1738, %v1744
        %v1948 = vsel %vm677, %v1740, %v1746
        %v1949 = vsel %vm677, %v1742, %v1748
        %v1950 = vsel %vm677, %v1876, %v1738
        %v1951 = vsel %vm677, %v1878, %v1740
        %v1952 = vsel %vm677, %v1880, %v1742
        %v1953 = vmax.f32 %v1950, %v1665
        %v1954 = vmax.f32 %v1947, %v1666
        %v1955 = vmax.f32 %v1944, %v1667
        %v1956 = vmax.f32 %v1941, %v1668
        %v1957 = vmax.f32 %v1938, %v1669
        %v1958 = vmax.f32 %v1935, %v1670
        %v1959 = vmax.f32 %v1932, %v1671
        %v1960 = vmax.f32 %v1929, %v1672
        %v1961 = vmax.f32 %v1926, %v1673
        %v1962 = vmax.f32 %v1923, %v1674
        %v1963 = vmax.f32 %v1920, %v1675
        %v1964 = vmax.f32 %v1917, %v1676
        %v1965 = vmax.f32 %v1914, %v1677
        %v1966 = vmax.f32 %v1911, %v1678
        %v1967 = vmax.f32 %v1908, %v1679
        %v1968 = vmax.f32 %v1905, %v1680
        %v1969 = vmax.f32 %v1902, %v1681
        %v1970 = vmax.f32 %v1899, %v1682
        %v1971 = vmax.f32 %v1896, %v1683
        %v1972 = vmax.f32 %v1893, %v1684
        %v1973 = vmax.f32 %v1890, %v1685
        %v1974 = vmax.f32 %v1887, %v1686
        %v1975 = vmax.f32 %v1884, %v1687
        %v1976 = vmax.f32 %v1881, %v1688
        %v1977 = vmax.f32 %v1951, %v1689
        %v1978 = vmax.f32 %v1948, %v1690
        %v1979 = vmax.f32 %v1945, %v1691
        %v1980 = vmax.f32 %v1942, %v1692
        %v1981 = vmax.f32 %v1939, %v1693
        %v1982 = vmax.f32 %v1936, %v1694
        %v1983 = vmax.f32 %v1933, %v1695
        %v1984 = vmax.f32 %v1930, %v1696
        %v1985 = vmax.f32 %v1927, %v1697
        %v1986 = vmax.f32 %v1924, %v1698
        %v1987 = vmax.f32 %v1921, %v1699
        %v1988 = vmax.f32 %v1918, %v1700
        %v1989 = vmax.f32 %v1915, %v1701
        %v1990 = vmax.f32 %v1912, %v1702
        %v1991 = vmax.f32 %v1909, %v1703
        %v1992 = vmax.f32 %v1906, %v1704
        %v1993 = vmax.f32 %v1903, %v1705
        %v1994 = vmax.f32 %v1900, %v1706
        %v1995 = vmax.f32 %v1897, %v1707
        %v1996 = vmax.f32 %v1894, %v1708
        %v1997 = vmax.f32 %v1891, %v1709
        %v1998 = vmax.f32 %v1888, %v1710
        %v1999 = vmax.f32 %v1885, %v1711
        %v2000 = vmax.f32 %v1882, %v1712
        %v2001 = vmax.f32 %v1952, %v1713
        %v2002 = vmax.f32 %v1949, %v1714
        %v2003 = vmax.f32 %v1946, %v1715
        %v2004 = vmax.f32 %v1943, %v1716
        %v2005 = vmax.f32 %v1940, %v1717
        %v2006 = vmax.f32 %v1937, %v1718
        %v2007 = vmax.f32 %v1934, %v1719
        %v2008 = vmax.f32 %v1931, %v1720
        %v2009 = vmax.f32 %v1928, %v1721
        %v2010 = vmax.f32 %v1925, %v1722
        %v2011 = vmax.f32 %v1922, %v1723
        %v2012 = vmax.f32 %v1919, %v1724
        %v2013 = vmax.f32 %v1916, %v1725
        %v2014 = vmax.f32 %v1913, %v1726
        %v2015 = vmax.f32 %v1910, %v1727
        %v2016 = vmax.f32 %v1907, %v1728
        %v2017 = vmax.f32 %v1904, %v1729
        %v2018 = vmax.f32 %v1901, %v1730
        %v2019 = vmax.f32 %v1898, %v1731
        %v2020 = vmax.f32 %v1895, %v1732
        %v2021 = vmax.f32 %v1892, %v1733
        %v2022 = vmax.f32 %v1889, %v1734
        %v2023 = vmax.f32 %v1886, %v1735
        %v2024 = vmax.f32 %v1883, %v1736
        %2025 = vrot.lane.b32.xlu0 %v1665, 127
        %v2026 = vpop.permute.xlu0 %2025
        %2027 = vrot.lane.b32.xlu0 %v1689, 127
        %v2028 = vpop.permute.xlu0 %2027
        %2029 = vrot.lane.b32.xlu0 %v1713, 127
        %v2030 = vpop.permute.xlu0 %2029
        %2031 = vrot.lane.b32.xlu0 %v1666, 127
        %v2032 = vpop.permute.xlu0 %2031
        %2033 = vrot.lane.b32.xlu0 %v1690, 127
        %v2034 = vpop.permute.xlu0 %2033
        %2035 = vrot.lane.b32.xlu0 %v1714, 127
        %v2036 = vpop.permute.xlu0 %2035
        %2037 = vrot.lane.b32.xlu0 %v1667, 127
        %v2038 = vpop.permute.xlu0 %2037
        %2039 = vrot.lane.b32.xlu0 %v1691, 127
        %v2040 = vpop.permute.xlu0 %2039
        %2041 = vrot.lane.b32.xlu0 %v1715, 127
        %v2042 = vpop.permute.xlu0 %2041
        %2043 = vrot.lane.b32.xlu0 %v1668, 127
        %v2044 = vpop.permute.xlu0 %2043
        %2045 = vrot.lane.b32.xlu0 %v1692, 127
        %v2046 = vpop.permute.xlu0 %2045
        %2047 = vrot.lane.b32.xlu0 %v1716, 127
        %v2048 = vpop.permute.xlu0 %2047
        %2049 = vrot.lane.b32.xlu0 %v1669, 127
        %v2050 = vpop.permute.xlu0 %2049
        %2051 = vrot.lane.b32.xlu0 %v1693, 127
        %v2052 = vpop.permute.xlu0 %2051
        %2053 = vrot.lane.b32.xlu0 %v1717, 127
        %v2054 = vpop.permute.xlu0 %2053
        %2055 = vrot.lane.b32.xlu0 %v1670, 127
        %v2056 = vpop.permute.xlu0 %2055
        %2057 = vrot.lane.b32.xlu0 %v1694, 127
        %v2058 = vpop.permute.xlu0 %2057
        %2059 = vrot.lane.b32.xlu0 %v1718, 127
        %v2060 = vpop.permute.xlu0 %2059
        %2061 = vrot.lane.b32.xlu0 %v1671, 127
        %v2062 = vpop.permute.xlu0 %2061
        %2063 = vrot.lane.b32.xlu0 %v1695, 127
        %v2064 = vpop.permute.xlu0 %2063
        %2065 = vrot.lane.b32.xlu0 %v1719, 127
        %v2066 = vpop.permute.xlu0 %2065
        %2067 = vrot.lane.b32.xlu0 %v1672, 127
        %v2068 = vpop.permute.xlu0 %2067
        %2069 = vrot.lane.b32.xlu0 %v1696, 127
        %v2070 = vpop.permute.xlu0 %2069
        %2071 = vrot.lane.b32.xlu0 %v1720, 127
        %v2072 = vpop.permute.xlu0 %2071
        %2073 = vrot.lane.b32.xlu0 %v1673, 127
        %v2074 = vpop.permute.xlu0 %2073
        %2075 = vrot.lane.b32.xlu0 %v1697, 127
        %v2076 = vpop.permute.xlu0 %2075
        %2077 = vrot.lane.b32.xlu0 %v1721, 127
        %v2078 = vpop.permute.xlu0 %2077
        %2079 = vrot.lane.b32.xlu0 %v1674, 127
        %v2080 = vpop.permute.xlu0 %2079
        %2081 = vrot.lane.b32.xlu0 %v1698, 127
        %v2082 = vpop.permute.xlu0 %2081
        %2083 = vrot.lane.b32.xlu0 %v1722, 127
        %v2084 = vpop.permute.xlu0 %2083
        %2085 = vrot.lane.b32.xlu0 %v1675, 127
        %v2086 = vpop.permute.xlu0 %2085
        %2087 = vrot.lane.b32.xlu0 %v1699, 127
        %v2088 = vpop.permute.xlu0 %2087
        %2089 = vrot.lane.b32.xlu0 %v1723, 127
        %v2090 = vpop.permute.xlu0 %2089
        %2091 = vrot.lane.b32.xlu0 %v1676, 127
        %v2092 = vpop.permute.xlu0 %2091
        %2093 = vrot.lane.b32.xlu0 %v1700, 127
        %v2094 = vpop.permute.xlu0 %2093
        %2095 = vrot.lane.b32.xlu0 %v1724, 127
        %v2096 = vpop.permute.xlu0 %2095
        %2097 = vrot.lane.b32.xlu0 %v1677, 127
        %v2098 = vpop.permute.xlu0 %2097
        %2099 = vrot.lane.b32.xlu0 %v1701, 127
        %v2100 = vpop.permute.xlu0 %2099
        %2101 = vrot.lane.b32.xlu0 %v1725, 127
        %v2102 = vpop.permute.xlu0 %2101
        %2103 = vrot.lane.b32.xlu0 %v1678, 127
        %v2104 = vpop.permute.xlu0 %2103
        %2105 = vrot.lane.b32.xlu0 %v1702, 127
        %v2106 = vpop.permute.xlu0 %2105
        %2107 = vrot.lane.b32.xlu0 %v1726, 127
        %v2108 = vpop.permute.xlu0 %2107
        %2109 = vrot.lane.b32.xlu0 %v1679, 127
        %v2110 = vpop.permute.xlu0 %2109
        %2111 = vrot.lane.b32.xlu0 %v1703, 127
        %v2112 = vpop.permute.xlu0 %2111
        %2113 = vrot.lane.b32.xlu0 %v1727, 127
        %v2114 = vpop.permute.xlu0 %2113
        %2115 = vrot.lane.b32.xlu0 %v1680, 127
        %v2116 = vpop.permute.xlu0 %2115
        %2117 = vrot.lane.b32.xlu0 %v1704, 127
        %v2118 = vpop.permute.xlu0 %2117
        %2119 = vrot.lane.b32.xlu0 %v1728, 127
        %v2120 = vpop.permute.xlu0 %2119
        %2121 = vrot.lane.b32.xlu0 %v1681, 127
        %v2122 = vpop.permute.xlu0 %2121
        %2123 = vrot.lane.b32.xlu0 %v1705, 127
        %v2124 = vpop.permute.xlu0 %2123
        %2125 = vrot.lane.b32.xlu0 %v1729, 127
        %v2126 = vpop.permute.xlu0 %2125
        %2127 = vrot.lane.b32.xlu0 %v1682, 127
        %v2128 = vpop.permute.xlu0 %2127
        %2129 = vrot.lane.b32.xlu0 %v1706, 127
        %v2130 = vpop.permute.xlu0 %2129
        %2131 = vrot.lane.b32.xlu0 %v1730, 127
        %v2132 = vpop.permute.xlu0 %2131
        %2133 = vrot.lane.b32.xlu0 %v1683, 127
        %v2134 = vpop.permute.xlu0 %2133
        %2135 = vrot.lane.b32.xlu0 %v1707, 127
        %v2136 = vpop.permute.xlu0 %2135
        %2137 = vrot.lane.b32.xlu0 %v1731, 127
        %v2138 = vpop.permute.xlu0 %2137
        %2139 = vrot.lane.b32.xlu0 %v1684, 127
        %v2140 = vpop.permute.xlu0 %2139
        %2141 = vrot.lane.b32.xlu0 %v1708, 127
        %v2142 = vpop.permute.xlu0 %2141
        %2143 = vrot.lane.b32.xlu0 %v1732, 127
        %v2144 = vpop.permute.xlu0 %2143
        %2145 = vrot.lane.b32.xlu0 %v1685, 127
        %v2146 = vpop.permute.xlu0 %2145
        %2147 = vrot.lane.b32.xlu0 %v1709, 127
        %v2148 = vpop.permute.xlu0 %2147
        %2149 = vrot.lane.b32.xlu0 %v1733, 127
        %v2150 = vpop.permute.xlu0 %2149
        %2151 = vrot.lane.b32.xlu0 %v1686, 127
        %v2152 = vpop.permute.xlu0 %2151
        %2153 = vrot.lane.b32.xlu0 %v1710, 127
        %v2154 = vpop.permute.xlu0 %2153
        %2155 = vrot.lane.b32.xlu0 %v1734, 127
        %v2156 = vpop.permute.xlu0 %2155
        %2157 = vrot.lane.b32.xlu0 %v1687, 127
        %v2158 = vpop.permute.xlu0 %2157
        %2159 = vrot.lane.b32.xlu0 %v1711, 127
        %v2160 = vpop.permute.xlu0 %2159
        %2161 = vrot.lane.b32.xlu0 %v1735, 127
        %v2162 = vpop.permute.xlu0 %2161
        %2163 = vrot.lane.b32.xlu0 %v1688, 127
        %v2164 = vpop.permute.xlu0 %2163
        %2165 = vrot.lane.b32.xlu0 %v1712, 127
        %v2166 = vpop.permute.xlu0 %2165
        %2167 = vrot.lane.b32.xlu0 %v1736, 127
        %v2168 = vpop.permute.xlu0 %2167
        %v2169 = vsel %vm750, %v2158, %v2164
        %v2170 = vsel %vm750, %v2160, %v2166
        %v2171 = vsel %vm750, %v2162, %v2168
        %v2172 = vsel %vm750, %v2152, %v2158
        %v2173 = vsel %vm750, %v2154, %v2160
        %v2174 = vsel %vm750, %v2156, %v2162
        %v2175 = vsel %vm750, %v2146, %v2152
        %v2176 = vsel %vm750, %v2148, %v2154
        %v2177 = vsel %vm750, %v2150, %v2156
        %v2178 = vsel %vm750, %v2140, %v2146
        %v2179 = vsel %vm750, %v2142, %v2148
        %v2180 = vsel %vm750, %v2144, %v2150
        %v2181 = vsel %vm750, %v2134, %v2140
        %v2182 = vsel %vm750, %v2136, %v2142
        %v2183 = vsel %vm750, %v2138, %v2144
        %v2184 = vsel %vm750, %v2128, %v2134
        %v2185 = vsel %vm750, %v2130, %v2136
        %v2186 = vsel %vm750, %v2132, %v2138
        %v2187 = vsel %vm750, %v2122, %v2128
        %v2188 = vsel %vm750, %v2124, %v2130
        %v2189 = vsel %vm750, %v2126, %v2132
        %v2190 = vsel %vm750, %v2116, %v2122
        %v2191 = vsel %vm750, %v2118, %v2124
        %v2192 = vsel %vm750, %v2120, %v2126
        %v2193 = vsel %vm750, %v2110, %v2116
        %v2194 = vsel %vm750, %v2112, %v2118
        %v2195 = vsel %vm750, %v2114, %v2120
        %v2196 = vsel %vm750, %v2104, %v2110
        %v2197 = vsel %vm750, %v2106, %v2112
        %v2198 = vsel %vm750, %v2108, %v2114
        %v2199 = vsel %vm750, %v2098, %v2104
        %v2200 = vsel %vm750, %v2100, %v2106
        %v2201 = vsel %vm750, %v2102, %v2108
        %v2202 = vsel %vm750, %v2092, %v2098
        %v2203 = vsel %vm750, %v2094, %v2100
        %v2204 = vsel %vm750, %v2096, %v2102
        %v2205 = vsel %vm750, %v2086, %v2092
        %v2206 = vsel %vm750, %v2088, %v2094
        %v2207 = vsel %vm750, %v2090, %v2096
        %v2208 = vsel %vm750, %v2080, %v2086
        %v2209 = vsel %vm750, %v2082, %v2088
        %v2210 = vsel %vm750, %v2084, %v2090
        %v2211 = vsel %vm750, %v2074, %v2080
        %v2212 = vsel %vm750, %v2076, %v2082
        %v2213 = vsel %vm750, %v2078, %v2084
        %v2214 = vsel %vm750, %v2068, %v2074
        %v2215 = vsel %vm750, %v2070, %v2076
        %v2216 = vsel %vm750, %v2072, %v2078
        %v2217 = vsel %vm750, %v2062, %v2068
        %v2218 = vsel %vm750, %v2064, %v2070
        %v2219 = vsel %vm750, %v2066, %v2072
        %v2220 = vsel %vm750, %v2056, %v2062
        %v2221 = vsel %vm750, %v2058, %v2064
        %v2222 = vsel %vm750, %v2060, %v2066
        %v2223 = vsel %vm750, %v2050, %v2056
        %v2224 = vsel %vm750, %v2052, %v2058
        %v2225 = vsel %vm750, %v2054, %v2060
        %v2226 = vsel %vm750, %v2044, %v2050
        %v2227 = vsel %vm750, %v2046, %v2052
        %v2228 = vsel %vm750, %v2048, %v2054
        %v2229 = vsel %vm750, %v2038, %v2044
        %v2230 = vsel %vm750, %v2040, %v2046
        %v2231 = vsel %vm750, %v2042, %v2048
        %v2232 = vsel %vm750, %v2032, %v2038
        %v2233 = vsel %vm750, %v2034, %v2040
        %v2234 = vsel %vm750, %v2036, %v2042
        %v2235 = vsel %vm750, %v2026, %v2032
        %v2236 = vsel %vm750, %v2028, %v2034
        %v2237 = vsel %vm750, %v2030, %v2036
        %v2238 = vsel %vm750, %v2164, %v2026
        %v2239 = vsel %vm750, %v2166, %v2028
        %v2240 = vsel %vm750, %v2168, %v2030
        %v2241 = vmax.f32 %v1953, %v2235
        %v2242 = vmax.f32 %v1954, %v2232
        %v2243 = vmax.f32 %v1955, %v2229
        %v2244 = vmax.f32 %v1956, %v2226
        %v2245 = vmax.f32 %v1957, %v2223
        %v2246 = vmax.f32 %v1958, %v2220
        %v2247 = vmax.f32 %v1959, %v2217
        %v2248 = vmax.f32 %v1960, %v2214
        %v2249 = vmax.f32 %v1961, %v2211
        %v2250 = vmax.f32 %v1962, %v2208
        %v2251 = vmax.f32 %v1963, %v2205
        %v2252 = vmax.f32 %v1964, %v2202
        %v2253 = vmax.f32 %v1965, %v2199
        %v2254 = vmax.f32 %v1966, %v2196
        %v2255 = vmax.f32 %v1967, %v2193
        %v2256 = vmax.f32 %v1968, %v2190
        %v2257 = vmax.f32 %v1969, %v2187
        %v2258 = vmax.f32 %v1970, %v2184
        %v2259 = vmax.f32 %v1971, %v2181
        %v2260 = vmax.f32 %v1972, %v2178
        %v2261 = vmax.f32 %v1973, %v2175
        %v2262 = vmax.f32 %v1974, %v2172
        %v2263 = vmax.f32 %v1975, %v2169
        %v2264 = vmax.f32 %v1976, %v2238
        %v2265 = vmax.f32 %v1977, %v2236
        %v2266 = vmax.f32 %v1978, %v2233
        %v2267 = vmax.f32 %v1979, %v2230
        %v2268 = vmax.f32 %v1980, %v2227
        %v2269 = vmax.f32 %v1981, %v2224
        %v2270 = vmax.f32 %v1982, %v2221
        %v2271 = vmax.f32 %v1983, %v2218
        %v2272 = vmax.f32 %v1984, %v2215
        %v2273 = vmax.f32 %v1985, %v2212
        %v2274 = vmax.f32 %v1986, %v2209
        %v2275 = vmax.f32 %v1987, %v2206
        %v2276 = vmax.f32 %v1988, %v2203
        %v2277 = vmax.f32 %v1989, %v2200
        %v2278 = vmax.f32 %v1990, %v2197
        %v2279 = vmax.f32 %v1991, %v2194
        %v2280 = vmax.f32 %v1992, %v2191
        %v2281 = vmax.f32 %v1993, %v2188
        %v2282 = vmax.f32 %v1994, %v2185
        %v2283 = vmax.f32 %v1995, %v2182
        %v2284 = vmax.f32 %v1996, %v2179
        %v2285 = vmax.f32 %v1997, %v2176
        %v2286 = vmax.f32 %v1998, %v2173
        %v2287 = vmax.f32 %v1999, %v2170
        %v2288 = vmax.f32 %v2000, %v2239
        %v2289 = vmax.f32 %v2001, %v2237
        %v2290 = vmax.f32 %v2002, %v2234
        %v2291 = vmax.f32 %v2003, %v2231
        %v2292 = vmax.f32 %v2004, %v2228
        %v2293 = vmax.f32 %v2005, %v2225
        %v2294 = vmax.f32 %v2006, %v2222
        %v2295 = vmax.f32 %v2007, %v2219
        %v2296 = vmax.f32 %v2008, %v2216
        %v2297 = vmax.f32 %v2009, %v2213
        %v2298 = vmax.f32 %v2010, %v2210
        %v2299 = vmax.f32 %v2011, %v2207
        %v2300 = vmax.f32 %v2012, %v2204
        %v2301 = vmax.f32 %v2013, %v2201
        %v2302 = vmax.f32 %v2014, %v2198
        %v2303 = vmax.f32 %v2015, %v2195
        %v2304 = vmax.f32 %v2016, %v2192
        %v2305 = vmax.f32 %v2017, %v2189
        %v2306 = vmax.f32 %v2018, %v2186
        %v2307 = vmax.f32 %v2019, %v2183
        %v2308 = vmax.f32 %v2020, %v2180
        %v2309 = vmax.f32 %v2021, %v2177
        %v2310 = vmax.f32 %v2022, %v2174
        %v2311 = vmax.f32 %v2023, %v2171
        %v2312 = vmax.f32 %v2024, %v2240
        %vm2313 = vcmp.gt.f32.partialorder %v457, 0.5
        %vm2314 = vcmp.gt.f32.partialorder %v458, 0.5
        %vm2315 = vcmp.gt.f32.partialorder %v459, 0.5
        %vm2316 = vcmp.gt.f32.partialorder %v460, 0.5
        %vm2317 = vcmp.gt.f32.partialorder %v461, 0.5
        %vm2318 = vcmp.gt.f32.partialorder %v462, 0.5
        %vm2319 = vcmp.gt.f32.partialorder %v463, 0.5
        %vm2320 = vcmp.gt.f32.partialorder %v464, 0.5
        %vm2321 = vcmp.gt.f32.partialorder %v465, 0.5
        %vm2322 = vcmp.gt.f32.partialorder %v466, 0.5
        %vm2323 = vcmp.gt.f32.partialorder %v467, 0.5
        %vm2324 = vcmp.gt.f32.partialorder %v468, 0.5
        %vm2325 = vcmp.gt.f32.partialorder %v469, 0.5
        %vm2326 = vcmp.gt.f32.partialorder %v470, 0.5
        %vm2327 = vcmp.gt.f32.partialorder %v471, 0.5
        %vm2328 = vcmp.gt.f32.partialorder %v472, 0.5
        %vm2329 = vcmp.gt.f32.partialorder %v473, 0.5
        %vm2330 = vcmp.gt.f32.partialorder %v474, 0.5
        %vm2331 = vcmp.gt.f32.partialorder %v475, 0.5
        %vm2332 = vcmp.gt.f32.partialorder %v476, 0.5
        %vm2333 = vcmp.gt.f32.partialorder %v477, 0.5
        %vm2334 = vcmp.gt.f32.partialorder %v478, 0.5
        %vm2335 = vcmp.gt.f32.partialorder %v479, 0.5
        %vm2336 = vcmp.gt.f32.partialorder %v480, 0.5
        %v2337 = vsel %vm2313, 1, 0
        %v2338 = vsel %vm2314, 1, 0
        %v2339 = vsel %vm2315, 1, 0
        %v2340 = vsel %vm2316, 1, 0
        %v2341 = vsel %vm2317, 1, 0
        %v2342 = vsel %vm2318, 1, 0
        %v2343 = vsel %vm2319, 1, 0
        %v2344 = vsel %vm2320, 1, 0
        %v2345 = vsel %vm2321, 1, 0
        %v2346 = vsel %vm2322, 1, 0
        %v2347 = vsel %vm2323, 1, 0
        %v2348 = vsel %vm2324, 1, 0
        %v2349 = vsel %vm2325, 1, 0
        %v2350 = vsel %vm2326, 1, 0
        %v2351 = vsel %vm2327, 1, 0
        %v2352 = vsel %vm2328, 1, 0
        %v2353 = vsel %vm2329, 1, 0
        %v2354 = vsel %vm2330, 1, 0
        %v2355 = vsel %vm2331, 1, 0
        %v2356 = vsel %vm2332, 1, 0
        %v2357 = vsel %vm2333, 1, 0
        %v2358 = vsel %vm2334, 1, 0
        %v2359 = vsel %vm2335, 1, 0
        %v2360 = vsel %vm2336, 1, 0
        %v2361 = vperm.slane %v2337, 1
        %v2362 = vperm.slane %v2338, 1
        %v2363 = vperm.slane %v2339, 1
        %v2364 = vperm.slane %v2340, 1
        %v2365 = vperm.slane %v2341, 1
        %v2366 = vperm.slane %v2342, 1
        %v2367 = vperm.slane %v2343, 1
        %v2368 = vperm.slane %v2344, 1
        %v2369 = vperm.slane %v2345, 1
        %v2370 = vperm.slane %v2346, 1
        %v2371 = vperm.slane %v2347, 1
        %v2372 = vperm.slane %v2348, 1
        %v2373 = vperm.slane %v2349, 1
        %v2374 = vperm.slane %v2350, 1
        %v2375 = vperm.slane %v2351, 1
        %v2376 = vperm.slane %v2352, 1
        %v2377 = vperm.slane %v2353, 1
        %v2378 = vperm.slane %v2354, 1
        %v2379 = vperm.slane %v2355, 1
        %v2380 = vperm.slane %v2356, 1
        %v2381 = vperm.slane %v2357, 1
        %v2382 = vperm.slane %v2358, 1
        %v2383 = vperm.slane %v2359, 1
        %v2384 = vperm.slane %v2360, 1
        %vm2385 = vcmp.eq.s32.totalorder %v2361, 1
        %vm2386 = vcmp.eq.s32.totalorder %v2362, 1
        %vm2387 = vcmp.eq.s32.totalorder %v2363, 1
        %vm2388 = vcmp.eq.s32.totalorder %v2364, 1
        %vm2389 = vcmp.eq.s32.totalorder %v2365, 1
        %vm2390 = vcmp.eq.s32.totalorder %v2366, 1
        %vm2391 = vcmp.eq.s32.totalorder %v2367, 1
        %vm2392 = vcmp.eq.s32.totalorder %v2368, 1
        %vm2393 = vcmp.eq.s32.totalorder %v2369, 1
        %vm2394 = vcmp.eq.s32.totalorder %v2370, 1
        %vm2395 = vcmp.eq.s32.totalorder %v2371, 1
        %vm2396 = vcmp.eq.s32.totalorder %v2372, 1
        %vm2397 = vcmp.eq.s32.totalorder %v2373, 1
        %vm2398 = vcmp.eq.s32.totalorder %v2374, 1
        %vm2399 = vcmp.eq.s32.totalorder %v2375, 1
        %vm2400 = vcmp.eq.s32.totalorder %v2376, 1
        %vm2401 = vcmp.eq.s32.totalorder %v2377, 1
        %vm2402 = vcmp.eq.s32.totalorder %v2378, 1
        %vm2403 = vcmp.eq.s32.totalorder %v2379, 1
        %vm2404 = vcmp.eq.s32.totalorder %v2380, 1
        %vm2405 = vcmp.eq.s32.totalorder %v2381, 1
        %vm2406 = vcmp.eq.s32.totalorder %v2382, 1
        %vm2407 = vcmp.eq.s32.totalorder %v2383, 1
        %vm2408 = vcmp.eq.s32.totalorder %v2384, 1
        %v2409 = vsel %vm2385, %v2241, 0.0
        %v2410 = vsel %vm2386, %v2242, 0.0
        %v2411 = vsel %vm2387, %v2243, 0.0
        %v2412 = vsel %vm2388, %v2244, 0.0
        %v2413 = vsel %vm2389, %v2245, 0.0
        %v2414 = vsel %vm2390, %v2246, 0.0
        %v2415 = vsel %vm2391, %v2247, 0.0
        %v2416 = vsel %vm2392, %v2248, 0.0
        %v2417 = vsel %vm2393, %v2249, 0.0
        %v2418 = vsel %vm2394, %v2250, 0.0
        %v2419 = vsel %vm2395, %v2251, 0.0
        %v2420 = vsel %vm2396, %v2252, 0.0
        %v2421 = vsel %vm2397, %v2253, 0.0
        %v2422 = vsel %vm2398, %v2254, 0.0
        %v2423 = vsel %vm2399, %v2255, 0.0
        %v2424 = vsel %vm2400, %v2256, 0.0
        %v2425 = vsel %vm2401, %v2257, 0.0
        %v2426 = vsel %vm2402, %v2258, 0.0
        %v2427 = vsel %vm2403, %v2259, 0.0
        %v2428 = vsel %vm2404, %v2260, 0.0
        %v2429 = vsel %vm2405, %v2261, 0.0
        %v2430 = vsel %vm2406, %v2262, 0.0
        %v2431 = vsel %vm2407, %v2263, 0.0
        %v2432 = vsel %vm2408, %v2264, 0.0
        %v2433 = vsel %vm2385, %v2265, 0.0
        %v2434 = vsel %vm2386, %v2266, 0.0
        %v2435 = vsel %vm2387, %v2267, 0.0
        %v2436 = vsel %vm2388, %v2268, 0.0
        %v2437 = vsel %vm2389, %v2269, 0.0
        %v2438 = vsel %vm2390, %v2270, 0.0
        %v2439 = vsel %vm2391, %v2271, 0.0
        %v2440 = vsel %vm2392, %v2272, 0.0
        %v2441 = vsel %vm2393, %v2273, 0.0
        %v2442 = vsel %vm2394, %v2274, 0.0
        %v2443 = vsel %vm2395, %v2275, 0.0
        %v2444 = vsel %vm2396, %v2276, 0.0
        %v2445 = vsel %vm2397, %v2277, 0.0
        %v2446 = vsel %vm2398, %v2278, 0.0
        %v2447 = vsel %vm2399, %v2279, 0.0
        %v2448 = vsel %vm2400, %v2280, 0.0
        %v2449 = vsel %vm2401, %v2281, 0.0
        %v2450 = vsel %vm2402, %v2282, 0.0
        %v2451 = vsel %vm2403, %v2283, 0.0
        %v2452 = vsel %vm2404, %v2284, 0.0
        %v2453 = vsel %vm2405, %v2285, 0.0
        %v2454 = vsel %vm2406, %v2286, 0.0
        %v2455 = vsel %vm2407, %v2287, 0.0
        %v2456 = vsel %vm2408, %v2288, 0.0
        %v2457 = vsel %vm2385, %v2289, 0.0
        %v2458 = vsel %vm2386, %v2290, 0.0
        %v2459 = vsel %vm2387, %v2291, 0.0
        %v2460 = vsel %vm2388, %v2292, 0.0
        %v2461 = vsel %vm2389, %v2293, 0.0
        %v2462 = vsel %vm2390, %v2294, 0.0
        %v2463 = vsel %vm2391, %v2295, 0.0
        %v2464 = vsel %vm2392, %v2296, 0.0
        %v2465 = vsel %vm2393, %v2297, 0.0
        %v2466 = vsel %vm2394, %v2298, 0.0
        %v2467 = vsel %vm2395, %v2299, 0.0
        %v2468 = vsel %vm2396, %v2300, 0.0
        %v2469 = vsel %vm2397, %v2301, 0.0
        %v2470 = vsel %vm2398, %v2302, 0.0
        %v2471 = vsel %vm2399, %v2303, 0.0
        %v2472 = vsel %vm2400, %v2304, 0.0
        %v2473 = vsel %vm2401, %v2305, 0.0
        %v2474 = vsel %vm2402, %v2306, 0.0
        %v2475 = vsel %vm2403, %v2307, 0.0
        %v2476 = vsel %vm2404, %v2308, 0.0
        %v2477 = vsel %vm2405, %v2309, 0.0
        %v2478 = vsel %vm2406, %v2310, 0.0
        %v2479 = vsel %vm2407, %v2311, 0.0
        %v2480 = vsel %vm2408, %v2312, 0.0
        %2481 = vrot.lane.b32.xlu0 %v2409, 6
        %v2482 = vpop.permute.xlu0 %2481
        %2483 = vrot.lane.b32.xlu0 %v2433, 6
        %v2484 = vpop.permute.xlu0 %2483
        %2485 = vrot.lane.b32.xlu0 %v2457, 6
        %v2486 = vpop.permute.xlu0 %2485
        %2487 = vrot.lane.b32.xlu0 %v2410, 6
        %v2488 = vpop.permute.xlu0 %2487
        %2489 = vrot.lane.b32.xlu0 %v2434, 6
        %v2490 = vpop.permute.xlu0 %2489
        %2491 = vrot.lane.b32.xlu0 %v2458, 6
        %v2492 = vpop.permute.xlu0 %2491
        %2493 = vrot.lane.b32.xlu0 %v2411, 6
        %v2494 = vpop.permute.xlu0 %2493
        %2495 = vrot.lane.b32.xlu0 %v2435, 6
        %v2496 = vpop.permute.xlu0 %2495
        %2497 = vrot.lane.b32.xlu0 %v2459, 6
        %v2498 = vpop.permute.xlu0 %2497
        %2499 = vrot.lane.b32.xlu0 %v2412, 6
        %v2500 = vpop.permute.xlu0 %2499
        %2501 = vrot.lane.b32.xlu0 %v2436, 6
        %v2502 = vpop.permute.xlu0 %2501
        %2503 = vrot.lane.b32.xlu0 %v2460, 6
        %v2504 = vpop.permute.xlu0 %2503
        %2505 = vrot.lane.b32.xlu0 %v2413, 6
        %v2506 = vpop.permute.xlu0 %2505
        %2507 = vrot.lane.b32.xlu0 %v2437, 6
        %v2508 = vpop.permute.xlu0 %2507
        %2509 = vrot.lane.b32.xlu0 %v2461, 6
        %v2510 = vpop.permute.xlu0 %2509
        %2511 = vrot.lane.b32.xlu0 %v2414, 6
        %v2512 = vpop.permute.xlu0 %2511
        %2513 = vrot.lane.b32.xlu0 %v2438, 6
        %v2514 = vpop.permute.xlu0 %2513
        %2515 = vrot.lane.b32.xlu0 %v2462, 6
        %v2516 = vpop.permute.xlu0 %2515
        %2517 = vrot.lane.b32.xlu0 %v2415, 6
        %v2518 = vpop.permute.xlu0 %2517
        %2519 = vrot.lane.b32.xlu0 %v2439, 6
        %v2520 = vpop.permute.xlu0 %2519
        %2521 = vrot.lane.b32.xlu0 %v2463, 6
        %v2522 = vpop.permute.xlu0 %2521
        %2523 = vrot.lane.b32.xlu0 %v2416, 6
        %v2524 = vpop.permute.xlu0 %2523
        %2525 = vrot.lane.b32.xlu0 %v2440, 6
        %v2526 = vpop.permute.xlu0 %2525
        %2527 = vrot.lane.b32.xlu0 %v2464, 6
        %v2528 = vpop.permute.xlu0 %2527
        %2529 = vrot.lane.b32.xlu0 %v2417, 6
        %v2530 = vpop.permute.xlu0 %2529
        %2531 = vrot.lane.b32.xlu0 %v2441, 6
        %v2532 = vpop.permute.xlu0 %2531
        %2533 = vrot.lane.b32.xlu0 %v2465, 6
        %v2534 = vpop.permute.xlu0 %2533
        %2535 = vrot.lane.b32.xlu0 %v2418, 6
        %v2536 = vpop.permute.xlu0 %2535
        %2537 = vrot.lane.b32.xlu0 %v2442, 6
        %v2538 = vpop.permute.xlu0 %2537
        %2539 = vrot.lane.b32.xlu0 %v2466, 6
        %v2540 = vpop.permute.xlu0 %2539
        %2541 = vrot.lane.b32.xlu0 %v2419, 6
        %v2542 = vpop.permute.xlu0 %2541
        %2543 = vrot.lane.b32.xlu0 %v2443, 6
        %v2544 = vpop.permute.xlu0 %2543
        %2545 = vrot.lane.b32.xlu0 %v2467, 6
        %v2546 = vpop.permute.xlu0 %2545
        %2547 = vrot.lane.b32.xlu0 %v2420, 6
        %v2548 = vpop.permute.xlu0 %2547
        %2549 = vrot.lane.b32.xlu0 %v2444, 6
        %v2550 = vpop.permute.xlu0 %2549
        %2551 = vrot.lane.b32.xlu0 %v2468, 6
        %v2552 = vpop.permute.xlu0 %2551
        %2553 = vrot.lane.b32.xlu0 %v2421, 6
        %v2554 = vpop.permute.xlu0 %2553
        %2555 = vrot.lane.b32.xlu0 %v2445, 6
        %v2556 = vpop.permute.xlu0 %2555
        %2557 = vrot.lane.b32.xlu0 %v2469, 6
        %v2558 = vpop.permute.xlu0 %2557
        %2559 = vrot.lane.b32.xlu0 %v2422, 6
        %v2560 = vpop.permute.xlu0 %2559
        %2561 = vrot.lane.b32.xlu0 %v2446, 6
        %v2562 = vpop.permute.xlu0 %2561
        %2563 = vrot.lane.b32.xlu0 %v2470, 6
        %v2564 = vpop.permute.xlu0 %2563
        %2565 = vrot.lane.b32.xlu0 %v2423, 6
        %v2566 = vpop.permute.xlu0 %2565
        %2567 = vrot.lane.b32.xlu0 %v2447, 6
        %v2568 = vpop.permute.xlu0 %2567
        %2569 = vrot.lane.b32.xlu0 %v2471, 6
        %v2570 = vpop.permute.xlu0 %2569
        %2571 = vrot.lane.b32.xlu0 %v2424, 6
        %v2572 = vpop.permute.xlu0 %2571
        %2573 = vrot.lane.b32.xlu0 %v2448, 6
        %v2574 = vpop.permute.xlu0 %2573
        %2575 = vrot.lane.b32.xlu0 %v2472, 6
        %v2576 = vpop.permute.xlu0 %2575
        %2577 = vrot.lane.b32.xlu0 %v2425, 6
        %v2578 = vpop.permute.xlu0 %2577
        %2579 = vrot.lane.b32.xlu0 %v2449, 6
        %v2580 = vpop.permute.xlu0 %2579
        %2581 = vrot.lane.b32.xlu0 %v2473, 6
        %v2582 = vpop.permute.xlu0 %2581
        %2583 = vrot.lane.b32.xlu0 %v2426, 6
        %v2584 = vpop.permute.xlu0 %2583
        %2585 = vrot.lane.b32.xlu0 %v2450, 6
        %v2586 = vpop.permute.xlu0 %2585
        %2587 = vrot.lane.b32.xlu0 %v2474, 6
        %v2588 = vpop.permute.xlu0 %2587
        %2589 = vrot.lane.b32.xlu0 %v2427, 6
        %v2590 = vpop.permute.xlu0 %2589
        %2591 = vrot.lane.b32.xlu0 %v2451, 6
        %v2592 = vpop.permute.xlu0 %2591
        %2593 = vrot.lane.b32.xlu0 %v2475, 6
        %v2594 = vpop.permute.xlu0 %2593
        %2595 = vrot.lane.b32.xlu0 %v2428, 6
        %v2596 = vpop.permute.xlu0 %2595
        %2597 = vrot.lane.b32.xlu0 %v2452, 6
        %v2598 = vpop.permute.xlu0 %2597
        %2599 = vrot.lane.b32.xlu0 %v2476, 6
        %v2600 = vpop.permute.xlu0 %2599
        %2601 = vrot.lane.b32.xlu0 %v2429, 6
        %v2602 = vpop.permute.xlu0 %2601
        %2603 = vrot.lane.b32.xlu0 %v2453, 6
        %v2604 = vpop.permute.xlu0 %2603
        %2605 = vrot.lane.b32.xlu0 %v2477, 6
        %v2606 = vpop.permute.xlu0 %2605
        %2607 = vrot.lane.b32.xlu0 %v2430, 6
        %v2608 = vpop.permute.xlu0 %2607
        %2609 = vrot.lane.b32.xlu0 %v2454, 6
        %v2610 = vpop.permute.xlu0 %2609
        %2611 = vrot.lane.b32.xlu0 %v2478, 6
        %v2612 = vpop.permute.xlu0 %2611
        %2613 = vrot.lane.b32.xlu0 %v2431, 6
        %v2614 = vpop.permute.xlu0 %2613
        %2615 = vrot.lane.b32.xlu0 %v2455, 6
        %v2616 = vpop.permute.xlu0 %2615
        %2617 = vrot.lane.b32.xlu0 %v2479, 6
        %v2618 = vpop.permute.xlu0 %2617
        %2619 = vrot.lane.b32.xlu0 %v2432, 6
        %v2620 = vpop.permute.xlu0 %2619
        %2621 = vrot.lane.b32.xlu0 %v2456, 6
        %v2622 = vpop.permute.xlu0 %2621
        %2623 = vrot.lane.b32.xlu0 %v2480, 6
        %v2624 = vpop.permute.xlu0 %2623
        %vm2625 = vcmp.lt.s32.totalorder %v530, 6
        %v2626 = vsel %vm2625, %v2614, %v2620
        %v2627 = vsel %vm2625, %v2616, %v2622
        %v2628 = vsel %vm2625, %v2618, %v2624
        %v2629 = vsel %vm2625, %v2608, %v2614
        %v2630 = vsel %vm2625, %v2610, %v2616
        %v2631 = vsel %vm2625, %v2612, %v2618
        %v2632 = vsel %vm2625, %v2602, %v2608
        %v2633 = vsel %vm2625, %v2604, %v2610
        %v2634 = vsel %vm2625, %v2606, %v2612
        %v2635 = vsel %vm2625, %v2596, %v2602
        %v2636 = vsel %vm2625, %v2598, %v2604
        %v2637 = vsel %vm2625, %v2600, %v2606
        %v2638 = vsel %vm2625, %v2590, %v2596
        %v2639 = vsel %vm2625, %v2592, %v2598
        %v2640 = vsel %vm2625, %v2594, %v2600
        %v2641 = vsel %vm2625, %v2584, %v2590
        %v2642 = vsel %vm2625, %v2586, %v2592
        %v2643 = vsel %vm2625, %v2588, %v2594
        %v2644 = vsel %vm2625, %v2578, %v2584
        %v2645 = vsel %vm2625, %v2580, %v2586
        %v2646 = vsel %vm2625, %v2582, %v2588
        %v2647 = vsel %vm2625, %v2572, %v2578
        %v2648 = vsel %vm2625, %v2574, %v2580
        %v2649 = vsel %vm2625, %v2576, %v2582
        %v2650 = vsel %vm2625, %v2566, %v2572
        %v2651 = vsel %vm2625, %v2568, %v2574
        %v2652 = vsel %vm2625, %v2570, %v2576
        %v2653 = vsel %vm2625, %v2560, %v2566
        %v2654 = vsel %vm2625, %v2562, %v2568
        %v2655 = vsel %vm2625, %v2564, %v2570
        %v2656 = vsel %vm2625, %v2554, %v2560
        %v2657 = vsel %vm2625, %v2556, %v2562
        %v2658 = vsel %vm2625, %v2558, %v2564
        %v2659 = vsel %vm2625, %v2548, %v2554
        %v2660 = vsel %vm2625, %v2550, %v2556
        %v2661 = vsel %vm2625, %v2552, %v2558
        %v2662 = vsel %vm2625, %v2542, %v2548
        %v2663 = vsel %vm2625, %v2544, %v2550
        %v2664 = vsel %vm2625, %v2546, %v2552
        %v2665 = vsel %vm2625, %v2536, %v2542
        %v2666 = vsel %vm2625, %v2538, %v2544
        %v2667 = vsel %vm2625, %v2540, %v2546
        %v2668 = vsel %vm2625, %v2530, %v2536
        %v2669 = vsel %vm2625, %v2532, %v2538
        %v2670 = vsel %vm2625, %v2534, %v2540
        %v2671 = vsel %vm2625, %v2524, %v2530
        %v2672 = vsel %vm2625, %v2526, %v2532
        %v2673 = vsel %vm2625, %v2528, %v2534
        %v2674 = vsel %vm2625, %v2518, %v2524
        %v2675 = vsel %vm2625, %v2520, %v2526
        %v2676 = vsel %vm2625, %v2522, %v2528
        %v2677 = vsel %vm2625, %v2512, %v2518
        %v2678 = vsel %vm2625, %v2514, %v2520
        %v2679 = vsel %vm2625, %v2516, %v2522
        %v2680 = vsel %vm2625, %v2506, %v2512
        %v2681 = vsel %vm2625, %v2508, %v2514
        %v2682 = vsel %vm2625, %v2510, %v2516
        %v2683 = vsel %vm2625, %v2500, %v2506
        %v2684 = vsel %vm2625, %v2502, %v2508
        %v2685 = vsel %vm2625, %v2504, %v2510
        %v2686 = vsel %vm2625, %v2494, %v2500
        %v2687 = vsel %vm2625, %v2496, %v2502
        %v2688 = vsel %vm2625, %v2498, %v2504
        %v2689 = vsel %vm2625, %v2488, %v2494
        %v2690 = vsel %vm2625, %v2490, %v2496
        %v2691 = vsel %vm2625, %v2492, %v2498
        %v2692 = vsel %vm2625, %v2482, %v2488
        %v2693 = vsel %vm2625, %v2484, %v2490
        %v2694 = vsel %vm2625, %v2486, %v2492
        %v2695 = vsel %vm2625, %v2620, %v2482
        %v2696 = vsel %vm2625, %v2622, %v2484
        %v2697 = vsel %vm2625, %v2624, %v2486
        %2698 = vrot.lane.b32.xlu0 %v2409, 4
        %v2699 = vpop.permute.xlu0 %2698
        %2700 = vrot.lane.b32.xlu0 %v2433, 4
        %v2701 = vpop.permute.xlu0 %2700
        %2702 = vrot.lane.b32.xlu0 %v2457, 4
        %v2703 = vpop.permute.xlu0 %2702
        %2704 = vrot.lane.b32.xlu0 %v2410, 4
        %v2705 = vpop.permute.xlu0 %2704
        %2706 = vrot.lane.b32.xlu0 %v2434, 4
        %v2707 = vpop.permute.xlu0 %2706
        %2708 = vrot.lane.b32.xlu0 %v2458, 4
        %v2709 = vpop.permute.xlu0 %2708
        %2710 = vrot.lane.b32.xlu0 %v2411, 4
        %v2711 = vpop.permute.xlu0 %2710
        %2712 = vrot.lane.b32.xlu0 %v2435, 4
        %v2713 = vpop.permute.xlu0 %2712
        %2714 = vrot.lane.b32.xlu0 %v2459, 4
        %v2715 = vpop.permute.xlu0 %2714
        %2716 = vrot.lane.b32.xlu0 %v2412, 4
        %v2717 = vpop.permute.xlu0 %2716
        %2718 = vrot.lane.b32.xlu0 %v2436, 4
        %v2719 = vpop.permute.xlu0 %2718
        %2720 = vrot.lane.b32.xlu0 %v2460, 4
        %v2721 = vpop.permute.xlu0 %2720
        %2722 = vrot.lane.b32.xlu0 %v2413, 4
        %v2723 = vpop.permute.xlu0 %2722
        %2724 = vrot.lane.b32.xlu0 %v2437, 4
        %v2725 = vpop.permute.xlu0 %2724
        %2726 = vrot.lane.b32.xlu0 %v2461, 4
        %v2727 = vpop.permute.xlu0 %2726
        %2728 = vrot.lane.b32.xlu0 %v2414, 4
        %v2729 = vpop.permute.xlu0 %2728
        %2730 = vrot.lane.b32.xlu0 %v2438, 4
        %v2731 = vpop.permute.xlu0 %2730
        %2732 = vrot.lane.b32.xlu0 %v2462, 4
        %v2733 = vpop.permute.xlu0 %2732
        %2734 = vrot.lane.b32.xlu0 %v2415, 4
        %v2735 = vpop.permute.xlu0 %2734
        %2736 = vrot.lane.b32.xlu0 %v2439, 4
        %v2737 = vpop.permute.xlu0 %2736
        %2738 = vrot.lane.b32.xlu0 %v2463, 4
        %v2739 = vpop.permute.xlu0 %2738
        %2740 = vrot.lane.b32.xlu0 %v2416, 4
        %v2741 = vpop.permute.xlu0 %2740
        %2742 = vrot.lane.b32.xlu0 %v2440, 4
        %v2743 = vpop.permute.xlu0 %2742
        %2744 = vrot.lane.b32.xlu0 %v2464, 4
        %v2745 = vpop.permute.xlu0 %2744
        %2746 = vrot.lane.b32.xlu0 %v2417, 4
        %v2747 = vpop.permute.xlu0 %2746
        %2748 = vrot.lane.b32.xlu0 %v2441, 4
        %v2749 = vpop.permute.xlu0 %2748
        %2750 = vrot.lane.b32.xlu0 %v2465, 4
        %v2751 = vpop.permute.xlu0 %2750
        %2752 = vrot.lane.b32.xlu0 %v2418, 4
        %v2753 = vpop.permute.xlu0 %2752
        %2754 = vrot.lane.b32.xlu0 %v2442, 4
        %v2755 = vpop.permute.xlu0 %2754
        %2756 = vrot.lane.b32.xlu0 %v2466, 4
        %v2757 = vpop.permute.xlu0 %2756
        %2758 = vrot.lane.b32.xlu0 %v2419, 4
        %v2759 = vpop.permute.xlu0 %2758
        %2760 = vrot.lane.b32.xlu0 %v2443, 4
        %v2761 = vpop.permute.xlu0 %2760
        %2762 = vrot.lane.b32.xlu0 %v2467, 4
        %v2763 = vpop.permute.xlu0 %2762
        %2764 = vrot.lane.b32.xlu0 %v2420, 4
        %v2765 = vpop.permute.xlu0 %2764
        %2766 = vrot.lane.b32.xlu0 %v2444, 4
        %v2767 = vpop.permute.xlu0 %2766
        %2768 = vrot.lane.b32.xlu0 %v2468, 4
        %v2769 = vpop.permute.xlu0 %2768
        %2770 = vrot.lane.b32.xlu0 %v2421, 4
        %v2771 = vpop.permute.xlu0 %2770
        %2772 = vrot.lane.b32.xlu0 %v2445, 4
        %v2773 = vpop.permute.xlu0 %2772
        %2774 = vrot.lane.b32.xlu0 %v2469, 4
        %v2775 = vpop.permute.xlu0 %2774
        %2776 = vrot.lane.b32.xlu0 %v2422, 4
        %v2777 = vpop.permute.xlu0 %2776
        %2778 = vrot.lane.b32.xlu0 %v2446, 4
        %v2779 = vpop.permute.xlu0 %2778
        %2780 = vrot.lane.b32.xlu0 %v2470, 4
        %v2781 = vpop.permute.xlu0 %2780
        %2782 = vrot.lane.b32.xlu0 %v2423, 4
        %v2783 = vpop.permute.xlu0 %2782
        %2784 = vrot.lane.b32.xlu0 %v2447, 4
        %v2785 = vpop.permute.xlu0 %2784
        %2786 = vrot.lane.b32.xlu0 %v2471, 4
        %v2787 = vpop.permute.xlu0 %2786
        %2788 = vrot.lane.b32.xlu0 %v2424, 4
        %v2789 = vpop.permute.xlu0 %2788
        %2790 = vrot.lane.b32.xlu0 %v2448, 4
        %v2791 = vpop.permute.xlu0 %2790
        %2792 = vrot.lane.b32.xlu0 %v2472, 4
        %v2793 = vpop.permute.xlu0 %2792
        %2794 = vrot.lane.b32.xlu0 %v2425, 4
        %v2795 = vpop.permute.xlu0 %2794
        %2796 = vrot.lane.b32.xlu0 %v2449, 4
        %v2797 = vpop.permute.xlu0 %2796
        %2798 = vrot.lane.b32.xlu0 %v2473, 4
        %v2799 = vpop.permute.xlu0 %2798
        %2800 = vrot.lane.b32.xlu0 %v2426, 4
        %v2801 = vpop.permute.xlu0 %2800
        %2802 = vrot.lane.b32.xlu0 %v2450, 4
        %v2803 = vpop.permute.xlu0 %2802
        %2804 = vrot.lane.b32.xlu0 %v2474, 4
        %v2805 = vpop.permute.xlu0 %2804
        %2806 = vrot.lane.b32.xlu0 %v2427, 4
        %v2807 = vpop.permute.xlu0 %2806
        %2808 = vrot.lane.b32.xlu0 %v2451, 4
        %v2809 = vpop.permute.xlu0 %2808
        %2810 = vrot.lane.b32.xlu0 %v2475, 4
        %v2811 = vpop.permute.xlu0 %2810
        %2812 = vrot.lane.b32.xlu0 %v2428, 4
        %v2813 = vpop.permute.xlu0 %2812
        %2814 = vrot.lane.b32.xlu0 %v2452, 4
        %v2815 = vpop.permute.xlu0 %2814
        %2816 = vrot.lane.b32.xlu0 %v2476, 4
        %v2817 = vpop.permute.xlu0 %2816
        %2818 = vrot.lane.b32.xlu0 %v2429, 4
        %v2819 = vpop.permute.xlu0 %2818
        %2820 = vrot.lane.b32.xlu0 %v2453, 4
        %v2821 = vpop.permute.xlu0 %2820
        %2822 = vrot.lane.b32.xlu0 %v2477, 4
        %v2823 = vpop.permute.xlu0 %2822
        %2824 = vrot.lane.b32.xlu0 %v2430, 4
        %v2825 = vpop.permute.xlu0 %2824
        %2826 = vrot.lane.b32.xlu0 %v2454, 4
        %v2827 = vpop.permute.xlu0 %2826
        %2828 = vrot.lane.b32.xlu0 %v2478, 4
        %v2829 = vpop.permute.xlu0 %2828
        %2830 = vrot.lane.b32.xlu0 %v2431, 4
        %v2831 = vpop.permute.xlu0 %2830
        %2832 = vrot.lane.b32.xlu0 %v2455, 4
        %v2833 = vpop.permute.xlu0 %2832
        %2834 = vrot.lane.b32.xlu0 %v2479, 4
        %v2835 = vpop.permute.xlu0 %2834
        %2836 = vrot.lane.b32.xlu0 %v2432, 4
        %v2837 = vpop.permute.xlu0 %2836
        %2838 = vrot.lane.b32.xlu0 %v2456, 4
        %v2839 = vpop.permute.xlu0 %2838
        %2840 = vrot.lane.b32.xlu0 %v2480, 4
        %v2841 = vpop.permute.xlu0 %2840
        %vm2842 = vcmp.lt.s32.totalorder %v530, 4
        %v2843 = vsel %vm2842, %v2831, %v2837
        %v2844 = vsel %vm2842, %v2833, %v2839
        %v2845 = vsel %vm2842, %v2835, %v2841
        %v2846 = vsel %vm2842, %v2825, %v2831
        %v2847 = vsel %vm2842, %v2827, %v2833
        %v2848 = vsel %vm2842, %v2829, %v2835
        %v2849 = vsel %vm2842, %v2819, %v2825
        %v2850 = vsel %vm2842, %v2821, %v2827
        %v2851 = vsel %vm2842, %v2823, %v2829
        %v2852 = vsel %vm2842, %v2813, %v2819
        %v2853 = vsel %vm2842, %v2815, %v2821
        %v2854 = vsel %vm2842, %v2817, %v2823
        %v2855 = vsel %vm2842, %v2807, %v2813
        %v2856 = vsel %vm2842, %v2809, %v2815
        %v2857 = vsel %vm2842, %v2811, %v2817
        %v2858 = vsel %vm2842, %v2801, %v2807
        %v2859 = vsel %vm2842, %v2803, %v2809
        %v2860 = vsel %vm2842, %v2805, %v2811
        %v2861 = vsel %vm2842, %v2795, %v2801
        %v2862 = vsel %vm2842, %v2797, %v2803
        %v2863 = vsel %vm2842, %v2799, %v2805
        %v2864 = vsel %vm2842, %v2789, %v2795
        %v2865 = vsel %vm2842, %v2791, %v2797
        %v2866 = vsel %vm2842, %v2793, %v2799
        %v2867 = vsel %vm2842, %v2783, %v2789
        %v2868 = vsel %vm2842, %v2785, %v2791
        %v2869 = vsel %vm2842, %v2787, %v2793
        %v2870 = vsel %vm2842, %v2777, %v2783
        %v2871 = vsel %vm2842, %v2779, %v2785
        %v2872 = vsel %vm2842, %v2781, %v2787
        %v2873 = vsel %vm2842, %v2771, %v2777
        %v2874 = vsel %vm2842, %v2773, %v2779
        %v2875 = vsel %vm2842, %v2775, %v2781
        %v2876 = vsel %vm2842, %v2765, %v2771
        %v2877 = vsel %vm2842, %v2767, %v2773
        %v2878 = vsel %vm2842, %v2769, %v2775
        %v2879 = vsel %vm2842, %v2759, %v2765
        %v2880 = vsel %vm2842, %v2761, %v2767
        %v2881 = vsel %vm2842, %v2763, %v2769
        %v2882 = vsel %vm2842, %v2753, %v2759
        %v2883 = vsel %vm2842, %v2755, %v2761
        %v2884 = vsel %vm2842, %v2757, %v2763
        %v2885 = vsel %vm2842, %v2747, %v2753
        %v2886 = vsel %vm2842, %v2749, %v2755
        %v2887 = vsel %vm2842, %v2751, %v2757
        %v2888 = vsel %vm2842, %v2741, %v2747
        %v2889 = vsel %vm2842, %v2743, %v2749
        %v2890 = vsel %vm2842, %v2745, %v2751
        %v2891 = vsel %vm2842, %v2735, %v2741
        %v2892 = vsel %vm2842, %v2737, %v2743
        %v2893 = vsel %vm2842, %v2739, %v2745
        %v2894 = vsel %vm2842, %v2729, %v2735
        %v2895 = vsel %vm2842, %v2731, %v2737
        %v2896 = vsel %vm2842, %v2733, %v2739
        %v2897 = vsel %vm2842, %v2723, %v2729
        %v2898 = vsel %vm2842, %v2725, %v2731
        %v2899 = vsel %vm2842, %v2727, %v2733
        %v2900 = vsel %vm2842, %v2717, %v2723
        %v2901 = vsel %vm2842, %v2719, %v2725
        %v2902 = vsel %vm2842, %v2721, %v2727
        %v2903 = vsel %vm2842, %v2711, %v2717
        %v2904 = vsel %vm2842, %v2713, %v2719
        %v2905 = vsel %vm2842, %v2715, %v2721
        %v2906 = vsel %vm2842, %v2705, %v2711
        %v2907 = vsel %vm2842, %v2707, %v2713
        %v2908 = vsel %vm2842, %v2709, %v2715
        %v2909 = vsel %vm2842, %v2699, %v2705
        %v2910 = vsel %vm2842, %v2701, %v2707
        %v2911 = vsel %vm2842, %v2703, %v2709
        %v2912 = vsel %vm2842, %v2837, %v2699
        %v2913 = vsel %vm2842, %v2839, %v2701
        %v2914 = vsel %vm2842, %v2841, %v2703
        %2915 = vrot.lane.b32.xlu0 %v2409, 2
        %v2916 = vpop.permute.xlu0 %2915
        %2917 = vrot.lane.b32.xlu0 %v2433, 2
        %v2918 = vpop.permute.xlu0 %2917
        %2919 = vrot.lane.b32.xlu0 %v2457, 2
        %v2920 = vpop.permute.xlu0 %2919
        %2921 = vrot.lane.b32.xlu0 %v2410, 2
        %v2922 = vpop.permute.xlu0 %2921
        %2923 = vrot.lane.b32.xlu0 %v2434, 2
        %v2924 = vpop.permute.xlu0 %2923
        %2925 = vrot.lane.b32.xlu0 %v2458, 2
        %v2926 = vpop.permute.xlu0 %2925
        %2927 = vrot.lane.b32.xlu0 %v2411, 2
        %v2928 = vpop.permute.xlu0 %2927
        %2929 = vrot.lane.b32.xlu0 %v2435, 2
        %v2930 = vpop.permute.xlu0 %2929
        %2931 = vrot.lane.b32.xlu0 %v2459, 2
        %v2932 = vpop.permute.xlu0 %2931
        %2933 = vrot.lane.b32.xlu0 %v2412, 2
        %v2934 = vpop.permute.xlu0 %2933
        %2935 = vrot.lane.b32.xlu0 %v2436, 2
        %v2936 = vpop.permute.xlu0 %2935
        %2937 = vrot.lane.b32.xlu0 %v2460, 2
        %v2938 = vpop.permute.xlu0 %2937
        %2939 = vrot.lane.b32.xlu0 %v2413, 2
        %v2940 = vpop.permute.xlu0 %2939
        %2941 = vrot.lane.b32.xlu0 %v2437, 2
        %v2942 = vpop.permute.xlu0 %2941
        %2943 = vrot.lane.b32.xlu0 %v2461, 2
        %v2944 = vpop.permute.xlu0 %2943
        %2945 = vrot.lane.b32.xlu0 %v2414, 2
        %v2946 = vpop.permute.xlu0 %2945
        %2947 = vrot.lane.b32.xlu0 %v2438, 2
        %v2948 = vpop.permute.xlu0 %2947
        %2949 = vrot.lane.b32.xlu0 %v2462, 2
        %v2950 = vpop.permute.xlu0 %2949
        %2951 = vrot.lane.b32.xlu0 %v2415, 2
        %v2952 = vpop.permute.xlu0 %2951
        %2953 = vrot.lane.b32.xlu0 %v2439, 2
        %v2954 = vpop.permute.xlu0 %2953
        %2955 = vrot.lane.b32.xlu0 %v2463, 2
        %v2956 = vpop.permute.xlu0 %2955
        %2957 = vrot.lane.b32.xlu0 %v2416, 2
        %v2958 = vpop.permute.xlu0 %2957
        %2959 = vrot.lane.b32.xlu0 %v2440, 2
        %v2960 = vpop.permute.xlu0 %2959
        %2961 = vrot.lane.b32.xlu0 %v2464, 2
        %v2962 = vpop.permute.xlu0 %2961
        %2963 = vrot.lane.b32.xlu0 %v2417, 2
        %v2964 = vpop.permute.xlu0 %2963
        %2965 = vrot.lane.b32.xlu0 %v2441, 2
        %v2966 = vpop.permute.xlu0 %2965
        %2967 = vrot.lane.b32.xlu0 %v2465, 2
        %v2968 = vpop.permute.xlu0 %2967
        %2969 = vrot.lane.b32.xlu0 %v2418, 2
        %v2970 = vpop.permute.xlu0 %2969
        %2971 = vrot.lane.b32.xlu0 %v2442, 2
        %v2972 = vpop.permute.xlu0 %2971
        %2973 = vrot.lane.b32.xlu0 %v2466, 2
        %v2974 = vpop.permute.xlu0 %2973
        %2975 = vrot.lane.b32.xlu0 %v2419, 2
        %v2976 = vpop.permute.xlu0 %2975
        %2977 = vrot.lane.b32.xlu0 %v2443, 2
        %v2978 = vpop.permute.xlu0 %2977
        %2979 = vrot.lane.b32.xlu0 %v2467, 2
        %v2980 = vpop.permute.xlu0 %2979
        %2981 = vrot.lane.b32.xlu0 %v2420, 2
        %v2982 = vpop.permute.xlu0 %2981
        %2983 = vrot.lane.b32.xlu0 %v2444, 2
        %v2984 = vpop.permute.xlu0 %2983
        %2985 = vrot.lane.b32.xlu0 %v2468, 2
        %v2986 = vpop.permute.xlu0 %2985
        %2987 = vrot.lane.b32.xlu0 %v2421, 2
        %v2988 = vpop.permute.xlu0 %2987
        %2989 = vrot.lane.b32.xlu0 %v2445, 2
        %v2990 = vpop.permute.xlu0 %2989
        %2991 = vrot.lane.b32.xlu0 %v2469, 2
        %v2992 = vpop.permute.xlu0 %2991
        %2993 = vrot.lane.b32.xlu0 %v2422, 2
        %v2994 = vpop.permute.xlu0 %2993
        %2995 = vrot.lane.b32.xlu0 %v2446, 2
        %v2996 = vpop.permute.xlu0 %2995
        %2997 = vrot.lane.b32.xlu0 %v2470, 2
        %v2998 = vpop.permute.xlu0 %2997
        %2999 = vrot.lane.b32.xlu0 %v2423, 2
        %v3000 = vpop.permute.xlu0 %2999
        %3001 = vrot.lane.b32.xlu0 %v2447, 2
        %v3002 = vpop.permute.xlu0 %3001
        %3003 = vrot.lane.b32.xlu0 %v2471, 2
        %v3004 = vpop.permute.xlu0 %3003
        %3005 = vrot.lane.b32.xlu0 %v2424, 2
        %v3006 = vpop.permute.xlu0 %3005
        %3007 = vrot.lane.b32.xlu0 %v2448, 2
        %v3008 = vpop.permute.xlu0 %3007
        %3009 = vrot.lane.b32.xlu0 %v2472, 2
        %v3010 = vpop.permute.xlu0 %3009
        %3011 = vrot.lane.b32.xlu0 %v2425, 2
        %v3012 = vpop.permute.xlu0 %3011
        %3013 = vrot.lane.b32.xlu0 %v2449, 2
        %v3014 = vpop.permute.xlu0 %3013
        %3015 = vrot.lane.b32.xlu0 %v2473, 2
        %v3016 = vpop.permute.xlu0 %3015
        %3017 = vrot.lane.b32.xlu0 %v2426, 2
        %v3018 = vpop.permute.xlu0 %3017
        %3019 = vrot.lane.b32.xlu0 %v2450, 2
        %v3020 = vpop.permute.xlu0 %3019
        %3021 = vrot.lane.b32.xlu0 %v2474, 2
        %v3022 = vpop.permute.xlu0 %3021
        %3023 = vrot.lane.b32.xlu0 %v2427, 2
        %v3024 = vpop.permute.xlu0 %3023
        %3025 = vrot.lane.b32.xlu0 %v2451, 2
        %v3026 = vpop.permute.xlu0 %3025
        %3027 = vrot.lane.b32.xlu0 %v2475, 2
        %v3028 = vpop.permute.xlu0 %3027
        %3029 = vrot.lane.b32.xlu0 %v2428, 2
        %v3030 = vpop.permute.xlu0 %3029
        %3031 = vrot.lane.b32.xlu0 %v2452, 2
        %v3032 = vpop.permute.xlu0 %3031
        %3033 = vrot.lane.b32.xlu0 %v2476, 2
        %v3034 = vpop.permute.xlu0 %3033
        %3035 = vrot.lane.b32.xlu0 %v2429, 2
        %v3036 = vpop.permute.xlu0 %3035
        %3037 = vrot.lane.b32.xlu0 %v2453, 2
        %v3038 = vpop.permute.xlu0 %3037
        %3039 = vrot.lane.b32.xlu0 %v2477, 2
        %v3040 = vpop.permute.xlu0 %3039
        %3041 = vrot.lane.b32.xlu0 %v2430, 2
        %v3042 = vpop.permute.xlu0 %3041
        %3043 = vrot.lane.b32.xlu0 %v2454, 2
        %v3044 = vpop.permute.xlu0 %3043
        %3045 = vrot.lane.b32.xlu0 %v2478, 2
        %v3046 = vpop.permute.xlu0 %3045
        %3047 = vrot.lane.b32.xlu0 %v2431, 2
        %v3048 = vpop.permute.xlu0 %3047
        %3049 = vrot.lane.b32.xlu0 %v2455, 2
        %v3050 = vpop.permute.xlu0 %3049
        %3051 = vrot.lane.b32.xlu0 %v2479, 2
        %v3052 = vpop.permute.xlu0 %3051
        %3053 = vrot.lane.b32.xlu0 %v2432, 2
        %v3054 = vpop.permute.xlu0 %3053
        %3055 = vrot.lane.b32.xlu0 %v2456, 2
        %v3056 = vpop.permute.xlu0 %3055
        %3057 = vrot.lane.b32.xlu0 %v2480, 2
        %v3058 = vpop.permute.xlu0 %3057
        %v3059 = vsel %vm604, %v3048, %v3054
        %v3060 = vsel %vm604, %v3050, %v3056
        %v3061 = vsel %vm604, %v3052, %v3058
        %v3062 = vsel %vm604, %v3042, %v3048
        %v3063 = vsel %vm604, %v3044, %v3050
        %v3064 = vsel %vm604, %v3046, %v3052
        %v3065 = vsel %vm604, %v3036, %v3042
        %v3066 = vsel %vm604, %v3038, %v3044
        %v3067 = vsel %vm604, %v3040, %v3046
        %v3068 = vsel %vm604, %v3030, %v3036
        %v3069 = vsel %vm604, %v3032, %v3038
        %v3070 = vsel %vm604, %v3034, %v3040
        %v3071 = vsel %vm604, %v3024, %v3030
        %v3072 = vsel %vm604, %v3026, %v3032
        %v3073 = vsel %vm604, %v3028, %v3034
        %v3074 = vsel %vm604, %v3018, %v3024
        %v3075 = vsel %vm604, %v3020, %v3026
        %v3076 = vsel %vm604, %v3022, %v3028
        %v3077 = vsel %vm604, %v3012, %v3018
        %v3078 = vsel %vm604, %v3014, %v3020
        %v3079 = vsel %vm604, %v3016, %v3022
        %v3080 = vsel %vm604, %v3006, %v3012
        %v3081 = vsel %vm604, %v3008, %v3014
        %v3082 = vsel %vm604, %v3010, %v3016
        %v3083 = vsel %vm604, %v3000, %v3006
        %v3084 = vsel %vm604, %v3002, %v3008
        %v3085 = vsel %vm604, %v3004, %v3010
        %v3086 = vsel %vm604, %v2994, %v3000
        %v3087 = vsel %vm604, %v2996, %v3002
        %v3088 = vsel %vm604, %v2998, %v3004
        %v3089 = vsel %vm604, %v2988, %v2994
        %v3090 = vsel %vm604, %v2990, %v2996
        %v3091 = vsel %vm604, %v2992, %v2998
        %v3092 = vsel %vm604, %v2982, %v2988
        %v3093 = vsel %vm604, %v2984, %v2990
        %v3094 = vsel %vm604, %v2986, %v2992
        %v3095 = vsel %vm604, %v2976, %v2982
        %v3096 = vsel %vm604, %v2978, %v2984
        %v3097 = vsel %vm604, %v2980, %v2986
        %v3098 = vsel %vm604, %v2970, %v2976
        %v3099 = vsel %vm604, %v2972, %v2978
        %v3100 = vsel %vm604, %v2974, %v2980
        %v3101 = vsel %vm604, %v2964, %v2970
        %v3102 = vsel %vm604, %v2966, %v2972
        %v3103 = vsel %vm604, %v2968, %v2974
        %v3104 = vsel %vm604, %v2958, %v2964
        %v3105 = vsel %vm604, %v2960, %v2966
        %v3106 = vsel %vm604, %v2962, %v2968
        %v3107 = vsel %vm604, %v2952, %v2958
        %v3108 = vsel %vm604, %v2954, %v2960
        %v3109 = vsel %vm604, %v2956, %v2962
        %v3110 = vsel %vm604, %v2946, %v2952
        %v3111 = vsel %vm604, %v2948, %v2954
        %v3112 = vsel %vm604, %v2950, %v2956
        %v3113 = vsel %vm604, %v2940, %v2946
        %v3114 = vsel %vm604, %v2942, %v2948
        %v3115 = vsel %vm604, %v2944, %v2950
        %v3116 = vsel %vm604, %v2934, %v2940
        %v3117 = vsel %vm604, %v2936, %v2942
        %v3118 = vsel %vm604, %v2938, %v2944
        %v3119 = vsel %vm604, %v2928, %v2934
        %v3120 = vsel %vm604, %v2930, %v2936
        %v3121 = vsel %vm604, %v2932, %v2938
        %v3122 = vsel %vm604, %v2922, %v2928
        %v3123 = vsel %vm604, %v2924, %v2930
        %v3124 = vsel %vm604, %v2926, %v2932
        %v3125 = vsel %vm604, %v2916, %v2922
        %v3126 = vsel %vm604, %v2918, %v2924
        %v3127 = vsel %vm604, %v2920, %v2926
        %v3128 = vsel %vm604, %v3054, %v2916
        %v3129 = vsel %vm604, %v3056, %v2918
        %v3130 = vsel %vm604, %v3058, %v2920
        %3131 = vrot.lane.b32.xlu0 %v2409, 126
        %v3132 = vpop.permute.xlu0 %3131
        %3133 = vrot.lane.b32.xlu0 %v2433, 126
        %v3134 = vpop.permute.xlu0 %3133
        %3135 = vrot.lane.b32.xlu0 %v2457, 126
        %v3136 = vpop.permute.xlu0 %3135
        %3137 = vrot.lane.b32.xlu0 %v2410, 126
        %v3138 = vpop.permute.xlu0 %3137
        %3139 = vrot.lane.b32.xlu0 %v2434, 126
        %v3140 = vpop.permute.xlu0 %3139
        %3141 = vrot.lane.b32.xlu0 %v2458, 126
        %v3142 = vpop.permute.xlu0 %3141
        %3143 = vrot.lane.b32.xlu0 %v2411, 126
        %v3144 = vpop.permute.xlu0 %3143
        %3145 = vrot.lane.b32.xlu0 %v2435, 126
        %v3146 = vpop.permute.xlu0 %3145
        %3147 = vrot.lane.b32.xlu0 %v2459, 126
        %v3148 = vpop.permute.xlu0 %3147
        %3149 = vrot.lane.b32.xlu0 %v2412, 126
        %v3150 = vpop.permute.xlu0 %3149
        %3151 = vrot.lane.b32.xlu0 %v2436, 126
        %v3152 = vpop.permute.xlu0 %3151
        %3153 = vrot.lane.b32.xlu0 %v2460, 126
        %v3154 = vpop.permute.xlu0 %3153
        %3155 = vrot.lane.b32.xlu0 %v2413, 126
        %v3156 = vpop.permute.xlu0 %3155
        %3157 = vrot.lane.b32.xlu0 %v2437, 126
        %v3158 = vpop.permute.xlu0 %3157
        %3159 = vrot.lane.b32.xlu0 %v2461, 126
        %v3160 = vpop.permute.xlu0 %3159
        %3161 = vrot.lane.b32.xlu0 %v2414, 126
        %v3162 = vpop.permute.xlu0 %3161
        %3163 = vrot.lane.b32.xlu0 %v2438, 126
        %v3164 = vpop.permute.xlu0 %3163
        %3165 = vrot.lane.b32.xlu0 %v2462, 126
        %v3166 = vpop.permute.xlu0 %3165
        %3167 = vrot.lane.b32.xlu0 %v2415, 126
        %v3168 = vpop.permute.xlu0 %3167
        %3169 = vrot.lane.b32.xlu0 %v2439, 126
        %v3170 = vpop.permute.xlu0 %3169
        %3171 = vrot.lane.b32.xlu0 %v2463, 126
        %v3172 = vpop.permute.xlu0 %3171
        %3173 = vrot.lane.b32.xlu0 %v2416, 126
        %v3174 = vpop.permute.xlu0 %3173
        %3175 = vrot.lane.b32.xlu0 %v2440, 126
        %v3176 = vpop.permute.xlu0 %3175
        %3177 = vrot.lane.b32.xlu0 %v2464, 126
        %v3178 = vpop.permute.xlu0 %3177
        %3179 = vrot.lane.b32.xlu0 %v2417, 126
        %v3180 = vpop.permute.xlu0 %3179
        %3181 = vrot.lane.b32.xlu0 %v2441, 126
        %v3182 = vpop.permute.xlu0 %3181
        %3183 = vrot.lane.b32.xlu0 %v2465, 126
        %v3184 = vpop.permute.xlu0 %3183
        %3185 = vrot.lane.b32.xlu0 %v2418, 126
        %v3186 = vpop.permute.xlu0 %3185
        %3187 = vrot.lane.b32.xlu0 %v2442, 126
        %v3188 = vpop.permute.xlu0 %3187
        %3189 = vrot.lane.b32.xlu0 %v2466, 126
        %v3190 = vpop.permute.xlu0 %3189
        %3191 = vrot.lane.b32.xlu0 %v2419, 126
        %v3192 = vpop.permute.xlu0 %3191
        %3193 = vrot.lane.b32.xlu0 %v2443, 126
        %v3194 = vpop.permute.xlu0 %3193
        %3195 = vrot.lane.b32.xlu0 %v2467, 126
        %v3196 = vpop.permute.xlu0 %3195
        %3197 = vrot.lane.b32.xlu0 %v2420, 126
        %v3198 = vpop.permute.xlu0 %3197
        %3199 = vrot.lane.b32.xlu0 %v2444, 126
        %v3200 = vpop.permute.xlu0 %3199
        %3201 = vrot.lane.b32.xlu0 %v2468, 126
        %v3202 = vpop.permute.xlu0 %3201
        %3203 = vrot.lane.b32.xlu0 %v2421, 126
        %v3204 = vpop.permute.xlu0 %3203
        %3205 = vrot.lane.b32.xlu0 %v2445, 126
        %v3206 = vpop.permute.xlu0 %3205
        %3207 = vrot.lane.b32.xlu0 %v2469, 126
        %v3208 = vpop.permute.xlu0 %3207
        %3209 = vrot.lane.b32.xlu0 %v2422, 126
        %v3210 = vpop.permute.xlu0 %3209
        %3211 = vrot.lane.b32.xlu0 %v2446, 126
        %v3212 = vpop.permute.xlu0 %3211
        %3213 = vrot.lane.b32.xlu0 %v2470, 126
        %v3214 = vpop.permute.xlu0 %3213
        %3215 = vrot.lane.b32.xlu0 %v2423, 126
        %v3216 = vpop.permute.xlu0 %3215
        %3217 = vrot.lane.b32.xlu0 %v2447, 126
        %v3218 = vpop.permute.xlu0 %3217
        %3219 = vrot.lane.b32.xlu0 %v2471, 126
        %v3220 = vpop.permute.xlu0 %3219
        %3221 = vrot.lane.b32.xlu0 %v2424, 126
        %v3222 = vpop.permute.xlu0 %3221
        %3223 = vrot.lane.b32.xlu0 %v2448, 126
        %v3224 = vpop.permute.xlu0 %3223
        %3225 = vrot.lane.b32.xlu0 %v2472, 126
        %v3226 = vpop.permute.xlu0 %3225
        %3227 = vrot.lane.b32.xlu0 %v2425, 126
        %v3228 = vpop.permute.xlu0 %3227
        %3229 = vrot.lane.b32.xlu0 %v2449, 126
        %v3230 = vpop.permute.xlu0 %3229
        %3231 = vrot.lane.b32.xlu0 %v2473, 126
        %v3232 = vpop.permute.xlu0 %3231
        %3233 = vrot.lane.b32.xlu0 %v2426, 126
        %v3234 = vpop.permute.xlu0 %3233
        %3235 = vrot.lane.b32.xlu0 %v2450, 126
        %v3236 = vpop.permute.xlu0 %3235
        %3237 = vrot.lane.b32.xlu0 %v2474, 126
        %v3238 = vpop.permute.xlu0 %3237
        %3239 = vrot.lane.b32.xlu0 %v2427, 126
        %v3240 = vpop.permute.xlu0 %3239
        %3241 = vrot.lane.b32.xlu0 %v2451, 126
        %v3242 = vpop.permute.xlu0 %3241
        %3243 = vrot.lane.b32.xlu0 %v2475, 126
        %v3244 = vpop.permute.xlu0 %3243
        %3245 = vrot.lane.b32.xlu0 %v2428, 126
        %v3246 = vpop.permute.xlu0 %3245
        %3247 = vrot.lane.b32.xlu0 %v2452, 126
        %v3248 = vpop.permute.xlu0 %3247
        %3249 = vrot.lane.b32.xlu0 %v2476, 126
        %v3250 = vpop.permute.xlu0 %3249
        %3251 = vrot.lane.b32.xlu0 %v2429, 126
        %v3252 = vpop.permute.xlu0 %3251
        %3253 = vrot.lane.b32.xlu0 %v2453, 126
        %v3254 = vpop.permute.xlu0 %3253
        %3255 = vrot.lane.b32.xlu0 %v2477, 126
        %v3256 = vpop.permute.xlu0 %3255
        %3257 = vrot.lane.b32.xlu0 %v2430, 126
        %v3258 = vpop.permute.xlu0 %3257
        %3259 = vrot.lane.b32.xlu0 %v2454, 126
        %v3260 = vpop.permute.xlu0 %3259
        %3261 = vrot.lane.b32.xlu0 %v2478, 126
        %v3262 = vpop.permute.xlu0 %3261
        %3263 = vrot.lane.b32.xlu0 %v2431, 126
        %v3264 = vpop.permute.xlu0 %3263
        %3265 = vrot.lane.b32.xlu0 %v2455, 126
        %v3266 = vpop.permute.xlu0 %3265
        %3267 = vrot.lane.b32.xlu0 %v2479, 126
        %v3268 = vpop.permute.xlu0 %3267
        %3269 = vrot.lane.b32.xlu0 %v2432, 126
        %v3270 = vpop.permute.xlu0 %3269
        %3271 = vrot.lane.b32.xlu0 %v2456, 126
        %v3272 = vpop.permute.xlu0 %3271
        %3273 = vrot.lane.b32.xlu0 %v2480, 126
        %v3274 = vpop.permute.xlu0 %3273
        %v3275 = vsel %vm823, %v3264, %v3270
        %v3276 = vsel %vm823, %v3266, %v3272
        %v3277 = vsel %vm823, %v3268, %v3274
        %v3278 = vsel %vm823, %v3258, %v3264
        %v3279 = vsel %vm823, %v3260, %v3266
        %v3280 = vsel %vm823, %v3262, %v3268
        %v3281 = vsel %vm823, %v3252, %v3258
        %v3282 = vsel %vm823, %v3254, %v3260
        %v3283 = vsel %vm823, %v3256, %v3262
        %v3284 = vsel %vm823, %v3246, %v3252
        %v3285 = vsel %vm823, %v3248, %v3254
        %v3286 = vsel %vm823, %v3250, %v3256
        %v3287 = vsel %vm823, %v3240, %v3246
        %v3288 = vsel %vm823, %v3242, %v3248
        %v3289 = vsel %vm823, %v3244, %v3250
        %v3290 = vsel %vm823, %v3234, %v3240
        %v3291 = vsel %vm823, %v3236, %v3242
        %v3292 = vsel %vm823, %v3238, %v3244
        %v3293 = vsel %vm823, %v3228, %v3234
        %v3294 = vsel %vm823, %v3230, %v3236
        %v3295 = vsel %vm823, %v3232, %v3238
        %v3296 = vsel %vm823, %v3222, %v3228
        %v3297 = vsel %vm823, %v3224, %v3230
        %v3298 = vsel %vm823, %v3226, %v3232
        %v3299 = vsel %vm823, %v3216, %v3222
        %v3300 = vsel %vm823, %v3218, %v3224
        %v3301 = vsel %vm823, %v3220, %v3226
        %v3302 = vsel %vm823, %v3210, %v3216
        %v3303 = vsel %vm823, %v3212, %v3218
        %v3304 = vsel %vm823, %v3214, %v3220
        %v3305 = vsel %vm823, %v3204, %v3210
        %v3306 = vsel %vm823, %v3206, %v3212
        %v3307 = vsel %vm823, %v3208, %v3214
        %v3308 = vsel %vm823, %v3198, %v3204
        %v3309 = vsel %vm823, %v3200, %v3206
        %v3310 = vsel %vm823, %v3202, %v3208
        %v3311 = vsel %vm823, %v3192, %v3198
        %v3312 = vsel %vm823, %v3194, %v3200
        %v3313 = vsel %vm823, %v3196, %v3202
        %v3314 = vsel %vm823, %v3186, %v3192
        %v3315 = vsel %vm823, %v3188, %v3194
        %v3316 = vsel %vm823, %v3190, %v3196
        %v3317 = vsel %vm823, %v3180, %v3186
        %v3318 = vsel %vm823, %v3182, %v3188
        %v3319 = vsel %vm823, %v3184, %v3190
        %v3320 = vsel %vm823, %v3174, %v3180
        %v3321 = vsel %vm823, %v3176, %v3182
        %v3322 = vsel %vm823, %v3178, %v3184
        %v3323 = vsel %vm823, %v3168, %v3174
        %v3324 = vsel %vm823, %v3170, %v3176
        %v3325 = vsel %vm823, %v3172, %v3178
        %v3326 = vsel %vm823, %v3162, %v3168
        %v3327 = vsel %vm823, %v3164, %v3170
        %v3328 = vsel %vm823, %v3166, %v3172
        %v3329 = vsel %vm823, %v3156, %v3162
        %v3330 = vsel %vm823, %v3158, %v3164
        %v3331 = vsel %vm823, %v3160, %v3166
        %v3332 = vsel %vm823, %v3150, %v3156
        %v3333 = vsel %vm823, %v3152, %v3158
        %v3334 = vsel %vm823, %v3154, %v3160
        %v3335 = vsel %vm823, %v3144, %v3150
        %v3336 = vsel %vm823, %v3146, %v3152
        %v3337 = vsel %vm823, %v3148, %v3154
        %v3338 = vsel %vm823, %v3138, %v3144
        %v3339 = vsel %vm823, %v3140, %v3146
        %v3340 = vsel %vm823, %v3142, %v3148
        %v3341 = vsel %vm823, %v3132, %v3138
        %v3342 = vsel %vm823, %v3134, %v3140
        %v3343 = vsel %vm823, %v3136, %v3142
        %v3344 = vsel %vm823, %v3270, %v3132
        %v3345 = vsel %vm823, %v3272, %v3134
        %v3346 = vsel %vm823, %v3274, %v3136
        %3347 = vrot.lane.b32.xlu0 %v2409, 124
        %v3348 = vpop.permute.xlu0 %3347
        %3349 = vrot.lane.b32.xlu0 %v2433, 124
        %v3350 = vpop.permute.xlu0 %3349
        %3351 = vrot.lane.b32.xlu0 %v2457, 124
        %v3352 = vpop.permute.xlu0 %3351
        %3353 = vrot.lane.b32.xlu0 %v2410, 124
        %v3354 = vpop.permute.xlu0 %3353
        %3355 = vrot.lane.b32.xlu0 %v2434, 124
        %v3356 = vpop.permute.xlu0 %3355
        %3357 = vrot.lane.b32.xlu0 %v2458, 124
        %v3358 = vpop.permute.xlu0 %3357
        %3359 = vrot.lane.b32.xlu0 %v2411, 124
        %v3360 = vpop.permute.xlu0 %3359
        %3361 = vrot.lane.b32.xlu0 %v2435, 124
        %v3362 = vpop.permute.xlu0 %3361
        %3363 = vrot.lane.b32.xlu0 %v2459, 124
        %v3364 = vpop.permute.xlu0 %3363
        %3365 = vrot.lane.b32.xlu0 %v2412, 124
        %v3366 = vpop.permute.xlu0 %3365
        %3367 = vrot.lane.b32.xlu0 %v2436, 124
        %v3368 = vpop.permute.xlu0 %3367
        %3369 = vrot.lane.b32.xlu0 %v2460, 124
        %v3370 = vpop.permute.xlu0 %3369
        %3371 = vrot.lane.b32.xlu0 %v2413, 124
        %v3372 = vpop.permute.xlu0 %3371
        %3373 = vrot.lane.b32.xlu0 %v2437, 124
        %v3374 = vpop.permute.xlu0 %3373
        %3375 = vrot.lane.b32.xlu0 %v2461, 124
        %v3376 = vpop.permute.xlu0 %3375
        %3377 = vrot.lane.b32.xlu0 %v2414, 124
        %v3378 = vpop.permute.xlu0 %3377
        %3379 = vrot.lane.b32.xlu0 %v2438, 124
        %v3380 = vpop.permute.xlu0 %3379
        %3381 = vrot.lane.b32.xlu0 %v2462, 124
        %v3382 = vpop.permute.xlu0 %3381
        %3383 = vrot.lane.b32.xlu0 %v2415, 124
        %v3384 = vpop.permute.xlu0 %3383
        %3385 = vrot.lane.b32.xlu0 %v2439, 124
        %v3386 = vpop.permute.xlu0 %3385
        %3387 = vrot.lane.b32.xlu0 %v2463, 124
        %v3388 = vpop.permute.xlu0 %3387
        %3389 = vrot.lane.b32.xlu0 %v2416, 124
        %v3390 = vpop.permute.xlu0 %3389
        %3391 = vrot.lane.b32.xlu0 %v2440, 124
        %v3392 = vpop.permute.xlu0 %3391
        %3393 = vrot.lane.b32.xlu0 %v2464, 124
        %v3394 = vpop.permute.xlu0 %3393
        %3395 = vrot.lane.b32.xlu0 %v2417, 124
        %v3396 = vpop.permute.xlu0 %3395
        %3397 = vrot.lane.b32.xlu0 %v2441, 124
        %v3398 = vpop.permute.xlu0 %3397
        %3399 = vrot.lane.b32.xlu0 %v2465, 124
        %v3400 = vpop.permute.xlu0 %3399
        %3401 = vrot.lane.b32.xlu0 %v2418, 124
        %v3402 = vpop.permute.xlu0 %3401
        %3403 = vrot.lane.b32.xlu0 %v2442, 124
        %v3404 = vpop.permute.xlu0 %3403
        %3405 = vrot.lane.b32.xlu0 %v2466, 124
        %v3406 = vpop.permute.xlu0 %3405
        %3407 = vrot.lane.b32.xlu0 %v2419, 124
        %v3408 = vpop.permute.xlu0 %3407
        %3409 = vrot.lane.b32.xlu0 %v2443, 124
        %v3410 = vpop.permute.xlu0 %3409
        %3411 = vrot.lane.b32.xlu0 %v2467, 124
        %v3412 = vpop.permute.xlu0 %3411
        %3413 = vrot.lane.b32.xlu0 %v2420, 124
        %v3414 = vpop.permute.xlu0 %3413
        %3415 = vrot.lane.b32.xlu0 %v2444, 124
        %v3416 = vpop.permute.xlu0 %3415
        %3417 = vrot.lane.b32.xlu0 %v2468, 124
        %v3418 = vpop.permute.xlu0 %3417
        %3419 = vrot.lane.b32.xlu0 %v2421, 124
        %v3420 = vpop.permute.xlu0 %3419
        %3421 = vrot.lane.b32.xlu0 %v2445, 124
        %v3422 = vpop.permute.xlu0 %3421
        %3423 = vrot.lane.b32.xlu0 %v2469, 124
        %v3424 = vpop.permute.xlu0 %3423
        %3425 = vrot.lane.b32.xlu0 %v2422, 124
        %v3426 = vpop.permute.xlu0 %3425
        %3427 = vrot.lane.b32.xlu0 %v2446, 124
        %v3428 = vpop.permute.xlu0 %3427
        %3429 = vrot.lane.b32.xlu0 %v2470, 124
        %v3430 = vpop.permute.xlu0 %3429
        %3431 = vrot.lane.b32.xlu0 %v2423, 124
        %v3432 = vpop.permute.xlu0 %3431
        %3433 = vrot.lane.b32.xlu0 %v2447, 124
        %v3434 = vpop.permute.xlu0 %3433
        %3435 = vrot.lane.b32.xlu0 %v2471, 124
        %v3436 = vpop.permute.xlu0 %3435
        %3437 = vrot.lane.b32.xlu0 %v2424, 124
        %v3438 = vpop.permute.xlu0 %3437
        %3439 = vrot.lane.b32.xlu0 %v2448, 124
        %v3440 = vpop.permute.xlu0 %3439
        %3441 = vrot.lane.b32.xlu0 %v2472, 124
        %v3442 = vpop.permute.xlu0 %3441
        %3443 = vrot.lane.b32.xlu0 %v2425, 124
        %v3444 = vpop.permute.xlu0 %3443
        %3445 = vrot.lane.b32.xlu0 %v2449, 124
        %v3446 = vpop.permute.xlu0 %3445
        %3447 = vrot.lane.b32.xlu0 %v2473, 124
        %v3448 = vpop.permute.xlu0 %3447
        %3449 = vrot.lane.b32.xlu0 %v2426, 124
        %v3450 = vpop.permute.xlu0 %3449
        %3451 = vrot.lane.b32.xlu0 %v2450, 124
        %v3452 = vpop.permute.xlu0 %3451
        %3453 = vrot.lane.b32.xlu0 %v2474, 124
        %v3454 = vpop.permute.xlu0 %3453
        %3455 = vrot.lane.b32.xlu0 %v2427, 124
        %v3456 = vpop.permute.xlu0 %3455
        %3457 = vrot.lane.b32.xlu0 %v2451, 124
        %v3458 = vpop.permute.xlu0 %3457
        %3459 = vrot.lane.b32.xlu0 %v2475, 124
        %v3460 = vpop.permute.xlu0 %3459
        %3461 = vrot.lane.b32.xlu0 %v2428, 124
        %v3462 = vpop.permute.xlu0 %3461
        %3463 = vrot.lane.b32.xlu0 %v2452, 124
        %v3464 = vpop.permute.xlu0 %3463
        %3465 = vrot.lane.b32.xlu0 %v2476, 124
        %v3466 = vpop.permute.xlu0 %3465
        %3467 = vrot.lane.b32.xlu0 %v2429, 124
        %v3468 = vpop.permute.xlu0 %3467
        %3469 = vrot.lane.b32.xlu0 %v2453, 124
        %v3470 = vpop.permute.xlu0 %3469
        %3471 = vrot.lane.b32.xlu0 %v2477, 124
        %v3472 = vpop.permute.xlu0 %3471
        %3473 = vrot.lane.b32.xlu0 %v2430, 124
        %v3474 = vpop.permute.xlu0 %3473
        %3475 = vrot.lane.b32.xlu0 %v2454, 124
        %v3476 = vpop.permute.xlu0 %3475
        %3477 = vrot.lane.b32.xlu0 %v2478, 124
        %v3478 = vpop.permute.xlu0 %3477
        %3479 = vrot.lane.b32.xlu0 %v2431, 124
        %v3480 = vpop.permute.xlu0 %3479
        %3481 = vrot.lane.b32.xlu0 %v2455, 124
        %v3482 = vpop.permute.xlu0 %3481
        %3483 = vrot.lane.b32.xlu0 %v2479, 124
        %v3484 = vpop.permute.xlu0 %3483
        %3485 = vrot.lane.b32.xlu0 %v2432, 124
        %v3486 = vpop.permute.xlu0 %3485
        %3487 = vrot.lane.b32.xlu0 %v2456, 124
        %v3488 = vpop.permute.xlu0 %3487
        %3489 = vrot.lane.b32.xlu0 %v2480, 124
        %v3490 = vpop.permute.xlu0 %3489
        %vm3491 = vcmp.lt.s32.totalorder %v530, 124
        %v3492 = vsel %vm3491, %v3480, %v3486
        %v3493 = vsel %vm3491, %v3482, %v3488
        %v3494 = vsel %vm3491, %v3484, %v3490
        %v3495 = vsel %vm3491, %v3474, %v3480
        %v3496 = vsel %vm3491, %v3476, %v3482
        %v3497 = vsel %vm3491, %v3478, %v3484
        %v3498 = vsel %vm3491, %v3468, %v3474
        %v3499 = vsel %vm3491, %v3470, %v3476
        %v3500 = vsel %vm3491, %v3472, %v3478
        %v3501 = vsel %vm3491, %v3462, %v3468
        %v3502 = vsel %vm3491, %v3464, %v3470
        %v3503 = vsel %vm3491, %v3466, %v3472
        %v3504 = vsel %vm3491, %v3456, %v3462
        %v3505 = vsel %vm3491, %v3458, %v3464
        %v3506 = vsel %vm3491, %v3460, %v3466
        %v3507 = vsel %vm3491, %v3450, %v3456
        %v3508 = vsel %vm3491, %v3452, %v3458
        %v3509 = vsel %vm3491, %v3454, %v3460
        %v3510 = vsel %vm3491, %v3444, %v3450
        %v3511 = vsel %vm3491, %v3446, %v3452
        %v3512 = vsel %vm3491, %v3448, %v3454
        %v3513 = vsel %vm3491, %v3438, %v3444
        %v3514 = vsel %vm3491, %v3440, %v3446
        %v3515 = vsel %vm3491, %v3442, %v3448
        %v3516 = vsel %vm3491, %v3432, %v3438
        %v3517 = vsel %vm3491, %v3434, %v3440
        %v3518 = vsel %vm3491, %v3436, %v3442
        %v3519 = vsel %vm3491, %v3426, %v3432
        %v3520 = vsel %vm3491, %v3428, %v3434
        %v3521 = vsel %vm3491, %v3430, %v3436
        %v3522 = vsel %vm3491, %v3420, %v3426
        %v3523 = vsel %vm3491, %v3422, %v3428
        %v3524 = vsel %vm3491, %v3424, %v3430
        %v3525 = vsel %vm3491, %v3414, %v3420
        %v3526 = vsel %vm3491, %v3416, %v3422
        %v3527 = vsel %vm3491, %v3418, %v3424
        %v3528 = vsel %vm3491, %v3408, %v3414
        %v3529 = vsel %vm3491, %v3410, %v3416
        %v3530 = vsel %vm3491, %v3412, %v3418
        %v3531 = vsel %vm3491, %v3402, %v3408
        %v3532 = vsel %vm3491, %v3404, %v3410
        %v3533 = vsel %vm3491, %v3406, %v3412
        %v3534 = vsel %vm3491, %v3396, %v3402
        %v3535 = vsel %vm3491, %v3398, %v3404
        %v3536 = vsel %vm3491, %v3400, %v3406
        %v3537 = vsel %vm3491, %v3390, %v3396
        %v3538 = vsel %vm3491, %v3392, %v3398
        %v3539 = vsel %vm3491, %v3394, %v3400
        %v3540 = vsel %vm3491, %v3384, %v3390
        %v3541 = vsel %vm3491, %v3386, %v3392
        %v3542 = vsel %vm3491, %v3388, %v3394
        %v3543 = vsel %vm3491, %v3378, %v3384
        %v3544 = vsel %vm3491, %v3380, %v3386
        %v3545 = vsel %vm3491, %v3382, %v3388
        %v3546 = vsel %vm3491, %v3372, %v3378
        %v3547 = vsel %vm3491, %v3374, %v3380
        %v3548 = vsel %vm3491, %v3376, %v3382
        %v3549 = vsel %vm3491, %v3366, %v3372
        %v3550 = vsel %vm3491, %v3368, %v3374
        %v3551 = vsel %vm3491, %v3370, %v3376
        %v3552 = vsel %vm3491, %v3360, %v3366
        %v3553 = vsel %vm3491, %v3362, %v3368
        %v3554 = vsel %vm3491, %v3364, %v3370
        %v3555 = vsel %vm3491, %v3354, %v3360
        %v3556 = vsel %vm3491, %v3356, %v3362
        %v3557 = vsel %vm3491, %v3358, %v3364
        %v3558 = vsel %vm3491, %v3348, %v3354
        %v3559 = vsel %vm3491, %v3350, %v3356
        %v3560 = vsel %vm3491, %v3352, %v3358
        %v3561 = vsel %vm3491, %v3486, %v3348
        %v3562 = vsel %vm3491, %v3488, %v3350
        %v3563 = vsel %vm3491, %v3490, %v3352
        %3564 = vrot.lane.b32.xlu0 %v2409, 122
        %v3565 = vpop.permute.xlu0 %3564
        %3566 = vrot.lane.b32.xlu0 %v2433, 122
        %v3567 = vpop.permute.xlu0 %3566
        %3568 = vrot.lane.b32.xlu0 %v2457, 122
        %v3569 = vpop.permute.xlu0 %3568
        %3570 = vrot.lane.b32.xlu0 %v2410, 122
        %v3571 = vpop.permute.xlu0 %3570
        %3572 = vrot.lane.b32.xlu0 %v2434, 122
        %v3573 = vpop.permute.xlu0 %3572
        %3574 = vrot.lane.b32.xlu0 %v2458, 122
        %v3575 = vpop.permute.xlu0 %3574
        %3576 = vrot.lane.b32.xlu0 %v2411, 122
        %v3577 = vpop.permute.xlu0 %3576
        %3578 = vrot.lane.b32.xlu0 %v2435, 122
        %v3579 = vpop.permute.xlu0 %3578
        %3580 = vrot.lane.b32.xlu0 %v2459, 122
        %v3581 = vpop.permute.xlu0 %3580
        %3582 = vrot.lane.b32.xlu0 %v2412, 122
        %v3583 = vpop.permute.xlu0 %3582
        %3584 = vrot.lane.b32.xlu0 %v2436, 122
        %v3585 = vpop.permute.xlu0 %3584
        %3586 = vrot.lane.b32.xlu0 %v2460, 122
        %v3587 = vpop.permute.xlu0 %3586
        %3588 = vrot.lane.b32.xlu0 %v2413, 122
        %v3589 = vpop.permute.xlu0 %3588
        %3590 = vrot.lane.b32.xlu0 %v2437, 122
        %v3591 = vpop.permute.xlu0 %3590
        %3592 = vrot.lane.b32.xlu0 %v2461, 122
        %v3593 = vpop.permute.xlu0 %3592
        %3594 = vrot.lane.b32.xlu0 %v2414, 122
        %v3595 = vpop.permute.xlu0 %3594
        %3596 = vrot.lane.b32.xlu0 %v2438, 122
        %v3597 = vpop.permute.xlu0 %3596
        %3598 = vrot.lane.b32.xlu0 %v2462, 122
        %v3599 = vpop.permute.xlu0 %3598
        %3600 = vrot.lane.b32.xlu0 %v2415, 122
        %v3601 = vpop.permute.xlu0 %3600
        %3602 = vrot.lane.b32.xlu0 %v2439, 122
        %v3603 = vpop.permute.xlu0 %3602
        %3604 = vrot.lane.b32.xlu0 %v2463, 122
        %v3605 = vpop.permute.xlu0 %3604
        %3606 = vrot.lane.b32.xlu0 %v2416, 122
        %v3607 = vpop.permute.xlu0 %3606
        %3608 = vrot.lane.b32.xlu0 %v2440, 122
        %v3609 = vpop.permute.xlu0 %3608
        %3610 = vrot.lane.b32.xlu0 %v2464, 122
        %v3611 = vpop.permute.xlu0 %3610
        %3612 = vrot.lane.b32.xlu0 %v2417, 122
        %v3613 = vpop.permute.xlu0 %3612
        %3614 = vrot.lane.b32.xlu0 %v2441, 122
        %v3615 = vpop.permute.xlu0 %3614
        %3616 = vrot.lane.b32.xlu0 %v2465, 122
        %v3617 = vpop.permute.xlu0 %3616
        %3618 = vrot.lane.b32.xlu0 %v2418, 122
        %v3619 = vpop.permute.xlu0 %3618
        %3620 = vrot.lane.b32.xlu0 %v2442, 122
        %v3621 = vpop.permute.xlu0 %3620
        %3622 = vrot.lane.b32.xlu0 %v2466, 122
        %v3623 = vpop.permute.xlu0 %3622
        %3624 = vrot.lane.b32.xlu0 %v2419, 122
        %v3625 = vpop.permute.xlu0 %3624
        %3626 = vrot.lane.b32.xlu0 %v2443, 122
        %v3627 = vpop.permute.xlu0 %3626
        %3628 = vrot.lane.b32.xlu0 %v2467, 122
        %v3629 = vpop.permute.xlu0 %3628
        %3630 = vrot.lane.b32.xlu0 %v2420, 122
        %v3631 = vpop.permute.xlu0 %3630
        %3632 = vrot.lane.b32.xlu0 %v2444, 122
        %v3633 = vpop.permute.xlu0 %3632
        %3634 = vrot.lane.b32.xlu0 %v2468, 122
        %v3635 = vpop.permute.xlu0 %3634
        %3636 = vrot.lane.b32.xlu0 %v2421, 122
        %v3637 = vpop.permute.xlu0 %3636
        %3638 = vrot.lane.b32.xlu0 %v2445, 122
        %v3639 = vpop.permute.xlu0 %3638
        %3640 = vrot.lane.b32.xlu0 %v2469, 122
        %v3641 = vpop.permute.xlu0 %3640
        %3642 = vrot.lane.b32.xlu0 %v2422, 122
        %v3643 = vpop.permute.xlu0 %3642
        %3644 = vrot.lane.b32.xlu0 %v2446, 122
        %v3645 = vpop.permute.xlu0 %3644
        %3646 = vrot.lane.b32.xlu0 %v2470, 122
        %v3647 = vpop.permute.xlu0 %3646
        %3648 = vrot.lane.b32.xlu0 %v2423, 122
        %v3649 = vpop.permute.xlu0 %3648
        %3650 = vrot.lane.b32.xlu0 %v2447, 122
        %v3651 = vpop.permute.xlu0 %3650
        %3652 = vrot.lane.b32.xlu0 %v2471, 122
        %v3653 = vpop.permute.xlu0 %3652
        %3654 = vrot.lane.b32.xlu0 %v2424, 122
        %v3655 = vpop.permute.xlu0 %3654
        %3656 = vrot.lane.b32.xlu0 %v2448, 122
        %v3657 = vpop.permute.xlu0 %3656
        %3658 = vrot.lane.b32.xlu0 %v2472, 122
        %v3659 = vpop.permute.xlu0 %3658
        %3660 = vrot.lane.b32.xlu0 %v2425, 122
        %v3661 = vpop.permute.xlu0 %3660
        %3662 = vrot.lane.b32.xlu0 %v2449, 122
        %v3663 = vpop.permute.xlu0 %3662
        %3664 = vrot.lane.b32.xlu0 %v2473, 122
        %v3665 = vpop.permute.xlu0 %3664
        %3666 = vrot.lane.b32.xlu0 %v2426, 122
        %v3667 = vpop.permute.xlu0 %3666
        %3668 = vrot.lane.b32.xlu0 %v2450, 122
        %v3669 = vpop.permute.xlu0 %3668
        %3670 = vrot.lane.b32.xlu0 %v2474, 122
        %v3671 = vpop.permute.xlu0 %3670
        %3672 = vrot.lane.b32.xlu0 %v2427, 122
        %v3673 = vpop.permute.xlu0 %3672
        %3674 = vrot.lane.b32.xlu0 %v2451, 122
        %v3675 = vpop.permute.xlu0 %3674
        %3676 = vrot.lane.b32.xlu0 %v2475, 122
        %v3677 = vpop.permute.xlu0 %3676
        %3678 = vrot.lane.b32.xlu0 %v2428, 122
        %v3679 = vpop.permute.xlu0 %3678
        %3680 = vrot.lane.b32.xlu0 %v2452, 122
        %v3681 = vpop.permute.xlu0 %3680
        %3682 = vrot.lane.b32.xlu0 %v2476, 122
        %v3683 = vpop.permute.xlu0 %3682
        %3684 = vrot.lane.b32.xlu0 %v2429, 122
        %v3685 = vpop.permute.xlu0 %3684
        %3686 = vrot.lane.b32.xlu0 %v2453, 122
        %v3687 = vpop.permute.xlu0 %3686
        %3688 = vrot.lane.b32.xlu0 %v2477, 122
        %v3689 = vpop.permute.xlu0 %3688
        %3690 = vrot.lane.b32.xlu0 %v2430, 122
        %v3691 = vpop.permute.xlu0 %3690
        %3692 = vrot.lane.b32.xlu0 %v2454, 122
        %v3693 = vpop.permute.xlu0 %3692
        %3694 = vrot.lane.b32.xlu0 %v2478, 122
        %v3695 = vpop.permute.xlu0 %3694
        %3696 = vrot.lane.b32.xlu0 %v2431, 122
        %v3697 = vpop.permute.xlu0 %3696
        %3698 = vrot.lane.b32.xlu0 %v2455, 122
        %v3699 = vpop.permute.xlu0 %3698
        %3700 = vrot.lane.b32.xlu0 %v2479, 122
        %v3701 = vpop.permute.xlu0 %3700
        %3702 = vrot.lane.b32.xlu0 %v2432, 122
        %v3703 = vpop.permute.xlu0 %3702
        %3704 = vrot.lane.b32.xlu0 %v2456, 122
        %v3705 = vpop.permute.xlu0 %3704
        %3706 = vrot.lane.b32.xlu0 %v2480, 122
        %v3707 = vpop.permute.xlu0 %3706
        %vm3708 = vcmp.lt.s32.totalorder %v530, 122
        %v3709 = vsel %vm3708, %v3697, %v3703
        %v3710 = vsel %vm3708, %v3699, %v3705
        %v3711 = vsel %vm3708, %v3701, %v3707
        %v3712 = vsel %vm3708, %v3691, %v3697
        %v3713 = vsel %vm3708, %v3693, %v3699
        %v3714 = vsel %vm3708, %v3695, %v3701
        %v3715 = vsel %vm3708, %v3685, %v3691
        %v3716 = vsel %vm3708, %v3687, %v3693
        %v3717 = vsel %vm3708, %v3689, %v3695
        %v3718 = vsel %vm3708, %v3679, %v3685
        %v3719 = vsel %vm3708, %v3681, %v3687
        %v3720 = vsel %vm3708, %v3683, %v3689
        %v3721 = vsel %vm3708, %v3673, %v3679
        %v3722 = vsel %vm3708, %v3675, %v3681
        %v3723 = vsel %vm3708, %v3677, %v3683
        %v3724 = vsel %vm3708, %v3667, %v3673
        %v3725 = vsel %vm3708, %v3669, %v3675
        %v3726 = vsel %vm3708, %v3671, %v3677
        %v3727 = vsel %vm3708, %v3661, %v3667
        %v3728 = vsel %vm3708, %v3663, %v3669
        %v3729 = vsel %vm3708, %v3665, %v3671
        %v3730 = vsel %vm3708, %v3655, %v3661
        %v3731 = vsel %vm3708, %v3657, %v3663
        %v3732 = vsel %vm3708, %v3659, %v3665
        %v3733 = vsel %vm3708, %v3649, %v3655
        %v3734 = vsel %vm3708, %v3651, %v3657
        %v3735 = vsel %vm3708, %v3653, %v3659
        %v3736 = vsel %vm3708, %v3643, %v3649
        %v3737 = vsel %vm3708, %v3645, %v3651
        %v3738 = vsel %vm3708, %v3647, %v3653
        %v3739 = vsel %vm3708, %v3637, %v3643
        %v3740 = vsel %vm3708, %v3639, %v3645
        %v3741 = vsel %vm3708, %v3641, %v3647
        %v3742 = vsel %vm3708, %v3631, %v3637
        %v3743 = vsel %vm3708, %v3633, %v3639
        %v3744 = vsel %vm3708, %v3635, %v3641
        %v3745 = vsel %vm3708, %v3625, %v3631
        %v3746 = vsel %vm3708, %v3627, %v3633
        %v3747 = vsel %vm3708, %v3629, %v3635
        %v3748 = vsel %vm3708, %v3619, %v3625
        %v3749 = vsel %vm3708, %v3621, %v3627
        %v3750 = vsel %vm3708, %v3623, %v3629
        %v3751 = vsel %vm3708, %v3613, %v3619
        %v3752 = vsel %vm3708, %v3615, %v3621
        %v3753 = vsel %vm3708, %v3617, %v3623
        %v3754 = vsel %vm3708, %v3607, %v3613
        %v3755 = vsel %vm3708, %v3609, %v3615
        %v3756 = vsel %vm3708, %v3611, %v3617
        %v3757 = vsel %vm3708, %v3601, %v3607
        %v3758 = vsel %vm3708, %v3603, %v3609
        %v3759 = vsel %vm3708, %v3605, %v3611
        %v3760 = vsel %vm3708, %v3595, %v3601
        %v3761 = vsel %vm3708, %v3597, %v3603
        %v3762 = vsel %vm3708, %v3599, %v3605
        %v3763 = vsel %vm3708, %v3589, %v3595
        %v3764 = vsel %vm3708, %v3591, %v3597
        %v3765 = vsel %vm3708, %v3593, %v3599
        %v3766 = vsel %vm3708, %v3583, %v3589
        %v3767 = vsel %vm3708, %v3585, %v3591
        %v3768 = vsel %vm3708, %v3587, %v3593
        %v3769 = vsel %vm3708, %v3577, %v3583
        %v3770 = vsel %vm3708, %v3579, %v3585
        %v3771 = vsel %vm3708, %v3581, %v3587
        %v3772 = vsel %vm3708, %v3571, %v3577
        %v3773 = vsel %vm3708, %v3573, %v3579
        %v3774 = vsel %vm3708, %v3575, %v3581
        %v3775 = vsel %vm3708, %v3565, %v3571
        %v3776 = vsel %vm3708, %v3567, %v3573
        %v3777 = vsel %vm3708, %v3569, %v3575
        %v3778 = vsel %vm3708, %v3703, %v3565
        %v3779 = vsel %vm3708, %v3705, %v3567
        %v3780 = vsel %vm3708, %v3707, %v3569
        %v3781 = vperm.slane %v457, 4
        %v3782 = vperm.slane %v458, 4
        %v3783 = vperm.slane %v459, 4
        %v3784 = vperm.slane %v460, 4
        %v3785 = vperm.slane %v461, 4
        %v3786 = vperm.slane %v462, 4
        %v3787 = vperm.slane %v463, 4
        %v3788 = vperm.slane %v464, 4
        %v3789 = vperm.slane %v465, 4
        %v3790 = vperm.slane %v466, 4
        %v3791 = vperm.slane %v467, 4
        %v3792 = vperm.slane %v468, 4
        %v3793 = vperm.slane %v469, 4
        %v3794 = vperm.slane %v470, 4
        %v3795 = vperm.slane %v471, 4
        %v3796 = vperm.slane %v472, 4
        %v3797 = vperm.slane %v473, 4
        %v3798 = vperm.slane %v474, 4
        %v3799 = vperm.slane %v475, 4
        %v3800 = vperm.slane %v476, 4
        %v3801 = vperm.slane %v477, 4
        %v3802 = vperm.slane %v478, 4
        %v3803 = vperm.slane %v479, 4
        %v3804 = vperm.slane %v480, 4
        %v3805 = vadd.f32 %v3128, %v3781
        %v3806 = vadd.f32 %v3125, %v3782
        %v3807 = vadd.f32 %v3122, %v3783
        %v3808 = vadd.f32 %v3119, %v3784
        %v3809 = vadd.f32 %v3116, %v3785
        %v3810 = vadd.f32 %v3113, %v3786
        %v3811 = vadd.f32 %v3110, %v3787
        %v3812 = vadd.f32 %v3107, %v3788
        %v3813 = vadd.f32 %v3104, %v3789
        %v3814 = vadd.f32 %v3101, %v3790
        %v3815 = vadd.f32 %v3098, %v3791
        %v3816 = vadd.f32 %v3095, %v3792
        %v3817 = vadd.f32 %v3092, %v3793
        %v3818 = vadd.f32 %v3089, %v3794
        %v3819 = vadd.f32 %v3086, %v3795
        %v3820 = vadd.f32 %v3083, %v3796
        %v3821 = vadd.f32 %v3080, %v3797
        %v3822 = vadd.f32 %v3077, %v3798
        %v3823 = vadd.f32 %v3074, %v3799
        %v3824 = vadd.f32 %v3071, %v3800
        %v3825 = vadd.f32 %v3068, %v3801
        %v3826 = vadd.f32 %v3065, %v3802
        %v3827 = vadd.f32 %v3062, %v3803
        %v3828 = vadd.f32 %v3059, %v3804
        %v3829 = vadd.f32 %v3129, %v3781
        %v3830 = vadd.f32 %v3126, %v3782
        %v3831 = vadd.f32 %v3123, %v3783
        %v3832 = vadd.f32 %v3120, %v3784
        %v3833 = vadd.f32 %v3117, %v3785
        %v3834 = vadd.f32 %v3114, %v3786
        %v3835 = vadd.f32 %v3111, %v3787
        %v3836 = vadd.f32 %v3108, %v3788
        %v3837 = vadd.f32 %v3105, %v3789
        %v3838 = vadd.f32 %v3102, %v3790
        %v3839 = vadd.f32 %v3099, %v3791
        %v3840 = vadd.f32 %v3096, %v3792
        %v3841 = vadd.f32 %v3093, %v3793
        %v3842 = vadd.f32 %v3090, %v3794
        %v3843 = vadd.f32 %v3087, %v3795
        %v3844 = vadd.f32 %v3084, %v3796
        %v3845 = vadd.f32 %v3081, %v3797
        %v3846 = vadd.f32 %v3078, %v3798
        %v3847 = vadd.f32 %v3075, %v3799
        %v3848 = vadd.f32 %v3072, %v3800
        %v3849 = vadd.f32 %v3069, %v3801
        %v3850 = vadd.f32 %v3066, %v3802
        %v3851 = vadd.f32 %v3063, %v3803
        %v3852 = vadd.f32 %v3060, %v3804
        %v3853 = vadd.f32 %v3130, %v3781
        %v3854 = vadd.f32 %v3127, %v3782
        %v3855 = vadd.f32 %v3124, %v3783
        %v3856 = vadd.f32 %v3121, %v3784
        %v3857 = vadd.f32 %v3118, %v3785
        %v3858 = vadd.f32 %v3115, %v3786
        %v3859 = vadd.f32 %v3112, %v3787
        %v3860 = vadd.f32 %v3109, %v3788
        %v3861 = vadd.f32 %v3106, %v3789
        %v3862 = vadd.f32 %v3103, %v3790
        %v3863 = vadd.f32 %v3100, %v3791
        %v3864 = vadd.f32 %v3097, %v3792
        %v3865 = vadd.f32 %v3094, %v3793
        %v3866 = vadd.f32 %v3091, %v3794
        %v3867 = vadd.f32 %v3088, %v3795
        %v3868 = vadd.f32 %v3085, %v3796
        %v3869 = vadd.f32 %v3082, %v3797
        %v3870 = vadd.f32 %v3079, %v3798
        %v3871 = vadd.f32 %v3076, %v3799
        %v3872 = vadd.f32 %v3073, %v3800
        %v3873 = vadd.f32 %v3070, %v3801
        %v3874 = vadd.f32 %v3067, %v3802
        %v3875 = vadd.f32 %v3064, %v3803
        %v3876 = vadd.f32 %v3061, %v3804
        %v3877 = vmax.f32 %v3805, %v2409
        %v3878 = vmax.f32 %v3806, %v2410
        %v3879 = vmax.f32 %v3807, %v2411
        %v3880 = vmax.f32 %v3808, %v2412
        %v3881 = vmax.f32 %v3809, %v2413
        %v3882 = vmax.f32 %v3810, %v2414
        %v3883 = vmax.f32 %v3811, %v2415
        %v3884 = vmax.f32 %v3812, %v2416
        %v3885 = vmax.f32 %v3813, %v2417
        %v3886 = vmax.f32 %v3814, %v2418
        %v3887 = vmax.f32 %v3815, %v2419
        %v3888 = vmax.f32 %v3816, %v2420
        %v3889 = vmax.f32 %v3817, %v2421
        %v3890 = vmax.f32 %v3818, %v2422
        %v3891 = vmax.f32 %v3819, %v2423
        %v3892 = vmax.f32 %v3820, %v2424
        %v3893 = vmax.f32 %v3821, %v2425
        %v3894 = vmax.f32 %v3822, %v2426
        %v3895 = vmax.f32 %v3823, %v2427
        %v3896 = vmax.f32 %v3824, %v2428
        %v3897 = vmax.f32 %v3825, %v2429
        %v3898 = vmax.f32 %v3826, %v2430
        %v3899 = vmax.f32 %v3827, %v2431
        %v3900 = vmax.f32 %v3828, %v2432
        %v3901 = vmax.f32 %v3829, %v2433
        %v3902 = vmax.f32 %v3830, %v2434
        %v3903 = vmax.f32 %v3831, %v2435
        %v3904 = vmax.f32 %v3832, %v2436
        %v3905 = vmax.f32 %v3833, %v2437
        %v3906 = vmax.f32 %v3834, %v2438
        %v3907 = vmax.f32 %v3835, %v2439
        %v3908 = vmax.f32 %v3836, %v2440
        %v3909 = vmax.f32 %v3837, %v2441
        %v3910 = vmax.f32 %v3838, %v2442
        %v3911 = vmax.f32 %v3839, %v2443
        %v3912 = vmax.f32 %v3840, %v2444
        %v3913 = vmax.f32 %v3841, %v2445
        %v3914 = vmax.f32 %v3842, %v2446
        %v3915 = vmax.f32 %v3843, %v2447
        %v3916 = vmax.f32 %v3844, %v2448
        %v3917 = vmax.f32 %v3845, %v2449
        %v3918 = vmax.f32 %v3846, %v2450
        %v3919 = vmax.f32 %v3847, %v2451
        %v3920 = vmax.f32 %v3848, %v2452
        %v3921 = vmax.f32 %v3849, %v2453
        %v3922 = vmax.f32 %v3850, %v2454
        %v3923 = vmax.f32 %v3851, %v2455
        %v3924 = vmax.f32 %v3852, %v2456
        %v3925 = vmax.f32 %v3853, %v2457
        %v3926 = vmax.f32 %v3854, %v2458
        %v3927 = vmax.f32 %v3855, %v2459
        %v3928 = vmax.f32 %v3856, %v2460
        %v3929 = vmax.f32 %v3857, %v2461
        %v3930 = vmax.f32 %v3858, %v2462
        %v3931 = vmax.f32 %v3859, %v2463
        %v3932 = vmax.f32 %v3860, %v2464
        %v3933 = vmax.f32 %v3861, %v2465
        %v3934 = vmax.f32 %v3862, %v2466
        %v3935 = vmax.f32 %v3863, %v2467
        %v3936 = vmax.f32 %v3864, %v2468
        %v3937 = vmax.f32 %v3865, %v2469
        %v3938 = vmax.f32 %v3866, %v2470
        %v3939 = vmax.f32 %v3867, %v2471
        %v3940 = vmax.f32 %v3868, %v2472
        %v3941 = vmax.f32 %v3869, %v2473
        %v3942 = vmax.f32 %v3870, %v2474
        %v3943 = vmax.f32 %v3871, %v2475
        %v3944 = vmax.f32 %v3872, %v2476
        %v3945 = vmax.f32 %v3873, %v2477
        %v3946 = vmax.f32 %v3874, %v2478
        %v3947 = vmax.f32 %v3875, %v2479
        %v3948 = vmax.f32 %v3876, %v2480
        %v3949 = vperm.slane %v457, 5
        %v3950 = vperm.slane %v458, 5
        %v3951 = vperm.slane %v459, 5
        %v3952 = vperm.slane %v460, 5
        %v3953 = vperm.slane %v461, 5
        %v3954 = vperm.slane %v462, 5
        %v3955 = vperm.slane %v463, 5
        %v3956 = vperm.slane %v464, 5
        %v3957 = vperm.slane %v465, 5
        %v3958 = vperm.slane %v466, 5
        %v3959 = vperm.slane %v467, 5
        %v3960 = vperm.slane %v468, 5
        %v3961 = vperm.slane %v469, 5
        %v3962 = vperm.slane %v470, 5
        %v3963 = vperm.slane %v471, 5
        %v3964 = vperm.slane %v472, 5
        %v3965 = vperm.slane %v473, 5
        %v3966 = vperm.slane %v474, 5
        %v3967 = vperm.slane %v475, 5
        %v3968 = vperm.slane %v476, 5
        %v3969 = vperm.slane %v477, 5
        %v3970 = vperm.slane %v478, 5
        %v3971 = vperm.slane %v479, 5
        %v3972 = vperm.slane %v480, 5
        %v3973 = vadd.f32 %v3341, %v3949
        %v3974 = vadd.f32 %v3338, %v3950
        %v3975 = vadd.f32 %v3335, %v3951
        %v3976 = vadd.f32 %v3332, %v3952
        %v3977 = vadd.f32 %v3329, %v3953
        %v3978 = vadd.f32 %v3326, %v3954
        %v3979 = vadd.f32 %v3323, %v3955
        %v3980 = vadd.f32 %v3320, %v3956
        %v3981 = vadd.f32 %v3317, %v3957
        %v3982 = vadd.f32 %v3314, %v3958
        %v3983 = vadd.f32 %v3311, %v3959
        %v3984 = vadd.f32 %v3308, %v3960
        %v3985 = vadd.f32 %v3305, %v3961
        %v3986 = vadd.f32 %v3302, %v3962
        %v3987 = vadd.f32 %v3299, %v3963
        %v3988 = vadd.f32 %v3296, %v3964
        %v3989 = vadd.f32 %v3293, %v3965
        %v3990 = vadd.f32 %v3290, %v3966
        %v3991 = vadd.f32 %v3287, %v3967
        %v3992 = vadd.f32 %v3284, %v3968
        %v3993 = vadd.f32 %v3281, %v3969
        %v3994 = vadd.f32 %v3278, %v3970
        %v3995 = vadd.f32 %v3275, %v3971
        %v3996 = vadd.f32 %v3344, %v3972
        %v3997 = vadd.f32 %v3342, %v3949
        %v3998 = vadd.f32 %v3339, %v3950
        %v3999 = vadd.f32 %v3336, %v3951
        %v4000 = vadd.f32 %v3333, %v3952
        %v4001 = vadd.f32 %v3330, %v3953
        %v4002 = vadd.f32 %v3327, %v3954
        %v4003 = vadd.f32 %v3324, %v3955
        %v4004 = vadd.f32 %v3321, %v3956
        %v4005 = vadd.f32 %v3318, %v3957
        %v4006 = vadd.f32 %v3315, %v3958
        %v4007 = vadd.f32 %v3312, %v3959
        %v4008 = vadd.f32 %v3309, %v3960
        %v4009 = vadd.f32 %v3306, %v3961
        %v4010 = vadd.f32 %v3303, %v3962
        %v4011 = vadd.f32 %v3300, %v3963
        %v4012 = vadd.f32 %v3297, %v3964
        %v4013 = vadd.f32 %v3294, %v3965
        %v4014 = vadd.f32 %v3291, %v3966
        %v4015 = vadd.f32 %v3288, %v3967
        %v4016 = vadd.f32 %v3285, %v3968
        %v4017 = vadd.f32 %v3282, %v3969
        %v4018 = vadd.f32 %v3279, %v3970
        %v4019 = vadd.f32 %v3276, %v3971
        %v4020 = vadd.f32 %v3345, %v3972
        %v4021 = vadd.f32 %v3343, %v3949
        %v4022 = vadd.f32 %v3340, %v3950
        %v4023 = vadd.f32 %v3337, %v3951
        %v4024 = vadd.f32 %v3334, %v3952
        %v4025 = vadd.f32 %v3331, %v3953
        %v4026 = vadd.f32 %v3328, %v3954
        %v4027 = vadd.f32 %v3325, %v3955
        %v4028 = vadd.f32 %v3322, %v3956
        %v4029 = vadd.f32 %v3319, %v3957
        %v4030 = vadd.f32 %v3316, %v3958
        %v4031 = vadd.f32 %v3313, %v3959
        %v4032 = vadd.f32 %v3310, %v3960
        %v4033 = vadd.f32 %v3307, %v3961
        %v4034 = vadd.f32 %v3304, %v3962
        %v4035 = vadd.f32 %v3301, %v3963
        %v4036 = vadd.f32 %v3298, %v3964
        %v4037 = vadd.f32 %v3295, %v3965
        %v4038 = vadd.f32 %v3292, %v3966
        %v4039 = vadd.f32 %v3289, %v3967
        %v4040 = vadd.f32 %v3286, %v3968
        %v4041 = vadd.f32 %v3283, %v3969
        %v4042 = vadd.f32 %v3280, %v3970
        %v4043 = vadd.f32 %v3277, %v3971
        %v4044 = vadd.f32 %v3346, %v3972
        %v4045 = vmax.f32 %v3877, %v3973
        %v4046 = vmax.f32 %v3878, %v3974
        %v4047 = vmax.f32 %v3879, %v3975
        %v4048 = vmax.f32 %v3880, %v3976
        %v4049 = vmax.f32 %v3881, %v3977
        %v4050 = vmax.f32 %v3882, %v3978
        %v4051 = vmax.f32 %v3883, %v3979
        %v4052 = vmax.f32 %v3884, %v3980
        %v4053 = vmax.f32 %v3885, %v3981
        %v4054 = vmax.f32 %v3886, %v3982
        %v4055 = vmax.f32 %v3887, %v3983
        %v4056 = vmax.f32 %v3888, %v3984
        %v4057 = vmax.f32 %v3889, %v3985
        %v4058 = vmax.f32 %v3890, %v3986
        %v4059 = vmax.f32 %v3891, %v3987
        %v4060 = vmax.f32 %v3892, %v3988
        %v4061 = vmax.f32 %v3893, %v3989
        %v4062 = vmax.f32 %v3894, %v3990
        %v4063 = vmax.f32 %v3895, %v3991
        %v4064 = vmax.f32 %v3896, %v3992
        %v4065 = vmax.f32 %v3897, %v3993
        %v4066 = vmax.f32 %v3898, %v3994
        %v4067 = vmax.f32 %v3899, %v3995
        %v4068 = vmax.f32 %v3900, %v3996
        %v4069 = vmax.f32 %v3901, %v3997
        %v4070 = vmax.f32 %v3902, %v3998
        %v4071 = vmax.f32 %v3903, %v3999
        %v4072 = vmax.f32 %v3904, %v4000
        %v4073 = vmax.f32 %v3905, %v4001
        %v4074 = vmax.f32 %v3906, %v4002
        %v4075 = vmax.f32 %v3907, %v4003
        %v4076 = vmax.f32 %v3908, %v4004
        %v4077 = vmax.f32 %v3909, %v4005
        %v4078 = vmax.f32 %v3910, %v4006
        %v4079 = vmax.f32 %v3911, %v4007
        %v4080 = vmax.f32 %v3912, %v4008
        %v4081 = vmax.f32 %v3913, %v4009
        %v4082 = vmax.f32 %v3914, %v4010
        %v4083 = vmax.f32 %v3915, %v4011
        %v4084 = vmax.f32 %v3916, %v4012
        %v4085 = vmax.f32 %v3917, %v4013
        %v4086 = vmax.f32 %v3918, %v4014
        %v4087 = vmax.f32 %v3919, %v4015
        %v4088 = vmax.f32 %v3920, %v4016
        %v4089 = vmax.f32 %v3921, %v4017
        %v4090 = vmax.f32 %v3922, %v4018
        %v4091 = vmax.f32 %v3923, %v4019
        %v4092 = vmax.f32 %v3924, %v4020
        %v4093 = vmax.f32 %v3925, %v4021
        %v4094 = vmax.f32 %v3926, %v4022
        %v4095 = vmax.f32 %v3927, %v4023
        %v4096 = vmax.f32 %v3928, %v4024
        %v4097 = vmax.f32 %v3929, %v4025
        %v4098 = vmax.f32 %v3930, %v4026
        %v4099 = vmax.f32 %v3931, %v4027
        %v4100 = vmax.f32 %v3932, %v4028
        %v4101 = vmax.f32 %v3933, %v4029
        %v4102 = vmax.f32 %v3934, %v4030
        %v4103 = vmax.f32 %v3935, %v4031
        %v4104 = vmax.f32 %v3936, %v4032
        %v4105 = vmax.f32 %v3937, %v4033
        %v4106 = vmax.f32 %v3938, %v4034
        %v4107 = vmax.f32 %v3939, %v4035
        %v4108 = vmax.f32 %v3940, %v4036
        %v4109 = vmax.f32 %v3941, %v4037
        %v4110 = vmax.f32 %v3942, %v4038
        %v4111 = vmax.f32 %v3943, %v4039
        %v4112 = vmax.f32 %v3944, %v4040
        %v4113 = vmax.f32 %v3945, %v4041
        %v4114 = vmax.f32 %v3946, %v4042
        %v4115 = vmax.f32 %v3947, %v4043
        %v4116 = vmax.f32 %v3948, %v4044
        %v4117 = vld [vmem:[#allocation8] sm:$0xff]
        %v4118 = vld [vmem:[#allocation8 + $0x8] sm:$0xff]
        %v4119 = vld [vmem:[#allocation8 + $0x10] sm:$0xff]
        %v4120 = vpack.c.bf16 %v2696, %v2695
        %v4121 = vpack.c.bf16 %v2693, %v2692
        %v4122 = vpack.c.bf16 %v2690, %v2689
        %v4123 = vpack.c.bf16 %v2687, %v2686
        %v4124 = vpack.c.bf16 %v2684, %v2683
        %v4125 = vpack.c.bf16 %v2681, %v2680
        %v4126 = vpack.c.bf16 %v2678, %v2677
        %v4127 = vpack.c.bf16 %v2675, %v2674
        %v4128 = vpack.c.bf16 %v2672, %v2671
        %v4129 = vpack.c.bf16 %v2669, %v2668
        %v4130 = vpack.c.bf16 %v2666, %v2665
        %v4131 = vpack.c.bf16 %v2663, %v2662
        %v4132 = vpack.c.bf16 %v2660, %v2659
        %v4133 = vpack.c.bf16 %v2657, %v2656
        %v4134 = vpack.c.bf16 %v2654, %v2653
        %v4135 = vpack.c.bf16 %v2651, %v2650
        %v4136 = vpack.c.bf16 %v2648, %v2647
        %v4137 = vpack.c.bf16 %v2645, %v2644
        %v4138 = vpack.c.bf16 %v2642, %v2641
        %v4139 = vpack.c.bf16 %v2639, %v2638
        %v4140 = vpack.c.bf16 %v2636, %v2635
        %v4141 = vpack.c.bf16 %v2633, %v2632
        %v4142 = vpack.c.bf16 %v2630, %v2629
        %v4143 = vpack.c.bf16 %v2627, %v2626
        %v4144 = vpack.c.bf16 %v2912, %v2697
        %v4145 = vpack.c.bf16 %v2909, %v2694
        %v4146 = vpack.c.bf16 %v2906, %v2691
        %v4147 = vpack.c.bf16 %v2903, %v2688
        %v4148 = vpack.c.bf16 %v2900, %v2685
        %v4149 = vpack.c.bf16 %v2897, %v2682
        %v4150 = vpack.c.bf16 %v2894, %v2679
        %v4151 = vpack.c.bf16 %v2891, %v2676
        %v4152 = vpack.c.bf16 %v2888, %v2673
        %v4153 = vpack.c.bf16 %v2885, %v2670
        %v4154 = vpack.c.bf16 %v2882, %v2667
        %v4155 = vpack.c.bf16 %v2879, %v2664
        %v4156 = vpack.c.bf16 %v2876, %v2661
        %v4157 = vpack.c.bf16 %v2873, %v2658
        %v4158 = vpack.c.bf16 %v2870, %v2655
        %v4159 = vpack.c.bf16 %v2867, %v2652
        %v4160 = vpack.c.bf16 %v2864, %v2649
        %v4161 = vpack.c.bf16 %v2861, %v2646
        %v4162 = vpack.c.bf16 %v2858, %v2643
        %v4163 = vpack.c.bf16 %v2855, %v2640
        %v4164 = vpack.c.bf16 %v2852, %v2637
        %v4165 = vpack.c.bf16 %v2849, %v2634
        %v4166 = vpack.c.bf16 %v2846, %v2631
        %v4167 = vpack.c.bf16 %v2843, %v2628
        %v4168 = vpack.c.bf16 %v2914, %v2913
        %v4169 = vpack.c.bf16 %v2911, %v2910
        %v4170 = vpack.c.bf16 %v2908, %v2907
        %v4171 = vpack.c.bf16 %v2905, %v2904
        %v4172 = vpack.c.bf16 %v2902, %v2901
        %v4173 = vpack.c.bf16 %v2899, %v2898
        %v4174 = vpack.c.bf16 %v2896, %v2895
        %v4175 = vpack.c.bf16 %v2893, %v2892
        %v4176 = vpack.c.bf16 %v2890, %v2889
        %v4177 = vpack.c.bf16 %v2887, %v2886
        %v4178 = vpack.c.bf16 %v2884, %v2883
        %v4179 = vpack.c.bf16 %v2881, %v2880
        %v4180 = vpack.c.bf16 %v2878, %v2877
        %v4181 = vpack.c.bf16 %v2875, %v2874
        %v4182 = vpack.c.bf16 %v2872, %v2871
        %v4183 = vpack.c.bf16 %v2869, %v2868
        %v4184 = vpack.c.bf16 %v2866, %v2865
        %v4185 = vpack.c.bf16 %v2863, %v2862
        %v4186 = vpack.c.bf16 %v2860, %v2859
        %v4187 = vpack.c.bf16 %v2857, %v2856
        %v4188 = vpack.c.bf16 %v2854, %v2853
        %v4189 = vpack.c.bf16 %v2851, %v2850
        %v4190 = vpack.c.bf16 %v2848, %v2847
        %v4191 = vpack.c.bf16 %v2845, %v2844
        %v4192 = vpack.c.bf16 %v3129, %v3128
        %v4193 = vpack.c.bf16 %v3126, %v3125
        %v4194 = vpack.c.bf16 %v3123, %v3122
        %v4195 = vpack.c.bf16 %v3120, %v3119
        %v4196 = vpack.c.bf16 %v3117, %v3116
        %v4197 = vpack.c.bf16 %v3114, %v3113
        %v4198 = vpack.c.bf16 %v3111, %v3110
        %v4199 = vpack.c.bf16 %v3108, %v3107
        %v4200 = vpack.c.bf16 %v3105, %v3104
        %v4201 = vpack.c.bf16 %v3102, %v3101
        %v4202 = vpack.c.bf16 %v3099, %v3098
        %v4203 = vpack.c.bf16 %v3096, %v3095
        %v4204 = vpack.c.bf16 %v3093, %v3092
        %v4205 = vpack.c.bf16 %v3090, %v3089
        %v4206 = vpack.c.bf16 %v3087, %v3086
        %v4207 = vpack.c.bf16 %v3084, %v3083
        %v4208 = vpack.c.bf16 %v3081, %v3080
        %v4209 = vpack.c.bf16 %v3078, %v3077
        %v4210 = vpack.c.bf16 %v3075, %v3074
        %v4211 = vpack.c.bf16 %v3072, %v3071
        %v4212 = vpack.c.bf16 %v3069, %v3068
        %v4213 = vpack.c.bf16 %v3066, %v3065
        %v4214 = vpack.c.bf16 %v3063, %v3062
        %v4215 = vpack.c.bf16 %v3060, %v3059
        %v4216 = vpack.c.bf16 %v2409, %v3130
        %v4217 = vpack.c.bf16 %v2410, %v3127
        %v4218 = vpack.c.bf16 %v2411, %v3124
        %v4219 = vpack.c.bf16 %v2412, %v3121
        %v4220 = vpack.c.bf16 %v2413, %v3118
        %v4221 = vpack.c.bf16 %v2414, %v3115
        %v4222 = vpack.c.bf16 %v2415, %v3112
        %v4223 = vpack.c.bf16 %v2416, %v3109
        %v4224 = vpack.c.bf16 %v2417, %v3106
        %v4225 = vpack.c.bf16 %v2418, %v3103
        %v4226 = vpack.c.bf16 %v2419, %v3100
        %v4227 = vpack.c.bf16 %v2420, %v3097
        %v4228 = vpack.c.bf16 %v2421, %v3094
        %v4229 = vpack.c.bf16 %v2422, %v3091
        %v4230 = vpack.c.bf16 %v2423, %v3088
        %v4231 = vpack.c.bf16 %v2424, %v3085
        %v4232 = vpack.c.bf16 %v2425, %v3082
        %v4233 = vpack.c.bf16 %v2426, %v3079
        %v4234 = vpack.c.bf16 %v2427, %v3076
        %v4235 = vpack.c.bf16 %v2428, %v3073
        %v4236 = vpack.c.bf16 %v2429, %v3070
        %v4237 = vpack.c.bf16 %v2430, %v3067
        %v4238 = vpack.c.bf16 %v2431, %v3064
        %v4239 = vpack.c.bf16 %v2432, %v3061
        %v4240 = vpack.c.bf16 %v2457, %v2433
        %v4241 = vpack.c.bf16 %v2458, %v2434
        %v4242 = vpack.c.bf16 %v2459, %v2435
        %v4243 = vpack.c.bf16 %v2460, %v2436
        %v4244 = vpack.c.bf16 %v2461, %v2437
        %v4245 = vpack.c.bf16 %v2462, %v2438
        %v4246 = vpack.c.bf16 %v2463, %v2439
        %v4247 = vpack.c.bf16 %v2464, %v2440
        %v4248 = vpack.c.bf16 %v2465, %v2441
        %v4249 = vpack.c.bf16 %v2466, %v2442
        %v4250 = vpack.c.bf16 %v2467, %v2443
        %v4251 = vpack.c.bf16 %v2468, %v2444
        %v4252 = vpack.c.bf16 %v2469, %v2445
        %v4253 = vpack.c.bf16 %v2470, %v2446
        %v4254 = vpack.c.bf16 %v2471, %v2447
        %v4255 = vpack.c.bf16 %v2472, %v2448
        %v4256 = vpack.c.bf16 %v2473, %v2449
        %v4257 = vpack.c.bf16 %v2474, %v2450
        %v4258 = vpack.c.bf16 %v2475, %v2451
        %v4259 = vpack.c.bf16 %v2476, %v2452
        %v4260 = vpack.c.bf16 %v2477, %v2453
        %v4261 = vpack.c.bf16 %v2478, %v2454
        %v4262 = vpack.c.bf16 %v2479, %v2455
        %v4263 = vpack.c.bf16 %v2480, %v2456
        %v4264 = vpack.c.bf16 %v3342, %v3341
        %v4265 = vpack.c.bf16 %v3339, %v3338
        %v4266 = vpack.c.bf16 %v3336, %v3335
        %v4267 = vpack.c.bf16 %v3333, %v3332
        %v4268 = vpack.c.bf16 %v3330, %v3329
        %v4269 = vpack.c.bf16 %v3327, %v3326
        %v4270 = vpack.c.bf16 %v3324, %v3323
        %v4271 = vpack.c.bf16 %v3321, %v3320
        %v4272 = vpack.c.bf16 %v3318, %v3317
        %v4273 = vpack.c.bf16 %v3315, %v3314
        %v4274 = vpack.c.bf16 %v3312, %v3311
        %v4275 = vpack.c.bf16 %v3309, %v3308
        %v4276 = vpack.c.bf16 %v3306, %v3305
        %v4277 = vpack.c.bf16 %v3303, %v3302
        %v4278 = vpack.c.bf16 %v3300, %v3299
        %v4279 = vpack.c.bf16 %v3297, %v3296
        %v4280 = vpack.c.bf16 %v3294, %v3293
        %v4281 = vpack.c.bf16 %v3291, %v3290
        %v4282 = vpack.c.bf16 %v3288, %v3287
        %v4283 = vpack.c.bf16 %v3285, %v3284
        %v4284 = vpack.c.bf16 %v3282, %v3281
        %v4285 = vpack.c.bf16 %v3279, %v3278
        %v4286 = vpack.c.bf16 %v3276, %v3275
        %v4287 = vpack.c.bf16 %v3345, %v3344
        %v4288 = vpack.c.bf16 %v3558, %v3343
        %v4289 = vpack.c.bf16 %v3555, %v3340
        %v4290 = vpack.c.bf16 %v3552, %v3337
        %v4291 = vpack.c.bf16 %v3549, %v3334
        %v4292 = vpack.c.bf16 %v3546, %v3331
        %v4293 = vpack.c.bf16 %v3543, %v3328
        %v4294 = vpack.c.bf16 %v3540, %v3325
        %v4295 = vpack.c.bf16 %v3537, %v3322
        %v4296 = vpack.c.bf16 %v3534, %v3319
        %v4297 = vpack.c.bf16 %v3531, %v3316
        %v4298 = vpack.c.bf16 %v3528, %v3313
        %v4299 = vpack.c.bf16 %v3525, %v3310
        %v4300 = vpack.c.bf16 %v3522, %v3307
        %v4301 = vpack.c.bf16 %v3519, %v3304
        %v4302 = vpack.c.bf16 %v3516, %v3301
        %v4303 = vpack.c.bf16 %v3513, %v3298
        %v4304 = vpack.c.bf16 %v3510, %v3295
        %v4305 = vpack.c.bf16 %v3507, %v3292
        %v4306 = vpack.c.bf16 %v3504, %v3289
        %v4307 = vpack.c.bf16 %v3501, %v3286
        %v4308 = vpack.c.bf16 %v3498, %v3283
        %v4309 = vpack.c.bf16 %v3495, %v3280
        %v4310 = vpack.c.bf16 %v3492, %v3277
        %v4311 = vpack.c.bf16 %v3561, %v3346
        %v4312 = vpack.c.bf16 %v3560, %v3559
        %v4313 = vpack.c.bf16 %v3557, %v3556
        %v4314 = vpack.c.bf16 %v3554, %v3553
        %v4315 = vpack.c.bf16 %v3551, %v3550
        %v4316 = vpack.c.bf16 %v3548, %v3547
        %v4317 = vpack.c.bf16 %v3545, %v3544
        %v4318 = vpack.c.bf16 %v3542, %v3541
        %v4319 = vpack.c.bf16 %v3539, %v3538
        %v4320 = vpack.c.bf16 %v3536, %v3535
        %v4321 = vpack.c.bf16 %v3533, %v3532
        %v4322 = vpack.c.bf16 %v3530, %v3529
        %v4323 = vpack.c.bf16 %v3527, %v3526
        %v4324 = vpack.c.bf16 %v3524, %v3523
        %v4325 = vpack.c.bf16 %v3521, %v3520
        %v4326 = vpack.c.bf16 %v3518, %v3517
        %v4327 = vpack.c.bf16 %v3515, %v3514
        %v4328 = vpack.c.bf16 %v3512, %v3511
        %v4329 = vpack.c.bf16 %v3509, %v3508
        %v4330 = vpack.c.bf16 %v3506, %v3505
        %v4331 = vpack.c.bf16 %v3503, %v3502
        %v4332 = vpack.c.bf16 %v3500, %v3499
        %v4333 = vpack.c.bf16 %v3497, %v3496
        %v4334 = vpack.c.bf16 %v3494, %v3493
        %v4335 = vpack.c.bf16 %v3563, %v3562
        %v4336 = vpack.c.bf16 %v3776, %v3775
        %v4337 = vpack.c.bf16 %v3773, %v3772
        %v4338 = vpack.c.bf16 %v3770, %v3769
        %v4339 = vpack.c.bf16 %v3767, %v3766
        %v4340 = vpack.c.bf16 %v3764, %v3763
        %v4341 = vpack.c.bf16 %v3761, %v3760
        %v4342 = vpack.c.bf16 %v3758, %v3757
        %v4343 = vpack.c.bf16 %v3755, %v3754
        %v4344 = vpack.c.bf16 %v3752, %v3751
        %v4345 = vpack.c.bf16 %v3749, %v3748
        %v4346 = vpack.c.bf16 %v3746, %v3745
        %v4347 = vpack.c.bf16 %v3743, %v3742
        %v4348 = vpack.c.bf16 %v3740, %v3739
        %v4349 = vpack.c.bf16 %v3737, %v3736
        %v4350 = vpack.c.bf16 %v3734, %v3733
        %v4351 = vpack.c.bf16 %v3731, %v3730
        %v4352 = vpack.c.bf16 %v3728, %v3727
        %v4353 = vpack.c.bf16 %v3725, %v3724
        %v4354 = vpack.c.bf16 %v3722, %v3721
        %v4355 = vpack.c.bf16 %v3719, %v3718
        %v4356 = vpack.c.bf16 %v3716, %v3715
        %v4357 = vpack.c.bf16 %v3713, %v3712
        %v4358 = vpack.c.bf16 %v3710, %v3709
        %v4359 = vpack.c.bf16 %v3779, %v3778
        %v4360 = vpack.c.bf16 %v4045, %v3777
        %v4361 = vpack.c.bf16 %v4046, %v3774
        %v4362 = vpack.c.bf16 %v4047, %v3771
        %v4363 = vpack.c.bf16 %v4048, %v3768
        %v4364 = vpack.c.bf16 %v4049, %v3765
        %v4365 = vpack.c.bf16 %v4050, %v3762
        %v4366 = vpack.c.bf16 %v4051, %v3759
        %v4367 = vpack.c.bf16 %v4052, %v3756
        %v4368 = vpack.c.bf16 %v4053, %v3753
        %v4369 = vpack.c.bf16 %v4054, %v3750
        %v4370 = vpack.c.bf16 %v4055, %v3747
        %v4371 = vpack.c.bf16 %v4056, %v3744
        %v4372 = vpack.c.bf16 %v4057, %v3741
        %v4373 = vpack.c.bf16 %v4058, %v3738
        %v4374 = vpack.c.bf16 %v4059, %v3735
        %v4375 = vpack.c.bf16 %v4060, %v3732
        %v4376 = vpack.c.bf16 %v4061, %v3729
        %v4377 = vpack.c.bf16 %v4062, %v3726
        %v4378 = vpack.c.bf16 %v4063, %v3723
        %v4379 = vpack.c.bf16 %v4064, %v3720
        %v4380 = vpack.c.bf16 %v4065, %v3717
        %v4381 = vpack.c.bf16 %v4066, %v3714
        %v4382 = vpack.c.bf16 %v4067, %v3711
        %v4383 = vpack.c.bf16 %v4068, %v3780
        %v4384 = vpack.c.bf16 %v4093, %v4069
        %v4385 = vpack.c.bf16 %v4094, %v4070
        %v4386 = vpack.c.bf16 %v4095, %v4071
        %v4387 = vpack.c.bf16 %v4096, %v4072
        %v4388 = vpack.c.bf16 %v4097, %v4073
        %v4389 = vpack.c.bf16 %v4098, %v4074
        %v4390 = vpack.c.bf16 %v4099, %v4075
        %v4391 = vpack.c.bf16 %v4100, %v4076
        %v4392 = vpack.c.bf16 %v4101, %v4077
        %v4393 = vpack.c.bf16 %v4102, %v4078
        %v4394 = vpack.c.bf16 %v4103, %v4079
        %v4395 = vpack.c.bf16 %v4104, %v4080
        %v4396 = vpack.c.bf16 %v4105, %v4081
        %v4397 = vpack.c.bf16 %v4106, %v4082
        %v4398 = vpack.c.bf16 %v4107, %v4083
        %v4399 = vpack.c.bf16 %v4108, %v4084
        %v4400 = vpack.c.bf16 %v4109, %v4085
        %v4401 = vpack.c.bf16 %v4110, %v4086
        %v4402 = vpack.c.bf16 %v4111, %v4087
        %v4403 = vpack.c.bf16 %v4112, %v4088
        %v4404 = vpack.c.bf16 %v4113, %v4089
        %v4405 = vpack.c.bf16 %v4114, %v4090
        %v4406 = vpack.c.bf16 %v4115, %v4091
        %v4407 = vpack.c.bf16 %v4116, %v4092
        %v4408 = vld [vmem:[%s5] sm:$0xff]
        %v4409 = vld [vmem:[%s5 + $0x8] sm:$0xff]
        %v4410 = vld [vmem:[%s5 + $0x10] sm:$0xff]
        %4412 = vset.pattern.permute.xlu0 0
        %4413 = vperm.xlu0 %4412, %v4408
        %v4414 = vpop.permute.xlu0 %4413
        %4417 = vset.pattern.permute.xlu0 0
        %4418 = vperm.xlu0 %4417, %v4409
        %v4419 = vpop.permute.xlu0 %4418
        %4422 = vset.pattern.permute.xlu0 0
        %4423 = vperm.xlu0 %4422, %v4410
        %v4424 = vpop.permute.xlu0 %4423
        %v4429 = vunpack.c.l.b16 %v4117
        %v4430 = vunpack.c.h.b16 %v4117
        %v4431 = vunpack.c.l.b16 %v4118
        %v4432 = vunpack.c.h.b16 %v4118
        %v4433 = vunpack.c.l.b16 %v4119
        %v4434 = vunpack.c.h.b16 %v4119
        %v4435 = vpack.c.b16 %v4431, %v4429
        %v4436 = vpack.c.b16 %v4432, %v4430
        %v4437 = vpack.c.b16 %v4433, %v4433
        %v4438 = vpack.c.b16 %v4434, %v4434
        %vm4441 = vcmask 523264
        %v4443 = vsel %vm4441, %v4436, 0
        %v4446 = vsel %vm4441, %v4438, 0
        %4448 = vmatpush.bf16.msra.mxu0 %v4288
        %4449 = vmatpush.bf16.msra.mxu0 %v4264
        %4450 = vmatpush.bf16.msra.mxu0 %v4240
        %4451 = vmatpush.bf16.msra.mxu0 %v4216
        %4452 = vmatpush.bf16.msra.mxu0 %v4192
        %4453 = vmatpush.bf16.msra.mxu0 %v4168
        %4454 = vmatpush.bf16.msra.mxu0 %v4144
        %4455 = vmatpush.bf16.msra.mxu0 %v4120
        %4456 = vmatmul.bf16.gmra.mxu0 %v4435
        %v4457 = vpop.f32.mrf.mxu0
        %v4458 = vadd.f32 %v4414, %v4457
        %v4459 = vpop.f32.mrf.mxu0
        %v4460 = vadd.f32 %v4419, %v4459
        %4461 = vmatmul.bf16.gmra.mxu0 %v4437
        %v4462 = vpop.f32.mrf.mxu0
        %v4463 = vadd.f32 %v4424, %v4462
        %v4464 = vpop.f32.mrf.mxu0
        %4465 = vdwg.mxu0
        %4466 = vmatpush.bf16.msra.mxu0 0
        %4467 = vmatpush.bf16.msra.mxu0 0
        %4468 = vmatpush.bf16.msra.mxu0 0
        %4469 = vmatpush.bf16.msra.mxu0 0
        %4470 = vmatpush.bf16.msra.mxu0 %v4384
        %4471 = vmatpush.bf16.msra.mxu0 %v4360
        %4472 = vmatpush.bf16.msra.mxu0 %v4336
        %4473 = vmatpush.bf16.msra.mxu0 %v4312
        %4474 = vmatmul.bf16.gmra.mxu0 %v4443
        %v4475 = vpop.f32.mrf.mxu0
        %v4476 = vadd.f32 %v4458, %v4475
        %v4477 = vpop.f32.mrf.mxu0
        %v4478 = vadd.f32 %v4460, %v4477
        %4479 = vmatmul.bf16.gmra.mxu0 %v4446
        %v4480 = vpop.f32.mrf.mxu0
        %v4481 = vadd.f32 %v4463, %v4480
        %v4482 = vpop.f32.mrf.mxu0
        %4483 = vdwg.mxu0
        %4484 = vmatpush.bf16.msra.mxu0 %v4289
        %4485 = vmatpush.bf16.msra.mxu0 %v4265
        %4486 = vmatpush.bf16.msra.mxu0 %v4241
        %4487 = vmatpush.bf16.msra.mxu0 %v4217
        %4488 = vmatpush.bf16.msra.mxu0 %v4193
        %4489 = vmatpush.bf16.msra.mxu0 %v4169
        %4490 = vmatpush.bf16.msra.mxu0 %v4145
        %4491 = vmatpush.bf16.msra.mxu0 %v4121
        %4492 = vmatmul.bf16.gmra.mxu0 %v4435
        %v4493 = vpop.f32.mrf.mxu0
        %v4494 = vadd.f32 %v4414, %v4493
        %v4495 = vpop.f32.mrf.mxu0
        %v4496 = vadd.f32 %v4419, %v4495
        %4497 = vmatmul.bf16.gmra.mxu0 %v4437
        %v4498 = vpop.f32.mrf.mxu0
        %v4499 = vadd.f32 %v4424, %v4498
        %v4500 = vpop.f32.mrf.mxu0
        %4501 = vdwg.mxu0
        %4502 = vmatpush.bf16.msra.mxu0 0
        %4503 = vmatpush.bf16.msra.mxu0 0
        %4504 = vmatpush.bf16.msra.mxu0 0
        %4505 = vmatpush.bf16.msra.mxu0 0
        %4506 = vmatpush.bf16.msra.mxu0 %v4385
        %4507 = vmatpush.bf16.msra.mxu0 %v4361
        %4508 = vmatpush.bf16.msra.mxu0 %v4337
        %4509 = vmatpush.bf16.msra.mxu0 %v4313
        %4510 = vmatmul.bf16.gmra.mxu0 %v4443
        %v4511 = vpop.f32.mrf.mxu0
        %v4512 = vadd.f32 %v4494, %v4511
        %v4513 = vpop.f32.mrf.mxu0
        %v4514 = vadd.f32 %v4496, %v4513
        %4515 = vmatmul.bf16.gmra.mxu0 %v4446
        %v4516 = vpop.f32.mrf.mxu0
        %v4517 = vadd.f32 %v4499, %v4516
        %v4518 = vpop.f32.mrf.mxu0
        %4519 = vdwg.mxu0
        %4520 = vmatpush.bf16.msra.mxu0 %v4290
        %4521 = vmatpush.bf16.msra.mxu0 %v4266
        %4522 = vmatpush.bf16.msra.mxu0 %v4242
        %4523 = vmatpush.bf16.msra.mxu0 %v4218
        %4524 = vmatpush.bf16.msra.mxu0 %v4194
        %4525 = vmatpush.bf16.msra.mxu0 %v4170
        %4526 = vmatpush.bf16.msra.mxu0 %v4146
        %4527 = vmatpush.bf16.msra.mxu0 %v4122
        %4528 = vmatmul.bf16.gmra.mxu0 %v4435
        %v4529 = vpop.f32.mrf.mxu0
        %v4530 = vadd.f32 %v4414, %v4529
        %v4531 = vpop.f32.mrf.mxu0
        %v4532 = vadd.f32 %v4419, %v4531
        %4533 = vmatmul.bf16.gmra.mxu0 %v4437
        %v4534 = vpop.f32.mrf.mxu0
        %v4535 = vadd.f32 %v4424, %v4534
        %v4536 = vpop.f32.mrf.mxu0
        %4537 = vdwg.mxu0
        %4538 = vmatpush.bf16.msra.mxu0 0
        %4539 = vmatpush.bf16.msra.mxu0 0
        %4540 = vmatpush.bf16.msra.mxu0 0
        %4541 = vmatpush.bf16.msra.mxu0 0
        %4542 = vmatpush.bf16.msra.mxu0 %v4386
        %4543 = vmatpush.bf16.msra.mxu0 %v4362
        %4544 = vmatpush.bf16.msra.mxu0 %v4338
        %4545 = vmatpush.bf16.msra.mxu0 %v4314
        %4546 = vmatmul.bf16.gmra.mxu0 %v4443
        %v4547 = vpop.f32.mrf.mxu0
        %v4548 = vadd.f32 %v4530, %v4547
        %v4549 = vpop.f32.mrf.mxu0
        %v4550 = vadd.f32 %v4532, %v4549
        %4551 = vmatmul.bf16.gmra.mxu0 %v4446
        %v4552 = vpop.f32.mrf.mxu0
        %v4553 = vadd.f32 %v4535, %v4552
        %v4554 = vpop.f32.mrf.mxu0
        %4555 = vdwg.mxu0
        %4556 = vmatpush.bf16.msra.mxu0 %v4291
        %4557 = vmatpush.bf16.msra.mxu0 %v4267
        %4558 = vmatpush.bf16.msra.mxu0 %v4243
        %4559 = vmatpush.bf16.msra.mxu0 %v4219
        %4560 = vmatpush.bf16.msra.mxu0 %v4195
        %4561 = vmatpush.bf16.msra.mxu0 %v4171
        %4562 = vmatpush.bf16.msra.mxu0 %v4147
        %4563 = vmatpush.bf16.msra.mxu0 %v4123
        %4564 = vmatmul.bf16.gmra.mxu0 %v4435
        %v4565 = vpop.f32.mrf.mxu0
        %v4566 = vadd.f32 %v4414, %v4565
        %v4567 = vpop.f32.mrf.mxu0
        %v4568 = vadd.f32 %v4419, %v4567
        %4569 = vmatmul.bf16.gmra.mxu0 %v4437
        %v4570 = vpop.f32.mrf.mxu0
        %v4571 = vadd.f32 %v4424, %v4570
        %v4572 = vpop.f32.mrf.mxu0
        %4573 = vdwg.mxu0
        %4574 = vmatpush.bf16.msra.mxu0 0
        %4575 = vmatpush.bf16.msra.mxu0 0
        %4576 = vmatpush.bf16.msra.mxu0 0
        %4577 = vmatpush.bf16.msra.mxu0 0
        %4578 = vmatpush.bf16.msra.mxu0 %v4387
        %4579 = vmatpush.bf16.msra.mxu0 %v4363
        %4580 = vmatpush.bf16.msra.mxu0 %v4339
        %4581 = vmatpush.bf16.msra.mxu0 %v4315
        %4582 = vmatmul.bf16.gmra.mxu0 %v4443
        %v4583 = vpop.f32.mrf.mxu0
        %v4584 = vadd.f32 %v4566, %v4583
        %v4585 = vpop.f32.mrf.mxu0
        %v4586 = vadd.f32 %v4568, %v4585
        %4587 = vmatmul.bf16.gmra.mxu0 %v4446
        %v4588 = vpop.f32.mrf.mxu0
        %v4589 = vadd.f32 %v4571, %v4588
        %v4590 = vpop.f32.mrf.mxu0
        %4591 = vdwg.mxu0
        %4592 = vmatpush.bf16.msra.mxu0 %v4292
        %4593 = vmatpush.bf16.msra.mxu0 %v4268
        %4594 = vmatpush.bf16.msra.mxu0 %v4244
        %4595 = vmatpush.bf16.msra.mxu0 %v4220
        %4596 = vmatpush.bf16.msra.mxu0 %v4196
        %4597 = vmatpush.bf16.msra.mxu0 %v4172
        %4598 = vmatpush.bf16.msra.mxu0 %v4148
        %4599 = vmatpush.bf16.msra.mxu0 %v4124
        %4600 = vmatmul.bf16.gmra.mxu0 %v4435
        %v4601 = vpop.f32.mrf.mxu0
        %v4602 = vadd.f32 %v4414, %v4601
        %v4603 = vpop.f32.mrf.mxu0
        %v4604 = vadd.f32 %v4419, %v4603
        %4605 = vmatmul.bf16.gmra.mxu0 %v4437
        %v4606 = vpop.f32.mrf.mxu0
        %v4607 = vadd.f32 %v4424, %v4606
        %v4608 = vpop.f32.mrf.mxu0
        %4609 = vdwg.mxu0
        %4610 = vmatpush.bf16.msra.mxu0 0
        %4611 = vmatpush.bf16.msra.mxu0 0
        %4612 = vmatpush.bf16.msra.mxu0 0
        %4613 = vmatpush.bf16.msra.mxu0 0
        %4614 = vmatpush.bf16.msra.mxu0 %v4388
        %4615 = vmatpush.bf16.msra.mxu0 %v4364
        %4616 = vmatpush.bf16.msra.mxu0 %v4340
        %4617 = vmatpush.bf16.msra.mxu0 %v4316
        %4618 = vmatmul.bf16.gmra.mxu0 %v4443
        %v4619 = vpop.f32.mrf.mxu0
        %v4620 = vadd.f32 %v4602, %v4619
        %v4621 = vpop.f32.mrf.mxu0
        %v4622 = vadd.f32 %v4604, %v4621
        %4623 = vmatmul.bf16.gmra.mxu0 %v4446
        %v4624 = vpop.f32.mrf.mxu0
        %v4625 = vadd.f32 %v4607, %v4624
        %v4626 = vpop.f32.mrf.mxu0
        %4627 = vdwg.mxu0
        %4628 = vmatpush.bf16.msra.mxu0 %v4293
        %4629 = vmatpush.bf16.msra.mxu0 %v4269
        %4630 = vmatpush.bf16.msra.mxu0 %v4245
        %4631 = vmatpush.bf16.msra.mxu0 %v4221
        %4632 = vmatpush.bf16.msra.mxu0 %v4197
        %4633 = vmatpush.bf16.msra.mxu0 %v4173
        %4634 = vmatpush.bf16.msra.mxu0 %v4149
        %4635 = vmatpush.bf16.msra.mxu0 %v4125
        %4636 = vmatmul.bf16.gmra.mxu0 %v4435
        %v4637 = vpop.f32.mrf.mxu0
        %v4638 = vadd.f32 %v4414, %v4637
        %v4639 = vpop.f32.mrf.mxu0
        %v4640 = vadd.f32 %v4419, %v4639
        %4641 = vmatmul.bf16.gmra.mxu0 %v4437
        %v4642 = vpop.f32.mrf.mxu0
        %v4643 = vadd.f32 %v4424, %v4642
        %v4644 = vpop.f32.mrf.mxu0
        %4645 = vdwg.mxu0
        %4646 = vmatpush.bf16.msra.mxu0 0
        %4647 = vmatpush.bf16.msra.mxu0 0
        %4648 = vmatpush.bf16.msra.mxu0 0
        %4649 = vmatpush.bf16.msra.mxu0 0
        %4650 = vmatpush.bf16.msra.mxu0 %v4389
        %4651 = vmatpush.bf16.msra.mxu0 %v4365
        %4652 = vmatpush.bf16.msra.mxu0 %v4341
        %4653 = vmatpush.bf16.msra.mxu0 %v4317
        %4654 = vmatmul.bf16.gmra.mxu0 %v4443
        %v4655 = vpop.f32.mrf.mxu0
        %v4656 = vadd.f32 %v4638, %v4655
        %v4657 = vpop.f32.mrf.mxu0
        %v4658 = vadd.f32 %v4640, %v4657
        %4659 = vmatmul.bf16.gmra.mxu0 %v4446
        %v4660 = vpop.f32.mrf.mxu0
        %v4661 = vadd.f32 %v4643, %v4660
        %v4662 = vpop.f32.mrf.mxu0
        %4663 = vdwg.mxu0
        %4664 = vmatpush.bf16.msra.mxu0 %v4294
        %4665 = vmatpush.bf16.msra.mxu0 %v4270
        %4666 = vmatpush.bf16.msra.mxu0 %v4246
        %4667 = vmatpush.bf16.msra.mxu0 %v4222
        %4668 = vmatpush.bf16.msra.mxu0 %v4198
        %4669 = vmatpush.bf16.msra.mxu0 %v4174
        %4670 = vmatpush.bf16.msra.mxu0 %v4150
        %4671 = vmatpush.bf16.msra.mxu0 %v4126
        %4672 = vmatmul.bf16.gmra.mxu0 %v4435
        %v4673 = vpop.f32.mrf.mxu0
        %v4674 = vadd.f32 %v4414, %v4673
        %v4675 = vpop.f32.mrf.mxu0
        %v4676 = vadd.f32 %v4419, %v4675
        %4677 = vmatmul.bf16.gmra.mxu0 %v4437
        %v4678 = vpop.f32.mrf.mxu0
        %v4679 = vadd.f32 %v4424, %v4678
        %v4680 = vpop.f32.mrf.mxu0
        %4681 = vdwg.mxu0
        %4682 = vmatpush.bf16.msra.mxu0 0
        %4683 = vmatpush.bf16.msra.mxu0 0
        %4684 = vmatpush.bf16.msra.mxu0 0
        %4685 = vmatpush.bf16.msra.mxu0 0
        %4686 = vmatpush.bf16.msra.mxu0 %v4390
        %4687 = vmatpush.bf16.msra.mxu0 %v4366
        %4688 = vmatpush.bf16.msra.mxu0 %v4342
        %4689 = vmatpush.bf16.msra.mxu0 %v4318
        %4690 = vmatmul.bf16.gmra.mxu0 %v4443
        %v4691 = vpop.f32.mrf.mxu0
        %v4692 = vadd.f32 %v4674, %v4691
        %v4693 = vpop.f32.mrf.mxu0
        %v4694 = vadd.f32 %v4676, %v4693
        %4695 = vmatmul.bf16.gmra.mxu0 %v4446
        %v4696 = vpop.f32.mrf.mxu0
        %v4697 = vadd.f32 %v4679, %v4696
        %v4698 = vpop.f32.mrf.mxu0
        %4699 = vdwg.mxu0
        %4700 = vmatpush.bf16.msra.mxu0 %v4295
        %4701 = vmatpush.bf16.msra.mxu0 %v4271
        %4702 = vmatpush.bf16.msra.mxu0 %v4247
        %4703 = vmatpush.bf16.msra.mxu0 %v4223
        %4704 = vmatpush.bf16.msra.mxu0 %v4199
        %4705 = vmatpush.bf16.msra.mxu0 %v4175
        %4706 = vmatpush.bf16.msra.mxu0 %v4151
        %4707 = vmatpush.bf16.msra.mxu0 %v4127
        %4708 = vmatmul.bf16.gmra.mxu0 %v4435
        %v4709 = vpop.f32.mrf.mxu0
        %v4710 = vadd.f32 %v4414, %v4709
        %v4711 = vpop.f32.mrf.mxu0
        %v4712 = vadd.f32 %v4419, %v4711
        %4713 = vmatmul.bf16.gmra.mxu0 %v4437
        %v4714 = vpop.f32.mrf.mxu0
        %v4715 = vadd.f32 %v4424, %v4714
        %v4716 = vpop.f32.mrf.mxu0
        %4717 = vdwg.mxu0
        %4718 = vmatpush.bf16.msra.mxu0 0
        %4719 = vmatpush.bf16.msra.mxu0 0
        %4720 = vmatpush.bf16.msra.mxu0 0
        %4721 = vmatpush.bf16.msra.mxu0 0
        %4722 = vmatpush.bf16.msra.mxu0 %v4391
        %4723 = vmatpush.bf16.msra.mxu0 %v4367
        %4724 = vmatpush.bf16.msra.mxu0 %v4343
        %4725 = vmatpush.bf16.msra.mxu0 %v4319
        %4726 = vmatmul.bf16.gmra.mxu0 %v4443
        %v4727 = vpop.f32.mrf.mxu0
        %v4728 = vadd.f32 %v4710, %v4727
        %v4729 = vpop.f32.mrf.mxu0
        %v4730 = vadd.f32 %v4712, %v4729
        %4731 = vmatmul.bf16.gmra.mxu0 %v4446
        %v4732 = vpop.f32.mrf.mxu0
        %v4733 = vadd.f32 %v4715, %v4732
        %v4734 = vpop.f32.mrf.mxu0
        %4735 = vdwg.mxu0
        %4736 = vmatpush.bf16.msra.mxu0 %v4296
        %4737 = vmatpush.bf16.msra.mxu0 %v4272
        %4738 = vmatpush.bf16.msra.mxu0 %v4248
        %4739 = vmatpush.bf16.msra.mxu0 %v4224
        %4740 = vmatpush.bf16.msra.mxu0 %v4200
        %4741 = vmatpush.bf16.msra.mxu0 %v4176
        %4742 = vmatpush.bf16.msra.mxu0 %v4152
        %4743 = vmatpush.bf16.msra.mxu0 %v4128
        %4744 = vmatmul.bf16.gmra.mxu0 %v4435
        %v4745 = vpop.f32.mrf.mxu0
        %v4746 = vadd.f32 %v4414, %v4745
        %v4747 = vpop.f32.mrf.mxu0
        %v4748 = vadd.f32 %v4419, %v4747
        %4749 = vmatmul.bf16.gmra.mxu0 %v4437
        %v4750 = vpop.f32.mrf.mxu0
        %v4751 = vadd.f32 %v4424, %v4750
        %v4752 = vpop.f32.mrf.mxu0
        %4753 = vdwg.mxu0
        %4754 = vmatpush.bf16.msra.mxu0 0
        %4755 = vmatpush.bf16.msra.mxu0 0
        %4756 = vmatpush.bf16.msra.mxu0 0
        %4757 = vmatpush.bf16.msra.mxu0 0
        %4758 = vmatpush.bf16.msra.mxu0 %v4392
        %4759 = vmatpush.bf16.msra.mxu0 %v4368
        %4760 = vmatpush.bf16.msra.mxu0 %v4344
        %4761 = vmatpush.bf16.msra.mxu0 %v4320
        %4762 = vmatmul.bf16.gmra.mxu0 %v4443
        %v4763 = vpop.f32.mrf.mxu0
        %v4764 = vadd.f32 %v4746, %v4763
        %v4765 = vpop.f32.mrf.mxu0
        %v4766 = vadd.f32 %v4748, %v4765
        %4767 = vmatmul.bf16.gmra.mxu0 %v4446
        %v4768 = vpop.f32.mrf.mxu0
        %v4769 = vadd.f32 %v4751, %v4768
        %v4770 = vpop.f32.mrf.mxu0
        %4771 = vdwg.mxu0
        %4772 = vmatpush.bf16.msra.mxu0 %v4297
        %4773 = vmatpush.bf16.msra.mxu0 %v4273
        %4774 = vmatpush.bf16.msra.mxu0 %v4249
        %4775 = vmatpush.bf16.msra.mxu0 %v4225
        %4776 = vmatpush.bf16.msra.mxu0 %v4201
        %4777 = vmatpush.bf16.msra.mxu0 %v4177
        %4778 = vmatpush.bf16.msra.mxu0 %v4153
        %4779 = vmatpush.bf16.msra.mxu0 %v4129
        %4780 = vmatmul.bf16.gmra.mxu0 %v4435
        %v4781 = vpop.f32.mrf.mxu0
        %v4782 = vadd.f32 %v4414, %v4781
        %v4783 = vpop.f32.mrf.mxu0
        %v4784 = vadd.f32 %v4419, %v4783
        %4785 = vmatmul.bf16.gmra.mxu0 %v4437
        %v4786 = vpop.f32.mrf.mxu0
        %v4787 = vadd.f32 %v4424, %v4786
        %v4788 = vpop.f32.mrf.mxu0
        %4789 = vdwg.mxu0
        %4790 = vmatpush.bf16.msra.mxu0 0
        %4791 = vmatpush.bf16.msra.mxu0 0
        %4792 = vmatpush.bf16.msra.mxu0 0
        %4793 = vmatpush.bf16.msra.mxu0 0
        %4794 = vmatpush.bf16.msra.mxu0 %v4393
        %4795 = vmatpush.bf16.msra.mxu0 %v4369
        %4796 = vmatpush.bf16.msra.mxu0 %v4345
        %4797 = vmatpush.bf16.msra.mxu0 %v4321
        %4798 = vmatmul.bf16.gmra.mxu0 %v4443
        %v4799 = vpop.f32.mrf.mxu0
        %v4800 = vadd.f32 %v4782, %v4799
        %v4801 = vpop.f32.mrf.mxu0
        %v4802 = vadd.f32 %v4784, %v4801
        %4803 = vmatmul.bf16.gmra.mxu0 %v4446
        %v4804 = vpop.f32.mrf.mxu0
        %v4805 = vadd.f32 %v4787, %v4804
        %v4806 = vpop.f32.mrf.mxu0
        %4807 = vdwg.mxu0
        %4808 = vmatpush.bf16.msra.mxu0 %v4298
        %4809 = vmatpush.bf16.msra.mxu0 %v4274
        %4810 = vmatpush.bf16.msra.mxu0 %v4250
        %4811 = vmatpush.bf16.msra.mxu0 %v4226
        %4812 = vmatpush.bf16.msra.mxu0 %v4202
        %4813 = vmatpush.bf16.msra.mxu0 %v4178
        %4814 = vmatpush.bf16.msra.mxu0 %v4154
        %4815 = vmatpush.bf16.msra.mxu0 %v4130
        %4816 = vmatmul.bf16.gmra.mxu0 %v4435
        %v4817 = vpop.f32.mrf.mxu0
        %v4818 = vadd.f32 %v4414, %v4817
        %v4819 = vpop.f32.mrf.mxu0
        %v4820 = vadd.f32 %v4419, %v4819
        %4821 = vmatmul.bf16.gmra.mxu0 %v4437
        %v4822 = vpop.f32.mrf.mxu0
        %v4823 = vadd.f32 %v4424, %v4822
        %v4824 = vpop.f32.mrf.mxu0
        %4825 = vdwg.mxu0
        %4826 = vmatpush.bf16.msra.mxu0 0
        %4827 = vmatpush.bf16.msra.mxu0 0
        %4828 = vmatpush.bf16.msra.mxu0 0
        %4829 = vmatpush.bf16.msra.mxu0 0
        %4830 = vmatpush.bf16.msra.mxu0 %v4394
        %4831 = vmatpush.bf16.msra.mxu0 %v4370
        %4832 = vmatpush.bf16.msra.mxu0 %v4346
        %4833 = vmatpush.bf16.msra.mxu0 %v4322
        %4834 = vmatmul.bf16.gmra.mxu0 %v4443
        %v4835 = vpop.f32.mrf.mxu0
        %v4836 = vadd.f32 %v4818, %v4835
        %v4837 = vpop.f32.mrf.mxu0
        %v4838 = vadd.f32 %v4820, %v4837
        %4839 = vmatmul.bf16.gmra.mxu0 %v4446
        %v4840 = vpop.f32.mrf.mxu0
        %v4841 = vadd.f32 %v4823, %v4840
        %v4842 = vpop.f32.mrf.mxu0
        %4843 = vdwg.mxu0
        %4844 = vmatpush.bf16.msra.mxu0 %v4299
        %4845 = vmatpush.bf16.msra.mxu0 %v4275
        %4846 = vmatpush.bf16.msra.mxu0 %v4251
        %4847 = vmatpush.bf16.msra.mxu0 %v4227
        %4848 = vmatpush.bf16.msra.mxu0 %v4203
        %4849 = vmatpush.bf16.msra.mxu0 %v4179
        %4850 = vmatpush.bf16.msra.mxu0 %v4155
        %4851 = vmatpush.bf16.msra.mxu0 %v4131
        %4852 = vmatmul.bf16.gmra.mxu0 %v4435
        %v4853 = vpop.f32.mrf.mxu0
        %v4854 = vadd.f32 %v4414, %v4853
        %v4855 = vpop.f32.mrf.mxu0
        %v4856 = vadd.f32 %v4419, %v4855
        %4857 = vmatmul.bf16.gmra.mxu0 %v4437
        %v4858 = vpop.f32.mrf.mxu0
        %v4859 = vadd.f32 %v4424, %v4858
        %v4860 = vpop.f32.mrf.mxu0
        %4861 = vdwg.mxu0
        %4862 = vmatpush.bf16.msra.mxu0 0
        %4863 = vmatpush.bf16.msra.mxu0 0
        %4864 = vmatpush.bf16.msra.mxu0 0
        %4865 = vmatpush.bf16.msra.mxu0 0
        %4866 = vmatpush.bf16.msra.mxu0 %v4395
        %4867 = vmatpush.bf16.msra.mxu0 %v4371
        %4868 = vmatpush.bf16.msra.mxu0 %v4347
        %4869 = vmatpush.bf16.msra.mxu0 %v4323
        %4870 = vmatmul.bf16.gmra.mxu0 %v4443
        %v4871 = vpop.f32.mrf.mxu0
        %v4872 = vadd.f32 %v4854, %v4871
        %v4873 = vpop.f32.mrf.mxu0
        %v4874 = vadd.f32 %v4856, %v4873
        %4875 = vmatmul.bf16.gmra.mxu0 %v4446
        %v4876 = vpop.f32.mrf.mxu0
        %v4877 = vadd.f32 %v4859, %v4876
        %v4878 = vpop.f32.mrf.mxu0
        %4879 = vdwg.mxu0
        %4880 = vmatpush.bf16.msra.mxu0 %v4300
        %4881 = vmatpush.bf16.msra.mxu0 %v4276
        %4882 = vmatpush.bf16.msra.mxu0 %v4252
        %4883 = vmatpush.bf16.msra.mxu0 %v4228
        %4884 = vmatpush.bf16.msra.mxu0 %v4204
        %4885 = vmatpush.bf16.msra.mxu0 %v4180
        %4886 = vmatpush.bf16.msra.mxu0 %v4156
        %4887 = vmatpush.bf16.msra.mxu0 %v4132
        %4888 = vmatmul.bf16.gmra.mxu0 %v4435
        %v4889 = vpop.f32.mrf.mxu0
        %v4890 = vadd.f32 %v4414, %v4889
        %v4891 = vpop.f32.mrf.mxu0
        %v4892 = vadd.f32 %v4419, %v4891
        %4893 = vmatmul.bf16.gmra.mxu0 %v4437
        %v4894 = vpop.f32.mrf.mxu0
        %v4895 = vadd.f32 %v4424, %v4894
        %v4896 = vpop.f32.mrf.mxu0
        %4897 = vdwg.mxu0
        %4898 = vmatpush.bf16.msra.mxu0 0
        %4899 = vmatpush.bf16.msra.mxu0 0
        %4900 = vmatpush.bf16.msra.mxu0 0
        %4901 = vmatpush.bf16.msra.mxu0 0
        %4902 = vmatpush.bf16.msra.mxu0 %v4396
        %4903 = vmatpush.bf16.msra.mxu0 %v4372
        %4904 = vmatpush.bf16.msra.mxu0 %v4348
        %4905 = vmatpush.bf16.msra.mxu0 %v4324
        %4906 = vmatmul.bf16.gmra.mxu0 %v4443
        %v4907 = vpop.f32.mrf.mxu0
        %v4908 = vadd.f32 %v4890, %v4907
        %v4909 = vpop.f32.mrf.mxu0
        %v4910 = vadd.f32 %v4892, %v4909
        %4911 = vmatmul.bf16.gmra.mxu0 %v4446
        %v4912 = vpop.f32.mrf.mxu0
        %v4913 = vadd.f32 %v4895, %v4912
        %v4914 = vpop.f32.mrf.mxu0
        %4915 = vdwg.mxu0
        %4916 = vmatpush.bf16.msra.mxu0 %v4301
        %4917 = vmatpush.bf16.msra.mxu0 %v4277
        %4918 = vmatpush.bf16.msra.mxu0 %v4253
        %4919 = vmatpush.bf16.msra.mxu0 %v4229
        %4920 = vmatpush.bf16.msra.mxu0 %v4205
        %4921 = vmatpush.bf16.msra.mxu0 %v4181
        %4922 = vmatpush.bf16.msra.mxu0 %v4157
        %4923 = vmatpush.bf16.msra.mxu0 %v4133
        %4924 = vmatmul.bf16.gmra.mxu0 %v4435
        %v4925 = vpop.f32.mrf.mxu0
        %v4926 = vadd.f32 %v4414, %v4925
        %v4927 = vpop.f32.mrf.mxu0
        %v4928 = vadd.f32 %v4419, %v4927
        %4929 = vmatmul.bf16.gmra.mxu0 %v4437
        %v4930 = vpop.f32.mrf.mxu0
        %v4931 = vadd.f32 %v4424, %v4930
        %v4932 = vpop.f32.mrf.mxu0
        %4933 = vdwg.mxu0
        %4934 = vmatpush.bf16.msra.mxu0 0
        %4935 = vmatpush.bf16.msra.mxu0 0
        %4936 = vmatpush.bf16.msra.mxu0 0
        %4937 = vmatpush.bf16.msra.mxu0 0
        %4938 = vmatpush.bf16.msra.mxu0 %v4397
        %4939 = vmatpush.bf16.msra.mxu0 %v4373
        %4940 = vmatpush.bf16.msra.mxu0 %v4349
        %4941 = vmatpush.bf16.msra.mxu0 %v4325
        %4942 = vmatmul.bf16.gmra.mxu0 %v4443
        %v4943 = vpop.f32.mrf.mxu0
        %v4944 = vadd.f32 %v4926, %v4943
        %v4945 = vpop.f32.mrf.mxu0
        %v4946 = vadd.f32 %v4928, %v4945
        %4947 = vmatmul.bf16.gmra.mxu0 %v4446
        %v4948 = vpop.f32.mrf.mxu0
        %v4949 = vadd.f32 %v4931, %v4948
        %v4950 = vpop.f32.mrf.mxu0
        %4951 = vdwg.mxu0
        %4952 = vmatpush.bf16.msra.mxu0 %v4302
        %4953 = vmatpush.bf16.msra.mxu0 %v4278
        %4954 = vmatpush.bf16.msra.mxu0 %v4254
        %4955 = vmatpush.bf16.msra.mxu0 %v4230
        %4956 = vmatpush.bf16.msra.mxu0 %v4206
        %4957 = vmatpush.bf16.msra.mxu0 %v4182
        %4958 = vmatpush.bf16.msra.mxu0 %v4158
        %4959 = vmatpush.bf16.msra.mxu0 %v4134
        %4960 = vmatmul.bf16.gmra.mxu0 %v4435
        %v4961 = vpop.f32.mrf.mxu0
        %v4962 = vadd.f32 %v4414, %v4961
        %v4963 = vpop.f32.mrf.mxu0
        %v4964 = vadd.f32 %v4419, %v4963
        %4965 = vmatmul.bf16.gmra.mxu0 %v4437
        %v4966 = vpop.f32.mrf.mxu0
        %v4967 = vadd.f32 %v4424, %v4966
        %v4968 = vpop.f32.mrf.mxu0
        %4969 = vdwg.mxu0
        %4970 = vmatpush.bf16.msra.mxu0 0
        %4971 = vmatpush.bf16.msra.mxu0 0
        %4972 = vmatpush.bf16.msra.mxu0 0
        %4973 = vmatpush.bf16.msra.mxu0 0
        %4974 = vmatpush.bf16.msra.mxu0 %v4398
        %4975 = vmatpush.bf16.msra.mxu0 %v4374
        %4976 = vmatpush.bf16.msra.mxu0 %v4350
        %4977 = vmatpush.bf16.msra.mxu0 %v4326
        %4978 = vmatmul.bf16.gmra.mxu0 %v4443
        %v4979 = vpop.f32.mrf.mxu0
        %v4980 = vadd.f32 %v4962, %v4979
        %v4981 = vpop.f32.mrf.mxu0
        %v4982 = vadd.f32 %v4964, %v4981
        %4983 = vmatmul.bf16.gmra.mxu0 %v4446
        %v4984 = vpop.f32.mrf.mxu0
        %v4985 = vadd.f32 %v4967, %v4984
        %v4986 = vpop.f32.mrf.mxu0
        %4987 = vdwg.mxu0
        %4988 = vmatpush.bf16.msra.mxu0 %v4303
        %4989 = vmatpush.bf16.msra.mxu0 %v4279
        %4990 = vmatpush.bf16.msra.mxu0 %v4255
        %4991 = vmatpush.bf16.msra.mxu0 %v4231
        %4992 = vmatpush.bf16.msra.mxu0 %v4207
        %4993 = vmatpush.bf16.msra.mxu0 %v4183
        %4994 = vmatpush.bf16.msra.mxu0 %v4159
        %4995 = vmatpush.bf16.msra.mxu0 %v4135
        %4996 = vmatmul.bf16.gmra.mxu0 %v4435
        %v4997 = vpop.f32.mrf.mxu0
        %v4998 = vadd.f32 %v4414, %v4997
        %v4999 = vpop.f32.mrf.mxu0
        %v5000 = vadd.f32 %v4419, %v4999
        %5001 = vmatmul.bf16.gmra.mxu0 %v4437
        %v5002 = vpop.f32.mrf.mxu0
        %v5003 = vadd.f32 %v4424, %v5002
        %v5004 = vpop.f32.mrf.mxu0
        %5005 = vdwg.mxu0
        %5006 = vmatpush.bf16.msra.mxu0 0
        %5007 = vmatpush.bf16.msra.mxu0 0
        %5008 = vmatpush.bf16.msra.mxu0 0
        %5009 = vmatpush.bf16.msra.mxu0 0
        %5010 = vmatpush.bf16.msra.mxu0 %v4399
        %5011 = vmatpush.bf16.msra.mxu0 %v4375
        %5012 = vmatpush.bf16.msra.mxu0 %v4351
        %5013 = vmatpush.bf16.msra.mxu0 %v4327
        %5014 = vmatmul.bf16.gmra.mxu0 %v4443
        %v5015 = vpop.f32.mrf.mxu0
        %v5016 = vadd.f32 %v4998, %v5015
        %v5017 = vpop.f32.mrf.mxu0
        %v5018 = vadd.f32 %v5000, %v5017
        %5019 = vmatmul.bf16.gmra.mxu0 %v4446
        %v5020 = vpop.f32.mrf.mxu0
        %v5021 = vadd.f32 %v5003, %v5020
        %v5022 = vpop.f32.mrf.mxu0
        %5023 = vdwg.mxu0
        %5024 = vmatpush.bf16.msra.mxu0 %v4304
        %5025 = vmatpush.bf16.msra.mxu0 %v4280
        %5026 = vmatpush.bf16.msra.mxu0 %v4256
        %5027 = vmatpush.bf16.msra.mxu0 %v4232
        %5028 = vmatpush.bf16.msra.mxu0 %v4208
        %5029 = vmatpush.bf16.msra.mxu0 %v4184
        %5030 = vmatpush.bf16.msra.mxu0 %v4160
        %5031 = vmatpush.bf16.msra.mxu0 %v4136
        %5032 = vmatmul.bf16.gmra.mxu0 %v4435
        %v5033 = vpop.f32.mrf.mxu0
        %v5034 = vadd.f32 %v4414, %v5033
        %v5035 = vpop.f32.mrf.mxu0
        %v5036 = vadd.f32 %v4419, %v5035
        %5037 = vmatmul.bf16.gmra.mxu0 %v4437
        %v5038 = vpop.f32.mrf.mxu0
        %v5039 = vadd.f32 %v4424, %v5038
        %v5040 = vpop.f32.mrf.mxu0
        %5041 = vdwg.mxu0
        %5042 = vmatpush.bf16.msra.mxu0 0
        %5043 = vmatpush.bf16.msra.mxu0 0
        %5044 = vmatpush.bf16.msra.mxu0 0
        %5045 = vmatpush.bf16.msra.mxu0 0
        %5046 = vmatpush.bf16.msra.mxu0 %v4400
        %5047 = vmatpush.bf16.msra.mxu0 %v4376
        %5048 = vmatpush.bf16.msra.mxu0 %v4352
        %5049 = vmatpush.bf16.msra.mxu0 %v4328
        %5050 = vmatmul.bf16.gmra.mxu0 %v4443
        %v5051 = vpop.f32.mrf.mxu0
        %v5052 = vadd.f32 %v5034, %v5051
        %v5053 = vpop.f32.mrf.mxu0
        %v5054 = vadd.f32 %v5036, %v5053
        %5055 = vmatmul.bf16.gmra.mxu0 %v4446
        %v5056 = vpop.f32.mrf.mxu0
        %v5057 = vadd.f32 %v5039, %v5056
        %v5058 = vpop.f32.mrf.mxu0
        %5059 = vdwg.mxu0
        %5060 = vmatpush.bf16.msra.mxu0 %v4305
        %5061 = vmatpush.bf16.msra.mxu0 %v4281
        %5062 = vmatpush.bf16.msra.mxu0 %v4257
        %5063 = vmatpush.bf16.msra.mxu0 %v4233
        %5064 = vmatpush.bf16.msra.mxu0 %v4209
        %5065 = vmatpush.bf16.msra.mxu0 %v4185
        %5066 = vmatpush.bf16.msra.mxu0 %v4161
        %5067 = vmatpush.bf16.msra.mxu0 %v4137
        %5068 = vmatmul.bf16.gmra.mxu0 %v4435
        %v5069 = vpop.f32.mrf.mxu0
        %v5070 = vadd.f32 %v4414, %v5069
        %v5071 = vpop.f32.mrf.mxu0
        %v5072 = vadd.f32 %v4419, %v5071
        %5073 = vmatmul.bf16.gmra.mxu0 %v4437
        %v5074 = vpop.f32.mrf.mxu0
        %v5075 = vadd.f32 %v4424, %v5074
        %v5076 = vpop.f32.mrf.mxu0
        %5077 = vdwg.mxu0
        %5078 = vmatpush.bf16.msra.mxu0 0
        %5079 = vmatpush.bf16.msra.mxu0 0
        %5080 = vmatpush.bf16.msra.mxu0 0
        %5081 = vmatpush.bf16.msra.mxu0 0
        %5082 = vmatpush.bf16.msra.mxu0 %v4401
        %5083 = vmatpush.bf16.msra.mxu0 %v4377
        %5084 = vmatpush.bf16.msra.mxu0 %v4353
        %5085 = vmatpush.bf16.msra.mxu0 %v4329
        %5086 = vmatmul.bf16.gmra.mxu0 %v4443
        %v5087 = vpop.f32.mrf.mxu0
        %v5088 = vadd.f32 %v5070, %v5087
        %v5089 = vpop.f32.mrf.mxu0
        %v5090 = vadd.f32 %v5072, %v5089
        %5091 = vmatmul.bf16.gmra.mxu0 %v4446
        %v5092 = vpop.f32.mrf.mxu0
        %v5093 = vadd.f32 %v5075, %v5092
        %v5094 = vpop.f32.mrf.mxu0
        %5095 = vdwg.mxu0
        %5096 = vmatpush.bf16.msra.mxu0 %v4306
        %5097 = vmatpush.bf16.msra.mxu0 %v4282
        %5098 = vmatpush.bf16.msra.mxu0 %v4258
        %5099 = vmatpush.bf16.msra.mxu0 %v4234
        %5100 = vmatpush.bf16.msra.mxu0 %v4210
        %5101 = vmatpush.bf16.msra.mxu0 %v4186
        %5102 = vmatpush.bf16.msra.mxu0 %v4162
        %5103 = vmatpush.bf16.msra.mxu0 %v4138
        %5104 = vmatmul.bf16.gmra.mxu0 %v4435
        %v5105 = vpop.f32.mrf.mxu0
        %v5106 = vadd.f32 %v4414, %v5105
        %v5107 = vpop.f32.mrf.mxu0
        %v5108 = vadd.f32 %v4419, %v5107
        %5109 = vmatmul.bf16.gmra.mxu0 %v4437
        %v5110 = vpop.f32.mrf.mxu0
        %v5111 = vadd.f32 %v4424, %v5110
        %v5112 = vpop.f32.mrf.mxu0
        %5113 = vdwg.mxu0
        %5114 = vmatpush.bf16.msra.mxu0 0
        %5115 = vmatpush.bf16.msra.mxu0 0
        %5116 = vmatpush.bf16.msra.mxu0 0
        %5117 = vmatpush.bf16.msra.mxu0 0
        %5118 = vmatpush.bf16.msra.mxu0 %v4402
        %5119 = vmatpush.bf16.msra.mxu0 %v4378
        %5120 = vmatpush.bf16.msra.mxu0 %v4354
        %5121 = vmatpush.bf16.msra.mxu0 %v4330
        %5122 = vmatmul.bf16.gmra.mxu0 %v4443
        %v5123 = vpop.f32.mrf.mxu0
        %v5124 = vadd.f32 %v5106, %v5123
        %v5125 = vpop.f32.mrf.mxu0
        %v5126 = vadd.f32 %v5108, %v5125
        %5127 = vmatmul.bf16.gmra.mxu0 %v4446
        %v5128 = vpop.f32.mrf.mxu0
        %v5129 = vadd.f32 %v5111, %v5128
        %v5130 = vpop.f32.mrf.mxu0
        %5131 = vdwg.mxu0
        %5132 = vmatpush.bf16.msra.mxu0 %v4307
        %5133 = vmatpush.bf16.msra.mxu0 %v4283
        %5134 = vmatpush.bf16.msra.mxu0 %v4259
        %5135 = vmatpush.bf16.msra.mxu0 %v4235
        %5136 = vmatpush.bf16.msra.mxu0 %v4211
        %5137 = vmatpush.bf16.msra.mxu0 %v4187
        %5138 = vmatpush.bf16.msra.mxu0 %v4163
        %5139 = vmatpush.bf16.msra.mxu0 %v4139
        %5140 = vmatmul.bf16.gmra.mxu0 %v4435
        %v5141 = vpop.f32.mrf.mxu0
        %v5142 = vadd.f32 %v4414, %v5141
        %v5143 = vpop.f32.mrf.mxu0
        %v5144 = vadd.f32 %v4419, %v5143
        %5145 = vmatmul.bf16.gmra.mxu0 %v4437
        %v5146 = vpop.f32.mrf.mxu0
        %v5147 = vadd.f32 %v4424, %v5146
        %v5148 = vpop.f32.mrf.mxu0
        %5149 = vdwg.mxu0
        %5150 = vmatpush.bf16.msra.mxu0 0
        %5151 = vmatpush.bf16.msra.mxu0 0
        %5152 = vmatpush.bf16.msra.mxu0 0
        %5153 = vmatpush.bf16.msra.mxu0 0
        %5154 = vmatpush.bf16.msra.mxu0 %v4403
        %5155 = vmatpush.bf16.msra.mxu0 %v4379
        %5156 = vmatpush.bf16.msra.mxu0 %v4355
        %5157 = vmatpush.bf16.msra.mxu0 %v4331
        %5158 = vmatmul.bf16.gmra.mxu0 %v4443
        %v5159 = vpop.f32.mrf.mxu0
        %v5160 = vadd.f32 %v5142, %v5159
        %v5161 = vpop.f32.mrf.mxu0
        %v5162 = vadd.f32 %v5144, %v5161
        %5163 = vmatmul.bf16.gmra.mxu0 %v4446
        %v5164 = vpop.f32.mrf.mxu0
        %v5165 = vadd.f32 %v5147, %v5164
        %v5166 = vpop.f32.mrf.mxu0
        %5167 = vdwg.mxu0
        %5168 = vmatpush.bf16.msra.mxu0 %v4308
        %5169 = vmatpush.bf16.msra.mxu0 %v4284
        %5170 = vmatpush.bf16.msra.mxu0 %v4260
        %5171 = vmatpush.bf16.msra.mxu0 %v4236
        %5172 = vmatpush.bf16.msra.mxu0 %v4212
        %5173 = vmatpush.bf16.msra.mxu0 %v4188
        %5174 = vmatpush.bf16.msra.mxu0 %v4164
        %5175 = vmatpush.bf16.msra.mxu0 %v4140
        %5176 = vmatmul.bf16.gmra.mxu0 %v4435
        %v5177 = vpop.f32.mrf.mxu0
        %v5178 = vadd.f32 %v4414, %v5177
        %v5179 = vpop.f32.mrf.mxu0
        %v5180 = vadd.f32 %v4419, %v5179
        %5181 = vmatmul.bf16.gmra.mxu0 %v4437
        %v5182 = vpop.f32.mrf.mxu0
        %v5183 = vadd.f32 %v4424, %v5182
        %v5184 = vpop.f32.mrf.mxu0
        %5185 = vdwg.mxu0
        %5186 = vmatpush.bf16.msra.mxu0 0
        %5187 = vmatpush.bf16.msra.mxu0 0
        %5188 = vmatpush.bf16.msra.mxu0 0
        %5189 = vmatpush.bf16.msra.mxu0 0
        %5190 = vmatpush.bf16.msra.mxu0 %v4404
        %5191 = vmatpush.bf16.msra.mxu0 %v4380
        %5192 = vmatpush.bf16.msra.mxu0 %v4356
        %5193 = vmatpush.bf16.msra.mxu0 %v4332
        %5194 = vmatmul.bf16.gmra.mxu0 %v4443
        %v5195 = vpop.f32.mrf.mxu0
        %v5196 = vadd.f32 %v5178, %v5195
        %v5197 = vpop.f32.mrf.mxu0
        %v5198 = vadd.f32 %v5180, %v5197
        %5199 = vmatmul.bf16.gmra.mxu0 %v4446
        %v5200 = vpop.f32.mrf.mxu0
        %v5201 = vadd.f32 %v5183, %v5200
        %v5202 = vpop.f32.mrf.mxu0
        %5203 = vdwg.mxu0
        %5204 = vmatpush.bf16.msra.mxu0 %v4309
        %5205 = vmatpush.bf16.msra.mxu0 %v4285
        %5206 = vmatpush.bf16.msra.mxu0 %v4261
        %5207 = vmatpush.bf16.msra.mxu0 %v4237
        %5208 = vmatpush.bf16.msra.mxu0 %v4213
        %5209 = vmatpush.bf16.msra.mxu0 %v4189
        %5210 = vmatpush.bf16.msra.mxu0 %v4165
        %5211 = vmatpush.bf16.msra.mxu0 %v4141
        %5212 = vmatmul.bf16.gmra.mxu0 %v4435
        %v5213 = vpop.f32.mrf.mxu0
        %v5214 = vadd.f32 %v4414, %v5213
        %v5215 = vpop.f32.mrf.mxu0
        %v5216 = vadd.f32 %v4419, %v5215
        %5217 = vmatmul.bf16.gmra.mxu0 %v4437
        %v5218 = vpop.f32.mrf.mxu0
        %v5219 = vadd.f32 %v4424, %v5218
        %v5220 = vpop.f32.mrf.mxu0
        %5221 = vdwg.mxu0
        %5222 = vmatpush.bf16.msra.mxu0 0
        %5223 = vmatpush.bf16.msra.mxu0 0
        %5224 = vmatpush.bf16.msra.mxu0 0
        %5225 = vmatpush.bf16.msra.mxu0 0
        %5226 = vmatpush.bf16.msra.mxu0 %v4405
        %5227 = vmatpush.bf16.msra.mxu0 %v4381
        %5228 = vmatpush.bf16.msra.mxu0 %v4357
        %5229 = vmatpush.bf16.msra.mxu0 %v4333
        %5230 = vmatmul.bf16.gmra.mxu0 %v4443
        %v5231 = vpop.f32.mrf.mxu0
        %v5232 = vadd.f32 %v5214, %v5231
        %v5233 = vpop.f32.mrf.mxu0
        %v5234 = vadd.f32 %v5216, %v5233
        %5235 = vmatmul.bf16.gmra.mxu0 %v4446
        %v5236 = vpop.f32.mrf.mxu0
        %v5237 = vadd.f32 %v5219, %v5236
        %v5238 = vpop.f32.mrf.mxu0
        %5239 = vdwg.mxu0
        %5240 = vmatpush.bf16.msra.mxu0 %v4310
        %5241 = vmatpush.bf16.msra.mxu0 %v4286
        %5242 = vmatpush.bf16.msra.mxu0 %v4262
        %5243 = vmatpush.bf16.msra.mxu0 %v4238
        %5244 = vmatpush.bf16.msra.mxu0 %v4214
        %5245 = vmatpush.bf16.msra.mxu0 %v4190
        %5246 = vmatpush.bf16.msra.mxu0 %v4166
        %5247 = vmatpush.bf16.msra.mxu0 %v4142
        %5248 = vmatmul.bf16.gmra.mxu0 %v4435
        %v5249 = vpop.f32.mrf.mxu0
        %v5250 = vadd.f32 %v4414, %v5249
        %v5251 = vpop.f32.mrf.mxu0
        %v5252 = vadd.f32 %v4419, %v5251
        %5253 = vmatmul.bf16.gmra.mxu0 %v4437
        %v5254 = vpop.f32.mrf.mxu0
        %v5255 = vadd.f32 %v4424, %v5254
        %v5256 = vpop.f32.mrf.mxu0
        %5257 = vdwg.mxu0
        %5258 = vmatpush.bf16.msra.mxu0 0
        %5259 = vmatpush.bf16.msra.mxu0 0
        %5260 = vmatpush.bf16.msra.mxu0 0
        %5261 = vmatpush.bf16.msra.mxu0 0
        %5262 = vmatpush.bf16.msra.mxu0 %v4406
        %5263 = vmatpush.bf16.msra.mxu0 %v4382
        %5264 = vmatpush.bf16.msra.mxu0 %v4358
        %5265 = vmatpush.bf16.msra.mxu0 %v4334
        %5266 = vmatmul.bf16.gmra.mxu0 %v4443
        %v5267 = vpop.f32.mrf.mxu0
        %v5268 = vadd.f32 %v5250, %v5267
        %v5269 = vpop.f32.mrf.mxu0
        %v5270 = vadd.f32 %v5252, %v5269
        %5271 = vmatmul.bf16.gmra.mxu0 %v4446
        %v5272 = vpop.f32.mrf.mxu0
        %v5273 = vadd.f32 %v5255, %v5272
        %v5274 = vpop.f32.mrf.mxu0
        %5275 = vdwg.mxu0
        %5276 = vmatpush.bf16.msra.mxu0 %v4311
        %5277 = vmatpush.bf16.msra.mxu0 %v4287
        %5278 = vmatpush.bf16.msra.mxu0 %v4263
        %5279 = vmatpush.bf16.msra.mxu0 %v4239
        %5280 = vmatpush.bf16.msra.mxu0 %v4215
        %5281 = vmatpush.bf16.msra.mxu0 %v4191
        %5282 = vmatpush.bf16.msra.mxu0 %v4167
        %5283 = vmatpush.bf16.msra.mxu0 %v4143
        %5284 = vmatmul.bf16.gmra.mxu0 %v4435
        %v5285 = vpop.f32.mrf.mxu0
        %v5286 = vadd.f32 %v4414, %v5285
        %v5287 = vpop.f32.mrf.mxu0
        %v5288 = vadd.f32 %v4419, %v5287
        %5289 = vmatmul.bf16.gmra.mxu0 %v4437
        %v5290 = vpop.f32.mrf.mxu0
        %v5291 = vadd.f32 %v4424, %v5290
        %v5292 = vpop.f32.mrf.mxu0
        %5293 = vdwg.mxu0
        %5294 = vmatpush.bf16.msra.mxu0 0
        %5295 = vmatpush.bf16.msra.mxu0 0
        %5296 = vmatpush.bf16.msra.mxu0 0
        %5297 = vmatpush.bf16.msra.mxu0 0
        %5298 = vmatpush.bf16.msra.mxu0 %v4407
        %5299 = vmatpush.bf16.msra.mxu0 %v4383
        %5300 = vmatpush.bf16.msra.mxu0 %v4359
        %5301 = vmatpush.bf16.msra.mxu0 %v4335
        %5302 = vmatmul.bf16.gmra.mxu0 %v4443
        %v5303 = vpop.f32.mrf.mxu0
        %v5304 = vadd.f32 %v5286, %v5303
        %v5305 = vpop.f32.mrf.mxu0
        %v5306 = vadd.f32 %v5288, %v5305
        %5307 = vmatmul.bf16.gmra.mxu0 %v4446
        %v5308 = vpop.f32.mrf.mxu0
        %v5309 = vadd.f32 %v5291, %v5308
        %v5310 = vpop.f32.mrf.mxu0
        %5311 = vdwg.mxu0
        %v5312 = vmax.f32 %v4476, 0.0
        %v5313 = vmax.f32 %v4512, 0.0
        %v5314 = vmax.f32 %v4548, 0.0
        %v5315 = vmax.f32 %v4584, 0.0
        %v5316 = vmax.f32 %v4620, 0.0
        %v5317 = vmax.f32 %v4656, 0.0
        %v5318 = vmax.f32 %v4692, 0.0
        %v5319 = vmax.f32 %v4728, 0.0
        %v5320 = vmax.f32 %v4764, 0.0
        %v5321 = vmax.f32 %v4800, 0.0
        %v5322 = vmax.f32 %v4836, 0.0
        %v5323 = vmax.f32 %v4872, 0.0
        %v5324 = vmax.f32 %v4908, 0.0
        %v5325 = vmax.f32 %v4944, 0.0
        %v5326 = vmax.f32 %v4980, 0.0
        %v5327 = vmax.f32 %v5016, 0.0
        %v5328 = vmax.f32 %v5052, 0.0
        %v5329 = vmax.f32 %v5088, 0.0
        %v5330 = vmax.f32 %v5124, 0.0
        %v5331 = vmax.f32 %v5160, 0.0
        %v5332 = vmax.f32 %v5196, 0.0
        %v5333 = vmax.f32 %v5232, 0.0
        %v5334 = vmax.f32 %v5268, 0.0
        %v5335 = vmax.f32 %v5304, 0.0
        %v5336 = vmax.f32 %v4478, 0.0
        %v5337 = vmax.f32 %v4514, 0.0
        %v5338 = vmax.f32 %v4550, 0.0
        %v5339 = vmax.f32 %v4586, 0.0
        %v5340 = vmax.f32 %v4622, 0.0
        %v5341 = vmax.f32 %v4658, 0.0
        %v5342 = vmax.f32 %v4694, 0.0
        %v5343 = vmax.f32 %v4730, 0.0
        %v5344 = vmax.f32 %v4766, 0.0
        %v5345 = vmax.f32 %v4802, 0.0
        %v5346 = vmax.f32 %v4838, 0.0
        %v5347 = vmax.f32 %v4874, 0.0
        %v5348 = vmax.f32 %v4910, 0.0
        %v5349 = vmax.f32 %v4946, 0.0
        %v5350 = vmax.f32 %v4982, 0.0
        %v5351 = vmax.f32 %v5018, 0.0
        %v5352 = vmax.f32 %v5054, 0.0
        %v5353 = vmax.f32 %v5090, 0.0
        %v5354 = vmax.f32 %v5126, 0.0
        %v5355 = vmax.f32 %v5162, 0.0
        %v5356 = vmax.f32 %v5198, 0.0
        %v5357 = vmax.f32 %v5234, 0.0
        %v5358 = vmax.f32 %v5270, 0.0
        %v5359 = vmax.f32 %v5306, 0.0
        %v5360 = vmax.f32 %v4481, 0.0
        %v5361 = vmax.f32 %v4517, 0.0
        %v5362 = vmax.f32 %v4553, 0.0
        %v5363 = vmax.f32 %v4589, 0.0
        %v5364 = vmax.f32 %v4625, 0.0
        %v5365 = vmax.f32 %v4661, 0.0
        %v5366 = vmax.f32 %v4697, 0.0
        %v5367 = vmax.f32 %v4733, 0.0
        %v5368 = vmax.f32 %v4769, 0.0
        %v5369 = vmax.f32 %v4805, 0.0
        %v5370 = vmax.f32 %v4841, 0.0
        %v5371 = vmax.f32 %v4877, 0.0
        %v5372 = vmax.f32 %v4913, 0.0
        %v5373 = vmax.f32 %v4949, 0.0
        %v5374 = vmax.f32 %v4985, 0.0
        %v5375 = vmax.f32 %v5021, 0.0
        %v5376 = vmax.f32 %v5057, 0.0
        %v5377 = vmax.f32 %v5093, 0.0
        %v5378 = vmax.f32 %v5129, 0.0
        %v5379 = vmax.f32 %v5165, 0.0
        %v5380 = vmax.f32 %v5201, 0.0
        %v5381 = vmax.f32 %v5237, 0.0
        %v5382 = vmax.f32 %v5273, 0.0
        %v5383 = vmax.f32 %v5309, 0.0
        %v5384 = vpack.c.bf16 %v5336, %v5312
        %v5385 = vpack.c.bf16 %v5337, %v5313
        %v5386 = vpack.c.bf16 %v5338, %v5314
        %v5387 = vpack.c.bf16 %v5339, %v5315
        %v5388 = vpack.c.bf16 %v5340, %v5316
        %v5389 = vpack.c.bf16 %v5341, %v5317
        %v5390 = vpack.c.bf16 %v5342, %v5318
        %v5391 = vpack.c.bf16 %v5343, %v5319
        %v5392 = vpack.c.bf16 %v5344, %v5320
        %v5393 = vpack.c.bf16 %v5345, %v5321
        %v5394 = vpack.c.bf16 %v5346, %v5322
        %v5395 = vpack.c.bf16 %v5347, %v5323
        %v5396 = vpack.c.bf16 %v5348, %v5324
        %v5397 = vpack.c.bf16 %v5349, %v5325
        %v5398 = vpack.c.bf16 %v5350, %v5326
        %v5399 = vpack.c.bf16 %v5351, %v5327
        %v5400 = vpack.c.bf16 %v5352, %v5328
        %v5401 = vpack.c.bf16 %v5353, %v5329
        %v5402 = vpack.c.bf16 %v5354, %v5330
        %v5403 = vpack.c.bf16 %v5355, %v5331
        %v5404 = vpack.c.bf16 %v5356, %v5332
        %v5405 = vpack.c.bf16 %v5357, %v5333
        %v5406 = vpack.c.bf16 %v5358, %v5334
        %v5407 = vpack.c.bf16 %v5359, %v5335
        %v5408 = vpack.c.bf16 %v5360, %v5360
        %v5409 = vpack.c.bf16 %v5361, %v5361
        %v5410 = vpack.c.bf16 %v5362, %v5362
        %v5411 = vpack.c.bf16 %v5363, %v5363
        %v5412 = vpack.c.bf16 %v5364, %v5364
        %v5413 = vpack.c.bf16 %v5365, %v5365
        %v5414 = vpack.c.bf16 %v5366, %v5366
        %v5415 = vpack.c.bf16 %v5367, %v5367
        %v5416 = vpack.c.bf16 %v5368, %v5368
        %v5417 = vpack.c.bf16 %v5369, %v5369
        %v5418 = vpack.c.bf16 %v5370, %v5370
        %v5419 = vpack.c.bf16 %v5371, %v5371
        %v5420 = vpack.c.bf16 %v5372, %v5372
        %v5421 = vpack.c.bf16 %v5373, %v5373
        %v5422 = vpack.c.bf16 %v5374, %v5374
        %v5423 = vpack.c.bf16 %v5375, %v5375
        %v5424 = vpack.c.bf16 %v5376, %v5376
        %v5425 = vpack.c.bf16 %v5377, %v5377
        %v5426 = vpack.c.bf16 %v5378, %v5378
        %v5427 = vpack.c.bf16 %v5379, %v5379
        %v5428 = vpack.c.bf16 %v5380, %v5380
        %v5429 = vpack.c.bf16 %v5381, %v5381
        %v5430 = vpack.c.bf16 %v5382, %v5382
        %v5431 = vpack.c.bf16 %v5383, %v5383
        %v5432 = vld [vmem:[#allocation11] sm:$0xff]
        %v5433 = vld [vmem:[#allocation11 + $0x8] sm:$0xff]
        %v5434 = vld [vmem:[#allocation11 + $0x10] sm:$0xff]
        %v5435 = vld [vmem:[#allocation11 + $0x18] sm:$0xff]
        %v5436 = vld [vmem:[#allocation11 + $0x20] sm:$0xff]
        %v5437 = vld [vmem:[#allocation11 + $0x28] sm:$0xff]
        %v5438 = vld [vmem:[#allocation11 + $0x30] sm:$0xff]
        %v5439 = vld [vmem:[#allocation11 + $0x38] sm:$0xff]
        %v5440 = vld [vmem:[#allocation11 + $0x40] sm:$0xff]
        %v5441 = vld [vmem:[#allocation11 + $0x48] sm:$0xff]
        %v5442 = vld [vmem:[#allocation11 + $0x50] sm:$0xff]
        %v5443 = vld [vmem:[#allocation11 + $0x58] sm:$0xff]
        %v5444 = vld [vmem:[#allocation11 + $0x60] sm:$0xff]
        %v5445 = vld [vmem:[#allocation11 + $0x68] sm:$0xff]
        %v5446 = vld [vmem:[#allocation11 + $0x70] sm:$0xff]
        %v5447 = vld [vmem:[#allocation11 + $0x78] sm:$0xff]
        %v5448 = vld [vmem:[#allocation11 + $0x80] sm:$0xff]
        %v5449 = vld [vmem:[#allocation11 + $0x88] sm:$0xff]
        %v5450 = vld [vmem:[#allocation11 + $0x90] sm:$0xff]
        %v5451 = vld [vmem:[#allocation11 + $0x98] sm:$0xff]
        %v5452 = vld [vmem:[#allocation11 + $0xa0] sm:$0xff]
        %v5453 = vld [vmem:[#allocation11 + $0xa8] sm:$0xff]
        %v5454 = vld [vmem:[#allocation11 + $0xb0] sm:$0xff]
        %v5455 = vld [vmem:[#allocation11 + $0xb8] sm:$0xff]
        %v5456 = vld [vmem:[#allocation11 + $0xc0] sm:$0xff]
        %v5457 = vld [vmem:[#allocation11 + $0xc8] sm:$0xff]
        %v5458 = vld [vmem:[#allocation11 + $0xd0] sm:$0xff]
        %v5459 = vld [vmem:[#allocation11 + $0xd8] sm:$0xff]
        %v5460 = vld [vmem:[#allocation11 + $0xe0] sm:$0xff]
        %v5461 = vld [vmem:[#allocation11 + $0xe8] sm:$0xff]
        %v5462 = vld [vmem:[#allocation11 + $0xf0] sm:$0xff]
        %v5463 = vld [vmem:[#allocation11 + $0xf8] sm:$0xff]
        %v5464 = vld [vmem:[#allocation11 + $0x100] sm:$0xff]
        %v5465 = vld [vmem:[#allocation11 + $0x108] sm:$0xff]
        %v5466 = vld [vmem:[#allocation11 + $0x110] sm:$0xff]
        %v5467 = vld [vmem:[#allocation11 + $0x118] sm:$0xff]
        %v5468 = vld [vmem:[#allocation11 + $0x120] sm:$0xff]
        %v5469 = vld [vmem:[#allocation11 + $0x128] sm:$0xff]
        %v5470 = vld [vmem:[#allocation11 + $0x130] sm:$0xff]
        %v5471 = vld [vmem:[#allocation11 + $0x138] sm:$0xff]
        %v5472 = vld [vmem:[#allocation11 + $0x140] sm:$0xff]
        %v5473 = vld [vmem:[#allocation11 + $0x148] sm:$0xff]
        %v5474 = vld [vmem:[#allocation11 + $0x150] sm:$0xff]
        %v5475 = vld [vmem:[#allocation11 + $0x158] sm:$0xff]
        %v5476 = vld [vmem:[#allocation11 + $0x160] sm:$0xff]
        %v5477 = vld [vmem:[#allocation11 + $0x168] sm:$0xff]
        %v5478 = vld [vmem:[#allocation11 + $0x170] sm:$0xff]
        %v5479 = vld [vmem:[#allocation11 + $0x178] sm:$0xff]
        %v5480 = vld [vmem:[#allocation11 + $0x180] sm:$0xff]
        %v5481 = vld [vmem:[#allocation11 + $0x188] sm:$0xff]
        %v5482 = vld [vmem:[#allocation11 + $0x190] sm:$0xff]
        %v5483 = vld [vmem:[#allocation11 + $0x198] sm:$0xff]
        %v5484 = vld [vmem:[#allocation11 + $0x1a0] sm:$0xff]
        %v5485 = vld [vmem:[#allocation11 + $0x1a8] sm:$0xff]
        %v5486 = vld [vmem:[#allocation11 + $0x1b0] sm:$0xff]
        %v5487 = vld [vmem:[#allocation11 + $0x1b8] sm:$0xff]
        %v5488 = vld [vmem:[#allocation11 + $0x1c0] sm:$0xff]
        %v5489 = vld [vmem:[#allocation11 + $0x1c8] sm:$0xff]
        %v5490 = vld [vmem:[#allocation11 + $0x1d0] sm:$0xff]
        %v5491 = vld [vmem:[#allocation11 + $0x1d8] sm:$0xff]
        %v5492 = vld [vmem:[#allocation11 + $0x1e0] sm:$0xff]
        %v5493 = vld [vmem:[#allocation11 + $0x1e8] sm:$0xff]
        %v5494 = vld [vmem:[#allocation11 + $0x1f0] sm:$0xff]
        %v5495 = vld [vmem:[#allocation11 + $0x1f8] sm:$0xff]
        %v5496 = vld [vmem:[#allocation11 + $0x200] sm:$0xff]
        %v5497 = vld [vmem:[#allocation11 + $0x208] sm:$0xff]
        %v5498 = vld [vmem:[#allocation11 + $0x210] sm:$0xff]
        %v5499 = vld [vmem:[#allocation11 + $0x218] sm:$0xff]
        %v5500 = vld [vmem:[#allocation11 + $0x220] sm:$0xff]
        %v5501 = vld [vmem:[#allocation11 + $0x228] sm:$0xff]
        %v5502 = vld [vmem:[#allocation11 + $0x230] sm:$0xff]
        %v5503 = vld [vmem:[#allocation11 + $0x238] sm:$0xff]
        %v5504 = vld [vmem:[#allocation11 + $0x240] sm:$0xff]
        %v5505 = vld [vmem:[#allocation11 + $0x248] sm:$0xff]
        %v5506 = vld [vmem:[#allocation11 + $0x250] sm:$0xff]
        %v5507 = vld [vmem:[#allocation11 + $0x258] sm:$0xff]
        %v5508 = vld [vmem:[#allocation11 + $0x260] sm:$0xff]
        %v5509 = vld [vmem:[#allocation11 + $0x268] sm:$0xff]
        %v5510 = vld [vmem:[#allocation11 + $0x270] sm:$0xff]
        %v5511 = vld [vmem:[#allocation11 + $0x278] sm:$0xff]
        %v5512 = vld [vmem:[#allocation11 + $0x280] sm:$0xff]
        %v5513 = vld [vmem:[#allocation11 + $0x288] sm:$0xff]
        %v5514 = vld [vmem:[#allocation11 + $0x290] sm:$0xff]
        %v5515 = vld [vmem:[#allocation11 + $0x298] sm:$0xff]
        %v5516 = vld [vmem:[#allocation11 + $0x2a0] sm:$0xff]
        %v5517 = vld [vmem:[#allocation11 + $0x2a8] sm:$0xff]
        %v5518 = vld [vmem:[#allocation11 + $0x2b0] sm:$0xff]
        %v5519 = vld [vmem:[#allocation11 + $0x2b8] sm:$0xff]
        %v5520 = vld [vmem:[#allocation11 + $0x2c0] sm:$0xff]
        %v5521 = vld [vmem:[#allocation11 + $0x2c8] sm:$0xff]
        %v5522 = vld [vmem:[#allocation11 + $0x2d0] sm:$0xff]
        %v5523 = vld [vmem:[#allocation11 + $0x2d8] sm:$0xff]
        %v5524 = vld [vmem:[#allocation11 + $0x2e0] sm:$0xff]
        %v5525 = vld [vmem:[#allocation11 + $0x2e8] sm:$0xff]
        %v5526 = vld [vmem:[#allocation11 + $0x2f0] sm:$0xff]
        %v5527 = vld [vmem:[#allocation11 + $0x2f8] sm:$0xff]
        %v5528 = vld [vmem:[#allocation11 + $0x300] sm:$0xff]
        %v5529 = vld [vmem:[#allocation11 + $0x308] sm:$0xff]
        %v5530 = vld [vmem:[#allocation11 + $0x310] sm:$0xff]
        %v5531 = vld [vmem:[#allocation11 + $0x318] sm:$0xff]
        %v5532 = vld [vmem:[#allocation11 + $0x320] sm:$0xff]
        %v5533 = vld [vmem:[#allocation11 + $0x328] sm:$0xff]
        %v5534 = vld [vmem:[#allocation11 + $0x330] sm:$0xff]
        %v5535 = vld [vmem:[#allocation11 + $0x338] sm:$0xff]
        %v5536 = vld [vmem:[#allocation11 + $0x340] sm:$0xff]
        %v5537 = vld [vmem:[#allocation11 + $0x348] sm:$0xff]
        %v5538 = vld [vmem:[#allocation11 + $0x350] sm:$0xff]
        %v5539 = vld [vmem:[#allocation11 + $0x358] sm:$0xff]
        %v5540 = vld [vmem:[#allocation11 + $0x360] sm:$0xff]
        %v5541 = vld [vmem:[#allocation11 + $0x368] sm:$0xff]
        %v5542 = vld [vmem:[#allocation11 + $0x370] sm:$0xff]
        %v5543 = vld [vmem:[#allocation11 + $0x378] sm:$0xff]
        %v5544 = vld [vmem:[#allocation11 + $0x380] sm:$0xff]
        %v5545 = vld [vmem:[#allocation11 + $0x388] sm:$0xff]
        %v5546 = vld [vmem:[#allocation11 + $0x390] sm:$0xff]
        %v5547 = vld [vmem:[#allocation11 + $0x398] sm:$0xff]
        %v5548 = vld [vmem:[#allocation11 + $0x3a0] sm:$0xff]
        %v5549 = vld [vmem:[#allocation11 + $0x3a8] sm:$0xff]
        %v5550 = vld [vmem:[#allocation11 + $0x3b0] sm:$0xff]
        %v5551 = vld [vmem:[#allocation11 + $0x3b8] sm:$0xff]
        %v5552 = vld [vmem:[#allocation11 + $0x3c0] sm:$0xff]
        %v5553 = vld [vmem:[#allocation11 + $0x3c8] sm:$0xff]
        %v5554 = vld [vmem:[#allocation11 + $0x3d0] sm:$0xff]
        %v5555 = vld [vmem:[#allocation11 + $0x3d8] sm:$0xff]
        %v5556 = vld [vmem:[#allocation11 + $0x3e0] sm:$0xff]
        %v5557 = vld [vmem:[#allocation11 + $0x3e8] sm:$0xff]
        %v5558 = vld [vmem:[#allocation11 + $0x3f0] sm:$0xff]
        %v5559 = vld [vmem:[#allocation11 + $0x3f8] sm:$0xff]
        %v5560 = vld [vmem:[#allocation11 + $0x400] sm:$0xff]
        %v5561 = vld [vmem:[#allocation11 + $0x408] sm:$0xff]
        %v5562 = vld [vmem:[#allocation11 + $0x410] sm:$0xff]
        %v5563 = vld [vmem:[#allocation11 + $0x418] sm:$0xff]
        %v5564 = vld [vmem:[#allocation11 + $0x420] sm:$0xff]
        %v5565 = vld [vmem:[#allocation11 + $0x428] sm:$0xff]
        %v5566 = vld [vmem:[#allocation11 + $0x430] sm:$0xff]
        %v5567 = vld [vmem:[#allocation11 + $0x438] sm:$0xff]
        %v5568 = vld [vmem:[#allocation11 + $0x440] sm:$0xff]
        %v5569 = vld [vmem:[#allocation11 + $0x448] sm:$0xff]
        %v5570 = vld [vmem:[#allocation11 + $0x450] sm:$0xff]
        %v5571 = vld [vmem:[#allocation11 + $0x458] sm:$0xff]
        %v5572 = vld [vmem:[#allocation11 + $0x460] sm:$0xff]
        %v5573 = vld [vmem:[#allocation11 + $0x468] sm:$0xff]
        %v5574 = vld [vmem:[#allocation11 + $0x470] sm:$0xff]
        %v5575 = vld [vmem:[#allocation11 + $0x478] sm:$0xff]
        %v5576 = vld [vmem:[#allocation11 + $0x480] sm:$0xff]
        %v5577 = vld [vmem:[#allocation11 + $0x488] sm:$0xff]
        %v5578 = vld [vmem:[#allocation11 + $0x490] sm:$0xff]
        %v5579 = vld [vmem:[#allocation11 + $0x498] sm:$0xff]
        %v5580 = vld [vmem:[#allocation11 + $0x4a0] sm:$0xff]
        %v5581 = vld [vmem:[#allocation11 + $0x4a8] sm:$0xff]
        %v5582 = vld [vmem:[#allocation11 + $0x4b0] sm:$0xff]
        %v5583 = vld [vmem:[#allocation11 + $0x4b8] sm:$0xff]
        %v5584 = vld [vmem:[#allocation11 + $0x4c0] sm:$0xff]
        %v5585 = vld [vmem:[#allocation11 + $0x4c8] sm:$0xff]
        %v5586 = vld [vmem:[#allocation11 + $0x4d0] sm:$0xff]
        %v5587 = vld [vmem:[#allocation11 + $0x4d8] sm:$0xff]
        %v5588 = vld [vmem:[#allocation11 + $0x4e0] sm:$0xff]
        %v5589 = vld [vmem:[#allocation11 + $0x4e8] sm:$0xff]
        %v5590 = vld [vmem:[#allocation11 + $0x4f0] sm:$0xff]
        %v5591 = vld [vmem:[#allocation11 + $0x4f8] sm:$0xff]
        %v5592 = vld [vmem:[#allocation11 + $0x500] sm:$0xff]
        %v5593 = vld [vmem:[#allocation11 + $0x508] sm:$0xff]
        %v5594 = vld [vmem:[#allocation11 + $0x510] sm:$0xff]
        %v5595 = vld [vmem:[#allocation11 + $0x518] sm:$0xff]
        %v5596 = vld [vmem:[#allocation11 + $0x520] sm:$0xff]
        %v5597 = vld [vmem:[#allocation11 + $0x528] sm:$0xff]
        %v5598 = vld [vmem:[#allocation11 + $0x530] sm:$0xff]
        %v5599 = vld [vmem:[#allocation11 + $0x538] sm:$0xff]
        %v5600 = vld [vmem:[#allocation11 + $0x540] sm:$0xff]
        %v5601 = vld [vmem:[#allocation11 + $0x548] sm:$0xff]
        %v5602 = vld [vmem:[#allocation11 + $0x550] sm:$0xff]
        %v5603 = vld [vmem:[#allocation11 + $0x558] sm:$0xff]
        %v5604 = vld [vmem:[#allocation11 + $0x560] sm:$0xff]
        %v5605 = vld [vmem:[#allocation11 + $0x568] sm:$0xff]
        %v5606 = vld [vmem:[#allocation11 + $0x570] sm:$0xff]
        %v5607 = vld [vmem:[#allocation11 + $0x578] sm:$0xff]
        %v5608 = vld [vmem:[#allocation11 + $0x580] sm:$0xff]
        %v5609 = vld [vmem:[#allocation11 + $0x588] sm:$0xff]
        %v5610 = vld [vmem:[#allocation11 + $0x590] sm:$0xff]
        %v5611 = vld [vmem:[#allocation11 + $0x598] sm:$0xff]
        %v5612 = vld [vmem:[#allocation11 + $0x5a0] sm:$0xff]
        %v5613 = vld [vmem:[#allocation11 + $0x5a8] sm:$0xff]
        %v5614 = vld [vmem:[#allocation11 + $0x5b0] sm:$0xff]
        %v5615 = vld [vmem:[#allocation11 + $0x5b8] sm:$0xff]
        %v5616 = vld [vmem:[#allocation11 + $0x5c0] sm:$0xff]
        %v5617 = vld [vmem:[#allocation11 + $0x5c8] sm:$0xff]
        %v5618 = vld [vmem:[#allocation11 + $0x5d0] sm:$0xff]
        %v5619 = vld [vmem:[#allocation11 + $0x5d8] sm:$0xff]
        %v5620 = vld [vmem:[#allocation11 + $0x5e0] sm:$0xff]
        %v5621 = vld [vmem:[#allocation11 + $0x5e8] sm:$0xff]
        %v5622 = vld [vmem:[#allocation11 + $0x5f0] sm:$0xff]
        %v5623 = vld [vmem:[#allocation11 + $0x5f8] sm:$0xff]
        %v5624 = vld [vmem:[#allocation11 + $0x600] sm:$0xff]
        %v5625 = vld [vmem:[#allocation11 + $0x608] sm:$0xff]
        %v5626 = vld [vmem:[#allocation11 + $0x610] sm:$0xff]
        %v5627 = vld [vmem:[#allocation11 + $0x618] sm:$0xff]
        %v5628 = vld [vmem:[#allocation11 + $0x620] sm:$0xff]
        %v5629 = vld [vmem:[#allocation11 + $0x628] sm:$0xff]
        %v5630 = vld [vmem:[#allocation11 + $0x630] sm:$0xff]
        %v5631 = vld [vmem:[#allocation11 + $0x638] sm:$0xff]
        %v5632 = vld [vmem:[#allocation11 + $0x640] sm:$0xff]
        %v5633 = vld [vmem:[#allocation11 + $0x648] sm:$0xff]
        %v5634 = vld [vmem:[#allocation11 + $0x650] sm:$0xff]
        %v5635 = vld [vmem:[#allocation11 + $0x658] sm:$0xff]
        %v5636 = vld [vmem:[#allocation11 + $0x660] sm:$0xff]
        %v5637 = vld [vmem:[#allocation11 + $0x668] sm:$0xff]
        %v5638 = vld [vmem:[#allocation11 + $0x670] sm:$0xff]
        %v5639 = vld [vmem:[#allocation11 + $0x678] sm:$0xff]
        %v5640 = vld [vmem:[#allocation11 + $0x680] sm:$0xff]
        %v5641 = vld [vmem:[#allocation11 + $0x688] sm:$0xff]
        %v5642 = vld [vmem:[#allocation11 + $0x690] sm:$0xff]
        %v5643 = vld [vmem:[#allocation11 + $0x698] sm:$0xff]
        %v5644 = vld [vmem:[#allocation11 + $0x6a0] sm:$0xff]
        %v5645 = vld [vmem:[#allocation11 + $0x6a8] sm:$0xff]
        %v5646 = vld [vmem:[#allocation11 + $0x6b0] sm:$0xff]
        %v5647 = vld [vmem:[#allocation11 + $0x6b8] sm:$0xff]
        %v5648 = vld [vmem:[#allocation11 + $0x6c0] sm:$0xff]
        %v5649 = vld [vmem:[#allocation11 + $0x6c8] sm:$0xff]
        %v5650 = vld [vmem:[#allocation11 + $0x6d0] sm:$0xff]
        %v5651 = vld [vmem:[#allocation11 + $0x6d8] sm:$0xff]
        %v5652 = vld [vmem:[#allocation11 + $0x6e0] sm:$0xff]
        %v5653 = vld [vmem:[#allocation11 + $0x6e8] sm:$0xff]
        %v5654 = vld [vmem:[#allocation11 + $0x6f0] sm:$0xff]
        %v5655 = vld [vmem:[#allocation11 + $0x6f8] sm:$0xff]
        %v5656 = vld [vmem:[#allocation11 + $0x700] sm:$0xff]
        %v5657 = vld [vmem:[#allocation11 + $0x708] sm:$0xff]
        %v5658 = vld [vmem:[#allocation11 + $0x710] sm:$0xff]
        %v5659 = vld [vmem:[#allocation11 + $0x718] sm:$0xff]
        %v5660 = vld [vmem:[#allocation11 + $0x720] sm:$0xff]
        %v5661 = vld [vmem:[#allocation11 + $0x728] sm:$0xff]
        %v5662 = vld [vmem:[#allocation11 + $0x730] sm:$0xff]
        %v5663 = vld [vmem:[#allocation11 + $0x738] sm:$0xff]
        %v5664 = vld [vmem:[#allocation11 + $0x740] sm:$0xff]
        %v5665 = vld [vmem:[#allocation11 + $0x748] sm:$0xff]
        %v5666 = vld [vmem:[#allocation11 + $0x750] sm:$0xff]
        %v5667 = vld [vmem:[#allocation11 + $0x758] sm:$0xff]
        %v5668 = vld [vmem:[#allocation11 + $0x760] sm:$0xff]
        %v5669 = vld [vmem:[#allocation11 + $0x768] sm:$0xff]
        %v5670 = vld [vmem:[#allocation11 + $0x770] sm:$0xff]
        %v5671 = vld [vmem:[#allocation11 + $0x778] sm:$0xff]
        %v5672 = vld [vmem:[#allocation11 + $0x780] sm:$0xff]
        %v5673 = vld [vmem:[#allocation11 + $0x788] sm:$0xff]
        %v5674 = vld [vmem:[#allocation11 + $0x790] sm:$0xff]
        %v5675 = vld [vmem:[#allocation11 + $0x798] sm:$0xff]
        %v5676 = vld [vmem:[#allocation11 + $0x7a0] sm:$0xff]
        %v5677 = vld [vmem:[#allocation11 + $0x7a8] sm:$0xff]
        %v5678 = vld [vmem:[#allocation11 + $0x7b0] sm:$0xff]
        %v5679 = vld [vmem:[#allocation11 + $0x7b8] sm:$0xff]
        %v5680 = vld [vmem:[#allocation11 + $0x7c0] sm:$0xff]
        %v5681 = vld [vmem:[#allocation11 + $0x7c8] sm:$0xff]
        %v5682 = vld [vmem:[#allocation11 + $0x7d0] sm:$0xff]
        %v5683 = vld [vmem:[#allocation11 + $0x7d8] sm:$0xff]
        %v5684 = vld [vmem:[#allocation11 + $0x7e0] sm:$0xff]
        %v5685 = vld [vmem:[#allocation11 + $0x7e8] sm:$0xff]
        %v5686 = vld [vmem:[#allocation11 + $0x7f0] sm:$0xff]
        %v5687 = vld [vmem:[#allocation11 + $0x7f8] sm:$0xff]
        %v5688 = vld [vmem:[#allocation11 + $0x800] sm:$0xff]
        %v5689 = vld [vmem:[#allocation11 + $0x808] sm:$0xff]
        %v5690 = vld [vmem:[#allocation11 + $0x810] sm:$0xff]
        %v5691 = vld [vmem:[#allocation11 + $0x818] sm:$0xff]
        %v5692 = vld [vmem:[#allocation11 + $0x820] sm:$0xff]
        %v5693 = vld [vmem:[#allocation11 + $0x828] sm:$0xff]
        %v5694 = vld [vmem:[#allocation11 + $0x830] sm:$0xff]
        %v5695 = vld [vmem:[#allocation11 + $0x838] sm:$0xff]
        %v5696 = vld [vmem:[#allocation11 + $0x840] sm:$0xff]
        %v5697 = vld [vmem:[#allocation11 + $0x848] sm:$0xff]
        %v5698 = vld [vmem:[#allocation11 + $0x850] sm:$0xff]
        %v5699 = vld [vmem:[#allocation11 + $0x858] sm:$0xff]
        %v5700 = vld [vmem:[#allocation11 + $0x860] sm:$0xff]
        %v5701 = vld [vmem:[#allocation11 + $0x868] sm:$0xff]
        %v5702 = vld [vmem:[#allocation11 + $0x870] sm:$0xff]
        %v5703 = vld [vmem:[#allocation11 + $0x878] sm:$0xff]
        %v5704 = vld [vmem:[#allocation11 + $0x880] sm:$0xff]
        %v5705 = vld [vmem:[#allocation11 + $0x888] sm:$0xff]
        %v5706 = vld [vmem:[#allocation11 + $0x890] sm:$0xff]
        %v5707 = vld [vmem:[#allocation11 + $0x898] sm:$0xff]
        %v5708 = vld [vmem:[#allocation11 + $0x8a0] sm:$0xff]
        %v5709 = vld [vmem:[#allocation11 + $0x8a8] sm:$0xff]
        %v5710 = vld [vmem:[#allocation11 + $0x8b0] sm:$0xff]
        %v5711 = vld [vmem:[#allocation11 + $0x8b8] sm:$0xff]
        %v5712 = vld [vmem:[#allocation11 + $0x8c0] sm:$0xff]
        %v5713 = vld [vmem:[#allocation11 + $0x8c8] sm:$0xff]
        %v5714 = vld [vmem:[#allocation11 + $0x8d0] sm:$0xff]
        %v5715 = vld [vmem:[#allocation11 + $0x8d8] sm:$0xff]
        %v5716 = vld [vmem:[#allocation11 + $0x8e0] sm:$0xff]
        %v5717 = vld [vmem:[#allocation11 + $0x8e8] sm:$0xff]
        %v5718 = vld [vmem:[#allocation11 + $0x8f0] sm:$0xff]
        %v5719 = vld [vmem:[#allocation11 + $0x8f8] sm:$0xff]
        %v5720 = vld [vmem:[#allocation11 + $0x900] sm:$0xff]
        %v5721 = vld [vmem:[#allocation11 + $0x908] sm:$0xff]
        %v5722 = vld [vmem:[#allocation11 + $0x910] sm:$0xff]
        %v5723 = vld [vmem:[#allocation11 + $0x918] sm:$0xff]
        %v5724 = vld [vmem:[#allocation11 + $0x920] sm:$0xff]
        %v5725 = vld [vmem:[#allocation11 + $0x928] sm:$0xff]
        %v5726 = vld [vmem:[#allocation11 + $0x930] sm:$0xff]
        %v5727 = vld [vmem:[#allocation11 + $0x938] sm:$0xff]
        %v5728 = vld [vmem:[#allocation11 + $0x940] sm:$0xff]
        %v5729 = vld [vmem:[#allocation11 + $0x948] sm:$0xff]
        %v5730 = vld [vmem:[#allocation11 + $0x950] sm:$0xff]
        %v5731 = vld [vmem:[#allocation11 + $0x958] sm:$0xff]
        %v5732 = vld [vmem:[#allocation11 + $0x960] sm:$0xff]
        %v5733 = vld [vmem:[#allocation11 + $0x968] sm:$0xff]
        %v5734 = vld [vmem:[#allocation11 + $0x970] sm:$0xff]
        %v5735 = vld [vmem:[#allocation11 + $0x978] sm:$0xff]
        %v5736 = vld [vmem:[#allocation11 + $0x980] sm:$0xff]
        %v5737 = vld [vmem:[#allocation11 + $0x988] sm:$0xff]
        %v5738 = vld [vmem:[#allocation11 + $0x990] sm:$0xff]
        %v5739 = vld [vmem:[#allocation11 + $0x998] sm:$0xff]
        %v5740 = vld [vmem:[#allocation11 + $0x9a0] sm:$0xff]
        %v5741 = vld [vmem:[#allocation11 + $0x9a8] sm:$0xff]
        %v5742 = vld [vmem:[#allocation11 + $0x9b0] sm:$0xff]
        %v5743 = vld [vmem:[#allocation11 + $0x9b8] sm:$0xff]
        %v5744 = vld [vmem:[#allocation11 + $0x9c0] sm:$0xff]
        %v5745 = vld [vmem:[#allocation11 + $0x9c8] sm:$0xff]
        %v5746 = vld [vmem:[#allocation11 + $0x9d0] sm:$0xff]
        %v5747 = vld [vmem:[#allocation11 + $0x9d8] sm:$0xff]
        %v5748 = vld [vmem:[#allocation11 + $0x9e0] sm:$0xff]
        %v5749 = vld [vmem:[#allocation11 + $0x9e8] sm:$0xff]
        %v5750 = vld [vmem:[#allocation11 + $0x9f0] sm:$0xff]
        %v5751 = vld [vmem:[#allocation11 + $0x9f8] sm:$0xff]
        %v5752 = vld [vmem:[#allocation11 + $0xa00] sm:$0xff]
        %v5753 = vld [vmem:[#allocation11 + $0xa08] sm:$0xff]
        %v5754 = vld [vmem:[#allocation11 + $0xa10] sm:$0xff]
        %v5755 = vld [vmem:[#allocation11 + $0xa18] sm:$0xff]
        %v5756 = vld [vmem:[#allocation11 + $0xa20] sm:$0xff]
        %v5757 = vld [vmem:[#allocation11 + $0xa28] sm:$0xff]
        %v5758 = vld [vmem:[#allocation11 + $0xa30] sm:$0xff]
        %v5759 = vld [vmem:[#allocation11 + $0xa38] sm:$0xff]
        %v5760 = vld [vmem:[#allocation11 + $0xa40] sm:$0xff]
        %v5761 = vld [vmem:[#allocation11 + $0xa48] sm:$0xff]
        %v5762 = vld [vmem:[#allocation11 + $0xa50] sm:$0xff]
        %v5763 = vld [vmem:[#allocation11 + $0xa58] sm:$0xff]
        %v5764 = vld [vmem:[#allocation11 + $0xa60] sm:$0xff]
        %v5765 = vld [vmem:[#allocation11 + $0xa68] sm:$0xff]
        %v5766 = vld [vmem:[#allocation11 + $0xa70] sm:$0xff]
        %v5767 = vld [vmem:[#allocation11 + $0xa78] sm:$0xff]
        %v5768 = vld [vmem:[#allocation11 + $0xa80] sm:$0xff]
        %v5769 = vld [vmem:[#allocation11 + $0xa88] sm:$0xff]
        %v5770 = vld [vmem:[#allocation11 + $0xa90] sm:$0xff]
        %v5771 = vld [vmem:[#allocation11 + $0xa98] sm:$0xff]
        %v5772 = vld [vmem:[#allocation11 + $0xaa0] sm:$0xff]
        %v5773 = vld [vmem:[#allocation11 + $0xaa8] sm:$0xff]
        %v5774 = vld [vmem:[#allocation11 + $0xab0] sm:$0xff]
        %v5775 = vld [vmem:[#allocation11 + $0xab8] sm:$0xff]
        %v5776 = vld [vmem:[#allocation11 + $0xac0] sm:$0xff]
        %v5777 = vld [vmem:[#allocation11 + $0xac8] sm:$0xff]
        %v5778 = vld [vmem:[#allocation11 + $0xad0] sm:$0xff]
        %v5779 = vld [vmem:[#allocation11 + $0xad8] sm:$0xff]
        %v5780 = vld [vmem:[#allocation11 + $0xae0] sm:$0xff]
        %v5781 = vld [vmem:[#allocation11 + $0xae8] sm:$0xff]
        %v5782 = vld [vmem:[#allocation11 + $0xaf0] sm:$0xff]
        %v5783 = vld [vmem:[#allocation11 + $0xaf8] sm:$0xff]
        %v5784 = vld [vmem:[#allocation11 + $0xb00] sm:$0xff]
        %v5785 = vld [vmem:[#allocation11 + $0xb08] sm:$0xff]
        %v5786 = vld [vmem:[#allocation11 + $0xb10] sm:$0xff]
        %v5787 = vld [vmem:[#allocation11 + $0xb18] sm:$0xff]
        %v5788 = vld [vmem:[#allocation11 + $0xb20] sm:$0xff]
        %v5789 = vld [vmem:[#allocation11 + $0xb28] sm:$0xff]
        %v5790 = vld [vmem:[#allocation11 + $0xb30] sm:$0xff]
        %v5791 = vld [vmem:[#allocation11 + $0xb38] sm:$0xff]
        %v5792 = vld [vmem:[#allocation11 + $0xb40] sm:$0xff]
        %v5793 = vld [vmem:[#allocation11 + $0xb48] sm:$0xff]
        %v5794 = vld [vmem:[#allocation11 + $0xb50] sm:$0xff]
        %v5795 = vld [vmem:[#allocation11 + $0xb58] sm:$0xff]
        %v5796 = vld [vmem:[#allocation11 + $0xb60] sm:$0xff]
        %v5797 = vld [vmem:[#allocation11 + $0xb68] sm:$0xff]
        %v5798 = vld [vmem:[#allocation11 + $0xb70] sm:$0xff]
        %v5799 = vld [vmem:[#allocation11 + $0xb78] sm:$0xff]
        %v5800 = vld [vmem:[#allocation11 + $0xb80] sm:$0xff]
        %v5801 = vld [vmem:[#allocation11 + $0xb88] sm:$0xff]
        %v5802 = vld [vmem:[#allocation11 + $0xb90] sm:$0xff]
        %v5803 = vld [vmem:[#allocation11 + $0xb98] sm:$0xff]
        %v5804 = vld [vmem:[#allocation11 + $0xba0] sm:$0xff]
        %v5805 = vld [vmem:[#allocation11 + $0xba8] sm:$0xff]
        %v5806 = vld [vmem:[#allocation11 + $0xbb0] sm:$0xff]
        %v5807 = vld [vmem:[#allocation11 + $0xbb8] sm:$0xff]
        %v5808 = vld [vmem:[#allocation11 + $0xbc0] sm:$0xff]
        %v5809 = vld [vmem:[#allocation11 + $0xbc8] sm:$0xff]
        %v5810 = vld [vmem:[#allocation11 + $0xbd0] sm:$0xff]
        %v5811 = vld [vmem:[#allocation11 + $0xbd8] sm:$0xff]
        %v5812 = vld [vmem:[#allocation11 + $0xbe0] sm:$0xff]
        %v5813 = vld [vmem:[#allocation11 + $0xbe8] sm:$0xff]
        %v5814 = vld [vmem:[#allocation11 + $0xbf0] sm:$0xff]
        %v5815 = vld [vmem:[#allocation11 + $0xbf8] sm:$0xff]
        %v5816 = vld [vmem:[#allocation11 + $0xc00] sm:$0xff]
        %v5817 = vld [vmem:[#allocation11 + $0xc08] sm:$0xff]
        %v5818 = vld [vmem:[#allocation11 + $0xc10] sm:$0xff]
        %v5819 = vld [vmem:[#allocation11 + $0xc18] sm:$0xff]
        %v5820 = vld [vmem:[#allocation11 + $0xc20] sm:$0xff]
        %v5821 = vld [vmem:[#allocation11 + $0xc28] sm:$0xff]
        %v5822 = vld [vmem:[#allocation11 + $0xc30] sm:$0xff]
        %v5823 = vld [vmem:[#allocation11 + $0xc38] sm:$0xff]
        %v5824 = vld [vmem:[#allocation11 + $0xc40] sm:$0xff]
        %v5825 = vld [vmem:[#allocation11 + $0xc48] sm:$0xff]
        %v5826 = vld [vmem:[#allocation11 + $0xc50] sm:$0xff]
        %v5827 = vld [vmem:[#allocation11 + $0xc58] sm:$0xff]
        %v5828 = vld [vmem:[#allocation11 + $0xc60] sm:$0xff]
        %v5829 = vld [vmem:[#allocation11 + $0xc68] sm:$0xff]
        %v5830 = vld [vmem:[#allocation11 + $0xc70] sm:$0xff]
        %v5831 = vld [vmem:[#allocation11 + $0xc78] sm:$0xff]
        %v5832 = vld [vmem:[#allocation11 + $0xc80] sm:$0xff]
        %v5833 = vld [vmem:[#allocation11 + $0xc88] sm:$0xff]
        %v5834 = vld [vmem:[#allocation11 + $0xc90] sm:$0xff]
        %v5835 = vld [vmem:[#allocation11 + $0xc98] sm:$0xff]
        %v5836 = vld [vmem:[#allocation11 + $0xca0] sm:$0xff]
        %v5837 = vld [vmem:[#allocation11 + $0xca8] sm:$0xff]
        %v5838 = vld [vmem:[#allocation11 + $0xcb0] sm:$0xff]
        %v5839 = vld [vmem:[#allocation11 + $0xcb8] sm:$0xff]
        %v5840 = vld [vmem:[#allocation11 + $0xcc0] sm:$0xff]
        %v5841 = vld [vmem:[#allocation11 + $0xcc8] sm:$0xff]
        %v5842 = vld [vmem:[#allocation11 + $0xcd0] sm:$0xff]
        %v5843 = vld [vmem:[#allocation11 + $0xcd8] sm:$0xff]
        %v5844 = vld [vmem:[#allocation11 + $0xce0] sm:$0xff]
        %v5845 = vld [vmem:[#allocation11 + $0xce8] sm:$0xff]
        %v5846 = vld [vmem:[#allocation11 + $0xcf0] sm:$0xff]
        %v5847 = vld [vmem:[#allocation11 + $0xcf8] sm:$0xff]
        %v5848 = vld [vmem:[#allocation11 + $0xd00] sm:$0xff]
        %v5849 = vld [vmem:[#allocation11 + $0xd08] sm:$0xff]
        %v5850 = vld [vmem:[#allocation11 + $0xd10] sm:$0xff]
        %v5851 = vld [vmem:[#allocation11 + $0xd18] sm:$0xff]
        %v5852 = vld [vmem:[#allocation11 + $0xd20] sm:$0xff]
        %v5853 = vld [vmem:[#allocation11 + $0xd28] sm:$0xff]
        %v5854 = vld [vmem:[#allocation11 + $0xd30] sm:$0xff]
        %v5855 = vld [vmem:[#allocation11 + $0xd38] sm:$0xff]
        %v5856 = vld [vmem:[#allocation11 + $0xd40] sm:$0xff]
        %v5857 = vld [vmem:[#allocation11 + $0xd48] sm:$0xff]
        %v5858 = vld [vmem:[#allocation11 + $0xd50] sm:$0xff]
        %v5859 = vld [vmem:[#allocation11 + $0xd58] sm:$0xff]
        %v5860 = vld [vmem:[#allocation11 + $0xd60] sm:$0xff]
        %v5861 = vld [vmem:[#allocation11 + $0xd68] sm:$0xff]
        %v5862 = vld [vmem:[#allocation11 + $0xd70] sm:$0xff]
        %v5863 = vld [vmem:[#allocation11 + $0xd78] sm:$0xff]
        %v5864 = vld [vmem:[#allocation11 + $0xd80] sm:$0xff]
        %v5865 = vld [vmem:[#allocation11 + $0xd88] sm:$0xff]
        %v5866 = vld [vmem:[#allocation11 + $0xd90] sm:$0xff]
        %v5867 = vld [vmem:[#allocation11 + $0xd98] sm:$0xff]
        %v5868 = vld [vmem:[#allocation11 + $0xda0] sm:$0xff]
        %v5869 = vld [vmem:[#allocation11 + $0xda8] sm:$0xff]
        %v5870 = vld [vmem:[#allocation11 + $0xdb0] sm:$0xff]
        %v5871 = vld [vmem:[#allocation11 + $0xdb8] sm:$0xff]
        %v5872 = vld [vmem:[#allocation11 + $0xdc0] sm:$0xff]
        %v5873 = vld [vmem:[#allocation11 + $0xdc8] sm:$0xff]
        %v5874 = vld [vmem:[#allocation11 + $0xdd0] sm:$0xff]
        %v5875 = vld [vmem:[#allocation11 + $0xdd8] sm:$0xff]
        %v5876 = vld [vmem:[#allocation11 + $0xde0] sm:$0xff]
        %v5877 = vld [vmem:[#allocation11 + $0xde8] sm:$0xff]
        %v5878 = vld [vmem:[#allocation11 + $0xdf0] sm:$0xff]
        %v5879 = vld [vmem:[#allocation11 + $0xdf8] sm:$0xff]
        %v5880 = vld [vmem:[#allocation11 + $0xe00] sm:$0xff]
        %v5881 = vld [vmem:[#allocation11 + $0xe08] sm:$0xff]
        %v5882 = vld [vmem:[#allocation11 + $0xe10] sm:$0xff]
        %v5883 = vld [vmem:[#allocation11 + $0xe18] sm:$0xff]
        %v5884 = vld [vmem:[#allocation11 + $0xe20] sm:$0xff]
        %v5885 = vld [vmem:[#allocation11 + $0xe28] sm:$0xff]
        %v5886 = vld [vmem:[#allocation11 + $0xe30] sm:$0xff]
        %v5887 = vld [vmem:[#allocation11 + $0xe38] sm:$0xff]
        %v5888 = vld [vmem:[#allocation11 + $0xe40] sm:$0xff]
        %v5889 = vld [vmem:[#allocation11 + $0xe48] sm:$0xff]
        %v5890 = vld [vmem:[#allocation11 + $0xe50] sm:$0xff]
        %v5891 = vld [vmem:[#allocation11 + $0xe58] sm:$0xff]
        %v5892 = vld [vmem:[#allocation11 + $0xe60] sm:$0xff]
        %v5893 = vld [vmem:[#allocation11 + $0xe68] sm:$0xff]
        %v5894 = vld [vmem:[#allocation11 + $0xe70] sm:$0xff]
        %v5895 = vld [vmem:[#allocation11 + $0xe78] sm:$0xff]
        %v5896 = vld [vmem:[#allocation11 + $0xe80] sm:$0xff]
        %v5897 = vld [vmem:[#allocation11 + $0xe88] sm:$0xff]
        %v5898 = vld [vmem:[#allocation11 + $0xe90] sm:$0xff]
        %v5899 = vld [vmem:[#allocation11 + $0xe98] sm:$0xff]
        %v5900 = vld [vmem:[#allocation11 + $0xea0] sm:$0xff]
        %v5901 = vld [vmem:[#allocation11 + $0xea8] sm:$0xff]
        %v5902 = vld [vmem:[#allocation11 + $0xeb0] sm:$0xff]
        %v5903 = vld [vmem:[#allocation11 + $0xeb8] sm:$0xff]
        %v5904 = vld [vmem:[#allocation11 + $0xec0] sm:$0xff]
        %v5905 = vld [vmem:[#allocation11 + $0xec8] sm:$0xff]
        %v5906 = vld [vmem:[#allocation11 + $0xed0] sm:$0xff]
        %v5907 = vld [vmem:[#allocation11 + $0xed8] sm:$0xff]
        %v5908 = vld [vmem:[#allocation11 + $0xee0] sm:$0xff]
        %v5909 = vld [vmem:[#allocation11 + $0xee8] sm:$0xff]
        %v5910 = vld [vmem:[#allocation11 + $0xef0] sm:$0xff]
        %v5911 = vld [vmem:[#allocation11 + $0xef8] sm:$0xff]
        %v5912 = vld [vmem:[#allocation11 + $0xf00] sm:$0xff]
        %v5913 = vld [vmem:[#allocation11 + $0xf08] sm:$0xff]
        %v5914 = vld [vmem:[#allocation11 + $0xf10] sm:$0xff]
        %v5915 = vld [vmem:[#allocation11 + $0xf18] sm:$0xff]
        %v5916 = vld [vmem:[#allocation11 + $0xf20] sm:$0xff]
        %v5917 = vld [vmem:[#allocation11 + $0xf28] sm:$0xff]
        %v5918 = vld [vmem:[#allocation11 + $0xf30] sm:$0xff]
        %v5919 = vld [vmem:[#allocation11 + $0xf38] sm:$0xff]
        %v5920 = vld [vmem:[#allocation11 + $0xf40] sm:$0xff]
        %v5921 = vld [vmem:[#allocation11 + $0xf48] sm:$0xff]
        %v5922 = vld [vmem:[#allocation11 + $0xf50] sm:$0xff]
        %v5923 = vld [vmem:[#allocation11 + $0xf58] sm:$0xff]
        %v5924 = vld [vmem:[#allocation11 + $0xf60] sm:$0xff]
        %v5925 = vld [vmem:[#allocation11 + $0xf68] sm:$0xff]
        %v5926 = vld [vmem:[#allocation11 + $0xf70] sm:$0xff]
        %v5927 = vld [vmem:[#allocation11 + $0xf78] sm:$0xff]
        %v5928 = vld [vmem:[#allocation11 + $0xf80] sm:$0xff]
        %v5929 = vld [vmem:[#allocation11 + $0xf88] sm:$0xff]
        %v5930 = vld [vmem:[#allocation11 + $0xf90] sm:$0xff]
        %v5931 = vld [vmem:[#allocation11 + $0xf98] sm:$0xff]
        %v5932 = vld [vmem:[#allocation11 + $0xfa0] sm:$0xff]
        %v5933 = vld [vmem:[#allocation11 + $0xfa8] sm:$0xff]
        %v5934 = vld [vmem:[#allocation11 + $0xfb0] sm:$0xff]
        %v5935 = vld [vmem:[#allocation11 + $0xfb8] sm:$0xff]
        %v5936 = vld [vmem:[#allocation11 + $0xfc0] sm:$0xff]
        %v5937 = vld [vmem:[#allocation11 + $0xfc8] sm:$0xff]
        %v5938 = vld [vmem:[#allocation11 + $0xfd0] sm:$0xff]
        %v5939 = vld [vmem:[#allocation11 + $0xfd8] sm:$0xff]
        %v5940 = vld [vmem:[#allocation11 + $0xfe0] sm:$0xff]
        %v5941 = vld [vmem:[#allocation11 + $0xfe8] sm:$0xff]
        %v5942 = vld [vmem:[#allocation11 + $0xff0] sm:$0xff]
        %v5943 = vld [vmem:[#allocation11 + $0xff8] sm:$0xff]
        %v5944 = vld [vmem:[#allocation11 + $0x1000] sm:$0xff]
        %v5945 = vld [vmem:[#allocation11 + $0x1008] sm:$0xff]
        %v5946 = vld [vmem:[#allocation11 + $0x1010] sm:$0xff]
        %v5947 = vld [vmem:[#allocation11 + $0x1018] sm:$0xff]
        %v5948 = vld [vmem:[#allocation11 + $0x1020] sm:$0xff]
        %v5949 = vld [vmem:[#allocation11 + $0x1028] sm:$0xff]
        %v5950 = vld [vmem:[#allocation11 + $0x1030] sm:$0xff]
        %v5951 = vld [vmem:[#allocation11 + $0x1038] sm:$0xff]
        %v5952 = vld [vmem:[#allocation11 + $0x1040] sm:$0xff]
        %v5953 = vld [vmem:[#allocation11 + $0x1048] sm:$0xff]
        %v5954 = vld [vmem:[#allocation11 + $0x1050] sm:$0xff]
        %v5955 = vld [vmem:[#allocation11 + $0x1058] sm:$0xff]
        %v5956 = vld [vmem:[#allocation11 + $0x1060] sm:$0xff]
        %v5957 = vld [vmem:[#allocation11 + $0x1068] sm:$0xff]
        %v5958 = vld [vmem:[#allocation11 + $0x1070] sm:$0xff]
        %v5959 = vld [vmem:[#allocation11 + $0x1078] sm:$0xff]
        %v5960 = vld [vmem:[#allocation11 + $0x1080] sm:$0xff]
        %v5961 = vld [vmem:[#allocation11 + $0x1088] sm:$0xff]
        %v5962 = vld [vmem:[#allocation11 + $0x1090] sm:$0xff]
        %v5963 = vld [vmem:[#allocation11 + $0x1098] sm:$0xff]
        %v5964 = vld [vmem:[#allocation11 + $0x10a0] sm:$0xff]
        %v5965 = vld [vmem:[#allocation11 + $0x10a8] sm:$0xff]
        %v5966 = vld [vmem:[#allocation11 + $0x10b0] sm:$0xff]
        %v5967 = vld [vmem:[#allocation11 + $0x10b8] sm:$0xff]
        %v5968 = vld [vmem:[#allocation11 + $0x10c0] sm:$0xff]
        %v5969 = vld [vmem:[#allocation11 + $0x10c8] sm:$0xff]
        %v5970 = vld [vmem:[#allocation11 + $0x10d0] sm:$0xff]
        %v5971 = vld [vmem:[#allocation11 + $0x10d8] sm:$0xff]
        %v5972 = vld [vmem:[#allocation11 + $0x10e0] sm:$0xff]
        %v5973 = vld [vmem:[#allocation11 + $0x10e8] sm:$0xff]
        %v5974 = vld [vmem:[#allocation11 + $0x10f0] sm:$0xff]
        %v5975 = vld [vmem:[#allocation11 + $0x10f8] sm:$0xff]
        %v5976 = vld [vmem:[#allocation11 + $0x1100] sm:$0xff]
        %v5977 = vld [vmem:[#allocation11 + $0x1108] sm:$0xff]
        %v5978 = vld [vmem:[#allocation11 + $0x1110] sm:$0xff]
        %v5979 = vld [vmem:[#allocation11 + $0x1118] sm:$0xff]
        %v5980 = vld [vmem:[#allocation11 + $0x1120] sm:$0xff]
        %v5981 = vld [vmem:[#allocation11 + $0x1128] sm:$0xff]
        %v5982 = vld [vmem:[#allocation11 + $0x1130] sm:$0xff]
        %v5983 = vld [vmem:[#allocation11 + $0x1138] sm:$0xff]
        %v5984 = vld [vmem:[#allocation11 + $0x1140] sm:$0xff]
        %v5985 = vld [vmem:[#allocation11 + $0x1148] sm:$0xff]
        %v5986 = vld [vmem:[#allocation11 + $0x1150] sm:$0xff]
        %v5987 = vld [vmem:[#allocation11 + $0x1158] sm:$0xff]
        %v5988 = vld [vmem:[#allocation11 + $0x1160] sm:$0xff]
        %v5989 = vld [vmem:[#allocation11 + $0x1168] sm:$0xff]
        %v5990 = vld [vmem:[#allocation11 + $0x1170] sm:$0xff]
        %v5991 = vld [vmem:[#allocation11 + $0x1178] sm:$0xff]
        %v5992 = vld [vmem:[#allocation11 + $0x1180] sm:$0xff]
        %v5993 = vld [vmem:[#allocation11 + $0x1188] sm:$0xff]
        %v5994 = vld [vmem:[#allocation11 + $0x1190] sm:$0xff]
        %v5995 = vld [vmem:[#allocation11 + $0x1198] sm:$0xff]
        %v5996 = vld [vmem:[#allocation11 + $0x11a0] sm:$0xff]
        %v5997 = vld [vmem:[#allocation11 + $0x11a8] sm:$0xff]
        %v5998 = vld [vmem:[#allocation11 + $0x11b0] sm:$0xff]
        %v5999 = vld [vmem:[#allocation11 + $0x11b8] sm:$0xff]
        %v6000 = vld [vmem:[#allocation11 + $0x11c0] sm:$0xff]
        %v6001 = vld [vmem:[#allocation11 + $0x11c8] sm:$0xff]
        %v6002 = vld [vmem:[#allocation11 + $0x11d0] sm:$0xff]
        %v6003 = vld [vmem:[#allocation11 + $0x11d8] sm:$0xff]
        %v6004 = vld [vmem:[#allocation11 + $0x11e0] sm:$0xff]
        %v6005 = vld [vmem:[#allocation11 + $0x11e8] sm:$0xff]
        %v6006 = vld [vmem:[#allocation11 + $0x11f0] sm:$0xff]
        %v6007 = vld [vmem:[#allocation11 + $0x11f8] sm:$0xff]
        %v6008 = vld [vmem:[#allocation11 + $0x1200] sm:$0xff]
        %v6009 = vld [vmem:[#allocation11 + $0x1208] sm:$0xff]
        %v6010 = vld [vmem:[#allocation11 + $0x1210] sm:$0xff]
        %v6011 = vld [vmem:[#allocation11 + $0x1218] sm:$0xff]
        %v6012 = vld [vmem:[#allocation11 + $0x1220] sm:$0xff]
        %v6013 = vld [vmem:[#allocation11 + $0x1228] sm:$0xff]
        %v6014 = vld [vmem:[#allocation11 + $0x1230] sm:$0xff]
        %v6015 = vld [vmem:[#allocation11 + $0x1238] sm:$0xff]
        %v6016 = vld [vmem:[#allocation11 + $0x1240] sm:$0xff]
        %v6017 = vld [vmem:[#allocation11 + $0x1248] sm:$0xff]
        %v6018 = vld [vmem:[#allocation11 + $0x1250] sm:$0xff]
        %v6019 = vld [vmem:[#allocation11 + $0x1258] sm:$0xff]
        %v6020 = vld [vmem:[#allocation11 + $0x1260] sm:$0xff]
        %v6021 = vld [vmem:[#allocation11 + $0x1268] sm:$0xff]
        %v6022 = vld [vmem:[#allocation11 + $0x1270] sm:$0xff]
        %v6023 = vld [vmem:[#allocation11 + $0x1278] sm:$0xff]
        %v6024 = vld [vmem:[#allocation11 + $0x1280] sm:$0xff]
        %v6025 = vld [vmem:[#allocation11 + $0x1288] sm:$0xff]
        %v6026 = vld [vmem:[#allocation11 + $0x1290] sm:$0xff]
        %v6027 = vld [vmem:[#allocation11 + $0x1298] sm:$0xff]
        %v6028 = vld [vmem:[#allocation11 + $0x12a0] sm:$0xff]
        %v6029 = vld [vmem:[#allocation11 + $0x12a8] sm:$0xff]
        %v6030 = vld [vmem:[#allocation11 + $0x12b0] sm:$0xff]
        %v6031 = vld [vmem:[#allocation11 + $0x12b8] sm:$0xff]
        %v6032 = vld [vmem:[#allocation11 + $0x12c0] sm:$0xff]
        %v6033 = vld [vmem:[#allocation11 + $0x12c8] sm:$0xff]
        %v6034 = vld [vmem:[#allocation11 + $0x12d0] sm:$0xff]
        %v6035 = vld [vmem:[#allocation11 + $0x12d8] sm:$0xff]
        %v6036 = vld [vmem:[#allocation11 + $0x12e0] sm:$0xff]
        %v6037 = vld [vmem:[#allocation11 + $0x12e8] sm:$0xff]
        %v6038 = vld [vmem:[#allocation11 + $0x12f0] sm:$0xff]
        %v6039 = vld [vmem:[#allocation11 + $0x12f8] sm:$0xff]
        %v6040 = vld [vmem:[#allocation11 + $0x1300] sm:$0xff]
        %v6041 = vld [vmem:[#allocation11 + $0x1308] sm:$0xff]
        %v6042 = vld [vmem:[#allocation11 + $0x1310] sm:$0xff]
        %v6043 = vld [vmem:[#allocation11 + $0x1318] sm:$0xff]
        %v6044 = vld [vmem:[#allocation11 + $0x1320] sm:$0xff]
        %v6045 = vld [vmem:[#allocation11 + $0x1328] sm:$0xff]
        %v6046 = vld [vmem:[#allocation11 + $0x1330] sm:$0xff]
        %v6047 = vld [vmem:[#allocation11 + $0x1338] sm:$0xff]
        %v6048 = vld [vmem:[#allocation11 + $0x1340] sm:$0xff]
        %v6049 = vld [vmem:[#allocation11 + $0x1348] sm:$0xff]
        %v6050 = vld [vmem:[#allocation11 + $0x1350] sm:$0xff]
        %v6051 = vld [vmem:[#allocation11 + $0x1358] sm:$0xff]
        %v6052 = vld [vmem:[#allocation11 + $0x1360] sm:$0xff]
        %v6053 = vld [vmem:[#allocation11 + $0x1368] sm:$0xff]
        %v6054 = vld [vmem:[#allocation11 + $0x1370] sm:$0xff]
        %v6055 = vld [vmem:[#allocation11 + $0x1378] sm:$0xff]
        %v6056 = vld [vmem:[#allocation11 + $0x1380] sm:$0xff]
        %v6057 = vld [vmem:[#allocation11 + $0x1388] sm:$0xff]
        %v6058 = vld [vmem:[#allocation11 + $0x1390] sm:$0xff]
        %v6059 = vld [vmem:[#allocation11 + $0x1398] sm:$0xff]
        %v6060 = vld [vmem:[#allocation11 + $0x13a0] sm:$0xff]
        %v6061 = vld [vmem:[#allocation11 + $0x13a8] sm:$0xff]
        %v6062 = vld [vmem:[#allocation11 + $0x13b0] sm:$0xff]
        %v6063 = vld [vmem:[#allocation11 + $0x13b8] sm:$0xff]
        %v6064 = vld [vmem:[#allocation11 + $0x13c0] sm:$0xff]
        %v6065 = vld [vmem:[#allocation11 + $0x13c8] sm:$0xff]
        %v6066 = vld [vmem:[#allocation11 + $0x13d0] sm:$0xff]
        %v6067 = vld [vmem:[#allocation11 + $0x13d8] sm:$0xff]
        %v6068 = vld [vmem:[#allocation11 + $0x13e0] sm:$0xff]
        %v6069 = vld [vmem:[#allocation11 + $0x13e8] sm:$0xff]
        %v6070 = vld [vmem:[#allocation11 + $0x13f0] sm:$0xff]
        %v6071 = vld [vmem:[#allocation11 + $0x13f8] sm:$0xff]
        %v6072 = vld [vmem:[#allocation11 + $0x1400] sm:$0xff]
        %v6073 = vld [vmem:[#allocation11 + $0x1408] sm:$0xff]
        %v6074 = vld [vmem:[#allocation11 + $0x1410] sm:$0xff]
        %v6075 = vld [vmem:[#allocation11 + $0x1418] sm:$0xff]
        %v6076 = vld [vmem:[#allocation11 + $0x1420] sm:$0xff]
        %v6077 = vld [vmem:[#allocation11 + $0x1428] sm:$0xff]
        %v6078 = vld [vmem:[#allocation11 + $0x1430] sm:$0xff]
        %v6079 = vld [vmem:[#allocation11 + $0x1438] sm:$0xff]
        %v6080 = vld [vmem:[#allocation11 + $0x1440] sm:$0xff]
        %v6081 = vld [vmem:[#allocation11 + $0x1448] sm:$0xff]
        %v6082 = vld [vmem:[#allocation11 + $0x1450] sm:$0xff]
        %v6083 = vld [vmem:[#allocation11 + $0x1458] sm:$0xff]
        %v6084 = vld [vmem:[#allocation11 + $0x1460] sm:$0xff]
        %v6085 = vld [vmem:[#allocation11 + $0x1468] sm:$0xff]
        %v6086 = vld [vmem:[#allocation11 + $0x1470] sm:$0xff]
        %v6087 = vld [vmem:[#allocation11 + $0x1478] sm:$0xff]
        %v6088 = vld [vmem:[#allocation11 + $0x1480] sm:$0xff]
        %v6089 = vld [vmem:[#allocation11 + $0x1488] sm:$0xff]
        %v6090 = vld [vmem:[#allocation11 + $0x1490] sm:$0xff]
        %v6091 = vld [vmem:[#allocation11 + $0x1498] sm:$0xff]
        %v6092 = vld [vmem:[#allocation11 + $0x14a0] sm:$0xff]
        %v6093 = vld [vmem:[#allocation11 + $0x14a8] sm:$0xff]
        %v6094 = vld [vmem:[#allocation11 + $0x14b0] sm:$0xff]
        %v6095 = vld [vmem:[#allocation11 + $0x14b8] sm:$0xff]
        %v6096 = vld [vmem:[#allocation11 + $0x14c0] sm:$0xff]
        %v6097 = vld [vmem:[#allocation11 + $0x14c8] sm:$0xff]
        %v6098 = vld [vmem:[#allocation11 + $0x14d0] sm:$0xff]
        %v6099 = vld [vmem:[#allocation11 + $0x14d8] sm:$0xff]
        %v6100 = vld [vmem:[#allocation11 + $0x14e0] sm:$0xff]
        %v6101 = vld [vmem:[#allocation11 + $0x14e8] sm:$0xff]
        %v6102 = vld [vmem:[#allocation11 + $0x14f0] sm:$0xff]
        %v6103 = vld [vmem:[#allocation11 + $0x14f8] sm:$0xff]
        %v6104 = vld [vmem:[#allocation11 + $0x1500] sm:$0xff]
        %v6105 = vld [vmem:[#allocation11 + $0x1508] sm:$0xff]
        %v6106 = vld [vmem:[#allocation11 + $0x1510] sm:$0xff]
        %v6107 = vld [vmem:[#allocation11 + $0x1518] sm:$0xff]
        %v6108 = vld [vmem:[#allocation11 + $0x1520] sm:$0xff]
        %v6109 = vld [vmem:[#allocation11 + $0x1528] sm:$0xff]
        %v6110 = vld [vmem:[#allocation11 + $0x1530] sm:$0xff]
        %v6111 = vld [vmem:[#allocation11 + $0x1538] sm:$0xff]
        %v6112 = vld [vmem:[#allocation11 + $0x1540] sm:$0xff]
        %v6113 = vld [vmem:[#allocation11 + $0x1548] sm:$0xff]
        %v6114 = vld [vmem:[#allocation11 + $0x1550] sm:$0xff]
        %v6115 = vld [vmem:[#allocation11 + $0x1558] sm:$0xff]
        %v6116 = vld [vmem:[#allocation11 + $0x1560] sm:$0xff]
        %v6117 = vld [vmem:[#allocation11 + $0x1568] sm:$0xff]
        %v6118 = vld [vmem:[#allocation11 + $0x1570] sm:$0xff]
        %v6119 = vld [vmem:[#allocation11 + $0x1578] sm:$0xff]
        %v6120 = vld [vmem:[#allocation11 + $0x1580] sm:$0xff]
        %v6121 = vld [vmem:[#allocation11 + $0x1588] sm:$0xff]
        %v6122 = vld [vmem:[#allocation11 + $0x1590] sm:$0xff]
        %v6123 = vld [vmem:[#allocation11 + $0x1598] sm:$0xff]
        %v6124 = vld [vmem:[#allocation11 + $0x15a0] sm:$0xff]
        %v6125 = vld [vmem:[#allocation11 + $0x15a8] sm:$0xff]
        %v6126 = vld [vmem:[#allocation11 + $0x15b0] sm:$0xff]
        %v6127 = vld [vmem:[#allocation11 + $0x15b8] sm:$0xff]
        %v6128 = vld [vmem:[#allocation11 + $0x15c0] sm:$0xff]
        %v6129 = vld [vmem:[#allocation11 + $0x15c8] sm:$0xff]
        %v6130 = vld [vmem:[#allocation11 + $0x15d0] sm:$0xff]
        %v6131 = vld [vmem:[#allocation11 + $0x15d8] sm:$0xff]
        %v6132 = vld [vmem:[#allocation11 + $0x15e0] sm:$0xff]
        %v6133 = vld [vmem:[#allocation11 + $0x15e8] sm:$0xff]
        %v6134 = vld [vmem:[#allocation11 + $0x15f0] sm:$0xff]
        %v6135 = vld [vmem:[#allocation11 + $0x15f8] sm:$0xff]
        %v6136 = vld [vmem:[#allocation11 + $0x1600] sm:$0xff]
        %v6137 = vld [vmem:[#allocation11 + $0x1608] sm:$0xff]
        %v6138 = vld [vmem:[#allocation11 + $0x1610] sm:$0xff]
        %v6139 = vld [vmem:[#allocation11 + $0x1618] sm:$0xff]
        %v6140 = vld [vmem:[#allocation11 + $0x1620] sm:$0xff]
        %v6141 = vld [vmem:[#allocation11 + $0x1628] sm:$0xff]
        %v6142 = vld [vmem:[#allocation11 + $0x1630] sm:$0xff]
        %v6143 = vld [vmem:[#allocation11 + $0x1638] sm:$0xff]
        %v6144 = vld [vmem:[#allocation11 + $0x1640] sm:$0xff]
        %v6145 = vld [vmem:[#allocation11 + $0x1648] sm:$0xff]
        %v6146 = vld [vmem:[#allocation11 + $0x1650] sm:$0xff]
        %v6147 = vld [vmem:[#allocation11 + $0x1658] sm:$0xff]
        %v6148 = vld [vmem:[#allocation11 + $0x1660] sm:$0xff]
        %v6149 = vld [vmem:[#allocation11 + $0x1668] sm:$0xff]
        %v6150 = vld [vmem:[#allocation11 + $0x1670] sm:$0xff]
        %v6151 = vld [vmem:[#allocation11 + $0x1678] sm:$0xff]
        %v6152 = vld [vmem:[#allocation11 + $0x1680] sm:$0xff]
        %v6153 = vld [vmem:[#allocation11 + $0x1688] sm:$0xff]
        %v6154 = vld [vmem:[#allocation11 + $0x1690] sm:$0xff]
        %v6155 = vld [vmem:[#allocation11 + $0x1698] sm:$0xff]
        %v6156 = vld [vmem:[#allocation11 + $0x16a0] sm:$0xff]
        %v6157 = vld [vmem:[#allocation11 + $0x16a8] sm:$0xff]
        %v6158 = vld [vmem:[#allocation11 + $0x16b0] sm:$0xff]
        %v6159 = vld [vmem:[#allocation11 + $0x16b8] sm:$0xff]
        %v6160 = vld [vmem:[#allocation11 + $0x16c0] sm:$0xff]
        %v6161 = vld [vmem:[#allocation11 + $0x16c8] sm:$0xff]
        %v6162 = vld [vmem:[#allocation11 + $0x16d0] sm:$0xff]
        %v6163 = vld [vmem:[#allocation11 + $0x16d8] sm:$0xff]
        %v6164 = vld [vmem:[#allocation11 + $0x16e0] sm:$0xff]
        %v6165 = vld [vmem:[#allocation11 + $0x16e8] sm:$0xff]
        %v6166 = vld [vmem:[#allocation11 + $0x16f0] sm:$0xff]
        %v6167 = vld [vmem:[#allocation11 + $0x16f8] sm:$0xff]
        %v6168 = vld [vmem:[#allocation11 + $0x1700] sm:$0xff]
        %v6169 = vld [vmem:[#allocation11 + $0x1708] sm:$0xff]
        %v6170 = vld [vmem:[#allocation11 + $0x1710] sm:$0xff]
        %v6171 = vld [vmem:[#allocation11 + $0x1718] sm:$0xff]
        %v6172 = vld [vmem:[#allocation11 + $0x1720] sm:$0xff]
        %v6173 = vld [vmem:[#allocation11 + $0x1728] sm:$0xff]
        %v6174 = vld [vmem:[#allocation11 + $0x1730] sm:$0xff]
        %v6175 = vld [vmem:[#allocation11 + $0x1738] sm:$0xff]
        %v6176 = vld [vmem:[#allocation11 + $0x1740] sm:$0xff]
        %v6177 = vld [vmem:[#allocation11 + $0x1748] sm:$0xff]
        %v6178 = vld [vmem:[#allocation11 + $0x1750] sm:$0xff]
        %v6179 = vld [vmem:[#allocation11 + $0x1758] sm:$0xff]
        %v6180 = vld [vmem:[#allocation11 + $0x1760] sm:$0xff]
        %v6181 = vld [vmem:[#allocation11 + $0x1768] sm:$0xff]
        %v6182 = vld [vmem:[#allocation11 + $0x1770] sm:$0xff]
        %v6183 = vld [vmem:[#allocation11 + $0x1778] sm:$0xff]
        %v6184 = vld [vmem:[#allocation11 + $0x1780] sm:$0xff]
        %v6185 = vld [vmem:[#allocation11 + $0x1788] sm:$0xff]
        %v6186 = vld [vmem:[#allocation11 + $0x1790] sm:$0xff]
        %v6187 = vld [vmem:[#allocation11 + $0x1798] sm:$0xff]
        %v6188 = vld [vmem:[#allocation11 + $0x17a0] sm:$0xff]
        %v6189 = vld [vmem:[#allocation11 + $0x17a8] sm:$0xff]
        %v6190 = vld [vmem:[#allocation11 + $0x17b0] sm:$0xff]
        %v6191 = vld [vmem:[#allocation11 + $0x17b8] sm:$0xff]
        %v6192 = vld [vmem:[#allocation11 + $0x17c0] sm:$0xff]
        %v6193 = vld [vmem:[#allocation11 + $0x17c8] sm:$0xff]
        %v6194 = vld [vmem:[#allocation11 + $0x17d0] sm:$0xff]
        %v6195 = vld [vmem:[#allocation11 + $0x17d8] sm:$0xff]
        %v6196 = vld [vmem:[#allocation11 + $0x17e0] sm:$0xff]
        %v6197 = vld [vmem:[#allocation11 + $0x17e8] sm:$0xff]
        %v6198 = vld [vmem:[#allocation11 + $0x17f0] sm:$0xff]
        %v6199 = vld [vmem:[#allocation11 + $0x17f8] sm:$0xff]
        %v6968 = vunpack.c.l.b16 %v5432
        %v6969 = vunpack.c.h.b16 %v5432
        %v6970 = vunpack.c.l.b16 %v5433
        %v6971 = vunpack.c.h.b16 %v5433
        %v6972 = vunpack.c.l.b16 %v5434
        %v6973 = vunpack.c.h.b16 %v5434
        %v6974 = vunpack.c.l.b16 %v5435
        %v6975 = vunpack.c.h.b16 %v5435
        %v6976 = vunpack.c.l.b16 %v5436
        %v6977 = vunpack.c.h.b16 %v5436
        %v6978 = vunpack.c.l.b16 %v5437
        %v6979 = vunpack.c.h.b16 %v5437
        %v6980 = vunpack.c.l.b16 %v5438
        %v6981 = vunpack.c.h.b16 %v5438
        %v6982 = vunpack.c.l.b16 %v5439
        %v6983 = vunpack.c.h.b16 %v5439
        %v6984 = vunpack.c.l.b16 %v5440
        %v6985 = vunpack.c.h.b16 %v5440
        %v6986 = vunpack.c.l.b16 %v5441
        %v6987 = vunpack.c.h.b16 %v5441
        %v6988 = vunpack.c.l.b16 %v5442
        %v6989 = vunpack.c.h.b16 %v5442
        %v6990 = vunpack.c.l.b16 %v5443
        %v6991 = vunpack.c.h.b16 %v5443
        %v6992 = vunpack.c.l.b16 %v5444
        %v6993 = vunpack.c.h.b16 %v5444
        %v6994 = vunpack.c.l.b16 %v5445
        %v6995 = vunpack.c.h.b16 %v5445
        %v6996 = vunpack.c.l.b16 %v5446
        %v6997 = vunpack.c.h.b16 %v5446
        %v6998 = vunpack.c.l.b16 %v5447
        %v6999 = vunpack.c.h.b16 %v5447
        %v7000 = vunpack.c.l.b16 %v5448
        %v7001 = vunpack.c.h.b16 %v5448
        %v7002 = vunpack.c.l.b16 %v5449
        %v7003 = vunpack.c.h.b16 %v5449
        %v7004 = vunpack.c.l.b16 %v5450
        %v7005 = vunpack.c.h.b16 %v5450
        %v7006 = vunpack.c.l.b16 %v5451
        %v7007 = vunpack.c.h.b16 %v5451
        %v7008 = vunpack.c.l.b16 %v5452
        %v7009 = vunpack.c.h.b16 %v5452
        %v7010 = vunpack.c.l.b16 %v5453
        %v7011 = vunpack.c.h.b16 %v5453
        %v7012 = vunpack.c.l.b16 %v5454
        %v7013 = vunpack.c.h.b16 %v5454
        %v7014 = vunpack.c.l.b16 %v5455
        %v7015 = vunpack.c.h.b16 %v5455
        %v7016 = vunpack.c.l.b16 %v5456
        %v7017 = vunpack.c.h.b16 %v5456
        %v7018 = vunpack.c.l.b16 %v5457
        %v7019 = vunpack.c.h.b16 %v5457
        %v7020 = vunpack.c.l.b16 %v5458
        %v7021 = vunpack.c.h.b16 %v5458
        %v7022 = vunpack.c.l.b16 %v5459
        %v7023 = vunpack.c.h.b16 %v5459
        %v7024 = vunpack.c.l.b16 %v5460
        %v7025 = vunpack.c.h.b16 %v5460
        %v7026 = vunpack.c.l.b16 %v5461
        %v7027 = vunpack.c.h.b16 %v5461
        %v7028 = vunpack.c.l.b16 %v5462
        %v7029 = vunpack.c.h.b16 %v5462
        %v7030 = vunpack.c.l.b16 %v5463
        %v7031 = vunpack.c.h.b16 %v5463
        %v7032 = vunpack.c.l.b16 %v5464
        %v7033 = vunpack.c.h.b16 %v5464
        %v7034 = vunpack.c.l.b16 %v5465
        %v7035 = vunpack.c.h.b16 %v5465
        %v7036 = vunpack.c.l.b16 %v5466
        %v7037 = vunpack.c.h.b16 %v5466
        %v7038 = vunpack.c.l.b16 %v5467
        %v7039 = vunpack.c.h.b16 %v5467
        %v7040 = vunpack.c.l.b16 %v5468
        %v7041 = vunpack.c.h.b16 %v5468
        %v7042 = vunpack.c.l.b16 %v5469
        %v7043 = vunpack.c.h.b16 %v5469
        %v7044 = vunpack.c.l.b16 %v5470
        %v7045 = vunpack.c.h.b16 %v5470
        %v7046 = vunpack.c.l.b16 %v5471
        %v7047 = vunpack.c.h.b16 %v5471
        %v7048 = vunpack.c.l.b16 %v5472
        %v7049 = vunpack.c.h.b16 %v5472
        %v7050 = vunpack.c.l.b16 %v5473
        %v7051 = vunpack.c.h.b16 %v5473
        %v7052 = vunpack.c.l.b16 %v5474
        %v7053 = vunpack.c.h.b16 %v5474
        %v7054 = vunpack.c.l.b16 %v5475
        %v7055 = vunpack.c.h.b16 %v5475
        %v7056 = vunpack.c.l.b16 %v5476
        %v7057 = vunpack.c.h.b16 %v5476
        %v7058 = vunpack.c.l.b16 %v5477
        %v7059 = vunpack.c.h.b16 %v5477
        %v7060 = vunpack.c.l.b16 %v5478
        %v7061 = vunpack.c.h.b16 %v5478
        %v7062 = vunpack.c.l.b16 %v5479
        %v7063 = vunpack.c.h.b16 %v5479
        %v7064 = vunpack.c.l.b16 %v5480
        %v7065 = vunpack.c.h.b16 %v5480
        %v7066 = vunpack.c.l.b16 %v5481
        %v7067 = vunpack.c.h.b16 %v5481
        %v7068 = vunpack.c.l.b16 %v5482
        %v7069 = vunpack.c.h.b16 %v5482
        %v7070 = vunpack.c.l.b16 %v5483
        %v7071 = vunpack.c.h.b16 %v5483
        %v7072 = vunpack.c.l.b16 %v5484
        %v7073 = vunpack.c.h.b16 %v5484
        %v7074 = vunpack.c.l.b16 %v5485
        %v7075 = vunpack.c.h.b16 %v5485
        %v7076 = vunpack.c.l.b16 %v5486
        %v7077 = vunpack.c.h.b16 %v5486
        %v7078 = vunpack.c.l.b16 %v5487
        %v7079 = vunpack.c.h.b16 %v5487
        %v7080 = vunpack.c.l.b16 %v5488
        %v7081 = vunpack.c.h.b16 %v5488
        %v7082 = vunpack.c.l.b16 %v5489
        %v7083 = vunpack.c.h.b16 %v5489
        %v7084 = vunpack.c.l.b16 %v5490
        %v7085 = vunpack.c.h.b16 %v5490
        %v7086 = vunpack.c.l.b16 %v5491
        %v7087 = vunpack.c.h.b16 %v5491
        %v7088 = vunpack.c.l.b16 %v5492
        %v7089 = vunpack.c.h.b16 %v5492
        %v7090 = vunpack.c.l.b16 %v5493
        %v7091 = vunpack.c.h.b16 %v5493
        %v7092 = vunpack.c.l.b16 %v5494
        %v7093 = vunpack.c.h.b16 %v5494
        %v7094 = vunpack.c.l.b16 %v5495
        %v7095 = vunpack.c.h.b16 %v5495
        %v7096 = vunpack.c.l.b16 %v5496
        %v7097 = vunpack.c.h.b16 %v5496
        %v7098 = vunpack.c.l.b16 %v5497
        %v7099 = vunpack.c.h.b16 %v5497
        %v7100 = vunpack.c.l.b16 %v5498
        %v7101 = vunpack.c.h.b16 %v5498
        %v7102 = vunpack.c.l.b16 %v5499
        %v7103 = vunpack.c.h.b16 %v5499
        %v7104 = vunpack.c.l.b16 %v5500
        %v7105 = vunpack.c.h.b16 %v5500
        %v7106 = vunpack.c.l.b16 %v5501
        %v7107 = vunpack.c.h.b16 %v5501
        %v7108 = vunpack.c.l.b16 %v5502
        %v7109 = vunpack.c.h.b16 %v5502
        %v7110 = vunpack.c.l.b16 %v5503
        %v7111 = vunpack.c.h.b16 %v5503
        %v7112 = vunpack.c.l.b16 %v5504
        %v7113 = vunpack.c.h.b16 %v5504
        %v7114 = vunpack.c.l.b16 %v5505
        %v7115 = vunpack.c.h.b16 %v5505
        %v7116 = vunpack.c.l.b16 %v5506
        %v7117 = vunpack.c.h.b16 %v5506
        %v7118 = vunpack.c.l.b16 %v5507
        %v7119 = vunpack.c.h.b16 %v5507
        %v7120 = vunpack.c.l.b16 %v5508
        %v7121 = vunpack.c.h.b16 %v5508
        %v7122 = vunpack.c.l.b16 %v5509
        %v7123 = vunpack.c.h.b16 %v5509
        %v7124 = vunpack.c.l.b16 %v5510
        %v7125 = vunpack.c.h.b16 %v5510
        %v7126 = vunpack.c.l.b16 %v5511
        %v7127 = vunpack.c.h.b16 %v5511
        %v7128 = vunpack.c.l.b16 %v5512
        %v7129 = vunpack.c.h.b16 %v5512
        %v7130 = vunpack.c.l.b16 %v5513
        %v7131 = vunpack.c.h.b16 %v5513
        %v7132 = vunpack.c.l.b16 %v5514
        %v7133 = vunpack.c.h.b16 %v5514
        %v7134 = vunpack.c.l.b16 %v5515
        %v7135 = vunpack.c.h.b16 %v5515
        %v7136 = vunpack.c.l.b16 %v5516
        %v7137 = vunpack.c.h.b16 %v5516
        %v7138 = vunpack.c.l.b16 %v5517
        %v7139 = vunpack.c.h.b16 %v5517
        %v7140 = vunpack.c.l.b16 %v5518
        %v7141 = vunpack.c.h.b16 %v5518
        %v7142 = vunpack.c.l.b16 %v5519
        %v7143 = vunpack.c.h.b16 %v5519
        %v7144 = vunpack.c.l.b16 %v5520
        %v7145 = vunpack.c.h.b16 %v5520
        %v7146 = vunpack.c.l.b16 %v5521
        %v7147 = vunpack.c.h.b16 %v5521
        %v7148 = vunpack.c.l.b16 %v5522
        %v7149 = vunpack.c.h.b16 %v5522
        %v7150 = vunpack.c.l.b16 %v5523
        %v7151 = vunpack.c.h.b16 %v5523
        %v7152 = vunpack.c.l.b16 %v5524
        %v7153 = vunpack.c.h.b16 %v5524
        %v7154 = vunpack.c.l.b16 %v5525
        %v7155 = vunpack.c.h.b16 %v5525
        %v7156 = vunpack.c.l.b16 %v5526
        %v7157 = vunpack.c.h.b16 %v5526
        %v7158 = vunpack.c.l.b16 %v5527
        %v7159 = vunpack.c.h.b16 %v5527
        %v7160 = vunpack.c.l.b16 %v5528
        %v7161 = vunpack.c.h.b16 %v5528
        %v7162 = vunpack.c.l.b16 %v5529
        %v7163 = vunpack.c.h.b16 %v5529
        %v7164 = vunpack.c.l.b16 %v5530
        %v7165 = vunpack.c.h.b16 %v5530
        %v7166 = vunpack.c.l.b16 %v5531
        %v7167 = vunpack.c.h.b16 %v5531
        %v7168 = vunpack.c.l.b16 %v5532
        %v7169 = vunpack.c.h.b16 %v5532
        %v7170 = vunpack.c.l.b16 %v5533
        %v7171 = vunpack.c.h.b16 %v5533
        %v7172 = vunpack.c.l.b16 %v5534
        %v7173 = vunpack.c.h.b16 %v5534
        %v7174 = vunpack.c.l.b16 %v5535
        %v7175 = vunpack.c.h.b16 %v5535
        %v7176 = vunpack.c.l.b16 %v5536
        %v7177 = vunpack.c.h.b16 %v5536
        %v7178 = vunpack.c.l.b16 %v5537
        %v7179 = vunpack.c.h.b16 %v5537
        %v7180 = vunpack.c.l.b16 %v5538
        %v7181 = vunpack.c.h.b16 %v5538
        %v7182 = vunpack.c.l.b16 %v5539
        %v7183 = vunpack.c.h.b16 %v5539
        %v7184 = vunpack.c.l.b16 %v5540
        %v7185 = vunpack.c.h.b16 %v5540
        %v7186 = vunpack.c.l.b16 %v5541
        %v7187 = vunpack.c.h.b16 %v5541
        %v7188 = vunpack.c.l.b16 %v5542
        %v7189 = vunpack.c.h.b16 %v5542
        %v7190 = vunpack.c.l.b16 %v5543
        %v7191 = vunpack.c.h.b16 %v5543
        %v7192 = vunpack.c.l.b16 %v5544
        %v7193 = vunpack.c.h.b16 %v5544
        %v7194 = vunpack.c.l.b16 %v5545
        %v7195 = vunpack.c.h.b16 %v5545
        %v7196 = vunpack.c.l.b16 %v5546
        %v7197 = vunpack.c.h.b16 %v5546
        %v7198 = vunpack.c.l.b16 %v5547
        %v7199 = vunpack.c.h.b16 %v5547
        %v7200 = vunpack.c.l.b16 %v5548
        %v7201 = vunpack.c.h.b16 %v5548
        %v7202 = vunpack.c.l.b16 %v5549
        %v7203 = vunpack.c.h.b16 %v5549
        %v7204 = vunpack.c.l.b16 %v5550
        %v7205 = vunpack.c.h.b16 %v5550
        %v7206 = vunpack.c.l.b16 %v5551
        %v7207 = vunpack.c.h.b16 %v5551
        %v7208 = vunpack.c.l.b16 %v5552
        %v7209 = vunpack.c.h.b16 %v5552
        %v7210 = vunpack.c.l.b16 %v5553
        %v7211 = vunpack.c.h.b16 %v5553
        %v7212 = vunpack.c.l.b16 %v5554
        %v7213 = vunpack.c.h.b16 %v5554
        %v7214 = vunpack.c.l.b16 %v5555
        %v7215 = vunpack.c.h.b16 %v5555
        %v7216 = vunpack.c.l.b16 %v5556
        %v7217 = vunpack.c.h.b16 %v5556
        %v7218 = vunpack.c.l.b16 %v5557
        %v7219 = vunpack.c.h.b16 %v5557
        %v7220 = vunpack.c.l.b16 %v5558
        %v7221 = vunpack.c.h.b16 %v5558
        %v7222 = vunpack.c.l.b16 %v5559
        %v7223 = vunpack.c.h.b16 %v5559
        %v7224 = vunpack.c.l.b16 %v5560
        %v7225 = vunpack.c.h.b16 %v5560
        %v7226 = vunpack.c.l.b16 %v5561
        %v7227 = vunpack.c.h.b16 %v5561
        %v7228 = vunpack.c.l.b16 %v5562
        %v7229 = vunpack.c.h.b16 %v5562
        %v7230 = vunpack.c.l.b16 %v5563
        %v7231 = vunpack.c.h.b16 %v5563
        %v7232 = vunpack.c.l.b16 %v5564
        %v7233 = vunpack.c.h.b16 %v5564
        %v7234 = vunpack.c.l.b16 %v5565
        %v7235 = vunpack.c.h.b16 %v5565
        %v7236 = vunpack.c.l.b16 %v5566
        %v7237 = vunpack.c.h.b16 %v5566
        %v7238 = vunpack.c.l.b16 %v5567
        %v7239 = vunpack.c.h.b16 %v5567
        %v7240 = vunpack.c.l.b16 %v5568
        %v7241 = vunpack.c.h.b16 %v5568
        %v7242 = vunpack.c.l.b16 %v5569
        %v7243 = vunpack.c.h.b16 %v5569
        %v7244 = vunpack.c.l.b16 %v5570
        %v7245 = vunpack.c.h.b16 %v5570
        %v7246 = vunpack.c.l.b16 %v5571
        %v7247 = vunpack.c.h.b16 %v5571
        %v7248 = vunpack.c.l.b16 %v5572
        %v7249 = vunpack.c.h.b16 %v5572
        %v7250 = vunpack.c.l.b16 %v5573
        %v7251 = vunpack.c.h.b16 %v5573
        %v7252 = vunpack.c.l.b16 %v5574
        %v7253 = vunpack.c.h.b16 %v5574
        %v7254 = vunpack.c.l.b16 %v5575
        %v7255 = vunpack.c.h.b16 %v5575
        %v7256 = vunpack.c.l.b16 %v5576
        %v7257 = vunpack.c.h.b16 %v5576
        %v7258 = vunpack.c.l.b16 %v5577
        %v7259 = vunpack.c.h.b16 %v5577
        %v7260 = vunpack.c.l.b16 %v5578
        %v7261 = vunpack.c.h.b16 %v5578
        %v7262 = vunpack.c.l.b16 %v5579
        %v7263 = vunpack.c.h.b16 %v5579
        %v7264 = vunpack.c.l.b16 %v5580
        %v7265 = vunpack.c.h.b16 %v5580
        %v7266 = vunpack.c.l.b16 %v5581
        %v7267 = vunpack.c.h.b16 %v5581
        %v7268 = vunpack.c.l.b16 %v5582
        %v7269 = vunpack.c.h.b16 %v5582
        %v7270 = vunpack.c.l.b16 %v5583
        %v7271 = vunpack.c.h.b16 %v5583
        %v7272 = vunpack.c.l.b16 %v5584
        %v7273 = vunpack.c.h.b16 %v5584
        %v7274 = vunpack.c.l.b16 %v5585
        %v7275 = vunpack.c.h.b16 %v5585
        %v7276 = vunpack.c.l.b16 %v5586
        %v7277 = vunpack.c.h.b16 %v5586
        %v7278 = vunpack.c.l.b16 %v5587
        %v7279 = vunpack.c.h.b16 %v5587
        %v7280 = vunpack.c.l.b16 %v5588
        %v7281 = vunpack.c.h.b16 %v5588
        %v7282 = vunpack.c.l.b16 %v5589
        %v7283 = vunpack.c.h.b16 %v5589
        %v7284 = vunpack.c.l.b16 %v5590
        %v7285 = vunpack.c.h.b16 %v5590
        %v7286 = vunpack.c.l.b16 %v5591
        %v7287 = vunpack.c.h.b16 %v5591
        %v7288 = vunpack.c.l.b16 %v5592
        %v7289 = vunpack.c.h.b16 %v5592
        %v7290 = vunpack.c.l.b16 %v5593
        %v7291 = vunpack.c.h.b16 %v5593
        %v7292 = vunpack.c.l.b16 %v5594
        %v7293 = vunpack.c.h.b16 %v5594
        %v7294 = vunpack.c.l.b16 %v5595
        %v7295 = vunpack.c.h.b16 %v5595
        %v7296 = vunpack.c.l.b16 %v5596
        %v7297 = vunpack.c.h.b16 %v5596
        %v7298 = vunpack.c.l.b16 %v5597
        %v7299 = vunpack.c.h.b16 %v5597
        %v7300 = vunpack.c.l.b16 %v5598
        %v7301 = vunpack.c.h.b16 %v5598
        %v7302 = vunpack.c.l.b16 %v5599
        %v7303 = vunpack.c.h.b16 %v5599
        %v7304 = vunpack.c.l.b16 %v5600
        %v7305 = vunpack.c.h.b16 %v5600
        %v7306 = vunpack.c.l.b16 %v5601
        %v7307 = vunpack.c.h.b16 %v5601
        %v7308 = vunpack.c.l.b16 %v5602
        %v7309 = vunpack.c.h.b16 %v5602
        %v7310 = vunpack.c.l.b16 %v5603
        %v7311 = vunpack.c.h.b16 %v5603
        %v7312 = vunpack.c.l.b16 %v5604
        %v7313 = vunpack.c.h.b16 %v5604
        %v7314 = vunpack.c.l.b16 %v5605
        %v7315 = vunpack.c.h.b16 %v5605
        %v7316 = vunpack.c.l.b16 %v5606
        %v7317 = vunpack.c.h.b16 %v5606
        %v7318 = vunpack.c.l.b16 %v5607
        %v7319 = vunpack.c.h.b16 %v5607
        %v7320 = vunpack.c.l.b16 %v5608
        %v7321 = vunpack.c.h.b16 %v5608
        %v7322 = vunpack.c.l.b16 %v5609
        %v7323 = vunpack.c.h.b16 %v5609
        %v7324 = vunpack.c.l.b16 %v5610
        %v7325 = vunpack.c.h.b16 %v5610
        %v7326 = vunpack.c.l.b16 %v5611
        %v7327 = vunpack.c.h.b16 %v5611
        %v7328 = vunpack.c.l.b16 %v5612
        %v7329 = vunpack.c.h.b16 %v5612
        %v7330 = vunpack.c.l.b16 %v5613
        %v7331 = vunpack.c.h.b16 %v5613
        %v7332 = vunpack.c.l.b16 %v5614
        %v7333 = vunpack.c.h.b16 %v5614
        %v7334 = vunpack.c.l.b16 %v5615
        %v7335 = vunpack.c.h.b16 %v5615
        %v7336 = vunpack.c.l.b16 %v5616
        %v7337 = vunpack.c.h.b16 %v5616
        %v7338 = vunpack.c.l.b16 %v5617
        %v7339 = vunpack.c.h.b16 %v5617
        %v7340 = vunpack.c.l.b16 %v5618
        %v7341 = vunpack.c.h.b16 %v5618
        %v7342 = vunpack.c.l.b16 %v5619
        %v7343 = vunpack.c.h.b16 %v5619
        %v7344 = vunpack.c.l.b16 %v5620
        %v7345 = vunpack.c.h.b16 %v5620
        %v7346 = vunpack.c.l.b16 %v5621
        %v7347 = vunpack.c.h.b16 %v5621
        %v7348 = vunpack.c.l.b16 %v5622
        %v7349 = vunpack.c.h.b16 %v5622
        %v7350 = vunpack.c.l.b16 %v5623
        %v7351 = vunpack.c.h.b16 %v5623
        %v7352 = vunpack.c.l.b16 %v5624
        %v7353 = vunpack.c.h.b16 %v5624
        %v7354 = vunpack.c.l.b16 %v5625
        %v7355 = vunpack.c.h.b16 %v5625
        %v7356 = vunpack.c.l.b16 %v5626
        %v7357 = vunpack.c.h.b16 %v5626
        %v7358 = vunpack.c.l.b16 %v5627
        %v7359 = vunpack.c.h.b16 %v5627
        %v7360 = vunpack.c.l.b16 %v5628
        %v7361 = vunpack.c.h.b16 %v5628
        %v7362 = vunpack.c.l.b16 %v5629
        %v7363 = vunpack.c.h.b16 %v5629
        %v7364 = vunpack.c.l.b16 %v5630
        %v7365 = vunpack.c.h.b16 %v5630
        %v7366 = vunpack.c.l.b16 %v5631
        %v7367 = vunpack.c.h.b16 %v5631
        %v7368 = vunpack.c.l.b16 %v5632
        %v7369 = vunpack.c.h.b16 %v5632
        %v7370 = vunpack.c.l.b16 %v5633
        %v7371 = vunpack.c.h.b16 %v5633
        %v7372 = vunpack.c.l.b16 %v5634
        %v7373 = vunpack.c.h.b16 %v5634
        %v7374 = vunpack.c.l.b16 %v5635
        %v7375 = vunpack.c.h.b16 %v5635
        %v7376 = vunpack.c.l.b16 %v5636
        %v7377 = vunpack.c.h.b16 %v5636
        %v7378 = vunpack.c.l.b16 %v5637
        %v7379 = vunpack.c.h.b16 %v5637
        %v7380 = vunpack.c.l.b16 %v5638
        %v7381 = vunpack.c.h.b16 %v5638
        %v7382 = vunpack.c.l.b16 %v5639
        %v7383 = vunpack.c.h.b16 %v5639
        %v7384 = vunpack.c.l.b16 %v5640
        %v7385 = vunpack.c.h.b16 %v5640
        %v7386 = vunpack.c.l.b16 %v5641
        %v7387 = vunpack.c.h.b16 %v5641
        %v7388 = vunpack.c.l.b16 %v5642
        %v7389 = vunpack.c.h.b16 %v5642
        %v7390 = vunpack.c.l.b16 %v5643
        %v7391 = vunpack.c.h.b16 %v5643
        %v7392 = vunpack.c.l.b16 %v5644
        %v7393 = vunpack.c.h.b16 %v5644
        %v7394 = vunpack.c.l.b16 %v5645
        %v7395 = vunpack.c.h.b16 %v5645
        %v7396 = vunpack.c.l.b16 %v5646
        %v7397 = vunpack.c.h.b16 %v5646
        %v7398 = vunpack.c.l.b16 %v5647
        %v7399 = vunpack.c.h.b16 %v5647
        %v7400 = vunpack.c.l.b16 %v5648
        %v7401 = vunpack.c.h.b16 %v5648
        %v7402 = vunpack.c.l.b16 %v5649
        %v7403 = vunpack.c.h.b16 %v5649
        %v7404 = vunpack.c.l.b16 %v5650
        %v7405 = vunpack.c.h.b16 %v5650
        %v7406 = vunpack.c.l.b16 %v5651
        %v7407 = vunpack.c.h.b16 %v5651
        %v7408 = vunpack.c.l.b16 %v5652
        %v7409 = vunpack.c.h.b16 %v5652
        %v7410 = vunpack.c.l.b16 %v5653
        %v7411 = vunpack.c.h.b16 %v5653
        %v7412 = vunpack.c.l.b16 %v5654
        %v7413 = vunpack.c.h.b16 %v5654
        %v7414 = vunpack.c.l.b16 %v5655
        %v7415 = vunpack.c.h.b16 %v5655
        %v7416 = vunpack.c.l.b16 %v5656
        %v7417 = vunpack.c.h.b16 %v5656
        %v7418 = vunpack.c.l.b16 %v5657
        %v7419 = vunpack.c.h.b16 %v5657
        %v7420 = vunpack.c.l.b16 %v5658
        %v7421 = vunpack.c.h.b16 %v5658
        %v7422 = vunpack.c.l.b16 %v5659
        %v7423 = vunpack.c.h.b16 %v5659
        %v7424 = vunpack.c.l.b16 %v5660
        %v7425 = vunpack.c.h.b16 %v5660
        %v7426 = vunpack.c.l.b16 %v5661
        %v7427 = vunpack.c.h.b16 %v5661
        %v7428 = vunpack.c.l.b16 %v5662
        %v7429 = vunpack.c.h.b16 %v5662
        %v7430 = vunpack.c.l.b16 %v5663
        %v7431 = vunpack.c.h.b16 %v5663
        %v7432 = vunpack.c.l.b16 %v5664
        %v7433 = vunpack.c.h.b16 %v5664
        %v7434 = vunpack.c.l.b16 %v5665
        %v7435 = vunpack.c.h.b16 %v5665
        %v7436 = vunpack.c.l.b16 %v5666
        %v7437 = vunpack.c.h.b16 %v5666
        %v7438 = vunpack.c.l.b16 %v5667
        %v7439 = vunpack.c.h.b16 %v5667
        %v7440 = vunpack.c.l.b16 %v5668
        %v7441 = vunpack.c.h.b16 %v5668
        %v7442 = vunpack.c.l.b16 %v5669
        %v7443 = vunpack.c.h.b16 %v5669
        %v7444 = vunpack.c.l.b16 %v5670
        %v7445 = vunpack.c.h.b16 %v5670
        %v7446 = vunpack.c.l.b16 %v5671
        %v7447 = vunpack.c.h.b16 %v5671
        %v7448 = vunpack.c.l.b16 %v5672
        %v7449 = vunpack.c.h.b16 %v5672
        %v7450 = vunpack.c.l.b16 %v5673
        %v7451 = vunpack.c.h.b16 %v5673
        %v7452 = vunpack.c.l.b16 %v5674
        %v7453 = vunpack.c.h.b16 %v5674
        %v7454 = vunpack.c.l.b16 %v5675
        %v7455 = vunpack.c.h.b16 %v5675
        %v7456 = vunpack.c.l.b16 %v5676
        %v7457 = vunpack.c.h.b16 %v5676
        %v7458 = vunpack.c.l.b16 %v5677
        %v7459 = vunpack.c.h.b16 %v5677
        %v7460 = vunpack.c.l.b16 %v5678
        %v7461 = vunpack.c.h.b16 %v5678
        %v7462 = vunpack.c.l.b16 %v5679
        %v7463 = vunpack.c.h.b16 %v5679
        %v7464 = vunpack.c.l.b16 %v5680
        %v7465 = vunpack.c.h.b16 %v5680
        %v7466 = vunpack.c.l.b16 %v5681
        %v7467 = vunpack.c.h.b16 %v5681
        %v7468 = vunpack.c.l.b16 %v5682
        %v7469 = vunpack.c.h.b16 %v5682
        %v7470 = vunpack.c.l.b16 %v5683
        %v7471 = vunpack.c.h.b16 %v5683
        %v7472 = vunpack.c.l.b16 %v5684
        %v7473 = vunpack.c.h.b16 %v5684
        %v7474 = vunpack.c.l.b16 %v5685
        %v7475 = vunpack.c.h.b16 %v5685
        %v7476 = vunpack.c.l.b16 %v5686
        %v7477 = vunpack.c.h.b16 %v5686
        %v7478 = vunpack.c.l.b16 %v5687
        %v7479 = vunpack.c.h.b16 %v5687
        %v7480 = vunpack.c.l.b16 %v5688
        %v7481 = vunpack.c.h.b16 %v5688
        %v7482 = vunpack.c.l.b16 %v5689
        %v7483 = vunpack.c.h.b16 %v5689
        %v7484 = vunpack.c.l.b16 %v5690
        %v7485 = vunpack.c.h.b16 %v5690
        %v7486 = vunpack.c.l.b16 %v5691
        %v7487 = vunpack.c.h.b16 %v5691
        %v7488 = vunpack.c.l.b16 %v5692
        %v7489 = vunpack.c.h.b16 %v5692
        %v7490 = vunpack.c.l.b16 %v5693
        %v7491 = vunpack.c.h.b16 %v5693
        %v7492 = vunpack.c.l.b16 %v5694
        %v7493 = vunpack.c.h.b16 %v5694
        %v7494 = vunpack.c.l.b16 %v5695
        %v7495 = vunpack.c.h.b16 %v5695
        %v7496 = vunpack.c.l.b16 %v5696
        %v7497 = vunpack.c.h.b16 %v5696
        %v7498 = vunpack.c.l.b16 %v5697
        %v7499 = vunpack.c.h.b16 %v5697
        %v7500 = vunpack.c.l.b16 %v5698
        %v7501 = vunpack.c.h.b16 %v5698
        %v7502 = vunpack.c.l.b16 %v5699
        %v7503 = vunpack.c.h.b16 %v5699
        %v7504 = vunpack.c.l.b16 %v5700
        %v7505 = vunpack.c.h.b16 %v5700
        %v7506 = vunpack.c.l.b16 %v5701
        %v7507 = vunpack.c.h.b16 %v5701
        %v7508 = vunpack.c.l.b16 %v5702
        %v7509 = vunpack.c.h.b16 %v5702
        %v7510 = vunpack.c.l.b16 %v5703
        %v7511 = vunpack.c.h.b16 %v5703
        %v7512 = vunpack.c.l.b16 %v5704
        %v7513 = vunpack.c.h.b16 %v5704
        %v7514 = vunpack.c.l.b16 %v5705
        %v7515 = vunpack.c.h.b16 %v5705
        %v7516 = vunpack.c.l.b16 %v5706
        %v7517 = vunpack.c.h.b16 %v5706
        %v7518 = vunpack.c.l.b16 %v5707
        %v7519 = vunpack.c.h.b16 %v5707
        %v7520 = vunpack.c.l.b16 %v5708
        %v7521 = vunpack.c.h.b16 %v5708
        %v7522 = vunpack.c.l.b16 %v5709
        %v7523 = vunpack.c.h.b16 %v5709
        %v7524 = vunpack.c.l.b16 %v5710
        %v7525 = vunpack.c.h.b16 %v5710
        %v7526 = vunpack.c.l.b16 %v5711
        %v7527 = vunpack.c.h.b16 %v5711
        %v7528 = vunpack.c.l.b16 %v5712
        %v7529 = vunpack.c.h.b16 %v5712
        %v7530 = vunpack.c.l.b16 %v5713
        %v7531 = vunpack.c.h.b16 %v5713
        %v7532 = vunpack.c.l.b16 %v5714
        %v7533 = vunpack.c.h.b16 %v5714
        %v7534 = vunpack.c.l.b16 %v5715
        %v7535 = vunpack.c.h.b16 %v5715
        %v7536 = vunpack.c.l.b16 %v5716
        %v7537 = vunpack.c.h.b16 %v5716
        %v7538 = vunpack.c.l.b16 %v5717
        %v7539 = vunpack.c.h.b16 %v5717
        %v7540 = vunpack.c.l.b16 %v5718
        %v7541 = vunpack.c.h.b16 %v5718
        %v7542 = vunpack.c.l.b16 %v5719
        %v7543 = vunpack.c.h.b16 %v5719
        %v7544 = vunpack.c.l.b16 %v5720
        %v7545 = vunpack.c.h.b16 %v5720
        %v7546 = vunpack.c.l.b16 %v5721
        %v7547 = vunpack.c.h.b16 %v5721
        %v7548 = vunpack.c.l.b16 %v5722
        %v7549 = vunpack.c.h.b16 %v5722
        %v7550 = vunpack.c.l.b16 %v5723
        %v7551 = vunpack.c.h.b16 %v5723
        %v7552 = vunpack.c.l.b16 %v5724
        %v7553 = vunpack.c.h.b16 %v5724
        %v7554 = vunpack.c.l.b16 %v5725
        %v7555 = vunpack.c.h.b16 %v5725
        %v7556 = vunpack.c.l.b16 %v5726
        %v7557 = vunpack.c.h.b16 %v5726
        %v7558 = vunpack.c.l.b16 %v5727
        %v7559 = vunpack.c.h.b16 %v5727
        %v7560 = vunpack.c.l.b16 %v5728
        %v7561 = vunpack.c.h.b16 %v5728
        %v7562 = vunpack.c.l.b16 %v5729
        %v7563 = vunpack.c.h.b16 %v5729
        %v7564 = vunpack.c.l.b16 %v5730
        %v7565 = vunpack.c.h.b16 %v5730
        %v7566 = vunpack.c.l.b16 %v5731
        %v7567 = vunpack.c.h.b16 %v5731
        %v7568 = vunpack.c.l.b16 %v5732
        %v7569 = vunpack.c.h.b16 %v5732
        %v7570 = vunpack.c.l.b16 %v5733
        %v7571 = vunpack.c.h.b16 %v5733
        %v7572 = vunpack.c.l.b16 %v5734
        %v7573 = vunpack.c.h.b16 %v5734
        %v7574 = vunpack.c.l.b16 %v5735
        %v7575 = vunpack.c.h.b16 %v5735
        %v7576 = vunpack.c.l.b16 %v5736
        %v7577 = vunpack.c.h.b16 %v5736
        %v7578 = vunpack.c.l.b16 %v5737
        %v7579 = vunpack.c.h.b16 %v5737
        %v7580 = vunpack.c.l.b16 %v5738
        %v7581 = vunpack.c.h.b16 %v5738
        %v7582 = vunpack.c.l.b16 %v5739
        %v7583 = vunpack.c.h.b16 %v5739
        %v7584 = vunpack.c.l.b16 %v5740
        %v7585 = vunpack.c.h.b16 %v5740
        %v7586 = vunpack.c.l.b16 %v5741
        %v7587 = vunpack.c.h.b16 %v5741
        %v7588 = vunpack.c.l.b16 %v5742
        %v7589 = vunpack.c.h.b16 %v5742
        %v7590 = vunpack.c.l.b16 %v5743
        %v7591 = vunpack.c.h.b16 %v5743
        %v7592 = vunpack.c.l.b16 %v5744
        %v7593 = vunpack.c.h.b16 %v5744
        %v7594 = vunpack.c.l.b16 %v5745
        %v7595 = vunpack.c.h.b16 %v5745
        %v7596 = vunpack.c.l.b16 %v5746
        %v7597 = vunpack.c.h.b16 %v5746
        %v7598 = vunpack.c.l.b16 %v5747
        %v7599 = vunpack.c.h.b16 %v5747
        %v7600 = vunpack.c.l.b16 %v5748
        %v7601 = vunpack.c.h.b16 %v5748
        %v7602 = vunpack.c.l.b16 %v5749
        %v7603 = vunpack.c.h.b16 %v5749
        %v7604 = vunpack.c.l.b16 %v5750
        %v7605 = vunpack.c.h.b16 %v5750
        %v7606 = vunpack.c.l.b16 %v5751
        %v7607 = vunpack.c.h.b16 %v5751
        %v7608 = vunpack.c.l.b16 %v5752
        %v7609 = vunpack.c.h.b16 %v5752
        %v7610 = vunpack.c.l.b16 %v5753
        %v7611 = vunpack.c.h.b16 %v5753
        %v7612 = vunpack.c.l.b16 %v5754
        %v7613 = vunpack.c.h.b16 %v5754
        %v7614 = vunpack.c.l.b16 %v5755
        %v7615 = vunpack.c.h.b16 %v5755
        %v7616 = vunpack.c.l.b16 %v5756
        %v7617 = vunpack.c.h.b16 %v5756
        %v7618 = vunpack.c.l.b16 %v5757
        %v7619 = vunpack.c.h.b16 %v5757
        %v7620 = vunpack.c.l.b16 %v5758
        %v7621 = vunpack.c.h.b16 %v5758
        %v7622 = vunpack.c.l.b16 %v5759
        %v7623 = vunpack.c.h.b16 %v5759
        %v7624 = vunpack.c.l.b16 %v5760
        %v7625 = vunpack.c.h.b16 %v5760
        %v7626 = vunpack.c.l.b16 %v5761
        %v7627 = vunpack.c.h.b16 %v5761
        %v7628 = vunpack.c.l.b16 %v5762
        %v7629 = vunpack.c.h.b16 %v5762
        %v7630 = vunpack.c.l.b16 %v5763
        %v7631 = vunpack.c.h.b16 %v5763
        %v7632 = vunpack.c.l.b16 %v5764
        %v7633 = vunpack.c.h.b16 %v5764
        %v7634 = vunpack.c.l.b16 %v5765
        %v7635 = vunpack.c.h.b16 %v5765
        %v7636 = vunpack.c.l.b16 %v5766
        %v7637 = vunpack.c.h.b16 %v5766
        %v7638 = vunpack.c.l.b16 %v5767
        %v7639 = vunpack.c.h.b16 %v5767
        %v7640 = vunpack.c.l.b16 %v5768
        %v7641 = vunpack.c.h.b16 %v5768
        %v7642 = vunpack.c.l.b16 %v5769
        %v7643 = vunpack.c.h.b16 %v5769
        %v7644 = vunpack.c.l.b16 %v5770
        %v7645 = vunpack.c.h.b16 %v5770
        %v7646 = vunpack.c.l.b16 %v5771
        %v7647 = vunpack.c.h.b16 %v5771
        %v7648 = vunpack.c.l.b16 %v5772
        %v7649 = vunpack.c.h.b16 %v5772
        %v7650 = vunpack.c.l.b16 %v5773
        %v7651 = vunpack.c.h.b16 %v5773
        %v7652 = vunpack.c.l.b16 %v5774
        %v7653 = vunpack.c.h.b16 %v5774
        %v7654 = vunpack.c.l.b16 %v5775
        %v7655 = vunpack.c.h.b16 %v5775
        %v7656 = vunpack.c.l.b16 %v5776
        %v7657 = vunpack.c.h.b16 %v5776
        %v7658 = vunpack.c.l.b16 %v5777
        %v7659 = vunpack.c.h.b16 %v5777
        %v7660 = vunpack.c.l.b16 %v5778
        %v7661 = vunpack.c.h.b16 %v5778
        %v7662 = vunpack.c.l.b16 %v5779
        %v7663 = vunpack.c.h.b16 %v5779
        %v7664 = vunpack.c.l.b16 %v5780
        %v7665 = vunpack.c.h.b16 %v5780
        %v7666 = vunpack.c.l.b16 %v5781
        %v7667 = vunpack.c.h.b16 %v5781
        %v7668 = vunpack.c.l.b16 %v5782
        %v7669 = vunpack.c.h.b16 %v5782
        %v7670 = vunpack.c.l.b16 %v5783
        %v7671 = vunpack.c.h.b16 %v5783
        %v7672 = vunpack.c.l.b16 %v5784
        %v7673 = vunpack.c.h.b16 %v5784
        %v7674 = vunpack.c.l.b16 %v5785
        %v7675 = vunpack.c.h.b16 %v5785
        %v7676 = vunpack.c.l.b16 %v5786
        %v7677 = vunpack.c.h.b16 %v5786
        %v7678 = vunpack.c.l.b16 %v5787
        %v7679 = vunpack.c.h.b16 %v5787
        %v7680 = vunpack.c.l.b16 %v5788
        %v7681 = vunpack.c.h.b16 %v5788
        %v7682 = vunpack.c.l.b16 %v5789
        %v7683 = vunpack.c.h.b16 %v5789
        %v7684 = vunpack.c.l.b16 %v5790
        %v7685 = vunpack.c.h.b16 %v5790
        %v7686 = vunpack.c.l.b16 %v5791
        %v7687 = vunpack.c.h.b16 %v5791
        %v7688 = vunpack.c.l.b16 %v5792
        %v7689 = vunpack.c.h.b16 %v5792
        %v7690 = vunpack.c.l.b16 %v5793
        %v7691 = vunpack.c.h.b16 %v5793
        %v7692 = vunpack.c.l.b16 %v5794
        %v7693 = vunpack.c.h.b16 %v5794
        %v7694 = vunpack.c.l.b16 %v5795
        %v7695 = vunpack.c.h.b16 %v5795
        %v7696 = vunpack.c.l.b16 %v5796
        %v7697 = vunpack.c.h.b16 %v5796
        %v7698 = vunpack.c.l.b16 %v5797
        %v7699 = vunpack.c.h.b16 %v5797
        %v7700 = vunpack.c.l.b16 %v5798
        %v7701 = vunpack.c.h.b16 %v5798
        %v7702 = vunpack.c.l.b16 %v5799
        %v7703 = vunpack.c.h.b16 %v5799
        %v7704 = vunpack.c.l.b16 %v5800
        %v7705 = vunpack.c.h.b16 %v5800
        %v7706 = vunpack.c.l.b16 %v5801
        %v7707 = vunpack.c.h.b16 %v5801
        %v7708 = vunpack.c.l.b16 %v5802
        %v7709 = vunpack.c.h.b16 %v5802
        %v7710 = vunpack.c.l.b16 %v5803
        %v7711 = vunpack.c.h.b16 %v5803
        %v7712 = vunpack.c.l.b16 %v5804
        %v7713 = vunpack.c.h.b16 %v5804
        %v7714 = vunpack.c.l.b16 %v5805
        %v7715 = vunpack.c.h.b16 %v5805
        %v7716 = vunpack.c.l.b16 %v5806
        %v7717 = vunpack.c.h.b16 %v5806
        %v7718 = vunpack.c.l.b16 %v5807
        %v7719 = vunpack.c.h.b16 %v5807
        %v7720 = vunpack.c.l.b16 %v5808
        %v7721 = vunpack.c.h.b16 %v5808
        %v7722 = vunpack.c.l.b16 %v5809
        %v7723 = vunpack.c.h.b16 %v5809
        %v7724 = vunpack.c.l.b16 %v5810
        %v7725 = vunpack.c.h.b16 %v5810
        %v7726 = vunpack.c.l.b16 %v5811
        %v7727 = vunpack.c.h.b16 %v5811
        %v7728 = vunpack.c.l.b16 %v5812
        %v7729 = vunpack.c.h.b16 %v5812
        %v7730 = vunpack.c.l.b16 %v5813
        %v7731 = vunpack.c.h.b16 %v5813
        %v7732 = vunpack.c.l.b16 %v5814
        %v7733 = vunpack.c.h.b16 %v5814
        %v7734 = vunpack.c.l.b16 %v5815
        %v7735 = vunpack.c.h.b16 %v5815
        %v7736 = vunpack.c.l.b16 %v5816
        %v7737 = vunpack.c.h.b16 %v5816
        %v7738 = vunpack.c.l.b16 %v5817
        %v7739 = vunpack.c.h.b16 %v5817
        %v7740 = vunpack.c.l.b16 %v5818
        %v7741 = vunpack.c.h.b16 %v5818
        %v7742 = vunpack.c.l.b16 %v5819
        %v7743 = vunpack.c.h.b16 %v5819
        %v7744 = vunpack.c.l.b16 %v5820
        %v7745 = vunpack.c.h.b16 %v5820
        %v7746 = vunpack.c.l.b16 %v5821
        %v7747 = vunpack.c.h.b16 %v5821
        %v7748 = vunpack.c.l.b16 %v5822
        %v7749 = vunpack.c.h.b16 %v5822
        %v7750 = vunpack.c.l.b16 %v5823
        %v7751 = vunpack.c.h.b16 %v5823
        %v7752 = vunpack.c.l.b16 %v5824
        %v7753 = vunpack.c.h.b16 %v5824
        %v7754 = vunpack.c.l.b16 %v5825
        %v7755 = vunpack.c.h.b16 %v5825
        %v7756 = vunpack.c.l.b16 %v5826
        %v7757 = vunpack.c.h.b16 %v5826
        %v7758 = vunpack.c.l.b16 %v5827
        %v7759 = vunpack.c.h.b16 %v5827
        %v7760 = vunpack.c.l.b16 %v5828
        %v7761 = vunpack.c.h.b16 %v5828
        %v7762 = vunpack.c.l.b16 %v5829
        %v7763 = vunpack.c.h.b16 %v5829
        %v7764 = vunpack.c.l.b16 %v5830
        %v7765 = vunpack.c.h.b16 %v5830
        %v7766 = vunpack.c.l.b16 %v5831
        %v7767 = vunpack.c.h.b16 %v5831
        %v7768 = vunpack.c.l.b16 %v5832
        %v7769 = vunpack.c.h.b16 %v5832
        %v7770 = vunpack.c.l.b16 %v5833
        %v7771 = vunpack.c.h.b16 %v5833
        %v7772 = vunpack.c.l.b16 %v5834
        %v7773 = vunpack.c.h.b16 %v5834
        %v7774 = vunpack.c.l.b16 %v5835
        %v7775 = vunpack.c.h.b16 %v5835
        %v7776 = vunpack.c.l.b16 %v5836
        %v7777 = vunpack.c.h.b16 %v5836
        %v7778 = vunpack.c.l.b16 %v5837
        %v7779 = vunpack.c.h.b16 %v5837
        %v7780 = vunpack.c.l.b16 %v5838
        %v7781 = vunpack.c.h.b16 %v5838
        %v7782 = vunpack.c.l.b16 %v5839
        %v7783 = vunpack.c.h.b16 %v5839
        %v7784 = vunpack.c.l.b16 %v5840
        %v7785 = vunpack.c.h.b16 %v5840
        %v7786 = vunpack.c.l.b16 %v5841
        %v7787 = vunpack.c.h.b16 %v5841
        %v7788 = vunpack.c.l.b16 %v5842
        %v7789 = vunpack.c.h.b16 %v5842
        %v7790 = vunpack.c.l.b16 %v5843
        %v7791 = vunpack.c.h.b16 %v5843
        %v7792 = vunpack.c.l.b16 %v5844
        %v7793 = vunpack.c.h.b16 %v5844
        %v7794 = vunpack.c.l.b16 %v5845
        %v7795 = vunpack.c.h.b16 %v5845
        %v7796 = vunpack.c.l.b16 %v5846
        %v7797 = vunpack.c.h.b16 %v5846
        %v7798 = vunpack.c.l.b16 %v5847
        %v7799 = vunpack.c.h.b16 %v5847
        %v7800 = vunpack.c.l.b16 %v5848
        %v7801 = vunpack.c.h.b16 %v5848
        %v7802 = vunpack.c.l.b16 %v5849
        %v7803 = vunpack.c.h.b16 %v5849
        %v7804 = vunpack.c.l.b16 %v5850
        %v7805 = vunpack.c.h.b16 %v5850
        %v7806 = vunpack.c.l.b16 %v5851
        %v7807 = vunpack.c.h.b16 %v5851
        %v7808 = vunpack.c.l.b16 %v5852
        %v7809 = vunpack.c.h.b16 %v5852
        %v7810 = vunpack.c.l.b16 %v5853
        %v7811 = vunpack.c.h.b16 %v5853
        %v7812 = vunpack.c.l.b16 %v5854
        %v7813 = vunpack.c.h.b16 %v5854
        %v7814 = vunpack.c.l.b16 %v5855
        %v7815 = vunpack.c.h.b16 %v5855
        %v7816 = vunpack.c.l.b16 %v5856
        %v7817 = vunpack.c.h.b16 %v5856
        %v7818 = vunpack.c.l.b16 %v5857
        %v7819 = vunpack.c.h.b16 %v5857
        %v7820 = vunpack.c.l.b16 %v5858
        %v7821 = vunpack.c.h.b16 %v5858
        %v7822 = vunpack.c.l.b16 %v5859
        %v7823 = vunpack.c.h.b16 %v5859
        %v7824 = vunpack.c.l.b16 %v5860
        %v7825 = vunpack.c.h.b16 %v5860
        %v7826 = vunpack.c.l.b16 %v5861
        %v7827 = vunpack.c.h.b16 %v5861
        %v7828 = vunpack.c.l.b16 %v5862
        %v7829 = vunpack.c.h.b16 %v5862
        %v7830 = vunpack.c.l.b16 %v5863
        %v7831 = vunpack.c.h.b16 %v5863
        %v7832 = vunpack.c.l.b16 %v5864
        %v7833 = vunpack.c.h.b16 %v5864
        %v7834 = vunpack.c.l.b16 %v5865
        %v7835 = vunpack.c.h.b16 %v5865
        %v7836 = vunpack.c.l.b16 %v5866
        %v7837 = vunpack.c.h.b16 %v5866
        %v7838 = vunpack.c.l.b16 %v5867
        %v7839 = vunpack.c.h.b16 %v5867
        %v7840 = vunpack.c.l.b16 %v5868
        %v7841 = vunpack.c.h.b16 %v5868
        %v7842 = vunpack.c.l.b16 %v5869
        %v7843 = vunpack.c.h.b16 %v5869
        %v7844 = vunpack.c.l.b16 %v5870
        %v7845 = vunpack.c.h.b16 %v5870
        %v7846 = vunpack.c.l.b16 %v5871
        %v7847 = vunpack.c.h.b16 %v5871
        %v7848 = vunpack.c.l.b16 %v5872
        %v7849 = vunpack.c.h.b16 %v5872
        %v7850 = vunpack.c.l.b16 %v5873
        %v7851 = vunpack.c.h.b16 %v5873
        %v7852 = vunpack.c.l.b16 %v5874
        %v7853 = vunpack.c.h.b16 %v5874
        %v7854 = vunpack.c.l.b16 %v5875
        %v7855 = vunpack.c.h.b16 %v5875
        %v7856 = vunpack.c.l.b16 %v5876
        %v7857 = vunpack.c.h.b16 %v5876
        %v7858 = vunpack.c.l.b16 %v5877
        %v7859 = vunpack.c.h.b16 %v5877
        %v7860 = vunpack.c.l.b16 %v5878
        %v7861 = vunpack.c.h.b16 %v5878
        %v7862 = vunpack.c.l.b16 %v5879
        %v7863 = vunpack.c.h.b16 %v5879
        %v7864 = vunpack.c.l.b16 %v5880
        %v7865 = vunpack.c.h.b16 %v5880
        %v7866 = vunpack.c.l.b16 %v5881
        %v7867 = vunpack.c.h.b16 %v5881
        %v7868 = vunpack.c.l.b16 %v5882
        %v7869 = vunpack.c.h.b16 %v5882
        %v7870 = vunpack.c.l.b16 %v5883
        %v7871 = vunpack.c.h.b16 %v5883
        %v7872 = vunpack.c.l.b16 %v5884
        %v7873 = vunpack.c.h.b16 %v5884
        %v7874 = vunpack.c.l.b16 %v5885
        %v7875 = vunpack.c.h.b16 %v5885
        %v7876 = vunpack.c.l.b16 %v5886
        %v7877 = vunpack.c.h.b16 %v5886
        %v7878 = vunpack.c.l.b16 %v5887
        %v7879 = vunpack.c.h.b16 %v5887
        %v7880 = vunpack.c.l.b16 %v5888
        %v7881 = vunpack.c.h.b16 %v5888
        %v7882 = vunpack.c.l.b16 %v5889
        %v7883 = vunpack.c.h.b16 %v5889
        %v7884 = vunpack.c.l.b16 %v5890
        %v7885 = vunpack.c.h.b16 %v5890
        %v7886 = vunpack.c.l.b16 %v5891
        %v7887 = vunpack.c.h.b16 %v5891
        %v7888 = vunpack.c.l.b16 %v5892
        %v7889 = vunpack.c.h.b16 %v5892
        %v7890 = vunpack.c.l.b16 %v5893
        %v7891 = vunpack.c.h.b16 %v5893
        %v7892 = vunpack.c.l.b16 %v5894
        %v7893 = vunpack.c.h.b16 %v5894
        %v7894 = vunpack.c.l.b16 %v5895
        %v7895 = vunpack.c.h.b16 %v5895
        %v7896 = vunpack.c.l.b16 %v5896
        %v7897 = vunpack.c.h.b16 %v5896
        %v7898 = vunpack.c.l.b16 %v5897
        %v7899 = vunpack.c.h.b16 %v5897
        %v7900 = vunpack.c.l.b16 %v5898
        %v7901 = vunpack.c.h.b16 %v5898
        %v7902 = vunpack.c.l.b16 %v5899
        %v7903 = vunpack.c.h.b16 %v5899
        %v7904 = vunpack.c.l.b16 %v5900
        %v7905 = vunpack.c.h.b16 %v5900
        %v7906 = vunpack.c.l.b16 %v5901
        %v7907 = vunpack.c.h.b16 %v5901
        %v7908 = vunpack.c.l.b16 %v5902
        %v7909 = vunpack.c.h.b16 %v5902
        %v7910 = vunpack.c.l.b16 %v5903
        %v7911 = vunpack.c.h.b16 %v5903
        %v7912 = vunpack.c.l.b16 %v5904
        %v7913 = vunpack.c.h.b16 %v5904
        %v7914 = vunpack.c.l.b16 %v5905
        %v7915 = vunpack.c.h.b16 %v5905
        %v7916 = vunpack.c.l.b16 %v5906
        %v7917 = vunpack.c.h.b16 %v5906
        %v7918 = vunpack.c.l.b16 %v5907
        %v7919 = vunpack.c.h.b16 %v5907
        %v7920 = vunpack.c.l.b16 %v5908
        %v7921 = vunpack.c.h.b16 %v5908
        %v7922 = vunpack.c.l.b16 %v5909
        %v7923 = vunpack.c.h.b16 %v5909
        %v7924 = vunpack.c.l.b16 %v5910
        %v7925 = vunpack.c.h.b16 %v5910
        %v7926 = vunpack.c.l.b16 %v5911
        %v7927 = vunpack.c.h.b16 %v5911
        %v7928 = vunpack.c.l.b16 %v5912
        %v7929 = vunpack.c.h.b16 %v5912
        %v7930 = vunpack.c.l.b16 %v5913
        %v7931 = vunpack.c.h.b16 %v5913
        %v7932 = vunpack.c.l.b16 %v5914
        %v7933 = vunpack.c.h.b16 %v5914
        %v7934 = vunpack.c.l.b16 %v5915
        %v7935 = vunpack.c.h.b16 %v5915
        %v7936 = vunpack.c.l.b16 %v5916
        %v7937 = vunpack.c.h.b16 %v5916
        %v7938 = vunpack.c.l.b16 %v5917
        %v7939 = vunpack.c.h.b16 %v5917
        %v7940 = vunpack.c.l.b16 %v5918
        %v7941 = vunpack.c.h.b16 %v5918
        %v7942 = vunpack.c.l.b16 %v5919
        %v7943 = vunpack.c.h.b16 %v5919
        %v7944 = vunpack.c.l.b16 %v5920
        %v7945 = vunpack.c.h.b16 %v5920
        %v7946 = vunpack.c.l.b16 %v5921
        %v7947 = vunpack.c.h.b16 %v5921
        %v7948 = vunpack.c.l.b16 %v5922
        %v7949 = vunpack.c.h.b16 %v5922
        %v7950 = vunpack.c.l.b16 %v5923
        %v7951 = vunpack.c.h.b16 %v5923
        %v7952 = vunpack.c.l.b16 %v5924
        %v7953 = vunpack.c.h.b16 %v5924
        %v7954 = vunpack.c.l.b16 %v5925
        %v7955 = vunpack.c.h.b16 %v5925
        %v7956 = vunpack.c.l.b16 %v5926
        %v7957 = vunpack.c.h.b16 %v5926
        %v7958 = vunpack.c.l.b16 %v5927
        %v7959 = vunpack.c.h.b16 %v5927
        %v7960 = vunpack.c.l.b16 %v5928
        %v7961 = vunpack.c.h.b16 %v5928
        %v7962 = vunpack.c.l.b16 %v5929
        %v7963 = vunpack.c.h.b16 %v5929
        %v7964 = vunpack.c.l.b16 %v5930
        %v7965 = vunpack.c.h.b16 %v5930
        %v7966 = vunpack.c.l.b16 %v5931
        %v7967 = vunpack.c.h.b16 %v5931
        %v7968 = vunpack.c.l.b16 %v5932
        %v7969 = vunpack.c.h.b16 %v5932
        %v7970 = vunpack.c.l.b16 %v5933
        %v7971 = vunpack.c.h.b16 %v5933
        %v7972 = vunpack.c.l.b16 %v5934
        %v7973 = vunpack.c.h.b16 %v5934
        %v7974 = vunpack.c.l.b16 %v5935
        %v7975 = vunpack.c.h.b16 %v5935
        %v7976 = vunpack.c.l.b16 %v5936
        %v7977 = vunpack.c.h.b16 %v5936
        %v7978 = vunpack.c.l.b16 %v5937
        %v7979 = vunpack.c.h.b16 %v5937
        %v7980 = vunpack.c.l.b16 %v5938
        %v7981 = vunpack.c.h.b16 %v5938
        %v7982 = vunpack.c.l.b16 %v5939
        %v7983 = vunpack.c.h.b16 %v5939
        %v7984 = vunpack.c.l.b16 %v5940
        %v7985 = vunpack.c.h.b16 %v5940
        %v7986 = vunpack.c.l.b16 %v5941
        %v7987 = vunpack.c.h.b16 %v5941
        %v7988 = vunpack.c.l.b16 %v5942
        %v7989 = vunpack.c.h.b16 %v5942
        %v7990 = vunpack.c.l.b16 %v5943
        %v7991 = vunpack.c.h.b16 %v5943
        %v7992 = vunpack.c.l.b16 %v5944
        %v7993 = vunpack.c.h.b16 %v5944
        %v7994 = vunpack.c.l.b16 %v5945
        %v7995 = vunpack.c.h.b16 %v5945
        %v7996 = vunpack.c.l.b16 %v5946
        %v7997 = vunpack.c.h.b16 %v5946
        %v7998 = vunpack.c.l.b16 %v5947
        %v7999 = vunpack.c.h.b16 %v5947
        %v8000 = vunpack.c.l.b16 %v5948
        %v8001 = vunpack.c.h.b16 %v5948
        %v8002 = vunpack.c.l.b16 %v5949
        %v8003 = vunpack.c.h.b16 %v5949
        %v8004 = vunpack.c.l.b16 %v5950
        %v8005 = vunpack.c.h.b16 %v5950
        %v8006 = vunpack.c.l.b16 %v5951
        %v8007 = vunpack.c.h.b16 %v5951
        %v8008 = vunpack.c.l.b16 %v5952
        %v8009 = vunpack.c.h.b16 %v5952
        %v8010 = vunpack.c.l.b16 %v5953
        %v8011 = vunpack.c.h.b16 %v5953
        %v8012 = vunpack.c.l.b16 %v5954
        %v8013 = vunpack.c.h.b16 %v5954
        %v8014 = vunpack.c.l.b16 %v5955
        %v8015 = vunpack.c.h.b16 %v5955
        %v8016 = vunpack.c.l.b16 %v5956
        %v8017 = vunpack.c.h.b16 %v5956
        %v8018 = vunpack.c.l.b16 %v5957
        %v8019 = vunpack.c.h.b16 %v5957
        %v8020 = vunpack.c.l.b16 %v5958
        %v8021 = vunpack.c.h.b16 %v5958
        %v8022 = vunpack.c.l.b16 %v5959
        %v8023 = vunpack.c.h.b16 %v5959
        %v8024 = vunpack.c.l.b16 %v5960
        %v8025 = vunpack.c.h.b16 %v5960
        %v8026 = vunpack.c.l.b16 %v5961
        %v8027 = vunpack.c.h.b16 %v5961
        %v8028 = vunpack.c.l.b16 %v5962
        %v8029 = vunpack.c.h.b16 %v5962
        %v8030 = vunpack.c.l.b16 %v5963
        %v8031 = vunpack.c.h.b16 %v5963
        %v8032 = vunpack.c.l.b16 %v5964
        %v8033 = vunpack.c.h.b16 %v5964
        %v8034 = vunpack.c.l.b16 %v5965
        %v8035 = vunpack.c.h.b16 %v5965
        %v8036 = vunpack.c.l.b16 %v5966
        %v8037 = vunpack.c.h.b16 %v5966
        %v8038 = vunpack.c.l.b16 %v5967
        %v8039 = vunpack.c.h.b16 %v5967
        %v8040 = vunpack.c.l.b16 %v5968
        %v8041 = vunpack.c.h.b16 %v5968
        %v8042 = vunpack.c.l.b16 %v5969
        %v8043 = vunpack.c.h.b16 %v5969
        %v8044 = vunpack.c.l.b16 %v5970
        %v8045 = vunpack.c.h.b16 %v5970
        %v8046 = vunpack.c.l.b16 %v5971
        %v8047 = vunpack.c.h.b16 %v5971
        %v8048 = vunpack.c.l.b16 %v5972
        %v8049 = vunpack.c.h.b16 %v5972
        %v8050 = vunpack.c.l.b16 %v5973
        %v8051 = vunpack.c.h.b16 %v5973
        %v8052 = vunpack.c.l.b16 %v5974
        %v8053 = vunpack.c.h.b16 %v5974
        %v8054 = vunpack.c.l.b16 %v5975
        %v8055 = vunpack.c.h.b16 %v5975
        %v8056 = vunpack.c.l.b16 %v5976
        %v8057 = vunpack.c.h.b16 %v5976
        %v8058 = vunpack.c.l.b16 %v5977
        %v8059 = vunpack.c.h.b16 %v5977
        %v8060 = vunpack.c.l.b16 %v5978
        %v8061 = vunpack.c.h.b16 %v5978
        %v8062 = vunpack.c.l.b16 %v5979
        %v8063 = vunpack.c.h.b16 %v5979
        %v8064 = vunpack.c.l.b16 %v5980
        %v8065 = vunpack.c.h.b16 %v5980
        %v8066 = vunpack.c.l.b16 %v5981
        %v8067 = vunpack.c.h.b16 %v5981
        %v8068 = vunpack.c.l.b16 %v5982
        %v8069 = vunpack.c.h.b16 %v5982
        %v8070 = vunpack.c.l.b16 %v5983
        %v8071 = vunpack.c.h.b16 %v5983
        %v8072 = vunpack.c.l.b16 %v5984
        %v8073 = vunpack.c.h.b16 %v5984
        %v8074 = vunpack.c.l.b16 %v5985
        %v8075 = vunpack.c.h.b16 %v5985
        %v8076 = vunpack.c.l.b16 %v5986
        %v8077 = vunpack.c.h.b16 %v5986
        %v8078 = vunpack.c.l.b16 %v5987
        %v8079 = vunpack.c.h.b16 %v5987
        %v8080 = vunpack.c.l.b16 %v5988
        %v8081 = vunpack.c.h.b16 %v5988
        %v8082 = vunpack.c.l.b16 %v5989
        %v8083 = vunpack.c.h.b16 %v5989
        %v8084 = vunpack.c.l.b16 %v5990
        %v8085 = vunpack.c.h.b16 %v5990
        %v8086 = vunpack.c.l.b16 %v5991
        %v8087 = vunpack.c.h.b16 %v5991
        %v8088 = vunpack.c.l.b16 %v5992
        %v8089 = vunpack.c.h.b16 %v5992
        %v8090 = vunpack.c.l.b16 %v5993
        %v8091 = vunpack.c.h.b16 %v5993
        %v8092 = vunpack.c.l.b16 %v5994
        %v8093 = vunpack.c.h.b16 %v5994
        %v8094 = vunpack.c.l.b16 %v5995
        %v8095 = vunpack.c.h.b16 %v5995
        %v8096 = vunpack.c.l.b16 %v5996
        %v8097 = vunpack.c.h.b16 %v5996
        %v8098 = vunpack.c.l.b16 %v5997
        %v8099 = vunpack.c.h.b16 %v5997
        %v8100 = vunpack.c.l.b16 %v5998
        %v8101 = vunpack.c.h.b16 %v5998
        %v8102 = vunpack.c.l.b16 %v5999
        %v8103 = vunpack.c.h.b16 %v5999
        %v8104 = vunpack.c.l.b16 %v6000
        %v8105 = vunpack.c.h.b16 %v6000
        %v8106 = vunpack.c.l.b16 %v6001
        %v8107 = vunpack.c.h.b16 %v6001
        %v8108 = vunpack.c.l.b16 %v6002
        %v8109 = vunpack.c.h.b16 %v6002
        %v8110 = vunpack.c.l.b16 %v6003
        %v8111 = vunpack.c.h.b16 %v6003
        %v8112 = vunpack.c.l.b16 %v6004
        %v8113 = vunpack.c.h.b16 %v6004
        %v8114 = vunpack.c.l.b16 %v6005
        %v8115 = vunpack.c.h.b16 %v6005
        %v8116 = vunpack.c.l.b16 %v6006
        %v8117 = vunpack.c.h.b16 %v6006
        %v8118 = vunpack.c.l.b16 %v6007
        %v8119 = vunpack.c.h.b16 %v6007
        %v8120 = vunpack.c.l.b16 %v6008
        %v8121 = vunpack.c.h.b16 %v6008
        %v8122 = vunpack.c.l.b16 %v6009
        %v8123 = vunpack.c.h.b16 %v6009
        %v8124 = vunpack.c.l.b16 %v6010
        %v8125 = vunpack.c.h.b16 %v6010
        %v8126 = vunpack.c.l.b16 %v6011
        %v8127 = vunpack.c.h.b16 %v6011
        %v8128 = vunpack.c.l.b16 %v6012
        %v8129 = vunpack.c.h.b16 %v6012
        %v8130 = vunpack.c.l.b16 %v6013
        %v8131 = vunpack.c.h.b16 %v6013
        %v8132 = vunpack.c.l.b16 %v6014
        %v8133 = vunpack.c.h.b16 %v6014
        %v8134 = vunpack.c.l.b16 %v6015
        %v8135 = vunpack.c.h.b16 %v6015
        %v8136 = vunpack.c.l.b16 %v6016
        %v8137 = vunpack.c.h.b16 %v6016
        %v8138 = vunpack.c.l.b16 %v6017
        %v8139 = vunpack.c.h.b16 %v6017
        %v8140 = vunpack.c.l.b16 %v6018
        %v8141 = vunpack.c.h.b16 %v6018
        %v8142 = vunpack.c.l.b16 %v6019
        %v8143 = vunpack.c.h.b16 %v6019
        %v8144 = vunpack.c.l.b16 %v6020
        %v8145 = vunpack.c.h.b16 %v6020
        %v8146 = vunpack.c.l.b16 %v6021
        %v8147 = vunpack.c.h.b16 %v6021
        %v8148 = vunpack.c.l.b16 %v6022
        %v8149 = vunpack.c.h.b16 %v6022
        %v8150 = vunpack.c.l.b16 %v6023
        %v8151 = vunpack.c.h.b16 %v6023
        %v8152 = vunpack.c.l.b16 %v6024
        %v8153 = vunpack.c.h.b16 %v6024
        %v8154 = vunpack.c.l.b16 %v6025
        %v8155 = vunpack.c.h.b16 %v6025
        %v8156 = vunpack.c.l.b16 %v6026
        %v8157 = vunpack.c.h.b16 %v6026
        %v8158 = vunpack.c.l.b16 %v6027
        %v8159 = vunpack.c.h.b16 %v6027
        %v8160 = vunpack.c.l.b16 %v6028
        %v8161 = vunpack.c.h.b16 %v6028
        %v8162 = vunpack.c.l.b16 %v6029
        %v8163 = vunpack.c.h.b16 %v6029
        %v8164 = vunpack.c.l.b16 %v6030
        %v8165 = vunpack.c.h.b16 %v6030
        %v8166 = vunpack.c.l.b16 %v6031
        %v8167 = vunpack.c.h.b16 %v6031
        %v8168 = vunpack.c.l.b16 %v6032
        %v8169 = vunpack.c.h.b16 %v6032
        %v8170 = vunpack.c.l.b16 %v6033
        %v8171 = vunpack.c.h.b16 %v6033
        %v8172 = vunpack.c.l.b16 %v6034
        %v8173 = vunpack.c.h.b16 %v6034
        %v8174 = vunpack.c.l.b16 %v6035
        %v8175 = vunpack.c.h.b16 %v6035
        %v8176 = vunpack.c.l.b16 %v6036
        %v8177 = vunpack.c.h.b16 %v6036
        %v8178 = vunpack.c.l.b16 %v6037
        %v8179 = vunpack.c.h.b16 %v6037
        %v8180 = vunpack.c.l.b16 %v6038
        %v8181 = vunpack.c.h.b16 %v6038
        %v8182 = vunpack.c.l.b16 %v6039
        %v8183 = vunpack.c.h.b16 %v6039
        %v8184 = vunpack.c.l.b16 %v6040
        %v8185 = vunpack.c.h.b16 %v6040
        %v8186 = vunpack.c.l.b16 %v6041
        %v8187 = vunpack.c.h.b16 %v6041
        %v8188 = vunpack.c.l.b16 %v6042
        %v8189 = vunpack.c.h.b16 %v6042
        %v8190 = vunpack.c.l.b16 %v6043
        %v8191 = vunpack.c.h.b16 %v6043
        %v8192 = vunpack.c.l.b16 %v6044
        %v8193 = vunpack.c.h.b16 %v6044
        %v8194 = vunpack.c.l.b16 %v6045
        %v8195 = vunpack.c.h.b16 %v6045
        %v8196 = vunpack.c.l.b16 %v6046
        %v8197 = vunpack.c.h.b16 %v6046
        %v8198 = vunpack.c.l.b16 %v6047
        %v8199 = vunpack.c.h.b16 %v6047
        %v8200 = vunpack.c.l.b16 %v6048
        %v8201 = vunpack.c.h.b16 %v6048
        %v8202 = vunpack.c.l.b16 %v6049
        %v8203 = vunpack.c.h.b16 %v6049
        %v8204 = vunpack.c.l.b16 %v6050
        %v8205 = vunpack.c.h.b16 %v6050
        %v8206 = vunpack.c.l.b16 %v6051
        %v8207 = vunpack.c.h.b16 %v6051
        %v8208 = vunpack.c.l.b16 %v6052
        %v8209 = vunpack.c.h.b16 %v6052
        %v8210 = vunpack.c.l.b16 %v6053
        %v8211 = vunpack.c.h.b16 %v6053
        %v8212 = vunpack.c.l.b16 %v6054
        %v8213 = vunpack.c.h.b16 %v6054
        %v8214 = vunpack.c.l.b16 %v6055
        %v8215 = vunpack.c.h.b16 %v6055
        %v8216 = vunpack.c.l.b16 %v6056
        %v8217 = vunpack.c.h.b16 %v6056
        %v8218 = vunpack.c.l.b16 %v6057
        %v8219 = vunpack.c.h.b16 %v6057
        %v8220 = vunpack.c.l.b16 %v6058
        %v8221 = vunpack.c.h.b16 %v6058
        %v8222 = vunpack.c.l.b16 %v6059
        %v8223 = vunpack.c.h.b16 %v6059
        %v8224 = vunpack.c.l.b16 %v6060
        %v8225 = vunpack.c.h.b16 %v6060
        %v8226 = vunpack.c.l.b16 %v6061
        %v8227 = vunpack.c.h.b16 %v6061
        %v8228 = vunpack.c.l.b16 %v6062
        %v8229 = vunpack.c.h.b16 %v6062
        %v8230 = vunpack.c.l.b16 %v6063
        %v8231 = vunpack.c.h.b16 %v6063
        %v8232 = vunpack.c.l.b16 %v6064
        %v8233 = vunpack.c.h.b16 %v6064
        %v8234 = vunpack.c.l.b16 %v6065
        %v8235 = vunpack.c.h.b16 %v6065
        %v8236 = vunpack.c.l.b16 %v6066
        %v8237 = vunpack.c.h.b16 %v6066
        %v8238 = vunpack.c.l.b16 %v6067
        %v8239 = vunpack.c.h.b16 %v6067
        %v8240 = vunpack.c.l.b16 %v6068
        %v8241 = vunpack.c.h.b16 %v6068
        %v8242 = vunpack.c.l.b16 %v6069
        %v8243 = vunpack.c.h.b16 %v6069
        %v8244 = vunpack.c.l.b16 %v6070
        %v8245 = vunpack.c.h.b16 %v6070
        %v8246 = vunpack.c.l.b16 %v6071
        %v8247 = vunpack.c.h.b16 %v6071
        %v8248 = vunpack.c.l.b16 %v6072
        %v8249 = vunpack.c.h.b16 %v6072
        %v8250 = vunpack.c.l.b16 %v6073
        %v8251 = vunpack.c.h.b16 %v6073
        %v8252 = vunpack.c.l.b16 %v6074
        %v8253 = vunpack.c.h.b16 %v6074
        %v8254 = vunpack.c.l.b16 %v6075
        %v8255 = vunpack.c.h.b16 %v6075
        %v8256 = vunpack.c.l.b16 %v6076
        %v8257 = vunpack.c.h.b16 %v6076
        %v8258 = vunpack.c.l.b16 %v6077
        %v8259 = vunpack.c.h.b16 %v6077
        %v8260 = vunpack.c.l.b16 %v6078
        %v8261 = vunpack.c.h.b16 %v6078
        %v8262 = vunpack.c.l.b16 %v6079
        %v8263 = vunpack.c.h.b16 %v6079
        %v8264 = vunpack.c.l.b16 %v6080
        %v8265 = vunpack.c.h.b16 %v6080
        %v8266 = vunpack.c.l.b16 %v6081
        %v8267 = vunpack.c.h.b16 %v6081
        %v8268 = vunpack.c.l.b16 %v6082
        %v8269 = vunpack.c.h.b16 %v6082
        %v8270 = vunpack.c.l.b16 %v6083
        %v8271 = vunpack.c.h.b16 %v6083
        %v8272 = vunpack.c.l.b16 %v6084
        %v8273 = vunpack.c.h.b16 %v6084
        %v8274 = vunpack.c.l.b16 %v6085
        %v8275 = vunpack.c.h.b16 %v6085
        %v8276 = vunpack.c.l.b16 %v6086
        %v8277 = vunpack.c.h.b16 %v6086
        %v8278 = vunpack.c.l.b16 %v6087
        %v8279 = vunpack.c.h.b16 %v6087
        %v8280 = vunpack.c.l.b16 %v6088
        %v8281 = vunpack.c.h.b16 %v6088
        %v8282 = vunpack.c.l.b16 %v6089
        %v8283 = vunpack.c.h.b16 %v6089
        %v8284 = vunpack.c.l.b16 %v6090
        %v8285 = vunpack.c.h.b16 %v6090
        %v8286 = vunpack.c.l.b16 %v6091
        %v8287 = vunpack.c.h.b16 %v6091
        %v8288 = vunpack.c.l.b16 %v6092
        %v8289 = vunpack.c.h.b16 %v6092
        %v8290 = vunpack.c.l.b16 %v6093
        %v8291 = vunpack.c.h.b16 %v6093
        %v8292 = vunpack.c.l.b16 %v6094
        %v8293 = vunpack.c.h.b16 %v6094
        %v8294 = vunpack.c.l.b16 %v6095
        %v8295 = vunpack.c.h.b16 %v6095
        %v8296 = vunpack.c.l.b16 %v6096
        %v8297 = vunpack.c.h.b16 %v6096
        %v8298 = vunpack.c.l.b16 %v6097
        %v8299 = vunpack.c.h.b16 %v6097
        %v8300 = vunpack.c.l.b16 %v6098
        %v8301 = vunpack.c.h.b16 %v6098
        %v8302 = vunpack.c.l.b16 %v6099
        %v8303 = vunpack.c.h.b16 %v6099
        %v8304 = vunpack.c.l.b16 %v6100
        %v8305 = vunpack.c.h.b16 %v6100
        %v8306 = vunpack.c.l.b16 %v6101
        %v8307 = vunpack.c.h.b16 %v6101
        %v8308 = vunpack.c.l.b16 %v6102
        %v8309 = vunpack.c.h.b16 %v6102
        %v8310 = vunpack.c.l.b16 %v6103
        %v8311 = vunpack.c.h.b16 %v6103
        %v8312 = vunpack.c.l.b16 %v6104
        %v8313 = vunpack.c.h.b16 %v6104
        %v8314 = vunpack.c.l.b16 %v6105
        %v8315 = vunpack.c.h.b16 %v6105
        %v8316 = vunpack.c.l.b16 %v6106
        %v8317 = vunpack.c.h.b16 %v6106
        %v8318 = vunpack.c.l.b16 %v6107
        %v8319 = vunpack.c.h.b16 %v6107
        %v8320 = vunpack.c.l.b16 %v6108
        %v8321 = vunpack.c.h.b16 %v6108
        %v8322 = vunpack.c.l.b16 %v6109
        %v8323 = vunpack.c.h.b16 %v6109
        %v8324 = vunpack.c.l.b16 %v6110
        %v8325 = vunpack.c.h.b16 %v6110
        %v8326 = vunpack.c.l.b16 %v6111
        %v8327 = vunpack.c.h.b16 %v6111
        %v8328 = vunpack.c.l.b16 %v6112
        %v8329 = vunpack.c.h.b16 %v6112
        %v8330 = vunpack.c.l.b16 %v6113
        %v8331 = vunpack.c.h.b16 %v6113
        %v8332 = vunpack.c.l.b16 %v6114
        %v8333 = vunpack.c.h.b16 %v6114
        %v8334 = vunpack.c.l.b16 %v6115
        %v8335 = vunpack.c.h.b16 %v6115
        %v8336 = vunpack.c.l.b16 %v6116
        %v8337 = vunpack.c.h.b16 %v6116
        %v8338 = vunpack.c.l.b16 %v6117
        %v8339 = vunpack.c.h.b16 %v6117
        %v8340 = vunpack.c.l.b16 %v6118
        %v8341 = vunpack.c.h.b16 %v6118
        %v8342 = vunpack.c.l.b16 %v6119
        %v8343 = vunpack.c.h.b16 %v6119
        %v8344 = vunpack.c.l.b16 %v6120
        %v8345 = vunpack.c.h.b16 %v6120
        %v8346 = vunpack.c.l.b16 %v6121
        %v8347 = vunpack.c.h.b16 %v6121
        %v8348 = vunpack.c.l.b16 %v6122
        %v8349 = vunpack.c.h.b16 %v6122
        %v8350 = vunpack.c.l.b16 %v6123
        %v8351 = vunpack.c.h.b16 %v6123
        %v8352 = vunpack.c.l.b16 %v6124
        %v8353 = vunpack.c.h.b16 %v6124
        %v8354 = vunpack.c.l.b16 %v6125
        %v8355 = vunpack.c.h.b16 %v6125
        %v8356 = vunpack.c.l.b16 %v6126
        %v8357 = vunpack.c.h.b16 %v6126
        %v8358 = vunpack.c.l.b16 %v6127
        %v8359 = vunpack.c.h.b16 %v6127
        %v8360 = vunpack.c.l.b16 %v6128
        %v8361 = vunpack.c.h.b16 %v6128
        %v8362 = vunpack.c.l.b16 %v6129
        %v8363 = vunpack.c.h.b16 %v6129
        %v8364 = vunpack.c.l.b16 %v6130
        %v8365 = vunpack.c.h.b16 %v6130
        %v8366 = vunpack.c.l.b16 %v6131
        %v8367 = vunpack.c.h.b16 %v6131
        %v8368 = vunpack.c.l.b16 %v6132
        %v8369 = vunpack.c.h.b16 %v6132
        %v8370 = vunpack.c.l.b16 %v6133
        %v8371 = vunpack.c.h.b16 %v6133
        %v8372 = vunpack.c.l.b16 %v6134
        %v8373 = vunpack.c.h.b16 %v6134
        %v8374 = vunpack.c.l.b16 %v6135
        %v8375 = vunpack.c.h.b16 %v6135
        %v8376 = vunpack.c.l.b16 %v6136
        %v8377 = vunpack.c.h.b16 %v6136
        %v8378 = vunpack.c.l.b16 %v6137
        %v8379 = vunpack.c.h.b16 %v6137
        %v8380 = vunpack.c.l.b16 %v6138
        %v8381 = vunpack.c.h.b16 %v6138
        %v8382 = vunpack.c.l.b16 %v6139
        %v8383 = vunpack.c.h.b16 %v6139
        %v8384 = vunpack.c.l.b16 %v6140
        %v8385 = vunpack.c.h.b16 %v6140
        %v8386 = vunpack.c.l.b16 %v6141
        %v8387 = vunpack.c.h.b16 %v6141
        %v8388 = vunpack.c.l.b16 %v6142
        %v8389 = vunpack.c.h.b16 %v6142
        %v8390 = vunpack.c.l.b16 %v6143
        %v8391 = vunpack.c.h.b16 %v6143
        %v8392 = vunpack.c.l.b16 %v6144
        %v8393 = vunpack.c.h.b16 %v6144
        %v8394 = vunpack.c.l.b16 %v6145
        %v8395 = vunpack.c.h.b16 %v6145
        %v8396 = vunpack.c.l.b16 %v6146
        %v8397 = vunpack.c.h.b16 %v6146
        %v8398 = vunpack.c.l.b16 %v6147
        %v8399 = vunpack.c.h.b16 %v6147
        %v8400 = vunpack.c.l.b16 %v6148
        %v8401 = vunpack.c.h.b16 %v6148
        %v8402 = vunpack.c.l.b16 %v6149
        %v8403 = vunpack.c.h.b16 %v6149
        %v8404 = vunpack.c.l.b16 %v6150
        %v8405 = vunpack.c.h.b16 %v6150
        %v8406 = vunpack.c.l.b16 %v6151
        %v8407 = vunpack.c.h.b16 %v6151
        %v8408 = vunpack.c.l.b16 %v6152
        %v8409 = vunpack.c.h.b16 %v6152
        %v8410 = vunpack.c.l.b16 %v6153
        %v8411 = vunpack.c.h.b16 %v6153
        %v8412 = vunpack.c.l.b16 %v6154
        %v8413 = vunpack.c.h.b16 %v6154
        %v8414 = vunpack.c.l.b16 %v6155
        %v8415 = vunpack.c.h.b16 %v6155
        %v8416 = vunpack.c.l.b16 %v6156
        %v8417 = vunpack.c.h.b16 %v6156
        %v8418 = vunpack.c.l.b16 %v6157
        %v8419 = vunpack.c.h.b16 %v6157
        %v8420 = vunpack.c.l.b16 %v6158
        %v8421 = vunpack.c.h.b16 %v6158
        %v8422 = vunpack.c.l.b16 %v6159
        %v8423 = vunpack.c.h.b16 %v6159
        %v8424 = vunpack.c.l.b16 %v6160
        %v8425 = vunpack.c.h.b16 %v6160
        %v8426 = vunpack.c.l.b16 %v6161
        %v8427 = vunpack.c.h.b16 %v6161
        %v8428 = vunpack.c.l.b16 %v6162
        %v8429 = vunpack.c.h.b16 %v6162
        %v8430 = vunpack.c.l.b16 %v6163
        %v8431 = vunpack.c.h.b16 %v6163
        %v8432 = vunpack.c.l.b16 %v6164
        %v8433 = vunpack.c.h.b16 %v6164
        %v8434 = vunpack.c.l.b16 %v6165
        %v8435 = vunpack.c.h.b16 %v6165
        %v8436 = vunpack.c.l.b16 %v6166
        %v8437 = vunpack.c.h.b16 %v6166
        %v8438 = vunpack.c.l.b16 %v6167
        %v8439 = vunpack.c.h.b16 %v6167
        %v8440 = vunpack.c.l.b16 %v6168
        %v8441 = vunpack.c.h.b16 %v6168
        %v8442 = vunpack.c.l.b16 %v6169
        %v8443 = vunpack.c.h.b16 %v6169
        %v8444 = vunpack.c.l.b16 %v6170
        %v8445 = vunpack.c.h.b16 %v6170
        %v8446 = vunpack.c.l.b16 %v6171
        %v8447 = vunpack.c.h.b16 %v6171
        %v8448 = vunpack.c.l.b16 %v6172
        %v8449 = vunpack.c.h.b16 %v6172
        %v8450 = vunpack.c.l.b16 %v6173
        %v8451 = vunpack.c.h.b16 %v6173
        %v8452 = vunpack.c.l.b16 %v6174
        %v8453 = vunpack.c.h.b16 %v6174
        %v8454 = vunpack.c.l.b16 %v6175
        %v8455 = vunpack.c.h.b16 %v6175
        %v8456 = vunpack.c.l.b16 %v6176
        %v8457 = vunpack.c.h.b16 %v6176
        %v8458 = vunpack.c.l.b16 %v6177
        %v8459 = vunpack.c.h.b16 %v6177
        %v8460 = vunpack.c.l.b16 %v6178
        %v8461 = vunpack.c.h.b16 %v6178
        %v8462 = vunpack.c.l.b16 %v6179
        %v8463 = vunpack.c.h.b16 %v6179
        %v8464 = vunpack.c.l.b16 %v6180
        %v8465 = vunpack.c.h.b16 %v6180
        %v8466 = vunpack.c.l.b16 %v6181
        %v8467 = vunpack.c.h.b16 %v6181
        %v8468 = vunpack.c.l.b16 %v6182
        %v8469 = vunpack.c.h.b16 %v6182
        %v8470 = vunpack.c.l.b16 %v6183
        %v8471 = vunpack.c.h.b16 %v6183
        %v8472 = vunpack.c.l.b16 %v6184
        %v8473 = vunpack.c.h.b16 %v6184
        %v8474 = vunpack.c.l.b16 %v6185
        %v8475 = vunpack.c.h.b16 %v6185
        %v8476 = vunpack.c.l.b16 %v6186
        %v8477 = vunpack.c.h.b16 %v6186
        %v8478 = vunpack.c.l.b16 %v6187
        %v8479 = vunpack.c.h.b16 %v6187
        %v8480 = vunpack.c.l.b16 %v6188
        %v8481 = vunpack.c.h.b16 %v6188
        %v8482 = vunpack.c.l.b16 %v6189
        %v8483 = vunpack.c.h.b16 %v6189
        %v8484 = vunpack.c.l.b16 %v6190
        %v8485 = vunpack.c.h.b16 %v6190
        %v8486 = vunpack.c.l.b16 %v6191
        %v8487 = vunpack.c.h.b16 %v6191
        %v8488 = vunpack.c.l.b16 %v6192
        %v8489 = vunpack.c.h.b16 %v6192
        %v8490 = vunpack.c.l.b16 %v6193
        %v8491 = vunpack.c.h.b16 %v6193
        %v8492 = vunpack.c.l.b16 %v6194
        %v8493 = vunpack.c.h.b16 %v6194
        %v8494 = vunpack.c.l.b16 %v6195
        %v8495 = vunpack.c.h.b16 %v6195
        %v8496 = vunpack.c.l.b16 %v6196
        %v8497 = vunpack.c.h.b16 %v6196
        %v8498 = vunpack.c.l.b16 %v6197
        %v8499 = vunpack.c.h.b16 %v6197
        %v8500 = vunpack.c.l.b16 %v6198
        %v8501 = vunpack.c.h.b16 %v6198
        %v8502 = vunpack.c.l.b16 %v6199
        %v8503 = vunpack.c.h.b16 %v6199
        %v8504 = vpack.c.b16 %v6972, %v6968
        %v8505 = vpack.c.b16 %v6973, %v6969
        %v8506 = vpack.c.b16 %v6974, %v6970
        %v8507 = vpack.c.b16 %v6975, %v6971
        %v8508 = vpack.c.b16 %v6980, %v6976
        %v8509 = vpack.c.b16 %v6981, %v6977
        %v8510 = vpack.c.b16 %v6982, %v6978
        %v8511 = vpack.c.b16 %v6983, %v6979
        %v8512 = vpack.c.b16 %v6988, %v6984
        %v8513 = vpack.c.b16 %v6989, %v6985
        %v8514 = vpack.c.b16 %v6990, %v6986
        %v8515 = vpack.c.b16 %v6991, %v6987
        %v8516 = vpack.c.b16 %v6996, %v6992
        %v8517 = vpack.c.b16 %v6997, %v6993
        %v8518 = vpack.c.b16 %v6998, %v6994
        %v8519 = vpack.c.b16 %v6999, %v6995
        %v8520 = vpack.c.b16 %v7004, %v7000
        %v8521 = vpack.c.b16 %v7005, %v7001
        %v8522 = vpack.c.b16 %v7006, %v7002
        %v8523 = vpack.c.b16 %v7007, %v7003
        %v8524 = vpack.c.b16 %v7012, %v7008
        %v8525 = vpack.c.b16 %v7013, %v7009
        %v8526 = vpack.c.b16 %v7014, %v7010
        %v8527 = vpack.c.b16 %v7015, %v7011
        %v8528 = vpack.c.b16 %v7020, %v7016
        %v8529 = vpack.c.b16 %v7021, %v7017
        %v8530 = vpack.c.b16 %v7022, %v7018
        %v8531 = vpack.c.b16 %v7023, %v7019
        %v8532 = vpack.c.b16 %v7028, %v7024
        %v8533 = vpack.c.b16 %v7029, %v7025
        %v8534 = vpack.c.b16 %v7030, %v7026
        %v8535 = vpack.c.b16 %v7031, %v7027
        %v8536 = vpack.c.b16 %v7036, %v7032
        %v8537 = vpack.c.b16 %v7037, %v7033
        %v8538 = vpack.c.b16 %v7038, %v7034
        %v8539 = vpack.c.b16 %v7039, %v7035
        %v8540 = vpack.c.b16 %v7044, %v7040
        %v8541 = vpack.c.b16 %v7045, %v7041
        %v8542 = vpack.c.b16 %v7046, %v7042
        %v8543 = vpack.c.b16 %v7047, %v7043
        %v8544 = vpack.c.b16 %v7052, %v7048
        %v8545 = vpack.c.b16 %v7053, %v7049
        %v8546 = vpack.c.b16 %v7054, %v7050
        %v8547 = vpack.c.b16 %v7055, %v7051
        %v8548 = vpack.c.b16 %v7060, %v7056
        %v8549 = vpack.c.b16 %v7061, %v7057
        %v8550 = vpack.c.b16 %v7062, %v7058
        %v8551 = vpack.c.b16 %v7063, %v7059
        %v8552 = vpack.c.b16 %v7068, %v7064
        %v8553 = vpack.c.b16 %v7069, %v7065
        %v8554 = vpack.c.b16 %v7070, %v7066
        %v8555 = vpack.c.b16 %v7071, %v7067
        %v8556 = vpack.c.b16 %v7076, %v7072
        %v8557 = vpack.c.b16 %v7077, %v7073
        %v8558 = vpack.c.b16 %v7078, %v7074
        %v8559 = vpack.c.b16 %v7079, %v7075
        %v8560 = vpack.c.b16 %v7084, %v7080
        %v8561 = vpack.c.b16 %v7085, %v7081
        %v8562 = vpack.c.b16 %v7086, %v7082
        %v8563 = vpack.c.b16 %v7087, %v7083
        %v8564 = vpack.c.b16 %v7092, %v7088
        %v8565 = vpack.c.b16 %v7093, %v7089
        %v8566 = vpack.c.b16 %v7094, %v7090
        %v8567 = vpack.c.b16 %v7095, %v7091
        %v8568 = vpack.c.b16 %v7100, %v7096
        %v8569 = vpack.c.b16 %v7101, %v7097
        %v8570 = vpack.c.b16 %v7102, %v7098
        %v8571 = vpack.c.b16 %v7103, %v7099
        %v8572 = vpack.c.b16 %v7108, %v7104
        %v8573 = vpack.c.b16 %v7109, %v7105
        %v8574 = vpack.c.b16 %v7110, %v7106
        %v8575 = vpack.c.b16 %v7111, %v7107
        %v8576 = vpack.c.b16 %v7116, %v7112
        %v8577 = vpack.c.b16 %v7117, %v7113
        %v8578 = vpack.c.b16 %v7118, %v7114
        %v8579 = vpack.c.b16 %v7119, %v7115
        %v8580 = vpack.c.b16 %v7124, %v7120
        %v8581 = vpack.c.b16 %v7125, %v7121
        %v8582 = vpack.c.b16 %v7126, %v7122
        %v8583 = vpack.c.b16 %v7127, %v7123
        %v8584 = vpack.c.b16 %v7132, %v7128
        %v8585 = vpack.c.b16 %v7133, %v7129
        %v8586 = vpack.c.b16 %v7134, %v7130
        %v8587 = vpack.c.b16 %v7135, %v7131
        %v8588 = vpack.c.b16 %v7140, %v7136
        %v8589 = vpack.c.b16 %v7141, %v7137
        %v8590 = vpack.c.b16 %v7142, %v7138
        %v8591 = vpack.c.b16 %v7143, %v7139
        %v8592 = vpack.c.b16 %v7148, %v7144
        %v8593 = vpack.c.b16 %v7149, %v7145
        %v8594 = vpack.c.b16 %v7150, %v7146
        %v8595 = vpack.c.b16 %v7151, %v7147
        %v8596 = vpack.c.b16 %v7156, %v7152
        %v8597 = vpack.c.b16 %v7157, %v7153
        %v8598 = vpack.c.b16 %v7158, %v7154
        %v8599 = vpack.c.b16 %v7159, %v7155
        %v8600 = vpack.c.b16 %v7164, %v7160
        %v8601 = vpack.c.b16 %v7165, %v7161
        %v8602 = vpack.c.b16 %v7166, %v7162
        %v8603 = vpack.c.b16 %v7167, %v7163
        %v8604 = vpack.c.b16 %v7172, %v7168
        %v8605 = vpack.c.b16 %v7173, %v7169
        %v8606 = vpack.c.b16 %v7174, %v7170
        %v8607 = vpack.c.b16 %v7175, %v7171
        %v8608 = vpack.c.b16 %v7180, %v7176
        %v8609 = vpack.c.b16 %v7181, %v7177
        %v8610 = vpack.c.b16 %v7182, %v7178
        %v8611 = vpack.c.b16 %v7183, %v7179
        %v8612 = vpack.c.b16 %v7188, %v7184
        %v8613 = vpack.c.b16 %v7189, %v7185
        %v8614 = vpack.c.b16 %v7190, %v7186
        %v8615 = vpack.c.b16 %v7191, %v7187
        %v8616 = vpack.c.b16 %v7196, %v7192
        %v8617 = vpack.c.b16 %v7197, %v7193
        %v8618 = vpack.c.b16 %v7198, %v7194
        %v8619 = vpack.c.b16 %v7199, %v7195
        %v8620 = vpack.c.b16 %v7204, %v7200
        %v8621 = vpack.c.b16 %v7205, %v7201
        %v8622 = vpack.c.b16 %v7206, %v7202
        %v8623 = vpack.c.b16 %v7207, %v7203
        %v8624 = vpack.c.b16 %v7212, %v7208
        %v8625 = vpack.c.b16 %v7213, %v7209
        %v8626 = vpack.c.b16 %v7214, %v7210
        %v8627 = vpack.c.b16 %v7215, %v7211
        %v8628 = vpack.c.b16 %v7220, %v7216
        %v8629 = vpack.c.b16 %v7221, %v7217
        %v8630 = vpack.c.b16 %v7222, %v7218
        %v8631 = vpack.c.b16 %v7223, %v7219
        %v8632 = vpack.c.b16 %v7228, %v7224
        %v8633 = vpack.c.b16 %v7229, %v7225
        %v8634 = vpack.c.b16 %v7230, %v7226
        %v8635 = vpack.c.b16 %v7231, %v7227
        %v8636 = vpack.c.b16 %v7236, %v7232
        %v8637 = vpack.c.b16 %v7237, %v7233
        %v8638 = vpack.c.b16 %v7238, %v7234
        %v8639 = vpack.c.b16 %v7239, %v7235
        %v8640 = vpack.c.b16 %v7244, %v7240
        %v8641 = vpack.c.b16 %v7245, %v7241
        %v8642 = vpack.c.b16 %v7246, %v7242
        %v8643 = vpack.c.b16 %v7247, %v7243
        %v8644 = vpack.c.b16 %v7252, %v7248
        %v8645 = vpack.c.b16 %v7253, %v7249
        %v8646 = vpack.c.b16 %v7254, %v7250
        %v8647 = vpack.c.b16 %v7255, %v7251
        %v8648 = vpack.c.b16 %v7260, %v7256
        %v8649 = vpack.c.b16 %v7261, %v7257
        %v8650 = vpack.c.b16 %v7262, %v7258
        %v8651 = vpack.c.b16 %v7263, %v7259
        %v8652 = vpack.c.b16 %v7268, %v7264
        %v8653 = vpack.c.b16 %v7269, %v7265
        %v8654 = vpack.c.b16 %v7270, %v7266
        %v8655 = vpack.c.b16 %v7271, %v7267
        %v8656 = vpack.c.b16 %v7276, %v7272
        %v8657 = vpack.c.b16 %v7277, %v7273
        %v8658 = vpack.c.b16 %v7278, %v7274
        %v8659 = vpack.c.b16 %v7279, %v7275
        %v8660 = vpack.c.b16 %v7284, %v7280
        %v8661 = vpack.c.b16 %v7285, %v7281
        %v8662 = vpack.c.b16 %v7286, %v7282
        %v8663 = vpack.c.b16 %v7287, %v7283
        %v8664 = vpack.c.b16 %v7292, %v7288
        %v8665 = vpack.c.b16 %v7293, %v7289
        %v8666 = vpack.c.b16 %v7294, %v7290
        %v8667 = vpack.c.b16 %v7295, %v7291
        %v8668 = vpack.c.b16 %v7300, %v7296
        %v8669 = vpack.c.b16 %v7301, %v7297
        %v8670 = vpack.c.b16 %v7302, %v7298
        %v8671 = vpack.c.b16 %v7303, %v7299
        %v8672 = vpack.c.b16 %v7308, %v7304
        %v8673 = vpack.c.b16 %v7309, %v7305
        %v8674 = vpack.c.b16 %v7310, %v7306
        %v8675 = vpack.c.b16 %v7311, %v7307
        %v8676 = vpack.c.b16 %v7316, %v7312
        %v8677 = vpack.c.b16 %v7317, %v7313
        %v8678 = vpack.c.b16 %v7318, %v7314
        %v8679 = vpack.c.b16 %v7319, %v7315
        %v8680 = vpack.c.b16 %v7324, %v7320
        %v8681 = vpack.c.b16 %v7325, %v7321
        %v8682 = vpack.c.b16 %v7326, %v7322
        %v8683 = vpack.c.b16 %v7327, %v7323
        %v8684 = vpack.c.b16 %v7332, %v7328
        %v8685 = vpack.c.b16 %v7333, %v7329
        %v8686 = vpack.c.b16 %v7334, %v7330
        %v8687 = vpack.c.b16 %v7335, %v7331
        %v8688 = vpack.c.b16 %v7340, %v7336
        %v8689 = vpack.c.b16 %v7341, %v7337
        %v8690 = vpack.c.b16 %v7342, %v7338
        %v8691 = vpack.c.b16 %v7343, %v7339
        %v8692 = vpack.c.b16 %v7348, %v7344
        %v8693 = vpack.c.b16 %v7349, %v7345
        %v8694 = vpack.c.b16 %v7350, %v7346
        %v8695 = vpack.c.b16 %v7351, %v7347
        %v8696 = vpack.c.b16 %v7356, %v7352
        %v8697 = vpack.c.b16 %v7357, %v7353
        %v8698 = vpack.c.b16 %v7358, %v7354
        %v8699 = vpack.c.b16 %v7359, %v7355
        %v8700 = vpack.c.b16 %v7364, %v7360
        %v8701 = vpack.c.b16 %v7365, %v7361
        %v8702 = vpack.c.b16 %v7366, %v7362
        %v8703 = vpack.c.b16 %v7367, %v7363
        %v8704 = vpack.c.b16 %v7372, %v7368
        %v8705 = vpack.c.b16 %v7373, %v7369
        %v8706 = vpack.c.b16 %v7374, %v7370
        %v8707 = vpack.c.b16 %v7375, %v7371
        %v8708 = vpack.c.b16 %v7380, %v7376
        %v8709 = vpack.c.b16 %v7381, %v7377
        %v8710 = vpack.c.b16 %v7382, %v7378
        %v8711 = vpack.c.b16 %v7383, %v7379
        %v8712 = vpack.c.b16 %v7388, %v7384
        %v8713 = vpack.c.b16 %v7389, %v7385
        %v8714 = vpack.c.b16 %v7390, %v7386
        %v8715 = vpack.c.b16 %v7391, %v7387
        %v8716 = vpack.c.b16 %v7396, %v7392
        %v8717 = vpack.c.b16 %v7397, %v7393
        %v8718 = vpack.c.b16 %v7398, %v7394
        %v8719 = vpack.c.b16 %v7399, %v7395
        %v8720 = vpack.c.b16 %v7404, %v7400
        %v8721 = vpack.c.b16 %v7405, %v7401
        %v8722 = vpack.c.b16 %v7406, %v7402
        %v8723 = vpack.c.b16 %v7407, %v7403
        %v8724 = vpack.c.b16 %v7412, %v7408
        %v8725 = vpack.c.b16 %v7413, %v7409
        %v8726 = vpack.c.b16 %v7414, %v7410
        %v8727 = vpack.c.b16 %v7415, %v7411
        %v8728 = vpack.c.b16 %v7420, %v7416
        %v8729 = vpack.c.b16 %v7421, %v7417
        %v8730 = vpack.c.b16 %v7422, %v7418
        %v8731 = vpack.c.b16 %v7423, %v7419
        %v8732 = vpack.c.b16 %v7428, %v7424
        %v8733 = vpack.c.b16 %v7429, %v7425
        %v8734 = vpack.c.b16 %v7430, %v7426
        %v8735 = vpack.c.b16 %v7431, %v7427
        %v8736 = vpack.c.b16 %v7436, %v7432
        %v8737 = vpack.c.b16 %v7437, %v7433
        %v8738 = vpack.c.b16 %v7438, %v7434
        %v8739 = vpack.c.b16 %v7439, %v7435
        %v8740 = vpack.c.b16 %v7444, %v7440
        %v8741 = vpack.c.b16 %v7445, %v7441
        %v8742 = vpack.c.b16 %v7446, %v7442
        %v8743 = vpack.c.b16 %v7447, %v7443
        %v8744 = vpack.c.b16 %v7452, %v7448
        %v8745 = vpack.c.b16 %v7453, %v7449
        %v8746 = vpack.c.b16 %v7454, %v7450
        %v8747 = vpack.c.b16 %v7455, %v7451
        %v8748 = vpack.c.b16 %v7460, %v7456
        %v8749 = vpack.c.b16 %v7461, %v7457
        %v8750 = vpack.c.b16 %v7462, %v7458
        %v8751 = vpack.c.b16 %v7463, %v7459
        %v8752 = vpack.c.b16 %v7468, %v7464
        %v8753 = vpack.c.b16 %v7469, %v7465
        %v8754 = vpack.c.b16 %v7470, %v7466
        %v8755 = vpack.c.b16 %v7471, %v7467
        %v8756 = vpack.c.b16 %v7476, %v7472
        %v8757 = vpack.c.b16 %v7477, %v7473
        %v8758 = vpack.c.b16 %v7478, %v7474
        %v8759 = vpack.c.b16 %v7479, %v7475
        %v8760 = vpack.c.b16 %v7484, %v7480
        %v8761 = vpack.c.b16 %v7485, %v7481
        %v8762 = vpack.c.b16 %v7486, %v7482
        %v8763 = vpack.c.b16 %v7487, %v7483
        %v8764 = vpack.c.b16 %v7492, %v7488
        %v8765 = vpack.c.b16 %v7493, %v7489
        %v8766 = vpack.c.b16 %v7494, %v7490
        %v8767 = vpack.c.b16 %v7495, %v7491
        %v8768 = vpack.c.b16 %v7500, %v7496
        %v8769 = vpack.c.b16 %v7501, %v7497
        %v8770 = vpack.c.b16 %v7502, %v7498
        %v8771 = vpack.c.b16 %v7503, %v7499
        %v8772 = vpack.c.b16 %v7508, %v7504
        %v8773 = vpack.c.b16 %v7509, %v7505
        %v8774 = vpack.c.b16 %v7510, %v7506
        %v8775 = vpack.c.b16 %v7511, %v7507
        %v8776 = vpack.c.b16 %v7516, %v7512
        %v8777 = vpack.c.b16 %v7517, %v7513
        %v8778 = vpack.c.b16 %v7518, %v7514
        %v8779 = vpack.c.b16 %v7519, %v7515
        %v8780 = vpack.c.b16 %v7524, %v7520
        %v8781 = vpack.c.b16 %v7525, %v7521
        %v8782 = vpack.c.b16 %v7526, %v7522
        %v8783 = vpack.c.b16 %v7527, %v7523
        %v8784 = vpack.c.b16 %v7532, %v7528
        %v8785 = vpack.c.b16 %v7533, %v7529
        %v8786 = vpack.c.b16 %v7534, %v7530
        %v8787 = vpack.c.b16 %v7535, %v7531
        %v8788 = vpack.c.b16 %v7540, %v7536
        %v8789 = vpack.c.b16 %v7541, %v7537
        %v8790 = vpack.c.b16 %v7542, %v7538
        %v8791 = vpack.c.b16 %v7543, %v7539
        %v8792 = vpack.c.b16 %v7548, %v7544
        %v8793 = vpack.c.b16 %v7549, %v7545
        %v8794 = vpack.c.b16 %v7550, %v7546
        %v8795 = vpack.c.b16 %v7551, %v7547
        %v8796 = vpack.c.b16 %v7556, %v7552
        %v8797 = vpack.c.b16 %v7557, %v7553
        %v8798 = vpack.c.b16 %v7558, %v7554
        %v8799 = vpack.c.b16 %v7559, %v7555
        %v8800 = vpack.c.b16 %v7564, %v7560
        %v8801 = vpack.c.b16 %v7565, %v7561
        %v8802 = vpack.c.b16 %v7566, %v7562
        %v8803 = vpack.c.b16 %v7567, %v7563
        %v8804 = vpack.c.b16 %v7572, %v7568
        %v8805 = vpack.c.b16 %v7573, %v7569
        %v8806 = vpack.c.b16 %v7574, %v7570
        %v8807 = vpack.c.b16 %v7575, %v7571
        %v8808 = vpack.c.b16 %v7580, %v7576
        %v8809 = vpack.c.b16 %v7581, %v7577
        %v8810 = vpack.c.b16 %v7582, %v7578
        %v8811 = vpack.c.b16 %v7583, %v7579
        %v8812 = vpack.c.b16 %v7588, %v7584
        %v8813 = vpack.c.b16 %v7589, %v7585
        %v8814 = vpack.c.b16 %v7590, %v7586
        %v8815 = vpack.c.b16 %v7591, %v7587
        %v8816 = vpack.c.b16 %v7596, %v7592
        %v8817 = vpack.c.b16 %v7597, %v7593
        %v8818 = vpack.c.b16 %v7598, %v7594
        %v8819 = vpack.c.b16 %v7599, %v7595
        %v8820 = vpack.c.b16 %v7604, %v7600
        %v8821 = vpack.c.b16 %v7605, %v7601
        %v8822 = vpack.c.b16 %v7606, %v7602
        %v8823 = vpack.c.b16 %v7607, %v7603
        %v8824 = vpack.c.b16 %v7612, %v7608
        %v8825 = vpack.c.b16 %v7613, %v7609
        %v8826 = vpack.c.b16 %v7614, %v7610
        %v8827 = vpack.c.b16 %v7615, %v7611
        %v8828 = vpack.c.b16 %v7620, %v7616
        %v8829 = vpack.c.b16 %v7621, %v7617
        %v8830 = vpack.c.b16 %v7622, %v7618
        %v8831 = vpack.c.b16 %v7623, %v7619
        %v8832 = vpack.c.b16 %v7628, %v7624
        %v8833 = vpack.c.b16 %v7629, %v7625
        %v8834 = vpack.c.b16 %v7630, %v7626
        %v8835 = vpack.c.b16 %v7631, %v7627
        %v8836 = vpack.c.b16 %v7636, %v7632
        %v8837 = vpack.c.b16 %v7637, %v7633
        %v8838 = vpack.c.b16 %v7638, %v7634
        %v8839 = vpack.c.b16 %v7639, %v7635
        %v8840 = vpack.c.b16 %v7644, %v7640
        %v8841 = vpack.c.b16 %v7645, %v7641
        %v8842 = vpack.c.b16 %v7646, %v7642
        %v8843 = vpack.c.b16 %v7647, %v7643
        %v8844 = vpack.c.b16 %v7652, %v7648
        %v8845 = vpack.c.b16 %v7653, %v7649
        %v8846 = vpack.c.b16 %v7654, %v7650
        %v8847 = vpack.c.b16 %v7655, %v7651
        %v8848 = vpack.c.b16 %v7660, %v7656
        %v8849 = vpack.c.b16 %v7661, %v7657
        %v8850 = vpack.c.b16 %v7662, %v7658
        %v8851 = vpack.c.b16 %v7663, %v7659
        %v8852 = vpack.c.b16 %v7668, %v7664
        %v8853 = vpack.c.b16 %v7669, %v7665
        %v8854 = vpack.c.b16 %v7670, %v7666
        %v8855 = vpack.c.b16 %v7671, %v7667
        %v8856 = vpack.c.b16 %v7676, %v7672
        %v8857 = vpack.c.b16 %v7677, %v7673
        %v8858 = vpack.c.b16 %v7678, %v7674
        %v8859 = vpack.c.b16 %v7679, %v7675
        %v8860 = vpack.c.b16 %v7684, %v7680
        %v8861 = vpack.c.b16 %v7685, %v7681
        %v8862 = vpack.c.b16 %v7686, %v7682
        %v8863 = vpack.c.b16 %v7687, %v7683
        %v8864 = vpack.c.b16 %v7692, %v7688
        %v8865 = vpack.c.b16 %v7693, %v7689
        %v8866 = vpack.c.b16 %v7694, %v7690
        %v8867 = vpack.c.b16 %v7695, %v7691
        %v8868 = vpack.c.b16 %v7700, %v7696
        %v8869 = vpack.c.b16 %v7701, %v7697
        %v8870 = vpack.c.b16 %v7702, %v7698
        %v8871 = vpack.c.b16 %v7703, %v7699
        %v8872 = vpack.c.b16 %v7708, %v7704
        %v8873 = vpack.c.b16 %v7709, %v7705
        %v8874 = vpack.c.b16 %v7710, %v7706
        %v8875 = vpack.c.b16 %v7711, %v7707
        %v8876 = vpack.c.b16 %v7716, %v7712
        %v8877 = vpack.c.b16 %v7717, %v7713
        %v8878 = vpack.c.b16 %v7718, %v7714
        %v8879 = vpack.c.b16 %v7719, %v7715
        %v8880 = vpack.c.b16 %v7724, %v7720
        %v8881 = vpack.c.b16 %v7725, %v7721
        %v8882 = vpack.c.b16 %v7726, %v7722
        %v8883 = vpack.c.b16 %v7727, %v7723
        %v8884 = vpack.c.b16 %v7732, %v7728
        %v8885 = vpack.c.b16 %v7733, %v7729
        %v8886 = vpack.c.b16 %v7734, %v7730
        %v8887 = vpack.c.b16 %v7735, %v7731
        %v8888 = vpack.c.b16 %v7740, %v7736
        %v8889 = vpack.c.b16 %v7741, %v7737
        %v8890 = vpack.c.b16 %v7742, %v7738
        %v8891 = vpack.c.b16 %v7743, %v7739
        %v8892 = vpack.c.b16 %v7748, %v7744
        %v8893 = vpack.c.b16 %v7749, %v7745
        %v8894 = vpack.c.b16 %v7750, %v7746
        %v8895 = vpack.c.b16 %v7751, %v7747
        %v8896 = vpack.c.b16 %v7756, %v7752
        %v8897 = vpack.c.b16 %v7757, %v7753
        %v8898 = vpack.c.b16 %v7758, %v7754
        %v8899 = vpack.c.b16 %v7759, %v7755
        %v8900 = vpack.c.b16 %v7764, %v7760
        %v8901 = vpack.c.b16 %v7765, %v7761
        %v8902 = vpack.c.b16 %v7766, %v7762
        %v8903 = vpack.c.b16 %v7767, %v7763
        %v8904 = vpack.c.b16 %v7772, %v7768
        %v8905 = vpack.c.b16 %v7773, %v7769
        %v8906 = vpack.c.b16 %v7774, %v7770
        %v8907 = vpack.c.b16 %v7775, %v7771
        %v8908 = vpack.c.b16 %v7780, %v7776
        %v8909 = vpack.c.b16 %v7781, %v7777
        %v8910 = vpack.c.b16 %v7782, %v7778
        %v8911 = vpack.c.b16 %v7783, %v7779
        %v8912 = vpack.c.b16 %v7788, %v7784
        %v8913 = vpack.c.b16 %v7789, %v7785
        %v8914 = vpack.c.b16 %v7790, %v7786
        %v8915 = vpack.c.b16 %v7791, %v7787
        %v8916 = vpack.c.b16 %v7796, %v7792
        %v8917 = vpack.c.b16 %v7797, %v7793
        %v8918 = vpack.c.b16 %v7798, %v7794
        %v8919 = vpack.c.b16 %v7799, %v7795
        %v8920 = vpack.c.b16 %v7804, %v7800
        %v8921 = vpack.c.b16 %v7805, %v7801
        %v8922 = vpack.c.b16 %v7806, %v7802
        %v8923 = vpack.c.b16 %v7807, %v7803
        %v8924 = vpack.c.b16 %v7812, %v7808
        %v8925 = vpack.c.b16 %v7813, %v7809
        %v8926 = vpack.c.b16 %v7814, %v7810
        %v8927 = vpack.c.b16 %v7815, %v7811
        %v8928 = vpack.c.b16 %v7820, %v7816
        %v8929 = vpack.c.b16 %v7821, %v7817
        %v8930 = vpack.c.b16 %v7822, %v7818
        %v8931 = vpack.c.b16 %v7823, %v7819
        %v8932 = vpack.c.b16 %v7828, %v7824
        %v8933 = vpack.c.b16 %v7829, %v7825
        %v8934 = vpack.c.b16 %v7830, %v7826
        %v8935 = vpack.c.b16 %v7831, %v7827
        %v8936 = vpack.c.b16 %v7836, %v7832
        %v8937 = vpack.c.b16 %v7837, %v7833
        %v8938 = vpack.c.b16 %v7838, %v7834
        %v8939 = vpack.c.b16 %v7839, %v7835
        %v8940 = vpack.c.b16 %v7844, %v7840
        %v8941 = vpack.c.b16 %v7845, %v7841
        %v8942 = vpack.c.b16 %v7846, %v7842
        %v8943 = vpack.c.b16 %v7847, %v7843
        %v8944 = vpack.c.b16 %v7852, %v7848
        %v8945 = vpack.c.b16 %v7853, %v7849
        %v8946 = vpack.c.b16 %v7854, %v7850
        %v8947 = vpack.c.b16 %v7855, %v7851
        %v8948 = vpack.c.b16 %v7860, %v7856
        %v8949 = vpack.c.b16 %v7861, %v7857
        %v8950 = vpack.c.b16 %v7862, %v7858
        %v8951 = vpack.c.b16 %v7863, %v7859
        %v8952 = vpack.c.b16 %v7868, %v7864
        %v8953 = vpack.c.b16 %v7869, %v7865
        %v8954 = vpack.c.b16 %v7870, %v7866
        %v8955 = vpack.c.b16 %v7871, %v7867
        %v8956 = vpack.c.b16 %v7876, %v7872
        %v8957 = vpack.c.b16 %v7877, %v7873
        %v8958 = vpack.c.b16 %v7878, %v7874
        %v8959 = vpack.c.b16 %v7879, %v7875
        %v8960 = vpack.c.b16 %v7884, %v7880
        %v8961 = vpack.c.b16 %v7885, %v7881
        %v8962 = vpack.c.b16 %v7886, %v7882
        %v8963 = vpack.c.b16 %v7887, %v7883
        %v8964 = vpack.c.b16 %v7892, %v7888
        %v8965 = vpack.c.b16 %v7893, %v7889
        %v8966 = vpack.c.b16 %v7894, %v7890
        %v8967 = vpack.c.b16 %v7895, %v7891
        %v8968 = vpack.c.b16 %v7900, %v7896
        %v8969 = vpack.c.b16 %v7901, %v7897
        %v8970 = vpack.c.b16 %v7902, %v7898
        %v8971 = vpack.c.b16 %v7903, %v7899
        %v8972 = vpack.c.b16 %v7908, %v7904
        %v8973 = vpack.c.b16 %v7909, %v7905
        %v8974 = vpack.c.b16 %v7910, %v7906
        %v8975 = vpack.c.b16 %v7911, %v7907
        %v8976 = vpack.c.b16 %v7916, %v7912
        %v8977 = vpack.c.b16 %v7917, %v7913
        %v8978 = vpack.c.b16 %v7918, %v7914
        %v8979 = vpack.c.b16 %v7919, %v7915
        %v8980 = vpack.c.b16 %v7924, %v7920
        %v8981 = vpack.c.b16 %v7925, %v7921
        %v8982 = vpack.c.b16 %v7926, %v7922
        %v8983 = vpack.c.b16 %v7927, %v7923
        %v8984 = vpack.c.b16 %v7932, %v7928
        %v8985 = vpack.c.b16 %v7933, %v7929
        %v8986 = vpack.c.b16 %v7934, %v7930
        %v8987 = vpack.c.b16 %v7935, %v7931
        %v8988 = vpack.c.b16 %v7940, %v7936
        %v8989 = vpack.c.b16 %v7941, %v7937
        %v8990 = vpack.c.b16 %v7942, %v7938
        %v8991 = vpack.c.b16 %v7943, %v7939
        %v8992 = vpack.c.b16 %v7948, %v7944
        %v8993 = vpack.c.b16 %v7949, %v7945
        %v8994 = vpack.c.b16 %v7950, %v7946
        %v8995 = vpack.c.b16 %v7951, %v7947
        %v8996 = vpack.c.b16 %v7956, %v7952
        %v8997 = vpack.c.b16 %v7957, %v7953
        %v8998 = vpack.c.b16 %v7958, %v7954
        %v8999 = vpack.c.b16 %v7959, %v7955
        %v9000 = vpack.c.b16 %v7964, %v7960
        %v9001 = vpack.c.b16 %v7965, %v7961
        %v9002 = vpack.c.b16 %v7966, %v7962
        %v9003 = vpack.c.b16 %v7967, %v7963
        %v9004 = vpack.c.b16 %v7972, %v7968
        %v9005 = vpack.c.b16 %v7973, %v7969
        %v9006 = vpack.c.b16 %v7974, %v7970
        %v9007 = vpack.c.b16 %v7975, %v7971
        %v9008 = vpack.c.b16 %v7980, %v7976
        %v9009 = vpack.c.b16 %v7981, %v7977
        %v9010 = vpack.c.b16 %v7982, %v7978
        %v9011 = vpack.c.b16 %v7983, %v7979
        %v9012 = vpack.c.b16 %v7988, %v7984
        %v9013 = vpack.c.b16 %v7989, %v7985
        %v9014 = vpack.c.b16 %v7990, %v7986
        %v9015 = vpack.c.b16 %v7991, %v7987
        %v9016 = vpack.c.b16 %v7996, %v7992
        %v9017 = vpack.c.b16 %v7997, %v7993
        %v9018 = vpack.c.b16 %v7998, %v7994
        %v9019 = vpack.c.b16 %v7999, %v7995
        %v9020 = vpack.c.b16 %v8004, %v8000
        %v9021 = vpack.c.b16 %v8005, %v8001
        %v9022 = vpack.c.b16 %v8006, %v8002
        %v9023 = vpack.c.b16 %v8007, %v8003
        %v9024 = vpack.c.b16 %v8012, %v8008
        %v9025 = vpack.c.b16 %v8013, %v8009
        %v9026 = vpack.c.b16 %v8014, %v8010
        %v9027 = vpack.c.b16 %v8015, %v8011
        %v9028 = vpack.c.b16 %v8020, %v8016
        %v9029 = vpack.c.b16 %v8021, %v8017
        %v9030 = vpack.c.b16 %v8022, %v8018
        %v9031 = vpack.c.b16 %v8023, %v8019
        %v9032 = vpack.c.b16 %v8028, %v8024
        %v9033 = vpack.c.b16 %v8029, %v8025
        %v9034 = vpack.c.b16 %v8030, %v8026
        %v9035 = vpack.c.b16 %v8031, %v8027
        %v9036 = vpack.c.b16 %v8036, %v8032
        %v9037 = vpack.c.b16 %v8037, %v8033
        %v9038 = vpack.c.b16 %v8038, %v8034
        %v9039 = vpack.c.b16 %v8039, %v8035
        %v9040 = vpack.c.b16 %v8044, %v8040
        %v9041 = vpack.c.b16 %v8045, %v8041
        %v9042 = vpack.c.b16 %v8046, %v8042
        %v9043 = vpack.c.b16 %v8047, %v8043
        %v9044 = vpack.c.b16 %v8052, %v8048
        %v9045 = vpack.c.b16 %v8053, %v8049
        %v9046 = vpack.c.b16 %v8054, %v8050
        %v9047 = vpack.c.b16 %v8055, %v8051
        %v9048 = vpack.c.b16 %v8060, %v8056
        %v9049 = vpack.c.b16 %v8061, %v8057
        %v9050 = vpack.c.b16 %v8062, %v8058
        %v9051 = vpack.c.b16 %v8063, %v8059
        %v9052 = vpack.c.b16 %v8068, %v8064
        %v9053 = vpack.c.b16 %v8069, %v8065
        %v9054 = vpack.c.b16 %v8070, %v8066
        %v9055 = vpack.c.b16 %v8071, %v8067
        %v9056 = vpack.c.b16 %v8076, %v8072
        %v9057 = vpack.c.b16 %v8077, %v8073
        %v9058 = vpack.c.b16 %v8078, %v8074
        %v9059 = vpack.c.b16 %v8079, %v8075
        %v9060 = vpack.c.b16 %v8084, %v8080
        %v9061 = vpack.c.b16 %v8085, %v8081
        %v9062 = vpack.c.b16 %v8086, %v8082
        %v9063 = vpack.c.b16 %v8087, %v8083
        %v9064 = vpack.c.b16 %v8092, %v8088
        %v9065 = vpack.c.b16 %v8093, %v8089
        %v9066 = vpack.c.b16 %v8094, %v8090
        %v9067 = vpack.c.b16 %v8095, %v8091
        %v9068 = vpack.c.b16 %v8100, %v8096
        %v9069 = vpack.c.b16 %v8101, %v8097
        %v9070 = vpack.c.b16 %v8102, %v8098
        %v9071 = vpack.c.b16 %v8103, %v8099
        %v9072 = vpack.c.b16 %v8108, %v8104
        %v9073 = vpack.c.b16 %v8109, %v8105
        %v9074 = vpack.c.b16 %v8110, %v8106
        %v9075 = vpack.c.b16 %v8111, %v8107
        %v9076 = vpack.c.b16 %v8116, %v8112
        %v9077 = vpack.c.b16 %v8117, %v8113
        %v9078 = vpack.c.b16 %v8118, %v8114
        %v9079 = vpack.c.b16 %v8119, %v8115
        %v9080 = vpack.c.b16 %v8124, %v8120
        %v9081 = vpack.c.b16 %v8125, %v8121
        %v9082 = vpack.c.b16 %v8126, %v8122
        %v9083 = vpack.c.b16 %v8127, %v8123
        %v9084 = vpack.c.b16 %v8132, %v8128
        %v9085 = vpack.c.b16 %v8133, %v8129
        %v9086 = vpack.c.b16 %v8134, %v8130
        %v9087 = vpack.c.b16 %v8135, %v8131
        %v9088 = vpack.c.b16 %v8140, %v8136
        %v9089 = vpack.c.b16 %v8141, %v8137
        %v9090 = vpack.c.b16 %v8142, %v8138
        %v9091 = vpack.c.b16 %v8143, %v8139
        %v9092 = vpack.c.b16 %v8148, %v8144
        %v9093 = vpack.c.b16 %v8149, %v8145
        %v9094 = vpack.c.b16 %v8150, %v8146
        %v9095 = vpack.c.b16 %v8151, %v8147
        %v9096 = vpack.c.b16 %v8156, %v8152
        %v9097 = vpack.c.b16 %v8157, %v8153
        %v9098 = vpack.c.b16 %v8158, %v8154
        %v9099 = vpack.c.b16 %v8159, %v8155
        %v9100 = vpack.c.b16 %v8164, %v8160
        %v9101 = vpack.c.b16 %v8165, %v8161
        %v9102 = vpack.c.b16 %v8166, %v8162
        %v9103 = vpack.c.b16 %v8167, %v8163
        %v9104 = vpack.c.b16 %v8172, %v8168
        %v9105 = vpack.c.b16 %v8173, %v8169
        %v9106 = vpack.c.b16 %v8174, %v8170
        %v9107 = vpack.c.b16 %v8175, %v8171
        %v9108 = vpack.c.b16 %v8180, %v8176
        %v9109 = vpack.c.b16 %v8181, %v8177
        %v9110 = vpack.c.b16 %v8182, %v8178
        %v9111 = vpack.c.b16 %v8183, %v8179
        %v9112 = vpack.c.b16 %v8188, %v8184
        %v9113 = vpack.c.b16 %v8189, %v8185
        %v9114 = vpack.c.b16 %v8190, %v8186
        %v9115 = vpack.c.b16 %v8191, %v8187
        %v9116 = vpack.c.b16 %v8196, %v8192
        %v9117 = vpack.c.b16 %v8197, %v8193
        %v9118 = vpack.c.b16 %v8198, %v8194
        %v9119 = vpack.c.b16 %v8199, %v8195
        %v9120 = vpack.c.b16 %v8204, %v8200
        %v9121 = vpack.c.b16 %v8205, %v8201
        %v9122 = vpack.c.b16 %v8206, %v8202
        %v9123 = vpack.c.b16 %v8207, %v8203
        %v9124 = vpack.c.b16 %v8212, %v8208
        %v9125 = vpack.c.b16 %v8213, %v8209
        %v9126 = vpack.c.b16 %v8214, %v8210
        %v9127 = vpack.c.b16 %v8215, %v8211
        %v9128 = vpack.c.b16 %v8220, %v8216
        %v9129 = vpack.c.b16 %v8221, %v8217
        %v9130 = vpack.c.b16 %v8222, %v8218
        %v9131 = vpack.c.b16 %v8223, %v8219
        %v9132 = vpack.c.b16 %v8228, %v8224
        %v9133 = vpack.c.b16 %v8229, %v8225
        %v9134 = vpack.c.b16 %v8230, %v8226
        %v9135 = vpack.c.b16 %v8231, %v8227
        %v9136 = vpack.c.b16 %v8236, %v8232
        %v9137 = vpack.c.b16 %v8237, %v8233
        %v9138 = vpack.c.b16 %v8238, %v8234
        %v9139 = vpack.c.b16 %v8239, %v8235
        %v9140 = vpack.c.b16 %v8244, %v8240
        %v9141 = vpack.c.b16 %v8245, %v8241
        %v9142 = vpack.c.b16 %v8246, %v8242
        %v9143 = vpack.c.b16 %v8247, %v8243
        %v9144 = vpack.c.b16 %v8252, %v8248
        %v9145 = vpack.c.b16 %v8253, %v8249
        %v9146 = vpack.c.b16 %v8254, %v8250
        %v9147 = vpack.c.b16 %v8255, %v8251
        %v9148 = vpack.c.b16 %v8260, %v8256
        %v9149 = vpack.c.b16 %v8261, %v8257
        %v9150 = vpack.c.b16 %v8262, %v8258
        %v9151 = vpack.c.b16 %v8263, %v8259
        %v9152 = vpack.c.b16 %v8268, %v8264
        %v9153 = vpack.c.b16 %v8269, %v8265
        %v9154 = vpack.c.b16 %v8270, %v8266
        %v9155 = vpack.c.b16 %v8271, %v8267
        %v9156 = vpack.c.b16 %v8276, %v8272
        %v9157 = vpack.c.b16 %v8277, %v8273
        %v9158 = vpack.c.b16 %v8278, %v8274
        %v9159 = vpack.c.b16 %v8279, %v8275
        %v9160 = vpack.c.b16 %v8284, %v8280
        %v9161 = vpack.c.b16 %v8285, %v8281
        %v9162 = vpack.c.b16 %v8286, %v8282
        %v9163 = vpack.c.b16 %v8287, %v8283
        %v9164 = vpack.c.b16 %v8292, %v8288
        %v9165 = vpack.c.b16 %v8293, %v8289
        %v9166 = vpack.c.b16 %v8294, %v8290
        %v9167 = vpack.c.b16 %v8295, %v8291
        %v9168 = vpack.c.b16 %v8300, %v8296
        %v9169 = vpack.c.b16 %v8301, %v8297
        %v9170 = vpack.c.b16 %v8302, %v8298
        %v9171 = vpack.c.b16 %v8303, %v8299
        %v9172 = vpack.c.b16 %v8308, %v8304
        %v9173 = vpack.c.b16 %v8309, %v8305
        %v9174 = vpack.c.b16 %v8310, %v8306
        %v9175 = vpack.c.b16 %v8311, %v8307
        %v9176 = vpack.c.b16 %v8316, %v8312
        %v9177 = vpack.c.b16 %v8317, %v8313
        %v9178 = vpack.c.b16 %v8318, %v8314
        %v9179 = vpack.c.b16 %v8319, %v8315
        %v9180 = vpack.c.b16 %v8324, %v8320
        %v9181 = vpack.c.b16 %v8325, %v8321
        %v9182 = vpack.c.b16 %v8326, %v8322
        %v9183 = vpack.c.b16 %v8327, %v8323
        %v9184 = vpack.c.b16 %v8332, %v8328
        %v9185 = vpack.c.b16 %v8333, %v8329
        %v9186 = vpack.c.b16 %v8334, %v8330
        %v9187 = vpack.c.b16 %v8335, %v8331
        %v9188 = vpack.c.b16 %v8340, %v8336
        %v9189 = vpack.c.b16 %v8341, %v8337
        %v9190 = vpack.c.b16 %v8342, %v8338
        %v9191 = vpack.c.b16 %v8343, %v8339
        %v9192 = vpack.c.b16 %v8348, %v8344
        %v9193 = vpack.c.b16 %v8349, %v8345
        %v9194 = vpack.c.b16 %v8350, %v8346
        %v9195 = vpack.c.b16 %v8351, %v8347
        %v9196 = vpack.c.b16 %v8356, %v8352
        %v9197 = vpack.c.b16 %v8357, %v8353
        %v9198 = vpack.c.b16 %v8358, %v8354
        %v9199 = vpack.c.b16 %v8359, %v8355
        %v9200 = vpack.c.b16 %v8364, %v8360
        %v9201 = vpack.c.b16 %v8365, %v8361
        %v9202 = vpack.c.b16 %v8366, %v8362
        %v9203 = vpack.c.b16 %v8367, %v8363
        %v9204 = vpack.c.b16 %v8372, %v8368
        %v9205 = vpack.c.b16 %v8373, %v8369
        %v9206 = vpack.c.b16 %v8374, %v8370
        %v9207 = vpack.c.b16 %v8375, %v8371
        %v9208 = vpack.c.b16 %v8380, %v8376
        %v9209 = vpack.c.b16 %v8381, %v8377
        %v9210 = vpack.c.b16 %v8382, %v8378
        %v9211 = vpack.c.b16 %v8383, %v8379
        %v9212 = vpack.c.b16 %v8388, %v8384
        %v9213 = vpack.c.b16 %v8389, %v8385
        %v9214 = vpack.c.b16 %v8390, %v8386
        %v9215 = vpack.c.b16 %v8391, %v8387
        %v9216 = vpack.c.b16 %v8396, %v8392
        %v9217 = vpack.c.b16 %v8397, %v8393
        %v9218 = vpack.c.b16 %v8398, %v8394
        %v9219 = vpack.c.b16 %v8399, %v8395
        %v9220 = vpack.c.b16 %v8404, %v8400
        %v9221 = vpack.c.b16 %v8405, %v8401
        %v9222 = vpack.c.b16 %v8406, %v8402
        %v9223 = vpack.c.b16 %v8407, %v8403
        %v9224 = vpack.c.b16 %v8412, %v8408
        %v9225 = vpack.c.b16 %v8413, %v8409
        %v9226 = vpack.c.b16 %v8414, %v8410
        %v9227 = vpack.c.b16 %v8415, %v8411
        %v9228 = vpack.c.b16 %v8420, %v8416
        %v9229 = vpack.c.b16 %v8421, %v8417
        %v9230 = vpack.c.b16 %v8422, %v8418
        %v9231 = vpack.c.b16 %v8423, %v8419
        %v9232 = vpack.c.b16 %v8428, %v8424
        %v9233 = vpack.c.b16 %v8429, %v8425
        %v9234 = vpack.c.b16 %v8430, %v8426
        %v9235 = vpack.c.b16 %v8431, %v8427
        %v9236 = vpack.c.b16 %v8436, %v8432
        %v9237 = vpack.c.b16 %v8437, %v8433
        %v9238 = vpack.c.b16 %v8438, %v8434
        %v9239 = vpack.c.b16 %v8439, %v8435
        %v9240 = vpack.c.b16 %v8444, %v8440
        %v9241 = vpack.c.b16 %v8445, %v8441
        %v9242 = vpack.c.b16 %v8446, %v8442
        %v9243 = vpack.c.b16 %v8447, %v8443
        %v9244 = vpack.c.b16 %v8452, %v8448
        %v9245 = vpack.c.b16 %v8453, %v8449
        %v9246 = vpack.c.b16 %v8454, %v8450
        %v9247 = vpack.c.b16 %v8455, %v8451
        %v9248 = vpack.c.b16 %v8460, %v8456
        %v9249 = vpack.c.b16 %v8461, %v8457
        %v9250 = vpack.c.b16 %v8462, %v8458
        %v9251 = vpack.c.b16 %v8463, %v8459
        %v9252 = vpack.c.b16 %v8468, %v8464
        %v9253 = vpack.c.b16 %v8469, %v8465
        %v9254 = vpack.c.b16 %v8470, %v8466
        %v9255 = vpack.c.b16 %v8471, %v8467
        %v9256 = vpack.c.b16 %v8476, %v8472
        %v9257 = vpack.c.b16 %v8477, %v8473
        %v9258 = vpack.c.b16 %v8478, %v8474
        %v9259 = vpack.c.b16 %v8479, %v8475
        %v9260 = vpack.c.b16 %v8484, %v8480
        %v9261 = vpack.c.b16 %v8485, %v8481
        %v9262 = vpack.c.b16 %v8486, %v8482
        %v9263 = vpack.c.b16 %v8487, %v8483
        %v9264 = vpack.c.b16 %v8492, %v8488
        %v9265 = vpack.c.b16 %v8493, %v8489
        %v9266 = vpack.c.b16 %v8494, %v8490
        %v9267 = vpack.c.b16 %v8495, %v8491
        %v9268 = vpack.c.b16 %v8500, %v8496
        %v9269 = vpack.c.b16 %v8501, %v8497
        %v9270 = vpack.c.b16 %v8502, %v8498
        %v9271 = vpack.c.b16 %v8503, %v8499
        %10040 = vmatpush.bf16.msra.mxu0 %v8532
        %10041 = vmatpush.bf16.msra.mxu0 %v8528
        %10042 = vmatpush.bf16.msra.mxu0 %v8524
        %10043 = vmatpush.bf16.msra.mxu0 %v8520
        %10044 = vmatpush.bf16.msra.mxu0 %v8516
        %10045 = vmatpush.bf16.msra.mxu0 %v8512
        %10046 = vmatpush.bf16.msra.mxu0 %v8508
        %10047 = vmatpush.bf16.msra.mxu0 %v8504
        %10048 = vmatmul.bf16.gmra.mxu0 %v5384
        %v10049 = vpop.f32.mrf.mxu0
        %v10050 = vadd.f32 0.0, %v10049
        %v10051 = vpop.f32.mrf.mxu0
        %v10052 = vadd.f32 0.0, %v10051
        %10053 = vmatmul.bf16.gmra.mxu0 %v5408
        %v10054 = vpop.f32.mrf.mxu0
        %v10055 = vadd.f32 0.0, %v10054
        %v10056 = vpop.f32.mrf.mxu0
        %10057 = vdwg.mxu0
        %10058 = vmatpush.bf16.msra.mxu0 %v8564
        %10059 = vmatpush.bf16.msra.mxu0 %v8560
        %10060 = vmatpush.bf16.msra.mxu0 %v8556
        %10061 = vmatpush.bf16.msra.mxu0 %v8552
        %10062 = vmatpush.bf16.msra.mxu0 %v8548
        %10063 = vmatpush.bf16.msra.mxu0 %v8544
        %10064 = vmatpush.bf16.msra.mxu0 %v8540
        %10065 = vmatpush.bf16.msra.mxu0 %v8536
        %10066 = vmatmul.bf16.gmra.mxu0 %v5385
        %v10067 = vpop.f32.mrf.mxu0
        %v10068 = vadd.f32 %v10050, %v10067
        %v10069 = vpop.f32.mrf.mxu0
        %v10070 = vadd.f32 %v10052, %v10069
        %10071 = vmatmul.bf16.gmra.mxu0 %v5409
        %v10072 = vpop.f32.mrf.mxu0
        %v10073 = vadd.f32 %v10055, %v10072
        %v10074 = vpop.f32.mrf.mxu0
        %10075 = vdwg.mxu0
        %10076 = vmatpush.bf16.msra.mxu0 %v8596
        %10077 = vmatpush.bf16.msra.mxu0 %v8592
        %10078 = vmatpush.bf16.msra.mxu0 %v8588
        %10079 = vmatpush.bf16.msra.mxu0 %v8584
        %10080 = vmatpush.bf16.msra.mxu0 %v8580
        %10081 = vmatpush.bf16.msra.mxu0 %v8576
        %10082 = vmatpush.bf16.msra.mxu0 %v8572
        %10083 = vmatpush.bf16.msra.mxu0 %v8568
        %10084 = vmatmul.bf16.gmra.mxu0 %v5386
        %v10085 = vpop.f32.mrf.mxu0
        %v10086 = vadd.f32 %v10068, %v10085
        %v10087 = vpop.f32.mrf.mxu0
        %v10088 = vadd.f32 %v10070, %v10087
        %10089 = vmatmul.bf16.gmra.mxu0 %v5410
        %v10090 = vpop.f32.mrf.mxu0
        %v10091 = vadd.f32 %v10073, %v10090
        %v10092 = vpop.f32.mrf.mxu0
        %10093 = vdwg.mxu0
        %10094 = vmatpush.bf16.msra.mxu0 %v8628
        %10095 = vmatpush.bf16.msra.mxu0 %v8624
        %10096 = vmatpush.bf16.msra.mxu0 %v8620
        %10097 = vmatpush.bf16.msra.mxu0 %v8616
        %10098 = vmatpush.bf16.msra.mxu0 %v8612
        %10099 = vmatpush.bf16.msra.mxu0 %v8608
        %10100 = vmatpush.bf16.msra.mxu0 %v8604
        %10101 = vmatpush.bf16.msra.mxu0 %v8600
        %10102 = vmatmul.bf16.gmra.mxu0 %v5387
        %v10103 = vpop.f32.mrf.mxu0
        %v10104 = vadd.f32 %v10086, %v10103
        %v10105 = vpop.f32.mrf.mxu0
        %v10106 = vadd.f32 %v10088, %v10105
        %10107 = vmatmul.bf16.gmra.mxu0 %v5411
        %v10108 = vpop.f32.mrf.mxu0
        %v10109 = vadd.f32 %v10091, %v10108
        %v10110 = vpop.f32.mrf.mxu0
        %10111 = vdwg.mxu0
        %10112 = vmatpush.bf16.msra.mxu0 %v8660
        %10113 = vmatpush.bf16.msra.mxu0 %v8656
        %10114 = vmatpush.bf16.msra.mxu0 %v8652
        %10115 = vmatpush.bf16.msra.mxu0 %v8648
        %10116 = vmatpush.bf16.msra.mxu0 %v8644
        %10117 = vmatpush.bf16.msra.mxu0 %v8640
        %10118 = vmatpush.bf16.msra.mxu0 %v8636
        %10119 = vmatpush.bf16.msra.mxu0 %v8632
        %10120 = vmatmul.bf16.gmra.mxu0 %v5388
        %v10121 = vpop.f32.mrf.mxu0
        %v10122 = vadd.f32 %v10104, %v10121
        %v10123 = vpop.f32.mrf.mxu0
        %v10124 = vadd.f32 %v10106, %v10123
        %10125 = vmatmul.bf16.gmra.mxu0 %v5412
        %v10126 = vpop.f32.mrf.mxu0
        %v10127 = vadd.f32 %v10109, %v10126
        %v10128 = vpop.f32.mrf.mxu0
        %10129 = vdwg.mxu0
        %10130 = vmatpush.bf16.msra.mxu0 %v8692
        %10131 = vmatpush.bf16.msra.mxu0 %v8688
        %10132 = vmatpush.bf16.msra.mxu0 %v8684
        %10133 = vmatpush.bf16.msra.mxu0 %v8680
        %10134 = vmatpush.bf16.msra.mxu0 %v8676
        %10135 = vmatpush.bf16.msra.mxu0 %v8672
        %10136 = vmatpush.bf16.msra.mxu0 %v8668
        %10137 = vmatpush.bf16.msra.mxu0 %v8664
        %10138 = vmatmul.bf16.gmra.mxu0 %v5389
        %v10139 = vpop.f32.mrf.mxu0
        %v10140 = vadd.f32 %v10122, %v10139
        %v10141 = vpop.f32.mrf.mxu0
        %v10142 = vadd.f32 %v10124, %v10141
        %10143 = vmatmul.bf16.gmra.mxu0 %v5413
        %v10144 = vpop.f32.mrf.mxu0
        %v10145 = vadd.f32 %v10127, %v10144
        %v10146 = vpop.f32.mrf.mxu0
        %10147 = vdwg.mxu0
        %10148 = vmatpush.bf16.msra.mxu0 %v8724
        %10149 = vmatpush.bf16.msra.mxu0 %v8720
        %10150 = vmatpush.bf16.msra.mxu0 %v8716
        %10151 = vmatpush.bf16.msra.mxu0 %v8712
        %10152 = vmatpush.bf16.msra.mxu0 %v8708
        %10153 = vmatpush.bf16.msra.mxu0 %v8704
        %10154 = vmatpush.bf16.msra.mxu0 %v8700
        %10155 = vmatpush.bf16.msra.mxu0 %v8696
        %10156 = vmatmul.bf16.gmra.mxu0 %v5390
        %v10157 = vpop.f32.mrf.mxu0
        %v10158 = vadd.f32 %v10140, %v10157
        %v10159 = vpop.f32.mrf.mxu0
        %v10160 = vadd.f32 %v10142, %v10159
        %10161 = vmatmul.bf16.gmra.mxu0 %v5414
        %v10162 = vpop.f32.mrf.mxu0
        %v10163 = vadd.f32 %v10145, %v10162
        %v10164 = vpop.f32.mrf.mxu0
        %10165 = vdwg.mxu0
        %10166 = vmatpush.bf16.msra.mxu0 %v8756
        %10167 = vmatpush.bf16.msra.mxu0 %v8752
        %10168 = vmatpush.bf16.msra.mxu0 %v8748
        %10169 = vmatpush.bf16.msra.mxu0 %v8744
        %10170 = vmatpush.bf16.msra.mxu0 %v8740
        %10171 = vmatpush.bf16.msra.mxu0 %v8736
        %10172 = vmatpush.bf16.msra.mxu0 %v8732
        %10173 = vmatpush.bf16.msra.mxu0 %v8728
        %10174 = vmatmul.bf16.gmra.mxu0 %v5391
        %v10175 = vpop.f32.mrf.mxu0
        %v10176 = vadd.f32 %v10158, %v10175
        %v10177 = vpop.f32.mrf.mxu0
        %v10178 = vadd.f32 %v10160, %v10177
        %10179 = vmatmul.bf16.gmra.mxu0 %v5415
        %v10180 = vpop.f32.mrf.mxu0
        %v10181 = vadd.f32 %v10163, %v10180
        %v10182 = vpop.f32.mrf.mxu0
        %10183 = vdwg.mxu0
        %10184 = vmatpush.bf16.msra.mxu0 %v8788
        %10185 = vmatpush.bf16.msra.mxu0 %v8784
        %10186 = vmatpush.bf16.msra.mxu0 %v8780
        %10187 = vmatpush.bf16.msra.mxu0 %v8776
        %10188 = vmatpush.bf16.msra.mxu0 %v8772
        %10189 = vmatpush.bf16.msra.mxu0 %v8768
        %10190 = vmatpush.bf16.msra.mxu0 %v8764
        %10191 = vmatpush.bf16.msra.mxu0 %v8760
        %10192 = vmatmul.bf16.gmra.mxu0 %v5392
        %v10193 = vpop.f32.mrf.mxu0
        %v10194 = vadd.f32 %v10176, %v10193
        %v10195 = vpop.f32.mrf.mxu0
        %v10196 = vadd.f32 %v10178, %v10195
        %10197 = vmatmul.bf16.gmra.mxu0 %v5416
        %v10198 = vpop.f32.mrf.mxu0
        %v10199 = vadd.f32 %v10181, %v10198
        %v10200 = vpop.f32.mrf.mxu0
        %10201 = vdwg.mxu0
        %10202 = vmatpush.bf16.msra.mxu0 %v8820
        %10203 = vmatpush.bf16.msra.mxu0 %v8816
        %10204 = vmatpush.bf16.msra.mxu0 %v8812
        %10205 = vmatpush.bf16.msra.mxu0 %v8808
        %10206 = vmatpush.bf16.msra.mxu0 %v8804
        %10207 = vmatpush.bf16.msra.mxu0 %v8800
        %10208 = vmatpush.bf16.msra.mxu0 %v8796
        %10209 = vmatpush.bf16.msra.mxu0 %v8792
        %10210 = vmatmul.bf16.gmra.mxu0 %v5393
        %v10211 = vpop.f32.mrf.mxu0
        %v10212 = vadd.f32 %v10194, %v10211
        %v10213 = vpop.f32.mrf.mxu0
        %v10214 = vadd.f32 %v10196, %v10213
        %10215 = vmatmul.bf16.gmra.mxu0 %v5417
        %v10216 = vpop.f32.mrf.mxu0
        %v10217 = vadd.f32 %v10199, %v10216
        %v10218 = vpop.f32.mrf.mxu0
        %10219 = vdwg.mxu0
        %10220 = vmatpush.bf16.msra.mxu0 %v8852
        %10221 = vmatpush.bf16.msra.mxu0 %v8848
        %10222 = vmatpush.bf16.msra.mxu0 %v8844
        %10223 = vmatpush.bf16.msra.mxu0 %v8840
        %10224 = vmatpush.bf16.msra.mxu0 %v8836
        %10225 = vmatpush.bf16.msra.mxu0 %v8832
        %10226 = vmatpush.bf16.msra.mxu0 %v8828
        %10227 = vmatpush.bf16.msra.mxu0 %v8824
        %10228 = vmatmul.bf16.gmra.mxu0 %v5394
        %v10229 = vpop.f32.mrf.mxu0
        %v10230 = vadd.f32 %v10212, %v10229
        %v10231 = vpop.f32.mrf.mxu0
        %v10232 = vadd.f32 %v10214, %v10231
        %10233 = vmatmul.bf16.gmra.mxu0 %v5418
        %v10234 = vpop.f32.mrf.mxu0
        %v10235 = vadd.f32 %v10217, %v10234
        %v10236 = vpop.f32.mrf.mxu0
        %10237 = vdwg.mxu0
        %10238 = vmatpush.bf16.msra.mxu0 %v8884
        %10239 = vmatpush.bf16.msra.mxu0 %v8880
        %10240 = vmatpush.bf16.msra.mxu0 %v8876
        %10241 = vmatpush.bf16.msra.mxu0 %v8872
        %10242 = vmatpush.bf16.msra.mxu0 %v8868
        %10243 = vmatpush.bf16.msra.mxu0 %v8864
        %10244 = vmatpush.bf16.msra.mxu0 %v8860
        %10245 = vmatpush.bf16.msra.mxu0 %v8856
        %10246 = vmatmul.bf16.gmra.mxu0 %v5395
        %v10247 = vpop.f32.mrf.mxu0
        %v10248 = vadd.f32 %v10230, %v10247
        %v10249 = vpop.f32.mrf.mxu0
        %v10250 = vadd.f32 %v10232, %v10249
        %10251 = vmatmul.bf16.gmra.mxu0 %v5419
        %v10252 = vpop.f32.mrf.mxu0
        %v10253 = vadd.f32 %v10235, %v10252
        %v10254 = vpop.f32.mrf.mxu0
        %10255 = vdwg.mxu0
        %10256 = vmatpush.bf16.msra.mxu0 %v8916
        %10257 = vmatpush.bf16.msra.mxu0 %v8912
        %10258 = vmatpush.bf16.msra.mxu0 %v8908
        %10259 = vmatpush.bf16.msra.mxu0 %v8904
        %10260 = vmatpush.bf16.msra.mxu0 %v8900
        %10261 = vmatpush.bf16.msra.mxu0 %v8896
        %10262 = vmatpush.bf16.msra.mxu0 %v8892
        %10263 = vmatpush.bf16.msra.mxu0 %v8888
        %10264 = vmatmul.bf16.gmra.mxu0 %v5396
        %v10265 = vpop.f32.mrf.mxu0
        %v10266 = vadd.f32 %v10248, %v10265
        %v10267 = vpop.f32.mrf.mxu0
        %v10268 = vadd.f32 %v10250, %v10267
        %10269 = vmatmul.bf16.gmra.mxu0 %v5420
        %v10270 = vpop.f32.mrf.mxu0
        %v10271 = vadd.f32 %v10253, %v10270
        %v10272 = vpop.f32.mrf.mxu0
        %10273 = vdwg.mxu0
        %10274 = vmatpush.bf16.msra.mxu0 %v8948
        %10275 = vmatpush.bf16.msra.mxu0 %v8944
        %10276 = vmatpush.bf16.msra.mxu0 %v8940
        %10277 = vmatpush.bf16.msra.mxu0 %v8936
        %10278 = vmatpush.bf16.msra.mxu0 %v8932
        %10279 = vmatpush.bf16.msra.mxu0 %v8928
        %10280 = vmatpush.bf16.msra.mxu0 %v8924
        %10281 = vmatpush.bf16.msra.mxu0 %v8920
        %10282 = vmatmul.bf16.gmra.mxu0 %v5397
        %v10283 = vpop.f32.mrf.mxu0
        %v10284 = vadd.f32 %v10266, %v10283
        %v10285 = vpop.f32.mrf.mxu0
        %v10286 = vadd.f32 %v10268, %v10285
        %10287 = vmatmul.bf16.gmra.mxu0 %v5421
        %v10288 = vpop.f32.mrf.mxu0
        %v10289 = vadd.f32 %v10271, %v10288
        %v10290 = vpop.f32.mrf.mxu0
        %10291 = vdwg.mxu0
        %10292 = vmatpush.bf16.msra.mxu0 %v8980
        %10293 = vmatpush.bf16.msra.mxu0 %v8976
        %10294 = vmatpush.bf16.msra.mxu0 %v8972
        %10295 = vmatpush.bf16.msra.mxu0 %v8968
        %10296 = vmatpush.bf16.msra.mxu0 %v8964
        %10297 = vmatpush.bf16.msra.mxu0 %v8960
        %10298 = vmatpush.bf16.msra.mxu0 %v8956
        %10299 = vmatpush.bf16.msra.mxu0 %v8952
        %10300 = vmatmul.bf16.gmra.mxu0 %v5398
        %v10301 = vpop.f32.mrf.mxu0
        %v10302 = vadd.f32 %v10284, %v10301
        %v10303 = vpop.f32.mrf.mxu0
        %v10304 = vadd.f32 %v10286, %v10303
        %10305 = vmatmul.bf16.gmra.mxu0 %v5422
        %v10306 = vpop.f32.mrf.mxu0
        %v10307 = vadd.f32 %v10289, %v10306
        %v10308 = vpop.f32.mrf.mxu0
        %10309 = vdwg.mxu0
        %10310 = vmatpush.bf16.msra.mxu0 %v9012
        %10311 = vmatpush.bf16.msra.mxu0 %v9008
        %10312 = vmatpush.bf16.msra.mxu0 %v9004
        %10313 = vmatpush.bf16.msra.mxu0 %v9000
        %10314 = vmatpush.bf16.msra.mxu0 %v8996
        %10315 = vmatpush.bf16.msra.mxu0 %v8992
        %10316 = vmatpush.bf16.msra.mxu0 %v8988
        %10317 = vmatpush.bf16.msra.mxu0 %v8984
        %10318 = vmatmul.bf16.gmra.mxu0 %v5399
        %v10319 = vpop.f32.mrf.mxu0
        %v10320 = vadd.f32 %v10302, %v10319
        %v10321 = vpop.f32.mrf.mxu0
        %v10322 = vadd.f32 %v10304, %v10321
        %10323 = vmatmul.bf16.gmra.mxu0 %v5423
        %v10324 = vpop.f32.mrf.mxu0
        %v10325 = vadd.f32 %v10307, %v10324
        %v10326 = vpop.f32.mrf.mxu0
        %10327 = vdwg.mxu0
        %10328 = vmatpush.bf16.msra.mxu0 %v9044
        %10329 = vmatpush.bf16.msra.mxu0 %v9040
        %10330 = vmatpush.bf16.msra.mxu0 %v9036
        %10331 = vmatpush.bf16.msra.mxu0 %v9032
        %10332 = vmatpush.bf16.msra.mxu0 %v9028
        %10333 = vmatpush.bf16.msra.mxu0 %v9024
        %10334 = vmatpush.bf16.msra.mxu0 %v9020
        %10335 = vmatpush.bf16.msra.mxu0 %v9016
        %10336 = vmatmul.bf16.gmra.mxu0 %v5400
        %v10337 = vpop.f32.mrf.mxu0
        %v10338 = vadd.f32 %v10320, %v10337
        %v10339 = vpop.f32.mrf.mxu0
        %v10340 = vadd.f32 %v10322, %v10339
        %10341 = vmatmul.bf16.gmra.mxu0 %v5424
        %v10342 = vpop.f32.mrf.mxu0
        %v10343 = vadd.f32 %v10325, %v10342
        %v10344 = vpop.f32.mrf.mxu0
        %10345 = vdwg.mxu0
        %10346 = vmatpush.bf16.msra.mxu0 %v9076
        %10347 = vmatpush.bf16.msra.mxu0 %v9072
        %10348 = vmatpush.bf16.msra.mxu0 %v9068
        %10349 = vmatpush.bf16.msra.mxu0 %v9064
        %10350 = vmatpush.bf16.msra.mxu0 %v9060
        %10351 = vmatpush.bf16.msra.mxu0 %v9056
        %10352 = vmatpush.bf16.msra.mxu0 %v9052
        %10353 = vmatpush.bf16.msra.mxu0 %v9048
        %10354 = vmatmul.bf16.gmra.mxu0 %v5401
        %v10355 = vpop.f32.mrf.mxu0
        %v10356 = vadd.f32 %v10338, %v10355
        %v10357 = vpop.f32.mrf.mxu0
        %v10358 = vadd.f32 %v10340, %v10357
        %10359 = vmatmul.bf16.gmra.mxu0 %v5425
        %v10360 = vpop.f32.mrf.mxu0
        %v10361 = vadd.f32 %v10343, %v10360
        %v10362 = vpop.f32.mrf.mxu0
        %10363 = vdwg.mxu0
        %10364 = vmatpush.bf16.msra.mxu0 %v9108
        %10365 = vmatpush.bf16.msra.mxu0 %v9104
        %10366 = vmatpush.bf16.msra.mxu0 %v9100
        %10367 = vmatpush.bf16.msra.mxu0 %v9096
        %10368 = vmatpush.bf16.msra.mxu0 %v9092
        %10369 = vmatpush.bf16.msra.mxu0 %v9088
        %10370 = vmatpush.bf16.msra.mxu0 %v9084
        %10371 = vmatpush.bf16.msra.mxu0 %v9080
        %10372 = vmatmul.bf16.gmra.mxu0 %v5402
        %v10373 = vpop.f32.mrf.mxu0
        %v10374 = vadd.f32 %v10356, %v10373
        %v10375 = vpop.f32.mrf.mxu0
        %v10376 = vadd.f32 %v10358, %v10375
        %10377 = vmatmul.bf16.gmra.mxu0 %v5426
        %v10378 = vpop.f32.mrf.mxu0
        %v10379 = vadd.f32 %v10361, %v10378
        %v10380 = vpop.f32.mrf.mxu0
        %10381 = vdwg.mxu0
        %10382 = vmatpush.bf16.msra.mxu0 %v9140
        %10383 = vmatpush.bf16.msra.mxu0 %v9136
        %10384 = vmatpush.bf16.msra.mxu0 %v9132
        %10385 = vmatpush.bf16.msra.mxu0 %v9128
        %10386 = vmatpush.bf16.msra.mxu0 %v9124
        %10387 = vmatpush.bf16.msra.mxu0 %v9120
        %10388 = vmatpush.bf16.msra.mxu0 %v9116
        %10389 = vmatpush.bf16.msra.mxu0 %v9112
        %10390 = vmatmul.bf16.gmra.mxu0 %v5403
        %v10391 = vpop.f32.mrf.mxu0
        %v10392 = vadd.f32 %v10374, %v10391
        %v10393 = vpop.f32.mrf.mxu0
        %v10394 = vadd.f32 %v10376, %v10393
        %10395 = vmatmul.bf16.gmra.mxu0 %v5427
        %v10396 = vpop.f32.mrf.mxu0
        %v10397 = vadd.f32 %v10379, %v10396
        %v10398 = vpop.f32.mrf.mxu0
        %10399 = vdwg.mxu0
        %10400 = vmatpush.bf16.msra.mxu0 %v9172
        %10401 = vmatpush.bf16.msra.mxu0 %v9168
        %10402 = vmatpush.bf16.msra.mxu0 %v9164
        %10403 = vmatpush.bf16.msra.mxu0 %v9160
        %10404 = vmatpush.bf16.msra.mxu0 %v9156
        %10405 = vmatpush.bf16.msra.mxu0 %v9152
        %10406 = vmatpush.bf16.msra.mxu0 %v9148
        %10407 = vmatpush.bf16.msra.mxu0 %v9144
        %10408 = vmatmul.bf16.gmra.mxu0 %v5404
        %v10409 = vpop.f32.mrf.mxu0
        %v10410 = vadd.f32 %v10392, %v10409
        %v10411 = vpop.f32.mrf.mxu0
        %v10412 = vadd.f32 %v10394, %v10411
        %10413 = vmatmul.bf16.gmra.mxu0 %v5428
        %v10414 = vpop.f32.mrf.mxu0
        %v10415 = vadd.f32 %v10397, %v10414
        %v10416 = vpop.f32.mrf.mxu0
        %10417 = vdwg.mxu0
        %10418 = vmatpush.bf16.msra.mxu0 %v9204
        %10419 = vmatpush.bf16.msra.mxu0 %v9200
        %10420 = vmatpush.bf16.msra.mxu0 %v9196
        %10421 = vmatpush.bf16.msra.mxu0 %v9192
        %10422 = vmatpush.bf16.msra.mxu0 %v9188
        %10423 = vmatpush.bf16.msra.mxu0 %v9184
        %10424 = vmatpush.bf16.msra.mxu0 %v9180
        %10425 = vmatpush.bf16.msra.mxu0 %v9176
        %10426 = vmatmul.bf16.gmra.mxu0 %v5405
        %v10427 = vpop.f32.mrf.mxu0
        %v10428 = vadd.f32 %v10410, %v10427
        %v10429 = vpop.f32.mrf.mxu0
        %v10430 = vadd.f32 %v10412, %v10429
        %10431 = vmatmul.bf16.gmra.mxu0 %v5429
        %v10432 = vpop.f32.mrf.mxu0
        %v10433 = vadd.f32 %v10415, %v10432
        %v10434 = vpop.f32.mrf.mxu0
        %10435 = vdwg.mxu0
        %10436 = vmatpush.bf16.msra.mxu0 %v9236
        %10437 = vmatpush.bf16.msra.mxu0 %v9232
        %10438 = vmatpush.bf16.msra.mxu0 %v9228
        %10439 = vmatpush.bf16.msra.mxu0 %v9224
        %10440 = vmatpush.bf16.msra.mxu0 %v9220
        %10441 = vmatpush.bf16.msra.mxu0 %v9216
        %10442 = vmatpush.bf16.msra.mxu0 %v9212
        %10443 = vmatpush.bf16.msra.mxu0 %v9208
        %10444 = vmatmul.bf16.gmra.mxu0 %v5406
        %v10445 = vpop.f32.mrf.mxu0
        %v10446 = vadd.f32 %v10428, %v10445
        %v10447 = vpop.f32.mrf.mxu0
        %v10448 = vadd.f32 %v10430, %v10447
        %10449 = vmatmul.bf16.gmra.mxu0 %v5430
        %v10450 = vpop.f32.mrf.mxu0
        %v10451 = vadd.f32 %v10433, %v10450
        %v10452 = vpop.f32.mrf.mxu0
        %10453 = vdwg.mxu0
        %10454 = vmatpush.bf16.msra.mxu0 %v9268
        %10455 = vmatpush.bf16.msra.mxu0 %v9264
        %10456 = vmatpush.bf16.msra.mxu0 %v9260
        %10457 = vmatpush.bf16.msra.mxu0 %v9256
        %10458 = vmatpush.bf16.msra.mxu0 %v9252
        %10459 = vmatpush.bf16.msra.mxu0 %v9248
        %10460 = vmatpush.bf16.msra.mxu0 %v9244
        %10461 = vmatpush.bf16.msra.mxu0 %v9240
        %10462 = vmatmul.bf16.gmra.mxu0 %v5407
        %v10463 = vpop.f32.mrf.mxu0
        %v10464 = vadd.f32 %v10446, %v10463
        %v10465 = vpop.f32.mrf.mxu0
        %v10466 = vadd.f32 %v10448, %v10465
        %10467 = vmatmul.bf16.gmra.mxu0 %v5431
        %v10468 = vpop.f32.mrf.mxu0
        %v10469 = vadd.f32 %v10451, %v10468
        %v10470 = vpop.f32.mrf.mxu0
        %10471 = vdwg.mxu0
        %10472 = vmatpush.bf16.msra.mxu0 %v8533
        %10473 = vmatpush.bf16.msra.mxu0 %v8529
        %10474 = vmatpush.bf16.msra.mxu0 %v8525
        %10475 = vmatpush.bf16.msra.mxu0 %v8521
        %10476 = vmatpush.bf16.msra.mxu0 %v8517
        %10477 = vmatpush.bf16.msra.mxu0 %v8513
        %10478 = vmatpush.bf16.msra.mxu0 %v8509
        %10479 = vmatpush.bf16.msra.mxu0 %v8505
        %10480 = vmatmul.bf16.gmra.mxu0 %v5384
        %v10481 = vpop.f32.mrf.mxu0
        %v10482 = vadd.f32 0.0, %v10481
        %v10483 = vpop.f32.mrf.mxu0
        %v10484 = vadd.f32 0.0, %v10483
        %10485 = vmatmul.bf16.gmra.mxu0 %v5408
        %v10486 = vpop.f32.mrf.mxu0
        %v10487 = vadd.f32 0.0, %v10486
        %v10488 = vpop.f32.mrf.mxu0
        %10489 = vdwg.mxu0
        %10490 = vmatpush.bf16.msra.mxu0 %v8565
        %10491 = vmatpush.bf16.msra.mxu0 %v8561
        %10492 = vmatpush.bf16.msra.mxu0 %v8557
        %10493 = vmatpush.bf16.msra.mxu0 %v8553
        %10494 = vmatpush.bf16.msra.mxu0 %v8549
        %10495 = vmatpush.bf16.msra.mxu0 %v8545
        %10496 = vmatpush.bf16.msra.mxu0 %v8541
        %10497 = vmatpush.bf16.msra.mxu0 %v8537
        %10498 = vmatmul.bf16.gmra.mxu0 %v5385
        %v10499 = vpop.f32.mrf.mxu0
        %v10500 = vadd.f32 %v10482, %v10499
        %v10501 = vpop.f32.mrf.mxu0
        %v10502 = vadd.f32 %v10484, %v10501
        %10503 = vmatmul.bf16.gmra.mxu0 %v5409
        %v10504 = vpop.f32.mrf.mxu0
        %v10505 = vadd.f32 %v10487, %v10504
        %v10506 = vpop.f32.mrf.mxu0
        %10507 = vdwg.mxu0
        %10508 = vmatpush.bf16.msra.mxu0 %v8597
        %10509 = vmatpush.bf16.msra.mxu0 %v8593
        %10510 = vmatpush.bf16.msra.mxu0 %v8589
        %10511 = vmatpush.bf16.msra.mxu0 %v8585
        %10512 = vmatpush.bf16.msra.mxu0 %v8581
        %10513 = vmatpush.bf16.msra.mxu0 %v8577
        %10514 = vmatpush.bf16.msra.mxu0 %v8573
        %10515 = vmatpush.bf16.msra.mxu0 %v8569
        %10516 = vmatmul.bf16.gmra.mxu0 %v5386
        %v10517 = vpop.f32.mrf.mxu0
        %v10518 = vadd.f32 %v10500, %v10517
        %v10519 = vpop.f32.mrf.mxu0
        %v10520 = vadd.f32 %v10502, %v10519
        %10521 = vmatmul.bf16.gmra.mxu0 %v5410
        %v10522 = vpop.f32.mrf.mxu0
        %v10523 = vadd.f32 %v10505, %v10522
        %v10524 = vpop.f32.mrf.mxu0
        %10525 = vdwg.mxu0
        %10526 = vmatpush.bf16.msra.mxu0 %v8629
        %10527 = vmatpush.bf16.msra.mxu0 %v8625
        %10528 = vmatpush.bf16.msra.mxu0 %v8621
        %10529 = vmatpush.bf16.msra.mxu0 %v8617
        %10530 = vmatpush.bf16.msra.mxu0 %v8613
        %10531 = vmatpush.bf16.msra.mxu0 %v8609
        %10532 = vmatpush.bf16.msra.mxu0 %v8605
        %10533 = vmatpush.bf16.msra.mxu0 %v8601
        %10534 = vmatmul.bf16.gmra.mxu0 %v5387
        %v10535 = vpop.f32.mrf.mxu0
        %v10536 = vadd.f32 %v10518, %v10535
        %v10537 = vpop.f32.mrf.mxu0
        %v10538 = vadd.f32 %v10520, %v10537
        %10539 = vmatmul.bf16.gmra.mxu0 %v5411
        %v10540 = vpop.f32.mrf.mxu0
        %v10541 = vadd.f32 %v10523, %v10540
        %v10542 = vpop.f32.mrf.mxu0
        %10543 = vdwg.mxu0
        %10544 = vmatpush.bf16.msra.mxu0 %v8661
        %10545 = vmatpush.bf16.msra.mxu0 %v8657
        %10546 = vmatpush.bf16.msra.mxu0 %v8653
        %10547 = vmatpush.bf16.msra.mxu0 %v8649
        %10548 = vmatpush.bf16.msra.mxu0 %v8645
        %10549 = vmatpush.bf16.msra.mxu0 %v8641
        %10550 = vmatpush.bf16.msra.mxu0 %v8637
        %10551 = vmatpush.bf16.msra.mxu0 %v8633
        %10552 = vmatmul.bf16.gmra.mxu0 %v5388
        %v10553 = vpop.f32.mrf.mxu0
        %v10554 = vadd.f32 %v10536, %v10553
        %v10555 = vpop.f32.mrf.mxu0
        %v10556 = vadd.f32 %v10538, %v10555
        %10557 = vmatmul.bf16.gmra.mxu0 %v5412
        %v10558 = vpop.f32.mrf.mxu0
        %v10559 = vadd.f32 %v10541, %v10558
        %v10560 = vpop.f32.mrf.mxu0
        %10561 = vdwg.mxu0
        %10562 = vmatpush.bf16.msra.mxu0 %v8693
        %10563 = vmatpush.bf16.msra.mxu0 %v8689
        %10564 = vmatpush.bf16.msra.mxu0 %v8685
        %10565 = vmatpush.bf16.msra.mxu0 %v8681
        %10566 = vmatpush.bf16.msra.mxu0 %v8677
        %10567 = vmatpush.bf16.msra.mxu0 %v8673
        %10568 = vmatpush.bf16.msra.mxu0 %v8669
        %10569 = vmatpush.bf16.msra.mxu0 %v8665
        %10570 = vmatmul.bf16.gmra.mxu0 %v5389
        %v10571 = vpop.f32.mrf.mxu0
        %v10572 = vadd.f32 %v10554, %v10571
        %v10573 = vpop.f32.mrf.mxu0
        %v10574 = vadd.f32 %v10556, %v10573
        %10575 = vmatmul.bf16.gmra.mxu0 %v5413
        %v10576 = vpop.f32.mrf.mxu0
        %v10577 = vadd.f32 %v10559, %v10576
        %v10578 = vpop.f32.mrf.mxu0
        %10579 = vdwg.mxu0
        %10580 = vmatpush.bf16.msra.mxu0 %v8725
        %10581 = vmatpush.bf16.msra.mxu0 %v8721
        %10582 = vmatpush.bf16.msra.mxu0 %v8717
        %10583 = vmatpush.bf16.msra.mxu0 %v8713
        %10584 = vmatpush.bf16.msra.mxu0 %v8709
        %10585 = vmatpush.bf16.msra.mxu0 %v8705
        %10586 = vmatpush.bf16.msra.mxu0 %v8701
        %10587 = vmatpush.bf16.msra.mxu0 %v8697
        %10588 = vmatmul.bf16.gmra.mxu0 %v5390
        %v10589 = vpop.f32.mrf.mxu0
        %v10590 = vadd.f32 %v10572, %v10589
        %v10591 = vpop.f32.mrf.mxu0
        %v10592 = vadd.f32 %v10574, %v10591
        %10593 = vmatmul.bf16.gmra.mxu0 %v5414
        %v10594 = vpop.f32.mrf.mxu0
        %v10595 = vadd.f32 %v10577, %v10594
        %v10596 = vpop.f32.mrf.mxu0
        %10597 = vdwg.mxu0
        %10598 = vmatpush.bf16.msra.mxu0 %v8757
        %10599 = vmatpush.bf16.msra.mxu0 %v8753
        %10600 = vmatpush.bf16.msra.mxu0 %v8749
        %10601 = vmatpush.bf16.msra.mxu0 %v8745
        %10602 = vmatpush.bf16.msra.mxu0 %v8741
        %10603 = vmatpush.bf16.msra.mxu0 %v8737
        %10604 = vmatpush.bf16.msra.mxu0 %v8733
        %10605 = vmatpush.bf16.msra.mxu0 %v8729
        %10606 = vmatmul.bf16.gmra.mxu0 %v5391
        %v10607 = vpop.f32.mrf.mxu0
        %v10608 = vadd.f32 %v10590, %v10607
        %v10609 = vpop.f32.mrf.mxu0
        %v10610 = vadd.f32 %v10592, %v10609
        %10611 = vmatmul.bf16.gmra.mxu0 %v5415
        %v10612 = vpop.f32.mrf.mxu0
        %v10613 = vadd.f32 %v10595, %v10612
        %v10614 = vpop.f32.mrf.mxu0
        %10615 = vdwg.mxu0
        %10616 = vmatpush.bf16.msra.mxu0 %v8789
        %10617 = vmatpush.bf16.msra.mxu0 %v8785
        %10618 = vmatpush.bf16.msra.mxu0 %v8781
        %10619 = vmatpush.bf16.msra.mxu0 %v8777
        %10620 = vmatpush.bf16.msra.mxu0 %v8773
        %10621 = vmatpush.bf16.msra.mxu0 %v8769
        %10622 = vmatpush.bf16.msra.mxu0 %v8765
        %10623 = vmatpush.bf16.msra.mxu0 %v8761
        %10624 = vmatmul.bf16.gmra.mxu0 %v5392
        %v10625 = vpop.f32.mrf.mxu0
        %v10626 = vadd.f32 %v10608, %v10625
        %v10627 = vpop.f32.mrf.mxu0
        %v10628 = vadd.f32 %v10610, %v10627
        %10629 = vmatmul.bf16.gmra.mxu0 %v5416
        %v10630 = vpop.f32.mrf.mxu0
        %v10631 = vadd.f32 %v10613, %v10630
        %v10632 = vpop.f32.mrf.mxu0
        %10633 = vdwg.mxu0
        %10634 = vmatpush.bf16.msra.mxu0 %v8821
        %10635 = vmatpush.bf16.msra.mxu0 %v8817
        %10636 = vmatpush.bf16.msra.mxu0 %v8813
        %10637 = vmatpush.bf16.msra.mxu0 %v8809
        %10638 = vmatpush.bf16.msra.mxu0 %v8805
        %10639 = vmatpush.bf16.msra.mxu0 %v8801
        %10640 = vmatpush.bf16.msra.mxu0 %v8797
        %10641 = vmatpush.bf16.msra.mxu0 %v8793
        %10642 = vmatmul.bf16.gmra.mxu0 %v5393
        %v10643 = vpop.f32.mrf.mxu0
        %v10644 = vadd.f32 %v10626, %v10643
        %v10645 = vpop.f32.mrf.mxu0
        %v10646 = vadd.f32 %v10628, %v10645
        %10647 = vmatmul.bf16.gmra.mxu0 %v5417
        %v10648 = vpop.f32.mrf.mxu0
        %v10649 = vadd.f32 %v10631, %v10648
        %v10650 = vpop.f32.mrf.mxu0
        %10651 = vdwg.mxu0
        %10652 = vmatpush.bf16.msra.mxu0 %v8853
        %10653 = vmatpush.bf16.msra.mxu0 %v8849
        %10654 = vmatpush.bf16.msra.mxu0 %v8845
        %10655 = vmatpush.bf16.msra.mxu0 %v8841
        %10656 = vmatpush.bf16.msra.mxu0 %v8837
        %10657 = vmatpush.bf16.msra.mxu0 %v8833
        %10658 = vmatpush.bf16.msra.mxu0 %v8829
        %10659 = vmatpush.bf16.msra.mxu0 %v8825
        %10660 = vmatmul.bf16.gmra.mxu0 %v5394
        %v10661 = vpop.f32.mrf.mxu0
        %v10662 = vadd.f32 %v10644, %v10661
        %v10663 = vpop.f32.mrf.mxu0
        %v10664 = vadd.f32 %v10646, %v10663
        %10665 = vmatmul.bf16.gmra.mxu0 %v5418
        %v10666 = vpop.f32.mrf.mxu0
        %v10667 = vadd.f32 %v10649, %v10666
        %v10668 = vpop.f32.mrf.mxu0
        %10669 = vdwg.mxu0
        %10670 = vmatpush.bf16.msra.mxu0 %v8885
        %10671 = vmatpush.bf16.msra.mxu0 %v8881
        %10672 = vmatpush.bf16.msra.mxu0 %v8877
        %10673 = vmatpush.bf16.msra.mxu0 %v8873
        %10674 = vmatpush.bf16.msra.mxu0 %v8869
        %10675 = vmatpush.bf16.msra.mxu0 %v8865
        %10676 = vmatpush.bf16.msra.mxu0 %v8861
        %10677 = vmatpush.bf16.msra.mxu0 %v8857
        %10678 = vmatmul.bf16.gmra.mxu0 %v5395
        %v10679 = vpop.f32.mrf.mxu0
        %v10680 = vadd.f32 %v10662, %v10679
        %v10681 = vpop.f32.mrf.mxu0
        %v10682 = vadd.f32 %v10664, %v10681
        %10683 = vmatmul.bf16.gmra.mxu0 %v5419
        %v10684 = vpop.f32.mrf.mxu0
        %v10685 = vadd.f32 %v10667, %v10684
        %v10686 = vpop.f32.mrf.mxu0
        %10687 = vdwg.mxu0
        %10688 = vmatpush.bf16.msra.mxu0 %v8917
        %10689 = vmatpush.bf16.msra.mxu0 %v8913
        %10690 = vmatpush.bf16.msra.mxu0 %v8909
        %10691 = vmatpush.bf16.msra.mxu0 %v8905
        %10692 = vmatpush.bf16.msra.mxu0 %v8901
        %10693 = vmatpush.bf16.msra.mxu0 %v8897
        %10694 = vmatpush.bf16.msra.mxu0 %v8893
        %10695 = vmatpush.bf16.msra.mxu0 %v8889
        %10696 = vmatmul.bf16.gmra.mxu0 %v5396
        %v10697 = vpop.f32.mrf.mxu0
        %v10698 = vadd.f32 %v10680, %v10697
        %v10699 = vpop.f32.mrf.mxu0
        %v10700 = vadd.f32 %v10682, %v10699
        %10701 = vmatmul.bf16.gmra.mxu0 %v5420
        %v10702 = vpop.f32.mrf.mxu0
        %v10703 = vadd.f32 %v10685, %v10702
        %v10704 = vpop.f32.mrf.mxu0
        %10705 = vdwg.mxu0
        %10706 = vmatpush.bf16.msra.mxu0 %v8949
        %10707 = vmatpush.bf16.msra.mxu0 %v8945
        %10708 = vmatpush.bf16.msra.mxu0 %v8941
        %10709 = vmatpush.bf16.msra.mxu0 %v8937
        %10710 = vmatpush.bf16.msra.mxu0 %v8933
        %10711 = vmatpush.bf16.msra.mxu0 %v8929
        %10712 = vmatpush.bf16.msra.mxu0 %v8925
        %10713 = vmatpush.bf16.msra.mxu0 %v8921
        %10714 = vmatmul.bf16.gmra.mxu0 %v5397
        %v10715 = vpop.f32.mrf.mxu0
        %v10716 = vadd.f32 %v10698, %v10715
        %v10717 = vpop.f32.mrf.mxu0
        %v10718 = vadd.f32 %v10700, %v10717
        %10719 = vmatmul.bf16.gmra.mxu0 %v5421
        %v10720 = vpop.f32.mrf.mxu0
        %v10721 = vadd.f32 %v10703, %v10720
        %v10722 = vpop.f32.mrf.mxu0
        %10723 = vdwg.mxu0
        %10724 = vmatpush.bf16.msra.mxu0 %v8981
        %10725 = vmatpush.bf16.msra.mxu0 %v8977
        %10726 = vmatpush.bf16.msra.mxu0 %v8973
        %10727 = vmatpush.bf16.msra.mxu0 %v8969
        %10728 = vmatpush.bf16.msra.mxu0 %v8965
        %10729 = vmatpush.bf16.msra.mxu0 %v8961
        %10730 = vmatpush.bf16.msra.mxu0 %v8957
        %10731 = vmatpush.bf16.msra.mxu0 %v8953
        %10732 = vmatmul.bf16.gmra.mxu0 %v5398
        %v10733 = vpop.f32.mrf.mxu0
        %v10734 = vadd.f32 %v10716, %v10733
        %v10735 = vpop.f32.mrf.mxu0
        %v10736 = vadd.f32 %v10718, %v10735
        %10737 = vmatmul.bf16.gmra.mxu0 %v5422
        %v10738 = vpop.f32.mrf.mxu0
        %v10739 = vadd.f32 %v10721, %v10738
        %v10740 = vpop.f32.mrf.mxu0
        %10741 = vdwg.mxu0
        %10742 = vmatpush.bf16.msra.mxu0 %v9013
        %10743 = vmatpush.bf16.msra.mxu0 %v9009
        %10744 = vmatpush.bf16.msra.mxu0 %v9005
        %10745 = vmatpush.bf16.msra.mxu0 %v9001
        %10746 = vmatpush.bf16.msra.mxu0 %v8997
        %10747 = vmatpush.bf16.msra.mxu0 %v8993
        %10748 = vmatpush.bf16.msra.mxu0 %v8989
        %10749 = vmatpush.bf16.msra.mxu0 %v8985
        %10750 = vmatmul.bf16.gmra.mxu0 %v5399
        %v10751 = vpop.f32.mrf.mxu0
        %v10752 = vadd.f32 %v10734, %v10751
        %v10753 = vpop.f32.mrf.mxu0
        %v10754 = vadd.f32 %v10736, %v10753
        %10755 = vmatmul.bf16.gmra.mxu0 %v5423
        %v10756 = vpop.f32.mrf.mxu0
        %v10757 = vadd.f32 %v10739, %v10756
        %v10758 = vpop.f32.mrf.mxu0
        %10759 = vdwg.mxu0
        %10760 = vmatpush.bf16.msra.mxu0 %v9045
        %10761 = vmatpush.bf16.msra.mxu0 %v9041
        %10762 = vmatpush.bf16.msra.mxu0 %v9037
        %10763 = vmatpush.bf16.msra.mxu0 %v9033
        %10764 = vmatpush.bf16.msra.mxu0 %v9029
        %10765 = vmatpush.bf16.msra.mxu0 %v9025
        %10766 = vmatpush.bf16.msra.mxu0 %v9021
        %10767 = vmatpush.bf16.msra.mxu0 %v9017
        %10768 = vmatmul.bf16.gmra.mxu0 %v5400
        %v10769 = vpop.f32.mrf.mxu0
        %v10770 = vadd.f32 %v10752, %v10769
        %v10771 = vpop.f32.mrf.mxu0
        %v10772 = vadd.f32 %v10754, %v10771
        %10773 = vmatmul.bf16.gmra.mxu0 %v5424
        %v10774 = vpop.f32.mrf.mxu0
        %v10775 = vadd.f32 %v10757, %v10774
        %v10776 = vpop.f32.mrf.mxu0
        %10777 = vdwg.mxu0
        %10778 = vmatpush.bf16.msra.mxu0 %v9077
        %10779 = vmatpush.bf16.msra.mxu0 %v9073
        %10780 = vmatpush.bf16.msra.mxu0 %v9069
        %10781 = vmatpush.bf16.msra.mxu0 %v9065
        %10782 = vmatpush.bf16.msra.mxu0 %v9061
        %10783 = vmatpush.bf16.msra.mxu0 %v9057
        %10784 = vmatpush.bf16.msra.mxu0 %v9053
        %10785 = vmatpush.bf16.msra.mxu0 %v9049
        %10786 = vmatmul.bf16.gmra.mxu0 %v5401
        %v10787 = vpop.f32.mrf.mxu0
        %v10788 = vadd.f32 %v10770, %v10787
        %v10789 = vpop.f32.mrf.mxu0
        %v10790 = vadd.f32 %v10772, %v10789
        %10791 = vmatmul.bf16.gmra.mxu0 %v5425
        %v10792 = vpop.f32.mrf.mxu0
        %v10793 = vadd.f32 %v10775, %v10792
        %v10794 = vpop.f32.mrf.mxu0
        %10795 = vdwg.mxu0
        %10796 = vmatpush.bf16.msra.mxu0 %v9109
        %10797 = vmatpush.bf16.msra.mxu0 %v9105
        %10798 = vmatpush.bf16.msra.mxu0 %v9101
        %10799 = vmatpush.bf16.msra.mxu0 %v9097
        %10800 = vmatpush.bf16.msra.mxu0 %v9093
        %10801 = vmatpush.bf16.msra.mxu0 %v9089
        %10802 = vmatpush.bf16.msra.mxu0 %v9085
        %10803 = vmatpush.bf16.msra.mxu0 %v9081
        %10804 = vmatmul.bf16.gmra.mxu0 %v5402
        %v10805 = vpop.f32.mrf.mxu0
        %v10806 = vadd.f32 %v10788, %v10805
        %v10807 = vpop.f32.mrf.mxu0
        %v10808 = vadd.f32 %v10790, %v10807
        %10809 = vmatmul.bf16.gmra.mxu0 %v5426
        %v10810 = vpop.f32.mrf.mxu0
        %v10811 = vadd.f32 %v10793, %v10810
        %v10812 = vpop.f32.mrf.mxu0
        %10813 = vdwg.mxu0
        %10814 = vmatpush.bf16.msra.mxu0 %v9141
        %10815 = vmatpush.bf16.msra.mxu0 %v9137
        %10816 = vmatpush.bf16.msra.mxu0 %v9133
        %10817 = vmatpush.bf16.msra.mxu0 %v9129
        %10818 = vmatpush.bf16.msra.mxu0 %v9125
        %10819 = vmatpush.bf16.msra.mxu0 %v9121
        %10820 = vmatpush.bf16.msra.mxu0 %v9117
        %10821 = vmatpush.bf16.msra.mxu0 %v9113
        %10822 = vmatmul.bf16.gmra.mxu0 %v5403
        %v10823 = vpop.f32.mrf.mxu0
        %v10824 = vadd.f32 %v10806, %v10823
        %v10825 = vpop.f32.mrf.mxu0
        %v10826 = vadd.f32 %v10808, %v10825
        %10827 = vmatmul.bf16.gmra.mxu0 %v5427
        %v10828 = vpop.f32.mrf.mxu0
        %v10829 = vadd.f32 %v10811, %v10828
        %v10830 = vpop.f32.mrf.mxu0
        %10831 = vdwg.mxu0
        %10832 = vmatpush.bf16.msra.mxu0 %v9173
        %10833 = vmatpush.bf16.msra.mxu0 %v9169
        %10834 = vmatpush.bf16.msra.mxu0 %v9165
        %10835 = vmatpush.bf16.msra.mxu0 %v9161
        %10836 = vmatpush.bf16.msra.mxu0 %v9157
        %10837 = vmatpush.bf16.msra.mxu0 %v9153
        %10838 = vmatpush.bf16.msra.mxu0 %v9149
        %10839 = vmatpush.bf16.msra.mxu0 %v9145
        %10840 = vmatmul.bf16.gmra.mxu0 %v5404
        %v10841 = vpop.f32.mrf.mxu0
        %v10842 = vadd.f32 %v10824, %v10841
        %v10843 = vpop.f32.mrf.mxu0
        %v10844 = vadd.f32 %v10826, %v10843
        %10845 = vmatmul.bf16.gmra.mxu0 %v5428
        %v10846 = vpop.f32.mrf.mxu0
        %v10847 = vadd.f32 %v10829, %v10846
        %v10848 = vpop.f32.mrf.mxu0
        %10849 = vdwg.mxu0
        %10850 = vmatpush.bf16.msra.mxu0 %v9205
        %10851 = vmatpush.bf16.msra.mxu0 %v9201
        %10852 = vmatpush.bf16.msra.mxu0 %v9197
        %10853 = vmatpush.bf16.msra.mxu0 %v9193
        %10854 = vmatpush.bf16.msra.mxu0 %v9189
        %10855 = vmatpush.bf16.msra.mxu0 %v9185
        %10856 = vmatpush.bf16.msra.mxu0 %v9181
        %10857 = vmatpush.bf16.msra.mxu0 %v9177
        %10858 = vmatmul.bf16.gmra.mxu0 %v5405
        %v10859 = vpop.f32.mrf.mxu0
        %v10860 = vadd.f32 %v10842, %v10859
        %v10861 = vpop.f32.mrf.mxu0
        %v10862 = vadd.f32 %v10844, %v10861
        %10863 = vmatmul.bf16.gmra.mxu0 %v5429
        %v10864 = vpop.f32.mrf.mxu0
        %v10865 = vadd.f32 %v10847, %v10864
        %v10866 = vpop.f32.mrf.mxu0
        %10867 = vdwg.mxu0
        %10868 = vmatpush.bf16.msra.mxu0 %v9237
        %10869 = vmatpush.bf16.msra.mxu0 %v9233
        %10870 = vmatpush.bf16.msra.mxu0 %v9229
        %10871 = vmatpush.bf16.msra.mxu0 %v9225
        %10872 = vmatpush.bf16.msra.mxu0 %v9221
        %10873 = vmatpush.bf16.msra.mxu0 %v9217
        %10874 = vmatpush.bf16.msra.mxu0 %v9213
        %10875 = vmatpush.bf16.msra.mxu0 %v9209
        %10876 = vmatmul.bf16.gmra.mxu0 %v5406
        %v10877 = vpop.f32.mrf.mxu0
        %v10878 = vadd.f32 %v10860, %v10877
        %v10879 = vpop.f32.mrf.mxu0
        %v10880 = vadd.f32 %v10862, %v10879
        %10881 = vmatmul.bf16.gmra.mxu0 %v5430
        %v10882 = vpop.f32.mrf.mxu0
        %v10883 = vadd.f32 %v10865, %v10882
        %v10884 = vpop.f32.mrf.mxu0
        %10885 = vdwg.mxu0
        %10886 = vmatpush.bf16.msra.mxu0 %v9269
        %10887 = vmatpush.bf16.msra.mxu0 %v9265
        %10888 = vmatpush.bf16.msra.mxu0 %v9261
        %10889 = vmatpush.bf16.msra.mxu0 %v9257
        %10890 = vmatpush.bf16.msra.mxu0 %v9253
        %10891 = vmatpush.bf16.msra.mxu0 %v9249
        %10892 = vmatpush.bf16.msra.mxu0 %v9245
        %10893 = vmatpush.bf16.msra.mxu0 %v9241
        %10894 = vmatmul.bf16.gmra.mxu0 %v5407
        %v10895 = vpop.f32.mrf.mxu0
        %v10896 = vadd.f32 %v10878, %v10895
        %v10897 = vpop.f32.mrf.mxu0
        %v10898 = vadd.f32 %v10880, %v10897
        %10899 = vmatmul.bf16.gmra.mxu0 %v5431
        %v10900 = vpop.f32.mrf.mxu0
        %v10901 = vadd.f32 %v10883, %v10900
        %v10902 = vpop.f32.mrf.mxu0
        %10903 = vdwg.mxu0
        %10904 = vmatpush.bf16.msra.mxu0 %v8534
        %10905 = vmatpush.bf16.msra.mxu0 %v8530
        %10906 = vmatpush.bf16.msra.mxu0 %v8526
        %10907 = vmatpush.bf16.msra.mxu0 %v8522
        %10908 = vmatpush.bf16.msra.mxu0 %v8518
        %10909 = vmatpush.bf16.msra.mxu0 %v8514
        %10910 = vmatpush.bf16.msra.mxu0 %v8510
        %10911 = vmatpush.bf16.msra.mxu0 %v8506
        %10912 = vmatmul.bf16.gmra.mxu0 %v5384
        %v10913 = vpop.f32.mrf.mxu0
        %v10914 = vadd.f32 0.0, %v10913
        %v10915 = vpop.f32.mrf.mxu0
        %v10916 = vadd.f32 0.0, %v10915
        %10917 = vmatmul.bf16.gmra.mxu0 %v5408
        %v10918 = vpop.f32.mrf.mxu0
        %v10919 = vadd.f32 0.0, %v10918
        %v10920 = vpop.f32.mrf.mxu0
        %10921 = vdwg.mxu0
        %10922 = vmatpush.bf16.msra.mxu0 %v8566
        %10923 = vmatpush.bf16.msra.mxu0 %v8562
        %10924 = vmatpush.bf16.msra.mxu0 %v8558
        %10925 = vmatpush.bf16.msra.mxu0 %v8554
        %10926 = vmatpush.bf16.msra.mxu0 %v8550
        %10927 = vmatpush.bf16.msra.mxu0 %v8546
        %10928 = vmatpush.bf16.msra.mxu0 %v8542
        %10929 = vmatpush.bf16.msra.mxu0 %v8538
        %10930 = vmatmul.bf16.gmra.mxu0 %v5385
        %v10931 = vpop.f32.mrf.mxu0
        %v10932 = vadd.f32 %v10914, %v10931
        %v10933 = vpop.f32.mrf.mxu0
        %v10934 = vadd.f32 %v10916, %v10933
        %10935 = vmatmul.bf16.gmra.mxu0 %v5409
        %v10936 = vpop.f32.mrf.mxu0
        %v10937 = vadd.f32 %v10919, %v10936
        %v10938 = vpop.f32.mrf.mxu0
        %10939 = vdwg.mxu0
        %10940 = vmatpush.bf16.msra.mxu0 %v8598
        %10941 = vmatpush.bf16.msra.mxu0 %v8594
        %10942 = vmatpush.bf16.msra.mxu0 %v8590
        %10943 = vmatpush.bf16.msra.mxu0 %v8586
        %10944 = vmatpush.bf16.msra.mxu0 %v8582
        %10945 = vmatpush.bf16.msra.mxu0 %v8578
        %10946 = vmatpush.bf16.msra.mxu0 %v8574
        %10947 = vmatpush.bf16.msra.mxu0 %v8570
        %10948 = vmatmul.bf16.gmra.mxu0 %v5386
        %v10949 = vpop.f32.mrf.mxu0
        %v10950 = vadd.f32 %v10932, %v10949
        %v10951 = vpop.f32.mrf.mxu0
        %v10952 = vadd.f32 %v10934, %v10951
        %10953 = vmatmul.bf16.gmra.mxu0 %v5410
        %v10954 = vpop.f32.mrf.mxu0
        %v10955 = vadd.f32 %v10937, %v10954
        %v10956 = vpop.f32.mrf.mxu0
        %10957 = vdwg.mxu0
        %10958 = vmatpush.bf16.msra.mxu0 %v8630
        %10959 = vmatpush.bf16.msra.mxu0 %v8626
        %10960 = vmatpush.bf16.msra.mxu0 %v8622
        %10961 = vmatpush.bf16.msra.mxu0 %v8618
        %10962 = vmatpush.bf16.msra.mxu0 %v8614
        %10963 = vmatpush.bf16.msra.mxu0 %v8610
        %10964 = vmatpush.bf16.msra.mxu0 %v8606
        %10965 = vmatpush.bf16.msra.mxu0 %v8602
        %10966 = vmatmul.bf16.gmra.mxu0 %v5387
        %v10967 = vpop.f32.mrf.mxu0
        %v10968 = vadd.f32 %v10950, %v10967
        %v10969 = vpop.f32.mrf.mxu0
        %v10970 = vadd.f32 %v10952, %v10969
        %10971 = vmatmul.bf16.gmra.mxu0 %v5411
        %v10972 = vpop.f32.mrf.mxu0
        %v10973 = vadd.f32 %v10955, %v10972
        %v10974 = vpop.f32.mrf.mxu0
        %10975 = vdwg.mxu0
        %10976 = vmatpush.bf16.msra.mxu0 %v8662
        %10977 = vmatpush.bf16.msra.mxu0 %v8658
        %10978 = vmatpush.bf16.msra.mxu0 %v8654
        %10979 = vmatpush.bf16.msra.mxu0 %v8650
        %10980 = vmatpush.bf16.msra.mxu0 %v8646
        %10981 = vmatpush.bf16.msra.mxu0 %v8642
        %10982 = vmatpush.bf16.msra.mxu0 %v8638
        %10983 = vmatpush.bf16.msra.mxu0 %v8634
        %10984 = vmatmul.bf16.gmra.mxu0 %v5388
        %v10985 = vpop.f32.mrf.mxu0
        %v10986 = vadd.f32 %v10968, %v10985
        %v10987 = vpop.f32.mrf.mxu0
        %v10988 = vadd.f32 %v10970, %v10987
        %10989 = vmatmul.bf16.gmra.mxu0 %v5412
        %v10990 = vpop.f32.mrf.mxu0
        %v10991 = vadd.f32 %v10973, %v10990
        %v10992 = vpop.f32.mrf.mxu0
        %10993 = vdwg.mxu0
        %10994 = vmatpush.bf16.msra.mxu0 %v8694
        %10995 = vmatpush.bf16.msra.mxu0 %v8690
        %10996 = vmatpush.bf16.msra.mxu0 %v8686
        %10997 = vmatpush.bf16.msra.mxu0 %v8682
        %10998 = vmatpush.bf16.msra.mxu0 %v8678
        %10999 = vmatpush.bf16.msra.mxu0 %v8674
        %11000 = vmatpush.bf16.msra.mxu0 %v8670
        %11001 = vmatpush.bf16.msra.mxu0 %v8666
        %11002 = vmatmul.bf16.gmra.mxu0 %v5389
        %v11003 = vpop.f32.mrf.mxu0
        %v11004 = vadd.f32 %v10986, %v11003
        %v11005 = vpop.f32.mrf.mxu0
        %v11006 = vadd.f32 %v10988, %v11005
        %11007 = vmatmul.bf16.gmra.mxu0 %v5413
        %v11008 = vpop.f32.mrf.mxu0
        %v11009 = vadd.f32 %v10991, %v11008
        %v11010 = vpop.f32.mrf.mxu0
        %11011 = vdwg.mxu0
        %11012 = vmatpush.bf16.msra.mxu0 %v8726
        %11013 = vmatpush.bf16.msra.mxu0 %v8722
        %11014 = vmatpush.bf16.msra.mxu0 %v8718
        %11015 = vmatpush.bf16.msra.mxu0 %v8714
        %11016 = vmatpush.bf16.msra.mxu0 %v8710
        %11017 = vmatpush.bf16.msra.mxu0 %v8706
        %11018 = vmatpush.bf16.msra.mxu0 %v8702
        %11019 = vmatpush.bf16.msra.mxu0 %v8698
        %11020 = vmatmul.bf16.gmra.mxu0 %v5390
        %v11021 = vpop.f32.mrf.mxu0
        %v11022 = vadd.f32 %v11004, %v11021
        %v11023 = vpop.f32.mrf.mxu0
        %v11024 = vadd.f32 %v11006, %v11023
        %11025 = vmatmul.bf16.gmra.mxu0 %v5414
        %v11026 = vpop.f32.mrf.mxu0
        %v11027 = vadd.f32 %v11009, %v11026
        %v11028 = vpop.f32.mrf.mxu0
        %11029 = vdwg.mxu0
        %11030 = vmatpush.bf16.msra.mxu0 %v8758
        %11031 = vmatpush.bf16.msra.mxu0 %v8754
        %11032 = vmatpush.bf16.msra.mxu0 %v8750
        %11033 = vmatpush.bf16.msra.mxu0 %v8746
        %11034 = vmatpush.bf16.msra.mxu0 %v8742
        %11035 = vmatpush.bf16.msra.mxu0 %v8738
        %11036 = vmatpush.bf16.msra.mxu0 %v8734
        %11037 = vmatpush.bf16.msra.mxu0 %v8730
        %11038 = vmatmul.bf16.gmra.mxu0 %v5391
        %v11039 = vpop.f32.mrf.mxu0
        %v11040 = vadd.f32 %v11022, %v11039
        %v11041 = vpop.f32.mrf.mxu0
        %v11042 = vadd.f32 %v11024, %v11041
        %11043 = vmatmul.bf16.gmra.mxu0 %v5415
        %v11044 = vpop.f32.mrf.mxu0
        %v11045 = vadd.f32 %v11027, %v11044
        %v11046 = vpop.f32.mrf.mxu0
        %11047 = vdwg.mxu0
        %11048 = vmatpush.bf16.msra.mxu0 %v8790
        %11049 = vmatpush.bf16.msra.mxu0 %v8786
        %11050 = vmatpush.bf16.msra.mxu0 %v8782
        %11051 = vmatpush.bf16.msra.mxu0 %v8778
        %11052 = vmatpush.bf16.msra.mxu0 %v8774
        %11053 = vmatpush.bf16.msra.mxu0 %v8770
        %11054 = vmatpush.bf16.msra.mxu0 %v8766
        %11055 = vmatpush.bf16.msra.mxu0 %v8762
        %11056 = vmatmul.bf16.gmra.mxu0 %v5392
        %v11057 = vpop.f32.mrf.mxu0
        %v11058 = vadd.f32 %v11040, %v11057
        %v11059 = vpop.f32.mrf.mxu0
        %v11060 = vadd.f32 %v11042, %v11059
        %11061 = vmatmul.bf16.gmra.mxu0 %v5416
        %v11062 = vpop.f32.mrf.mxu0
        %v11063 = vadd.f32 %v11045, %v11062
        %v11064 = vpop.f32.mrf.mxu0
        %11065 = vdwg.mxu0
        %11066 = vmatpush.bf16.msra.mxu0 %v8822
        %11067 = vmatpush.bf16.msra.mxu0 %v8818
        %11068 = vmatpush.bf16.msra.mxu0 %v8814
        %11069 = vmatpush.bf16.msra.mxu0 %v8810
        %11070 = vmatpush.bf16.msra.mxu0 %v8806
        %11071 = vmatpush.bf16.msra.mxu0 %v8802
        %11072 = vmatpush.bf16.msra.mxu0 %v8798
        %11073 = vmatpush.bf16.msra.mxu0 %v8794
        %11074 = vmatmul.bf16.gmra.mxu0 %v5393
        %v11075 = vpop.f32.mrf.mxu0
        %v11076 = vadd.f32 %v11058, %v11075
        %v11077 = vpop.f32.mrf.mxu0
        %v11078 = vadd.f32 %v11060, %v11077
        %11079 = vmatmul.bf16.gmra.mxu0 %v5417
        %v11080 = vpop.f32.mrf.mxu0
        %v11081 = vadd.f32 %v11063, %v11080
        %v11082 = vpop.f32.mrf.mxu0
        %11083 = vdwg.mxu0
        %11084 = vmatpush.bf16.msra.mxu0 %v8854
        %11085 = vmatpush.bf16.msra.mxu0 %v8850
        %11086 = vmatpush.bf16.msra.mxu0 %v8846
        %11087 = vmatpush.bf16.msra.mxu0 %v8842
        %11088 = vmatpush.bf16.msra.mxu0 %v8838
        %11089 = vmatpush.bf16.msra.mxu0 %v8834
        %11090 = vmatpush.bf16.msra.mxu0 %v8830
        %11091 = vmatpush.bf16.msra.mxu0 %v8826
        %11092 = vmatmul.bf16.gmra.mxu0 %v5394
        %v11093 = vpop.f32.mrf.mxu0
        %v11094 = vadd.f32 %v11076, %v11093
        %v11095 = vpop.f32.mrf.mxu0
        %v11096 = vadd.f32 %v11078, %v11095
        %11097 = vmatmul.bf16.gmra.mxu0 %v5418
        %v11098 = vpop.f32.mrf.mxu0
        %v11099 = vadd.f32 %v11081, %v11098
        %v11100 = vpop.f32.mrf.mxu0
        %11101 = vdwg.mxu0
        %11102 = vmatpush.bf16.msra.mxu0 %v8886
        %11103 = vmatpush.bf16.msra.mxu0 %v8882
        %11104 = vmatpush.bf16.msra.mxu0 %v8878
        %11105 = vmatpush.bf16.msra.mxu0 %v8874
        %11106 = vmatpush.bf16.msra.mxu0 %v8870
        %11107 = vmatpush.bf16.msra.mxu0 %v8866
        %11108 = vmatpush.bf16.msra.mxu0 %v8862
        %11109 = vmatpush.bf16.msra.mxu0 %v8858
        %11110 = vmatmul.bf16.gmra.mxu0 %v5395
        %v11111 = vpop.f32.mrf.mxu0
        %v11112 = vadd.f32 %v11094, %v11111
        %v11113 = vpop.f32.mrf.mxu0
        %v11114 = vadd.f32 %v11096, %v11113
        %11115 = vmatmul.bf16.gmra.mxu0 %v5419
        %v11116 = vpop.f32.mrf.mxu0
        %v11117 = vadd.f32 %v11099, %v11116
        %v11118 = vpop.f32.mrf.mxu0
        %11119 = vdwg.mxu0
        %11120 = vmatpush.bf16.msra.mxu0 %v8918
        %11121 = vmatpush.bf16.msra.mxu0 %v8914
        %11122 = vmatpush.bf16.msra.mxu0 %v8910
        %11123 = vmatpush.bf16.msra.mxu0 %v8906
        %11124 = vmatpush.bf16.msra.mxu0 %v8902
        %11125 = vmatpush.bf16.msra.mxu0 %v8898
        %11126 = vmatpush.bf16.msra.mxu0 %v8894
        %11127 = vmatpush.bf16.msra.mxu0 %v8890
        %11128 = vmatmul.bf16.gmra.mxu0 %v5396
        %v11129 = vpop.f32.mrf.mxu0
        %v11130 = vadd.f32 %v11112, %v11129
        %v11131 = vpop.f32.mrf.mxu0
        %v11132 = vadd.f32 %v11114, %v11131
        %11133 = vmatmul.bf16.gmra.mxu0 %v5420
        %v11134 = vpop.f32.mrf.mxu0
        %v11135 = vadd.f32 %v11117, %v11134
        %v11136 = vpop.f32.mrf.mxu0
        %11137 = vdwg.mxu0
        %11138 = vmatpush.bf16.msra.mxu0 %v8950
        %11139 = vmatpush.bf16.msra.mxu0 %v8946
        %11140 = vmatpush.bf16.msra.mxu0 %v8942
        %11141 = vmatpush.bf16.msra.mxu0 %v8938
        %11142 = vmatpush.bf16.msra.mxu0 %v8934
        %11143 = vmatpush.bf16.msra.mxu0 %v8930
        %11144 = vmatpush.bf16.msra.mxu0 %v8926
        %11145 = vmatpush.bf16.msra.mxu0 %v8922
        %11146 = vmatmul.bf16.gmra.mxu0 %v5397
        %v11147 = vpop.f32.mrf.mxu0
        %v11148 = vadd.f32 %v11130, %v11147
        %v11149 = vpop.f32.mrf.mxu0
        %v11150 = vadd.f32 %v11132, %v11149
        %11151 = vmatmul.bf16.gmra.mxu0 %v5421
        %v11152 = vpop.f32.mrf.mxu0
        %v11153 = vadd.f32 %v11135, %v11152
        %v11154 = vpop.f32.mrf.mxu0
        %11155 = vdwg.mxu0
        %11156 = vmatpush.bf16.msra.mxu0 %v8982
        %11157 = vmatpush.bf16.msra.mxu0 %v8978
        %11158 = vmatpush.bf16.msra.mxu0 %v8974
        %11159 = vmatpush.bf16.msra.mxu0 %v8970
        %11160 = vmatpush.bf16.msra.mxu0 %v8966
        %11161 = vmatpush.bf16.msra.mxu0 %v8962
        %11162 = vmatpush.bf16.msra.mxu0 %v8958
        %11163 = vmatpush.bf16.msra.mxu0 %v8954
        %11164 = vmatmul.bf16.gmra.mxu0 %v5398
        %v11165 = vpop.f32.mrf.mxu0
        %v11166 = vadd.f32 %v11148, %v11165
        %v11167 = vpop.f32.mrf.mxu0
        %v11168 = vadd.f32 %v11150, %v11167
        %11169 = vmatmul.bf16.gmra.mxu0 %v5422
        %v11170 = vpop.f32.mrf.mxu0
        %v11171 = vadd.f32 %v11153, %v11170
        %v11172 = vpop.f32.mrf.mxu0
        %11173 = vdwg.mxu0
        %11174 = vmatpush.bf16.msra.mxu0 %v9014
        %11175 = vmatpush.bf16.msra.mxu0 %v9010
        %11176 = vmatpush.bf16.msra.mxu0 %v9006
        %11177 = vmatpush.bf16.msra.mxu0 %v9002
        %11178 = vmatpush.bf16.msra.mxu0 %v8998
        %11179 = vmatpush.bf16.msra.mxu0 %v8994
        %11180 = vmatpush.bf16.msra.mxu0 %v8990
        %11181 = vmatpush.bf16.msra.mxu0 %v8986
        %11182 = vmatmul.bf16.gmra.mxu0 %v5399
        %v11183 = vpop.f32.mrf.mxu0
        %v11184 = vadd.f32 %v11166, %v11183
        %v11185 = vpop.f32.mrf.mxu0
        %v11186 = vadd.f32 %v11168, %v11185
        %11187 = vmatmul.bf16.gmra.mxu0 %v5423
        %v11188 = vpop.f32.mrf.mxu0
        %v11189 = vadd.f32 %v11171, %v11188
        %v11190 = vpop.f32.mrf.mxu0
        %11191 = vdwg.mxu0
        %11192 = vmatpush.bf16.msra.mxu0 %v9046
        %11193 = vmatpush.bf16.msra.mxu0 %v9042
        %11194 = vmatpush.bf16.msra.mxu0 %v9038
        %11195 = vmatpush.bf16.msra.mxu0 %v9034
        %11196 = vmatpush.bf16.msra.mxu0 %v9030
        %11197 = vmatpush.bf16.msra.mxu0 %v9026
        %11198 = vmatpush.bf16.msra.mxu0 %v9022
        %11199 = vmatpush.bf16.msra.mxu0 %v9018
        %11200 = vmatmul.bf16.gmra.mxu0 %v5400
        %v11201 = vpop.f32.mrf.mxu0
        %v11202 = vadd.f32 %v11184, %v11201
        %v11203 = vpop.f32.mrf.mxu0
        %v11204 = vadd.f32 %v11186, %v11203
        %11205 = vmatmul.bf16.gmra.mxu0 %v5424
        %v11206 = vpop.f32.mrf.mxu0
        %v11207 = vadd.f32 %v11189, %v11206
        %v11208 = vpop.f32.mrf.mxu0
        %11209 = vdwg.mxu0
        %11210 = vmatpush.bf16.msra.mxu0 %v9078
        %11211 = vmatpush.bf16.msra.mxu0 %v9074
        %11212 = vmatpush.bf16.msra.mxu0 %v9070
        %11213 = vmatpush.bf16.msra.mxu0 %v9066
        %11214 = vmatpush.bf16.msra.mxu0 %v9062
        %11215 = vmatpush.bf16.msra.mxu0 %v9058
        %11216 = vmatpush.bf16.msra.mxu0 %v9054
        %11217 = vmatpush.bf16.msra.mxu0 %v9050
        %11218 = vmatmul.bf16.gmra.mxu0 %v5401
        %v11219 = vpop.f32.mrf.mxu0
        %v11220 = vadd.f32 %v11202, %v11219
        %v11221 = vpop.f32.mrf.mxu0
        %v11222 = vadd.f32 %v11204, %v11221
        %11223 = vmatmul.bf16.gmra.mxu0 %v5425
        %v11224 = vpop.f32.mrf.mxu0
        %v11225 = vadd.f32 %v11207, %v11224
        %v11226 = vpop.f32.mrf.mxu0
        %11227 = vdwg.mxu0
        %11228 = vmatpush.bf16.msra.mxu0 %v9110
        %11229 = vmatpush.bf16.msra.mxu0 %v9106
        %11230 = vmatpush.bf16.msra.mxu0 %v9102
        %11231 = vmatpush.bf16.msra.mxu0 %v9098
        %11232 = vmatpush.bf16.msra.mxu0 %v9094
        %11233 = vmatpush.bf16.msra.mxu0 %v9090
        %11234 = vmatpush.bf16.msra.mxu0 %v9086
        %11235 = vmatpush.bf16.msra.mxu0 %v9082
        %11236 = vmatmul.bf16.gmra.mxu0 %v5402
        %v11237 = vpop.f32.mrf.mxu0
        %v11238 = vadd.f32 %v11220, %v11237
        %v11239 = vpop.f32.mrf.mxu0
        %v11240 = vadd.f32 %v11222, %v11239
        %11241 = vmatmul.bf16.gmra.mxu0 %v5426
        %v11242 = vpop.f32.mrf.mxu0
        %v11243 = vadd.f32 %v11225, %v11242
        %v11244 = vpop.f32.mrf.mxu0
        %11245 = vdwg.mxu0
        %11246 = vmatpush.bf16.msra.mxu0 %v9142
        %11247 = vmatpush.bf16.msra.mxu0 %v9138
        %11248 = vmatpush.bf16.msra.mxu0 %v9134
        %11249 = vmatpush.bf16.msra.mxu0 %v9130
        %11250 = vmatpush.bf16.msra.mxu0 %v9126
        %11251 = vmatpush.bf16.msra.mxu0 %v9122
        %11252 = vmatpush.bf16.msra.mxu0 %v9118
        %11253 = vmatpush.bf16.msra.mxu0 %v9114
        %11254 = vmatmul.bf16.gmra.mxu0 %v5403
        %v11255 = vpop.f32.mrf.mxu0
        %v11256 = vadd.f32 %v11238, %v11255
        %v11257 = vpop.f32.mrf.mxu0
        %v11258 = vadd.f32 %v11240, %v11257
        %11259 = vmatmul.bf16.gmra.mxu0 %v5427
        %v11260 = vpop.f32.mrf.mxu0
        %v11261 = vadd.f32 %v11243, %v11260
        %v11262 = vpop.f32.mrf.mxu0
        %11263 = vdwg.mxu0
        %11264 = vmatpush.bf16.msra.mxu0 %v9174
        %11265 = vmatpush.bf16.msra.mxu0 %v9170
        %11266 = vmatpush.bf16.msra.mxu0 %v9166
        %11267 = vmatpush.bf16.msra.mxu0 %v9162
        %11268 = vmatpush.bf16.msra.mxu0 %v9158
        %11269 = vmatpush.bf16.msra.mxu0 %v9154
        %11270 = vmatpush.bf16.msra.mxu0 %v9150
        %11271 = vmatpush.bf16.msra.mxu0 %v9146
        %11272 = vmatmul.bf16.gmra.mxu0 %v5404
        %v11273 = vpop.f32.mrf.mxu0
        %v11274 = vadd.f32 %v11256, %v11273
        %v11275 = vpop.f32.mrf.mxu0
        %v11276 = vadd.f32 %v11258, %v11275
        %11277 = vmatmul.bf16.gmra.mxu0 %v5428
        %v11278 = vpop.f32.mrf.mxu0
        %v11279 = vadd.f32 %v11261, %v11278
        %v11280 = vpop.f32.mrf.mxu0
        %11281 = vdwg.mxu0
        %11282 = vmatpush.bf16.msra.mxu0 %v9206
        %11283 = vmatpush.bf16.msra.mxu0 %v9202
        %11284 = vmatpush.bf16.msra.mxu0 %v9198
        %11285 = vmatpush.bf16.msra.mxu0 %v9194
        %11286 = vmatpush.bf16.msra.mxu0 %v9190
        %11287 = vmatpush.bf16.msra.mxu0 %v9186
        %11288 = vmatpush.bf16.msra.mxu0 %v9182
        %11289 = vmatpush.bf16.msra.mxu0 %v9178
        %11290 = vmatmul.bf16.gmra.mxu0 %v5405
        %v11291 = vpop.f32.mrf.mxu0
        %v11292 = vadd.f32 %v11274, %v11291
        %v11293 = vpop.f32.mrf.mxu0
        %v11294 = vadd.f32 %v11276, %v11293
        %11295 = vmatmul.bf16.gmra.mxu0 %v5429
        %v11296 = vpop.f32.mrf.mxu0
        %v11297 = vadd.f32 %v11279, %v11296
        %v11298 = vpop.f32.mrf.mxu0
        %11299 = vdwg.mxu0
        %11300 = vmatpush.bf16.msra.mxu0 %v9238
        %11301 = vmatpush.bf16.msra.mxu0 %v9234
        %11302 = vmatpush.bf16.msra.mxu0 %v9230
        %11303 = vmatpush.bf16.msra.mxu0 %v9226
        %11304 = vmatpush.bf16.msra.mxu0 %v9222
        %11305 = vmatpush.bf16.msra.mxu0 %v9218
        %11306 = vmatpush.bf16.msra.mxu0 %v9214
        %11307 = vmatpush.bf16.msra.mxu0 %v9210
        %11308 = vmatmul.bf16.gmra.mxu0 %v5406
        %v11309 = vpop.f32.mrf.mxu0
        %v11310 = vadd.f32 %v11292, %v11309
        %v11311 = vpop.f32.mrf.mxu0
        %v11312 = vadd.f32 %v11294, %v11311
        %11313 = vmatmul.bf16.gmra.mxu0 %v5430
        %v11314 = vpop.f32.mrf.mxu0
        %v11315 = vadd.f32 %v11297, %v11314
        %v11316 = vpop.f32.mrf.mxu0
        %11317 = vdwg.mxu0
        %11318 = vmatpush.bf16.msra.mxu0 %v9270
        %11319 = vmatpush.bf16.msra.mxu0 %v9266
        %11320 = vmatpush.bf16.msra.mxu0 %v9262
        %11321 = vmatpush.bf16.msra.mxu0 %v9258
        %11322 = vmatpush.bf16.msra.mxu0 %v9254
        %11323 = vmatpush.bf16.msra.mxu0 %v9250
        %11324 = vmatpush.bf16.msra.mxu0 %v9246
        %11325 = vmatpush.bf16.msra.mxu0 %v9242
        %11326 = vmatmul.bf16.gmra.mxu0 %v5407
        %v11327 = vpop.f32.mrf.mxu0
        %v11328 = vadd.f32 %v11310, %v11327
        %v11329 = vpop.f32.mrf.mxu0
        %v11330 = vadd.f32 %v11312, %v11329
        %11331 = vmatmul.bf16.gmra.mxu0 %v5431
        %v11332 = vpop.f32.mrf.mxu0
        %v11333 = vadd.f32 %v11315, %v11332
        %v11334 = vpop.f32.mrf.mxu0
        %11335 = vdwg.mxu0
        %11336 = vmatpush.bf16.msra.mxu0 %v8535
        %11337 = vmatpush.bf16.msra.mxu0 %v8531
        %11338 = vmatpush.bf16.msra.mxu0 %v8527
        %11339 = vmatpush.bf16.msra.mxu0 %v8523
        %11340 = vmatpush.bf16.msra.mxu0 %v8519
        %11341 = vmatpush.bf16.msra.mxu0 %v8515
        %11342 = vmatpush.bf16.msra.mxu0 %v8511
        %11343 = vmatpush.bf16.msra.mxu0 %v8507
        %11344 = vmatmul.bf16.gmra.mxu0 %v5384
        %v11345 = vpop.f32.mrf.mxu0
        %v11346 = vadd.f32 0.0, %v11345
        %v11347 = vpop.f32.mrf.mxu0
        %v11348 = vadd.f32 0.0, %v11347
        %11349 = vmatmul.bf16.gmra.mxu0 %v5408
        %v11350 = vpop.f32.mrf.mxu0
        %v11351 = vadd.f32 0.0, %v11350
        %v11352 = vpop.f32.mrf.mxu0
        %11353 = vdwg.mxu0
        %11354 = vmatpush.bf16.msra.mxu0 %v8567
        %11355 = vmatpush.bf16.msra.mxu0 %v8563
        %11356 = vmatpush.bf16.msra.mxu0 %v8559
        %11357 = vmatpush.bf16.msra.mxu0 %v8555
        %11358 = vmatpush.bf16.msra.mxu0 %v8551
        %11359 = vmatpush.bf16.msra.mxu0 %v8547
        %11360 = vmatpush.bf16.msra.mxu0 %v8543
        %11361 = vmatpush.bf16.msra.mxu0 %v8539
        %11362 = vmatmul.bf16.gmra.mxu0 %v5385
        %v11363 = vpop.f32.mrf.mxu0
        %v11364 = vadd.f32 %v11346, %v11363
        %v11365 = vpop.f32.mrf.mxu0
        %v11366 = vadd.f32 %v11348, %v11365
        %11367 = vmatmul.bf16.gmra.mxu0 %v5409
        %v11368 = vpop.f32.mrf.mxu0
        %v11369 = vadd.f32 %v11351, %v11368
        %v11370 = vpop.f32.mrf.mxu0
        %11371 = vdwg.mxu0
        %11372 = vmatpush.bf16.msra.mxu0 %v8599
        %11373 = vmatpush.bf16.msra.mxu0 %v8595
        %11374 = vmatpush.bf16.msra.mxu0 %v8591
        %11375 = vmatpush.bf16.msra.mxu0 %v8587
        %11376 = vmatpush.bf16.msra.mxu0 %v8583
        %11377 = vmatpush.bf16.msra.mxu0 %v8579
        %11378 = vmatpush.bf16.msra.mxu0 %v8575
        %11379 = vmatpush.bf16.msra.mxu0 %v8571
        %11380 = vmatmul.bf16.gmra.mxu0 %v5386
        %v11381 = vpop.f32.mrf.mxu0
        %v11382 = vadd.f32 %v11364, %v11381
        %v11383 = vpop.f32.mrf.mxu0
        %v11384 = vadd.f32 %v11366, %v11383
        %11385 = vmatmul.bf16.gmra.mxu0 %v5410
        %v11386 = vpop.f32.mrf.mxu0
        %v11387 = vadd.f32 %v11369, %v11386
        %v11388 = vpop.f32.mrf.mxu0
        %11389 = vdwg.mxu0
        %11390 = vmatpush.bf16.msra.mxu0 %v8631
        %11391 = vmatpush.bf16.msra.mxu0 %v8627
        %11392 = vmatpush.bf16.msra.mxu0 %v8623
        %11393 = vmatpush.bf16.msra.mxu0 %v8619
        %11394 = vmatpush.bf16.msra.mxu0 %v8615
        %11395 = vmatpush.bf16.msra.mxu0 %v8611
        %11396 = vmatpush.bf16.msra.mxu0 %v8607
        %11397 = vmatpush.bf16.msra.mxu0 %v8603
        %11398 = vmatmul.bf16.gmra.mxu0 %v5387
        %v11399 = vpop.f32.mrf.mxu0
        %v11400 = vadd.f32 %v11382, %v11399
        %v11401 = vpop.f32.mrf.mxu0
        %v11402 = vadd.f32 %v11384, %v11401
        %11403 = vmatmul.bf16.gmra.mxu0 %v5411
        %v11404 = vpop.f32.mrf.mxu0
        %v11405 = vadd.f32 %v11387, %v11404
        %v11406 = vpop.f32.mrf.mxu0
        %11407 = vdwg.mxu0
        %11408 = vmatpush.bf16.msra.mxu0 %v8663
        %11409 = vmatpush.bf16.msra.mxu0 %v8659
        %11410 = vmatpush.bf16.msra.mxu0 %v8655
        %11411 = vmatpush.bf16.msra.mxu0 %v8651
        %11412 = vmatpush.bf16.msra.mxu0 %v8647
        %11413 = vmatpush.bf16.msra.mxu0 %v8643
        %11414 = vmatpush.bf16.msra.mxu0 %v8639
        %11415 = vmatpush.bf16.msra.mxu0 %v8635
        %11416 = vmatmul.bf16.gmra.mxu0 %v5388
        %v11417 = vpop.f32.mrf.mxu0
        %v11418 = vadd.f32 %v11400, %v11417
        %v11419 = vpop.f32.mrf.mxu0
        %v11420 = vadd.f32 %v11402, %v11419
        %11421 = vmatmul.bf16.gmra.mxu0 %v5412
        %v11422 = vpop.f32.mrf.mxu0
        %v11423 = vadd.f32 %v11405, %v11422
        %v11424 = vpop.f32.mrf.mxu0
        %11425 = vdwg.mxu0
        %11426 = vmatpush.bf16.msra.mxu0 %v8695
        %11427 = vmatpush.bf16.msra.mxu0 %v8691
        %11428 = vmatpush.bf16.msra.mxu0 %v8687
        %11429 = vmatpush.bf16.msra.mxu0 %v8683
        %11430 = vmatpush.bf16.msra.mxu0 %v8679
        %11431 = vmatpush.bf16.msra.mxu0 %v8675
        %11432 = vmatpush.bf16.msra.mxu0 %v8671
        %11433 = vmatpush.bf16.msra.mxu0 %v8667
        %11434 = vmatmul.bf16.gmra.mxu0 %v5389
        %v11435 = vpop.f32.mrf.mxu0
        %v11436 = vadd.f32 %v11418, %v11435
        %v11437 = vpop.f32.mrf.mxu0
        %v11438 = vadd.f32 %v11420, %v11437
        %11439 = vmatmul.bf16.gmra.mxu0 %v5413
        %v11440 = vpop.f32.mrf.mxu0
        %v11441 = vadd.f32 %v11423, %v11440
        %v11442 = vpop.f32.mrf.mxu0
        %11443 = vdwg.mxu0
        %11444 = vmatpush.bf16.msra.mxu0 %v8727
        %11445 = vmatpush.bf16.msra.mxu0 %v8723
        %11446 = vmatpush.bf16.msra.mxu0 %v8719
        %11447 = vmatpush.bf16.msra.mxu0 %v8715
        %11448 = vmatpush.bf16.msra.mxu0 %v8711
        %11449 = vmatpush.bf16.msra.mxu0 %v8707
        %11450 = vmatpush.bf16.msra.mxu0 %v8703
        %11451 = vmatpush.bf16.msra.mxu0 %v8699
        %11452 = vmatmul.bf16.gmra.mxu0 %v5390
        %v11453 = vpop.f32.mrf.mxu0
        %v11454 = vadd.f32 %v11436, %v11453
        %v11455 = vpop.f32.mrf.mxu0
        %v11456 = vadd.f32 %v11438, %v11455
        %11457 = vmatmul.bf16.gmra.mxu0 %v5414
        %v11458 = vpop.f32.mrf.mxu0
        %v11459 = vadd.f32 %v11441, %v11458
        %v11460 = vpop.f32.mrf.mxu0
        %11461 = vdwg.mxu0
        %11462 = vmatpush.bf16.msra.mxu0 %v8759
        %11463 = vmatpush.bf16.msra.mxu0 %v8755
        %11464 = vmatpush.bf16.msra.mxu0 %v8751
        %11465 = vmatpush.bf16.msra.mxu0 %v8747
        %11466 = vmatpush.bf16.msra.mxu0 %v8743
        %11467 = vmatpush.bf16.msra.mxu0 %v8739
        %11468 = vmatpush.bf16.msra.mxu0 %v8735
        %11469 = vmatpush.bf16.msra.mxu0 %v8731
        %11470 = vmatmul.bf16.gmra.mxu0 %v5391
        %v11471 = vpop.f32.mrf.mxu0
        %v11472 = vadd.f32 %v11454, %v11471
        %v11473 = vpop.f32.mrf.mxu0
        %v11474 = vadd.f32 %v11456, %v11473
        %11475 = vmatmul.bf16.gmra.mxu0 %v5415
        %v11476 = vpop.f32.mrf.mxu0
        %v11477 = vadd.f32 %v11459, %v11476
        %v11478 = vpop.f32.mrf.mxu0
        %11479 = vdwg.mxu0
        %11480 = vmatpush.bf16.msra.mxu0 %v8791
        %11481 = vmatpush.bf16.msra.mxu0 %v8787
        %11482 = vmatpush.bf16.msra.mxu0 %v8783
        %11483 = vmatpush.bf16.msra.mxu0 %v8779
        %11484 = vmatpush.bf16.msra.mxu0 %v8775
        %11485 = vmatpush.bf16.msra.mxu0 %v8771
        %11486 = vmatpush.bf16.msra.mxu0 %v8767
        %11487 = vmatpush.bf16.msra.mxu0 %v8763
        %11488 = vmatmul.bf16.gmra.mxu0 %v5392
        %v11489 = vpop.f32.mrf.mxu0
        %v11490 = vadd.f32 %v11472, %v11489
        %v11491 = vpop.f32.mrf.mxu0
        %v11492 = vadd.f32 %v11474, %v11491
        %11493 = vmatmul.bf16.gmra.mxu0 %v5416
        %v11494 = vpop.f32.mrf.mxu0
        %v11495 = vadd.f32 %v11477, %v11494
        %v11496 = vpop.f32.mrf.mxu0
        %11497 = vdwg.mxu0
        %11498 = vmatpush.bf16.msra.mxu0 %v8823
        %11499 = vmatpush.bf16.msra.mxu0 %v8819
        %11500 = vmatpush.bf16.msra.mxu0 %v8815
        %11501 = vmatpush.bf16.msra.mxu0 %v8811
        %11502 = vmatpush.bf16.msra.mxu0 %v8807
        %11503 = vmatpush.bf16.msra.mxu0 %v8803
        %11504 = vmatpush.bf16.msra.mxu0 %v8799
        %11505 = vmatpush.bf16.msra.mxu0 %v8795
        %11506 = vmatmul.bf16.gmra.mxu0 %v5393
        %v11507 = vpop.f32.mrf.mxu0
        %v11508 = vadd.f32 %v11490, %v11507
        %v11509 = vpop.f32.mrf.mxu0
        %v11510 = vadd.f32 %v11492, %v11509
        %11511 = vmatmul.bf16.gmra.mxu0 %v5417
        %v11512 = vpop.f32.mrf.mxu0
        %v11513 = vadd.f32 %v11495, %v11512
        %v11514 = vpop.f32.mrf.mxu0
        %11515 = vdwg.mxu0
        %11516 = vmatpush.bf16.msra.mxu0 %v8855
        %11517 = vmatpush.bf16.msra.mxu0 %v8851
        %11518 = vmatpush.bf16.msra.mxu0 %v8847
        %11519 = vmatpush.bf16.msra.mxu0 %v8843
        %11520 = vmatpush.bf16.msra.mxu0 %v8839
        %11521 = vmatpush.bf16.msra.mxu0 %v8835
        %11522 = vmatpush.bf16.msra.mxu0 %v8831
        %11523 = vmatpush.bf16.msra.mxu0 %v8827
        %11524 = vmatmul.bf16.gmra.mxu0 %v5394
        %v11525 = vpop.f32.mrf.mxu0
        %v11526 = vadd.f32 %v11508, %v11525
        %v11527 = vpop.f32.mrf.mxu0
        %v11528 = vadd.f32 %v11510, %v11527
        %11529 = vmatmul.bf16.gmra.mxu0 %v5418
        %v11530 = vpop.f32.mrf.mxu0
        %v11531 = vadd.f32 %v11513, %v11530
        %v11532 = vpop.f32.mrf.mxu0
        %11533 = vdwg.mxu0
        %11534 = vmatpush.bf16.msra.mxu0 %v8887
        %11535 = vmatpush.bf16.msra.mxu0 %v8883
        %11536 = vmatpush.bf16.msra.mxu0 %v8879
        %11537 = vmatpush.bf16.msra.mxu0 %v8875
        %11538 = vmatpush.bf16.msra.mxu0 %v8871
        %11539 = vmatpush.bf16.msra.mxu0 %v8867
        %11540 = vmatpush.bf16.msra.mxu0 %v8863
        %11541 = vmatpush.bf16.msra.mxu0 %v8859
        %11542 = vmatmul.bf16.gmra.mxu0 %v5395
        %v11543 = vpop.f32.mrf.mxu0
        %v11544 = vadd.f32 %v11526, %v11543
        %v11545 = vpop.f32.mrf.mxu0
        %v11546 = vadd.f32 %v11528, %v11545
        %11547 = vmatmul.bf16.gmra.mxu0 %v5419
        %v11548 = vpop.f32.mrf.mxu0
        %v11549 = vadd.f32 %v11531, %v11548
        %v11550 = vpop.f32.mrf.mxu0
        %11551 = vdwg.mxu0
        %11552 = vmatpush.bf16.msra.mxu0 %v8919
        %11553 = vmatpush.bf16.msra.mxu0 %v8915
        %11554 = vmatpush.bf16.msra.mxu0 %v8911
        %11555 = vmatpush.bf16.msra.mxu0 %v8907
        %11556 = vmatpush.bf16.msra.mxu0 %v8903
        %11557 = vmatpush.bf16.msra.mxu0 %v8899
        %11558 = vmatpush.bf16.msra.mxu0 %v8895
        %11559 = vmatpush.bf16.msra.mxu0 %v8891
        %11560 = vmatmul.bf16.gmra.mxu0 %v5396
        %v11561 = vpop.f32.mrf.mxu0
        %v11562 = vadd.f32 %v11544, %v11561
        %v11563 = vpop.f32.mrf.mxu0
        %v11564 = vadd.f32 %v11546, %v11563
        %11565 = vmatmul.bf16.gmra.mxu0 %v5420
        %v11566 = vpop.f32.mrf.mxu0
        %v11567 = vadd.f32 %v11549, %v11566
        %v11568 = vpop.f32.mrf.mxu0
        %11569 = vdwg.mxu0
        %11570 = vmatpush.bf16.msra.mxu0 %v8951
        %11571 = vmatpush.bf16.msra.mxu0 %v8947
        %11572 = vmatpush.bf16.msra.mxu0 %v8943
        %11573 = vmatpush.bf16.msra.mxu0 %v8939
        %11574 = vmatpush.bf16.msra.mxu0 %v8935
        %11575 = vmatpush.bf16.msra.mxu0 %v8931
        %11576 = vmatpush.bf16.msra.mxu0 %v8927
        %11577 = vmatpush.bf16.msra.mxu0 %v8923
        %11578 = vmatmul.bf16.gmra.mxu0 %v5397
        %v11579 = vpop.f32.mrf.mxu0
        %v11580 = vadd.f32 %v11562, %v11579
        %v11581 = vpop.f32.mrf.mxu0
        %v11582 = vadd.f32 %v11564, %v11581
        %11583 = vmatmul.bf16.gmra.mxu0 %v5421
        %v11584 = vpop.f32.mrf.mxu0
        %v11585 = vadd.f32 %v11567, %v11584
        %v11586 = vpop.f32.mrf.mxu0
        %11587 = vdwg.mxu0
        %11588 = vmatpush.bf16.msra.mxu0 %v8983
        %11589 = vmatpush.bf16.msra.mxu0 %v8979
        %11590 = vmatpush.bf16.msra.mxu0 %v8975
        %11591 = vmatpush.bf16.msra.mxu0 %v8971
        %11592 = vmatpush.bf16.msra.mxu0 %v8967
        %11593 = vmatpush.bf16.msra.mxu0 %v8963
        %11594 = vmatpush.bf16.msra.mxu0 %v8959
        %11595 = vmatpush.bf16.msra.mxu0 %v8955
        %11596 = vmatmul.bf16.gmra.mxu0 %v5398
        %v11597 = vpop.f32.mrf.mxu0
        %v11598 = vadd.f32 %v11580, %v11597
        %v11599 = vpop.f32.mrf.mxu0
        %v11600 = vadd.f32 %v11582, %v11599
        %11601 = vmatmul.bf16.gmra.mxu0 %v5422
        %v11602 = vpop.f32.mrf.mxu0
        %v11603 = vadd.f32 %v11585, %v11602
        %v11604 = vpop.f32.mrf.mxu0
        %11605 = vdwg.mxu0
        %11606 = vmatpush.bf16.msra.mxu0 %v9015
        %11607 = vmatpush.bf16.msra.mxu0 %v9011
        %11608 = vmatpush.bf16.msra.mxu0 %v9007
        %11609 = vmatpush.bf16.msra.mxu0 %v9003
        %11610 = vmatpush.bf16.msra.mxu0 %v8999
        %11611 = vmatpush.bf16.msra.mxu0 %v8995
        %11612 = vmatpush.bf16.msra.mxu0 %v8991
        %11613 = vmatpush.bf16.msra.mxu0 %v8987
        %11614 = vmatmul.bf16.gmra.mxu0 %v5399
        %v11615 = vpop.f32.mrf.mxu0
        %v11616 = vadd.f32 %v11598, %v11615
        %v11617 = vpop.f32.mrf.mxu0
        %v11618 = vadd.f32 %v11600, %v11617
        %11619 = vmatmul.bf16.gmra.mxu0 %v5423
        %v11620 = vpop.f32.mrf.mxu0
        %v11621 = vadd.f32 %v11603, %v11620
        %v11622 = vpop.f32.mrf.mxu0
        %11623 = vdwg.mxu0
        %11624 = vmatpush.bf16.msra.mxu0 %v9047
        %11625 = vmatpush.bf16.msra.mxu0 %v9043
        %11626 = vmatpush.bf16.msra.mxu0 %v9039
        %11627 = vmatpush.bf16.msra.mxu0 %v9035
        %11628 = vmatpush.bf16.msra.mxu0 %v9031
        %11629 = vmatpush.bf16.msra.mxu0 %v9027
        %11630 = vmatpush.bf16.msra.mxu0 %v9023
        %11631 = vmatpush.bf16.msra.mxu0 %v9019
        %11632 = vmatmul.bf16.gmra.mxu0 %v5400
        %v11633 = vpop.f32.mrf.mxu0
        %v11634 = vadd.f32 %v11616, %v11633
        %v11635 = vpop.f32.mrf.mxu0
        %v11636 = vadd.f32 %v11618, %v11635
        %11637 = vmatmul.bf16.gmra.mxu0 %v5424
        %v11638 = vpop.f32.mrf.mxu0
        %v11639 = vadd.f32 %v11621, %v11638
        %v11640 = vpop.f32.mrf.mxu0
        %11641 = vdwg.mxu0
        %11642 = vmatpush.bf16.msra.mxu0 %v9079
        %11643 = vmatpush.bf16.msra.mxu0 %v9075
        %11644 = vmatpush.bf16.msra.mxu0 %v9071
        %11645 = vmatpush.bf16.msra.mxu0 %v9067
        %11646 = vmatpush.bf16.msra.mxu0 %v9063
        %11647 = vmatpush.bf16.msra.mxu0 %v9059
        %11648 = vmatpush.bf16.msra.mxu0 %v9055
        %11649 = vmatpush.bf16.msra.mxu0 %v9051
        %11650 = vmatmul.bf16.gmra.mxu0 %v5401
        %v11651 = vpop.f32.mrf.mxu0
        %v11652 = vadd.f32 %v11634, %v11651
        %v11653 = vpop.f32.mrf.mxu0
        %v11654 = vadd.f32 %v11636, %v11653
        %11655 = vmatmul.bf16.gmra.mxu0 %v5425
        %v11656 = vpop.f32.mrf.mxu0
        %v11657 = vadd.f32 %v11639, %v11656
        %v11658 = vpop.f32.mrf.mxu0
        %11659 = vdwg.mxu0
        %11660 = vmatpush.bf16.msra.mxu0 %v9111
        %11661 = vmatpush.bf16.msra.mxu0 %v9107
        %11662 = vmatpush.bf16.msra.mxu0 %v9103
        %11663 = vmatpush.bf16.msra.mxu0 %v9099
        %11664 = vmatpush.bf16.msra.mxu0 %v9095
        %11665 = vmatpush.bf16.msra.mxu0 %v9091
        %11666 = vmatpush.bf16.msra.mxu0 %v9087
        %11667 = vmatpush.bf16.msra.mxu0 %v9083
        %11668 = vmatmul.bf16.gmra.mxu0 %v5402
        %v11669 = vpop.f32.mrf.mxu0
        %v11670 = vadd.f32 %v11652, %v11669
        %v11671 = vpop.f32.mrf.mxu0
        %v11672 = vadd.f32 %v11654, %v11671
        %11673 = vmatmul.bf16.gmra.mxu0 %v5426
        %v11674 = vpop.f32.mrf.mxu0
        %v11675 = vadd.f32 %v11657, %v11674
        %v11676 = vpop.f32.mrf.mxu0
        %11677 = vdwg.mxu0
        %11678 = vmatpush.bf16.msra.mxu0 %v9143
        %11679 = vmatpush.bf16.msra.mxu0 %v9139
        %11680 = vmatpush.bf16.msra.mxu0 %v9135
        %11681 = vmatpush.bf16.msra.mxu0 %v9131
        %11682 = vmatpush.bf16.msra.mxu0 %v9127
        %11683 = vmatpush.bf16.msra.mxu0 %v9123
        %11684 = vmatpush.bf16.msra.mxu0 %v9119
        %11685 = vmatpush.bf16.msra.mxu0 %v9115
        %11686 = vmatmul.bf16.gmra.mxu0 %v5403
        %v11687 = vpop.f32.mrf.mxu0
        %v11688 = vadd.f32 %v11670, %v11687
        %v11689 = vpop.f32.mrf.mxu0
        %v11690 = vadd.f32 %v11672, %v11689
        %11691 = vmatmul.bf16.gmra.mxu0 %v5427
        %v11692 = vpop.f32.mrf.mxu0
        %v11693 = vadd.f32 %v11675, %v11692
        %v11694 = vpop.f32.mrf.mxu0
        %11695 = vdwg.mxu0
        %11696 = vmatpush.bf16.msra.mxu0 %v9175
        %11697 = vmatpush.bf16.msra.mxu0 %v9171
        %11698 = vmatpush.bf16.msra.mxu0 %v9167
        %11699 = vmatpush.bf16.msra.mxu0 %v9163
        %11700 = vmatpush.bf16.msra.mxu0 %v9159
        %11701 = vmatpush.bf16.msra.mxu0 %v9155
        %11702 = vmatpush.bf16.msra.mxu0 %v9151
        %11703 = vmatpush.bf16.msra.mxu0 %v9147
        %11704 = vmatmul.bf16.gmra.mxu0 %v5404
        %v11705 = vpop.f32.mrf.mxu0
        %v11706 = vadd.f32 %v11688, %v11705
        %v11707 = vpop.f32.mrf.mxu0
        %v11708 = vadd.f32 %v11690, %v11707
        %11709 = vmatmul.bf16.gmra.mxu0 %v5428
        %v11710 = vpop.f32.mrf.mxu0
        %v11711 = vadd.f32 %v11693, %v11710
        %v11712 = vpop.f32.mrf.mxu0
        %11713 = vdwg.mxu0
        %11714 = vmatpush.bf16.msra.mxu0 %v9207
        %11715 = vmatpush.bf16.msra.mxu0 %v9203
        %11716 = vmatpush.bf16.msra.mxu0 %v9199
        %11717 = vmatpush.bf16.msra.mxu0 %v9195
        %11718 = vmatpush.bf16.msra.mxu0 %v9191
        %11719 = vmatpush.bf16.msra.mxu0 %v9187
        %11720 = vmatpush.bf16.msra.mxu0 %v9183
        %11721 = vmatpush.bf16.msra.mxu0 %v9179
        %11722 = vmatmul.bf16.gmra.mxu0 %v5405
        %v11723 = vpop.f32.mrf.mxu0
        %v11724 = vadd.f32 %v11706, %v11723
        %v11725 = vpop.f32.mrf.mxu0
        %v11726 = vadd.f32 %v11708, %v11725
        %11727 = vmatmul.bf16.gmra.mxu0 %v5429
        %v11728 = vpop.f32.mrf.mxu0
        %v11729 = vadd.f32 %v11711, %v11728
        %v11730 = vpop.f32.mrf.mxu0
        %11731 = vdwg.mxu0
        %11732 = vmatpush.bf16.msra.mxu0 %v9239
        %11733 = vmatpush.bf16.msra.mxu0 %v9235
        %11734 = vmatpush.bf16.msra.mxu0 %v9231
        %11735 = vmatpush.bf16.msra.mxu0 %v9227
        %11736 = vmatpush.bf16.msra.mxu0 %v9223
        %11737 = vmatpush.bf16.msra.mxu0 %v9219
        %11738 = vmatpush.bf16.msra.mxu0 %v9215
        %11739 = vmatpush.bf16.msra.mxu0 %v9211
        %11740 = vmatmul.bf16.gmra.mxu0 %v5406
        %v11741 = vpop.f32.mrf.mxu0
        %v11742 = vadd.f32 %v11724, %v11741
        %v11743 = vpop.f32.mrf.mxu0
        %v11744 = vadd.f32 %v11726, %v11743
        %11745 = vmatmul.bf16.gmra.mxu0 %v5430
        %v11746 = vpop.f32.mrf.mxu0
        %v11747 = vadd.f32 %v11729, %v11746
        %v11748 = vpop.f32.mrf.mxu0
        %11749 = vdwg.mxu0
        %11750 = vmatpush.bf16.msra.mxu0 %v9271
        %11751 = vmatpush.bf16.msra.mxu0 %v9267
        %11752 = vmatpush.bf16.msra.mxu0 %v9263
        %11753 = vmatpush.bf16.msra.mxu0 %v9259
        %11754 = vmatpush.bf16.msra.mxu0 %v9255
        %11755 = vmatpush.bf16.msra.mxu0 %v9251
        %11756 = vmatpush.bf16.msra.mxu0 %v9247
        %11757 = vmatpush.bf16.msra.mxu0 %v9243
        %11758 = vmatmul.bf16.gmra.mxu0 %v5407
        %v11759 = vpop.f32.mrf.mxu0
        %v11760 = vadd.f32 %v11742, %v11759
        %v11761 = vpop.f32.mrf.mxu0
        %v11762 = vadd.f32 %v11744, %v11761
        %11763 = vmatmul.bf16.gmra.mxu0 %v5431
        %v11764 = vpop.f32.mrf.mxu0
        %v11765 = vadd.f32 %v11747, %v11764
        %v11766 = vpop.f32.mrf.mxu0
        %11767 = vdwg.mxu0
        %v11768 = vpack.c.bf16 %v10896, %v10464
        %v11769 = vpack.c.bf16 %v11760, %v11328
        %v11770 = vpack.c.bf16 %v10898, %v10466
        %v11771 = vpack.c.bf16 %v11762, %v11330
        %v11772 = vpack.c.bf16 %v10901, %v10469
        %v11773 = vpack.c.bf16 %v11765, %v11333
        %v11774 = vld [vmem:[#allocation10] sm:$0xf]
        %s11775 = scalar_lea.vmem [#allocation10], 4
        %v11776 = vld [vmem:[%s11775] sm:$0xf]
        %v11780 = vunpack.c.h.b16 %v11768
        %v11781 = vunpack.c.h.b16 %v11770
        %v11782 = vunpack.c.h.b16 %v11772
        %v11783 = vpack.c.b16 %v11781, %v11780
        %v11784 = vpack.c.b16 %v11782, %v11782
        %vm11786 = vcmask 195584
        %v11788 = vsel %vm11786, %v11776, 0
        %v11791 = vsel %vm1040, %v11784, 0
        %11793 = vmatpush.bf16.msra.mxu0 0
        %11794 = vmatpush.bf16.msra.mxu0 0
        %11795 = vmatpush.bf16.msra.mxu0 0
        %11796 = vmatpush.bf16.msra.mxu0 0
        %11797 = vmatpush.bf16.msra.mxu0 0
        %11798 = vmatpush.bf16.msra.mxu0 0
        %11799 = vmatpush.bf16.msra.mxu0 %v11791
        %11800 = vmatpush.bf16.msra.mxu0 %v11783
        %11801 = vmatmul.bf16.gmra.mxu0 %v11788
        %v11802 = vpop.f32.mrf.mxu0
        %v11803 = vadd.f32 0.0, %v11802
        %v11804 = vpop.f32.mrf.mxu0
        %11805 = vdwg.mxu0
        %v11806 = vunpack.c.l.b16 %v11768
        %v11807 = vunpack.c.l.b16 %v11770
        %v11808 = vunpack.c.l.b16 %v11772
        %v11809 = vpack.c.b16 %v11807, %v11806
        %v11810 = vpack.c.b16 %v11808, %v11808
        %v11813 = vsel %vm11786, %v11774, 0
        %v11816 = vsel %vm1040, %v11810, 0
        %11818 = vmatpush.bf16.msra.mxu0 0
        %11819 = vmatpush.bf16.msra.mxu0 0
        %11820 = vmatpush.bf16.msra.mxu0 0
        %11821 = vmatpush.bf16.msra.mxu0 0
        %11822 = vmatpush.bf16.msra.mxu0 0
        %11823 = vmatpush.bf16.msra.mxu0 0
        %11824 = vmatpush.bf16.msra.mxu0 %v11816
        %11825 = vmatpush.bf16.msra.mxu0 %v11809
        %11826 = vmatmul.bf16.gmra.mxu0 %v11813
        %v11827 = vpop.f32.mrf.mxu0
        %v11828 = vadd.f32 %v11803, %v11827
        %v11829 = vpop.f32.mrf.mxu0
        %11830 = vdwg.mxu0
        %s11831 = scalar_lea.vmem [#allocation10], 8
        %v11832 = vld [vmem:[%s11831] sm:$0xf]
        %v11836 = vunpack.c.l.b16 %v11769
        %v11837 = vunpack.c.l.b16 %v11771
        %v11838 = vunpack.c.l.b16 %v11773
        %v11839 = vpack.c.b16 %v11837, %v11836
        %v11840 = vpack.c.b16 %v11838, %v11838
        %v11843 = vsel %vm11786, %v11832, 0
        %v11846 = vsel %vm1040, %v11840, 0
        %11848 = vmatpush.bf16.msra.mxu0 0
        %11849 = vmatpush.bf16.msra.mxu0 0
        %11850 = vmatpush.bf16.msra.mxu0 0
        %11851 = vmatpush.bf16.msra.mxu0 0
        %11852 = vmatpush.bf16.msra.mxu0 0
        %11853 = vmatpush.bf16.msra.mxu0 0
        %11854 = vmatpush.bf16.msra.mxu0 %v11846
        %11855 = vmatpush.bf16.msra.mxu0 %v11839
        %11856 = vmatmul.bf16.gmra.mxu0 %v11843
        %v11857 = vpop.f32.mrf.mxu0
        %v11858 = vadd.f32 0.0, %v11857
        %v11859 = vpop.f32.mrf.mxu0
        %11860 = vdwg.mxu0
        %v11861 = vadd.f32 %v11828, %v11858
        %s11862 = scalar_lea.vmem [#allocation10], 12
        %v11863 = vld [vmem:[%s11862] sm:$0xf]
        %v11864 = vunpack.c.h.b16 %v11769
        %v11865 = vunpack.c.h.b16 %v11771
        %v11866 = vunpack.c.h.b16 %v11773
        %v11867 = vpack.c.b16 %v11865, %v11864
        %v11868 = vpack.c.b16 %v11866, %v11866
        %v11871 = vsel %vm11786, %v11863, 0
        %v11874 = vsel %vm1040, %v11868, 0
        %11876 = vmatpush.bf16.msra.mxu0 0
        %11877 = vmatpush.bf16.msra.mxu0 0
        %11878 = vmatpush.bf16.msra.mxu0 0
        %11879 = vmatpush.bf16.msra.mxu0 0
        %11880 = vmatpush.bf16.msra.mxu0 0
        %11881 = vmatpush.bf16.msra.mxu0 0
        %11882 = vmatpush.bf16.msra.mxu0 %v11874
        %11883 = vmatpush.bf16.msra.mxu0 %v11867
        %11884 = vmatmul.bf16.gmra.mxu0 %v11871
        %v11885 = vpop.f32.mrf.mxu0
        %v11886 = vadd.f32 0.0, %v11885
        %v11887 = vpop.f32.mrf.mxu0
        %11888 = vdwg.mxu0
        %v11889 = vadd.f32 %v11861, %v11886
        %v11890 = vld [vmem:[%s7] sm:$0xff]
        %11892 = vset.pattern.permute.xlu0 0
        %11893 = vperm.xlu0 %11892, %v11890
        %v11894 = vpop.permute.xlu0 %11893
        %v11896 = vadd.f32 %v11889, %v11894
        %11897 = vst [vmem:[%s431] sm:$0xff] %v11896
        %s11898 = sand.u32 %s231, 1
        %s11899 = scalar_lea.sflag [#allocation4], %s11898
        %s11900 = sand.u32 %s231, 1
        %s11901 = smul.addr %s11900, 8
        %s11902 = scalar_lea.vmem [#allocation13], %s11901
        // Predicated region
        $region81: #{tpu_custom_call.1} parent=55 // pred_check
          %p11903 = pneg %p241
        $region82: #{tpu_custom_call.1} parent=55 // pred_check_branch
          %11905 = sbr.rel (%p11903) target = $region84
        $region83: #{tpu_custom_call.1} parent=55 // pred_region
          %11907 = vsyncadd %s11899, 0
          %s11908 = smul.addr %s29, 8
          %s11909 = scalar_lea.hbm %s9, %s11908
          %s11911 = sshll.u32 %s11902, 4
          %s11912 = int_to_ptr.vmem [resolvable:$true] %s11911
          %s11913 = sshll.u32 %s11909, 4
          %s11914 = int_to_ptr.hbm [resolvable:$true] %s11913
          %11916 = dma.vmem_to_hbm [thread:$0]  %s11912, 128, %s11914, %s11899
        $region84: #{tpu_custom_call.1} parent=55 // pred_fallthru
          _
      $region56: #{tpu_custom_call.1} parent=5 // pred_fallthru
        _
      %p11917 = scmp.le.s32.totalorder 2, %s24
      // Predicated region
      $region85: #{tpu_custom_call.1} parent=5 // pred_check
        %p11918 = pneg %p11917
      $region86: #{tpu_custom_call.1} parent=5 // pred_check_branch
        %11920 = sbr.rel (%p11918) target = $region88
      $region87: #{tpu_custom_call.1} parent=5 // pred_region
        %s11921 = ssub.s32 %s24, 2
        // Predicated region
        $region89: #{tpu_custom_call.1} parent=87 // pred_check
          %p11922 = pneg %p247
        $region90: #{tpu_custom_call.1} parent=87 // pred_check_branch
          %11924 = sbr.rel (%p11922) target = $region92
        $region91: #{tpu_custom_call.1} parent=87 // pred_region
          %s11925 = sand.u32 %s232, 1
          %s11926 = scalar_lea.sflag [#allocation4], %s11925
          %s11927 = sand.u32 %s232, 1
          %s11928 = smul.addr %s11927, 8
          %s11929 = scalar_lea.vmem [#allocation13], %s11928
          %11931 = dma.done %s11926, 128
        $region92: #{tpu_custom_call.1} parent=87 // pred_fallthru
          _
      $region88: #{tpu_custom_call.1} parent=5 // pred_fallthru
        _
    $region6: #{tpu_custom_call.1} parent=1 // loop_footer
      %s28 = sadd.s32 1, %s24
    $region7: #{tpu_custom_call.1} parent=1 // loop_footer_branch
      %23 = sbr.rel target = $region3
    $region8: #{tpu_custom_call.1} parent=1 // loop_exit
      _
    %11932 = vsyncpa [#allocation3], 1
    %s11933 = scalar_lea.sflag [#allocation3], 1
    %11934 = vsyncpa %s11933, 1
    %11935 = vsyncpa [#allocation6], 1
    %11936 = vsyncpa [#allocation9], 1
    %11937 = vsyncpa [#allocation12], 1
    %11938 = vsyncpa [#allocation4], 1
    %s11939 = scalar_lea.sflag [#allocation4], 1
    %11940 = vsyncpa %s11939, 1

</llo_original>
